<compile_context>
chip_gen: v7x
topology: tpu7x:2x2x1
jax: 0.10.0
libtpu: 0.0.40
codegen_flags: <defaults>
</compile_context>

<pallas_src>
import functools

import numpy as np
import jax
import jax.numpy as jnp
from jax.experimental import pallas as pl
from jax.experimental.pallas import tpu as pltpu


# ----------------------------------------------------------------------------
# helpers
# ----------------------------------------------------------------------------
def _round_up(x, m):
    return (x + m - 1) // m * m


def _pick_tile(dim, desired, quantum):
    """Pick a tile size (multiple of `quantum`, <= desired) and the padded dim."""
    dq = _round_up(dim, quantum)
    if dq <= desired:
        return dq, dq
    t = _round_up(desired, quantum)
    return t, _round_up(dq, t)


def _pad2(a, r, c):
    pr, pc = r - a.shape[0], c - a.shape[1]
    if pr == 0 and pc == 0:
        return a
    return jnp.pad(a, ((0, pr), (0, pc)))


# ----------------------------------------------------------------------------
# Tiled GEMM kernel:  out = act(x @ w + b [+ add])
# ----------------------------------------------------------------------------
def _gemm_kernel(*refs, relu, has_add):
    if has_add:
        x_ref, w_ref, b_ref, a_ref, o_ref, acc_ref = refs
    else:
        x_ref, w_ref, b_ref, o_ref, acc_ref = refs
        a_ref = None

    k = pl.program_id(2)

    @pl.when(k == 0)
    def _():
        acc_ref[...] = jnp.zeros_like(acc_ref)

    acc_ref[...] += jnp.dot(x_ref[...], w_ref[...],
                            preferred_element_type=jnp.float32)

    @pl.when(k == pl.num_programs(2) - 1)
    def _():
        r = acc_ref[...] + b_ref[...]          # bias (1, tn) broadcasts over rows
        if has_add:
            r = r + a_ref[...].astype(jnp.float32)
        if relu:
            r = jnp.maximum(r, 0.0)
        o_ref[...] = r.astype(o_ref.dtype)


def gemm_bias_act(x, w, b, relu=False, add=None, out_dtype=jnp.bfloat16):
    """x: (M, K), w: (K, N), b: (N,), optional add: (M, N) -> (M, N)."""
    M, K = x.shape
    K2, Nc = w.shape
    assert K == K2

    tm, Mp = _pick_tile(M, 512, 8)
    tn, Np = _pick_tile(Nc, 256, 128)
    tk, Kp = _pick_tile(K, 512, 128)

    xp = _pad2(x, Mp, Kp).astype(jnp.bfloat16)
    wp = _pad2(w, Kp, Np).astype(jnp.bfloat16)
    bp = _pad2(b.reshape(1, Nc).astype(jnp.float32), 1, Np)

    inputs = [xp, wp, bp]
    in_specs = [
        pl.BlockSpec((tm, tk), lambda i, j, k: (i, k)),
        pl.BlockSpec((tk, tn), lambda i, j, k: (k, j)),
        pl.BlockSpec((1, tn), lambda i, j, k: (0, j)),
    ]
    has_add = add is not None
    if has_add:
        ap = _pad2(add.astype(jnp.bfloat16), Mp, Np)
        inputs.append(ap)
        in_specs.append(pl.BlockSpec((tm, tn), lambda i, j, k: (i, j)))

    out_itemsize = jnp.dtype(out_dtype).itemsize
    vmem = 2 * (tm * tk * 2 + tk * tn * 2)          # double-buffered bf16 x, w
    vmem += 2 * tn * 4                              # bias
    if has_add:
        vmem += 2 * tm * tn * 2
    vmem += 2 * tm * tn * out_itemsize              # output buffers
    vmem += tm * tn * 4                             # f32 accumulator scratch
    vmem_limit = int(min(max(4 * vmem, 16 * 2**20), 32 * 2**20))

    out = pl.pallas_call(
        functools.partial(_gemm_kernel, relu=relu, has_add=has_add),
        out_shape=jax.ShapeDtypeStruct((Mp, Np), out_dtype),
        grid_spec=pltpu.PrefetchScalarGridSpec(
            num_scalar_prefetch=0,
            grid=(Mp // tm, Np // tn, Kp // tk),
            in_specs=in_specs,
            out_specs=pl.BlockSpec((tm, tn), lambda i, j, k: (i, j)),
            scratch_shapes=[pltpu.VMEM((tm, tn), jnp.float32)],
        ),
        compiler_params=pltpu.CompilerParams(
            dimension_semantics=("parallel", "parallel", "arbitrary"),
            vmem_limit_bytes=vmem_limit,
        ),
    )(*inputs)
    return out[:M, :Nc]


# ----------------------------------------------------------------------------
# Batched "row-mix" kernel:  out[b] = M @ x[b]   (used for 1-D bilinear interp)
# ----------------------------------------------------------------------------
def _mix_kernel(m_ref, x_ref, o_ref):
    o_ref[0] = jnp.dot(m_ref[...], x_ref[0].astype(jnp.float32),
                       preferred_element_type=jnp.float32).astype(o_ref.dtype)


def mix_rows(x3, M, out_dtype):
    """x3: (B, R, L), M: (Rout, R)  ->  (B, Rout, L) with out[b] = M @ x3[b]."""
    B, R, L = x3.shape
    Rout = M.shape[0]

    tr, Rp = _pick_tile(Rout, 128, 8)
    tl, Lp = _pick_tile(L, 512, 128)

    Mp = _pad2(M.astype(jnp.float32), Rp, R)
    x3p = x3 if Lp == L else jnp.pad(x3, ((0, 0), (0, 0), (0, Lp - L)))

    out = pl.pallas_call(
        _mix_kernel,
        out_shape=jax.ShapeDtypeStruct((B, Rp, Lp), out_dtype),
        grid_spec=pltpu.PrefetchScalarGridSpec(
            num_scalar_prefetch=0,
            grid=(B, Rp // tr, Lp // tl),
            in_specs=[
                pl.BlockSpec((tr, R), lambda b, r, l: (r, 0)),
                pl.BlockSpec((1, R, tl), lambda b, r, l: (b, 0, l)),
            ],
            out_specs=pl.BlockSpec((1, tr, tl), lambda b, r, l: (b, r, l)),
        ),
        compiler_params=pltpu.CompilerParams(
            dimension_semantics=("parallel", "parallel", "parallel")),
    )(Mp, x3p)
    return out[:, :Rout, :L]


# ----------------------------------------------------------------------------
# Bilinear upsample (align_corners=False), NHWC, separable H-mix then W-mix
# ----------------------------------------------------------------------------
def _bilinear_matrix(out_size, in_size):
    o = np.arange(out_size, dtype=np.float64)
    src = (o + 0.5) * (in_size / out_size) - 0.5
    src = np.clip(src, 0.0, in_size - 1)
    i0 = np.floor(src).astype(np.int64)
    i1 = np.minimum(i0 + 1, in_size - 1)
    frac = src - i0
    M = np.zeros((out_size, in_size), np.float32)
    M[np.arange(out_size), i0] += (1.0 - frac).astype(np.float32)
    M[np.arange(out_size), i1] += frac.astype(np.float32)
    return jnp.asarray(M)


def bilinear_upsample(x, Hout, Wout, out_dtype=None):
    """x: (N, H, W, C) -> (N, Hout, Wout, C); matches F.interpolate(bilinear,
    align_corners=False). No host-side transposes; two pipelined Pallas calls."""
    N, H, W, C = x.shape
    if out_dtype is None:
        out_dtype = x.dtype
    Wh = _bilinear_matrix(Hout, H)                      # (Hout, H)
    Ww = _bilinear_matrix(Wout, W)                      # (Wout, W)
    # mix over H:  (N, H, W*C) -> (N, Hout, W*C)
    t = mix_rows(x.reshape(N, H, W * C), Wh, x.dtype).reshape(N, Hout, W, C)
    # mix over W:  (N*Hout, W, C) -> (N*Hout, Wout, C)
    y = mix_rows(t.reshape(N * Hout, W, C), Ww, out_dtype)
    return y.reshape(N, Hout, Wout, C)


# ----------------------------------------------------------------------------
# Conv2d (NHWC) = im2col glue + tiled Pallas GEMM; FPN add fused in epilogue
# ----------------------------------------------------------------------------
def _im2col_nhwc(x, kh, kw, stride, padding):
    N, H, W, C = x.shape
    xp = jnp.pad(x, ((0, 0), (padding, padding), (padding, padding), (0, 0)))
    Ho = (H + 2 * padding - kh) // stride + 1
    Wo = (W + 2 * padding - kw) // stride + 1
    cols = []
    for i in range(kh):
        for j in range(kw):
            cols.append(xp[:, i:i + stride * Ho:stride, j:j + stride * Wo:stride, :])
    p = jnp.concatenate(cols, axis=-1)                  # (N, Ho, Wo, kh*kw*C)
    return p.reshape(N * Ho * Wo, kh * kw * C), Ho, Wo


def conv2d(x, w, b, stride=1, padding=0, relu=False, add=None,
           out_dtype=jnp.bfloat16):
    """x: (N, H, W, Cin) ; w: (Cout, Cin, kh, kw) (torch layout) ; b: (Cout,).
    Optional `add` (N, Ho, Wo, Cout) is fused into the GEMM epilogue."""
    N, H, W, C = x.shape
    Cout, Cin, kh, kw = w.shape
    assert C == Cin
    if kh == 1 and kw == 1 and stride == 1 and padding == 0:
        cols, Ho, Wo = x.reshape(N * H * W, C), H, W
    else:
        cols, Ho, Wo = _im2col_nhwc(x, kh, kw, stride, padding)
    wm = jnp.transpose(w, (2, 3, 1, 0)).reshape(kh * kw * Cin, Cout)
    add2 = None if add is None else add.reshape(N * Ho * Wo, Cout)
    out = gemm_bias_act(cols, wm, b, relu=relu, add=add2, out_dtype=out_dtype)
    return out.reshape(N, Ho, Wo, Cout)


# ----------------------------------------------------------------------------
# Parameter init (deterministic, in-script)
# ----------------------------------------------------------------------------
def _conv_init(key, cout, cin, kh, kw):
    fan_in = cin * kh * kw
    w = jax.random.normal(key, (cout, cin, kh, kw), jnp.float32) / np.sqrt(fan_in)
    b = jnp.zeros((cout,), jnp.float32)
    return w, b


def init_psenet_params(key):
    ks = jax.random.split(key, 16)
    p = {}
    # backbone: strides 4, 2, 2, 2  ->  overall strides 4, 8, 16, 32
    p["bb1"] = _conv_init(ks[0], 16, 3, 3, 3)
    p["bb2"] = _conv_init(ks[1], 32, 16, 3, 3)
    p["bb3"] = _conv_init(ks[2], 64, 32, 3, 3)
    p["bb4"] = _conv_init(ks[3], 128, 64, 3, 3)
    # FPN (neck): reduce every level to 32 channels with 1x1 convs
    p["top"] = _conv_init(ks[4], 32, 128, 1, 1)
    p["lat3"] = _conv_init(ks[5], 32, 64, 1, 1)
    p["lat2"] = _conv_init(ks[6], 32, 32, 1, 1)
    p["lat1"] = _conv_init(ks[7], 32, 16, 1, 1)
    # detection head: conv3x3 + ReLU, conv1x1 -> 7 PSE kernel maps
    p["head1"] = _conv_init(ks[8], 64, 128, 3, 3)
    p["head2"] = _conv_init(ks[9], 7, 64, 1, 1)
    return p


# ----------------------------------------------------------------------------
# PSENet forward (NCHW in / NCHW out; NHWC internally)
# ----------------------------------------------------------------------------
def psenet_forward(params, imgs_nchw):
    Nb, _, H, W = imgs_nchw.shape
    imgs = jnp.transpose(imgs_nchw, (0, 2, 3, 1))                       # -> NHWC

    # ---- backbone ----
    c1 = conv2d(imgs, *params["bb1"], stride=4, padding=1, relu=True)   # stride 4
    c2 = conv2d(c1,   *params["bb2"], stride=2, padding=1, relu=True)   # stride 8
    c3 = conv2d(c2,   *params["bb3"], stride=2, padding=1, relu=True)   # stride 16
    c4 = conv2d(c3,   *params["bb4"], stride=2, padding=1, relu=True)   # stride 32

    # ---- FPN neck (top-down add fused into the lateral 1x1-conv epilogue) ----
    p4 = conv2d(c4, *params["top"])
    p3 = conv2d(c3, *params["lat3"],
                add=bilinear_upsample(p4, c3.shape[1], c3.shape[2]))
    p2 = conv2d(c2, *params["lat2"],
                add=bilinear_upsample(p3, c2.shape[1], c2.shape[2]))
    p1 = conv2d(c1, *params["lat1"],
                add=bilinear_upsample(p2, c1.shape[1], c1.shape[2]))

    f1 = p1
    f2 = bilinear_upsample(p2, f1.shape[1], f1.shape[2])
    f3 = bilinear_upsample(p3, f1.shape[1], f1.shape[2])
    f4 = bilinear_upsample(p4, f1.shape[1], f1.shape[2])
    # torch.cat((f1, f2, f3, f4), 1) == channel (lane-dim) concat in NHWC
    f = jnp.concatenate((f1, f2, f3, f4), axis=-1)                      # (N, H/4, W/4, 128)

    # ---- detection head ----
    h = conv2d(f, *params["head1"], stride=1, padding=1, relu=True)
    det = conv2d(h, *params["head2"], out_dtype=jnp.float32)            # (N, H/4, W/4, 7)

    # ---- self._upsample(det_out, imgs.size(), scale=1) ----
    det = bilinear_upsample(det, H, W, out_dtype=jnp.float32)           # (N, H, W, 7)
    return jnp.transpose(det, (0, 3, 1, 2))                             # -> NCHW


# ----------------------------------------------------------------------------
if __name__ == "__main__":
    key = jax.random.PRNGKey(0)
    k_param, k_img = jax.random.split(key)

    params = init_psenet_params(k_param)
    imgs = jax.random.normal(k_img, (2, 3, 32, 32), jnp.float32)        # NCHW

    out = jax.jit(psenet_forward)(params, imgs)
    out = jax.block_until_ready(out)

    assert out.shape == (2, 7, 32, 32), out.shape
    assert out.dtype == jnp.float32
    assert bool(jnp.all(jnp.isfinite(out)))
    print("KERNEL_OK")
</pallas_src>

<mosaic_0001>
module attributes {stable_mosaic.version = 11 : i64} {
  func.func @_gemm_kernel(%arg0: i32, %arg1: i32, %arg2: i32, %arg3: memref<128x128xbf16, #tpu.memory_space<vmem>>, %arg4: memref<128x128xbf16, #tpu.memory_space<vmem>>, %arg5: memref<1x128xf32, #tpu.memory_space<vmem>>, %arg6: memref<128x128xbf16, #tpu.memory_space<vmem>>, %arg7: memref<128x128xf32, #tpu.memory_space<vmem>>) attributes {dimension_semantics = [#tpu.dimension_semantics<parallel>, #tpu.dimension_semantics<parallel>, #tpu.dimension_semantics<arbitrary>], iteration_bounds = array<i64: 1, 1, 1>, scalar_prefetch = 0 : i64, scratch_operands = 1 : i64, tpu.core_type = #tpu.core_type<tc>, window_params = [{transform_indices = @transform_0, window_bounds = array<i64: 128, 128>}, {transform_indices = @transform_1, window_bounds = array<i64: 128, 128>}, {transform_indices = @transform_2, window_bounds = array<i64: 1, 128>}, {transform_indices = @transform_3, window_bounds = array<i64: 128, 128>}]} {
    %c0_i32 = arith.constant 0 : i32
    %0 = arith.cmpi eq, %arg2, %c0_i32 : i32
    %1 = arith.extui %0 : i1 to i32
    %c0_i32_0 = arith.constant 0 : i32
    %2 = arith.cmpi ne, %1, %c0_i32_0 : i32
    scf.if %2 {
      %cst_10 = arith.constant 0.000000e+00 : f32
      %12 = vector.broadcast %cst_10 : f32 to vector<128x128xf32>
      %c0_11 = arith.constant 0 : index
      %c0_12 = arith.constant 0 : index
      %13 = vector.load %arg7[%c0_11, %c0_12] : memref<128x128xf32, #tpu.memory_space<vmem>>, vector<128x128xf32>
      tpu.vector_store %arg7[%c0_11, %c0_12], %12 {strides = array<i32>} : memref<128x128xf32, #tpu.memory_space<vmem>>, vector<128x128xf32>,
    } else {
    }
    %c0 = arith.constant 0 : index
    %c0_1 = arith.constant 0 : index
    %3 = vector.load %arg7[%c0, %c0_1] : memref<128x128xf32, #tpu.memory_space<vmem>>, vector<128x128xf32>
    %c0_2 = arith.constant 0 : index
    %c0_3 = arith.constant 0 : index
    %4 = vector.load %arg3[%c0_2, %c0_3] : memref<128x128xbf16, #tpu.memory_space<vmem>>, vector<128x128xbf16>
    %c0_4 = arith.constant 0 : index
    %c0_5 = arith.constant 0 : index
    %5 = vector.load %arg4[%c0_4, %c0_5] : memref<128x128xbf16, #tpu.memory_space<vmem>>, vector<128x128xbf16>
    %cst = arith.constant dense<0.000000e+00> : vector<128x128xf32>
    %6 = tpu.matmul %4, %5, %cst {dimension_numbers = #tpu.dot_dimension_numbers<[1], [0], [0], [1], [0, 0, 1, 1], [], []>} : vector<128x128xbf16>, vector<128x128xbf16>, vector<128x128xf32> -> vector<128x128xf32>
    %7 = arith.addf %3, %6 : vector<128x128xf32>
    %c0_6 = arith.constant 0 : index
    %c0_7 = arith.constant 0 : index
    %8 = vector.load %arg7[%c0_6, %c0_7] : memref<128x128xf32, #tpu.memory_space<vmem>>, vector<128x128xf32>
    tpu.vector_store %arg7[%c0_6, %c0_7], %7 {strides = array<i32>} : memref<128x128xf32, #tpu.memory_space<vmem>>, vector<128x128xf32>,
    %c0_i32_8 = arith.constant 0 : i32
    %9 = arith.cmpi eq, %arg2, %c0_i32_8 : i32
    %10 = arith.extui %9 : i1 to i32
    %c0_i32_9 = arith.constant 0 : i32
    %11 = arith.cmpi ne, %10, %c0_i32_9 : i32
    scf.if %11 {
      %c0_10 = arith.constant 0 : index
      %c0_11 = arith.constant 0 : index
      %12 = vector.load %arg7[%c0_10, %c0_11] : memref<128x128xf32, #tpu.memory_space<vmem>>, vector<128x128xf32>
      %c0_12 = arith.constant 0 : index
      %c0_13 = arith.constant 0 : index
      %13 = vector.load %arg5[%c0_12, %c0_13] : memref<1x128xf32, #tpu.memory_space<vmem>>, vector<1x128xf32>
      %14 = vector.broadcast %13 : vector<1x128xf32> to vector<128x128xf32>
      %15 = arith.addf %12, %14 : vector<128x128xf32>
      %cst_14 = arith.constant 0.000000e+00 : f32
      %16 = vector.broadcast %cst_14 : f32 to vector<128x128xf32>
      %17 = arith.maximumf %15, %16 : vector<128x128xf32>
      %18 = arith.truncf %17 : vector<128x128xf32> to vector<128x128xbf16>
      %c0_15 = arith.constant 0 : index
      %c0_16 = arith.constant 0 : index
      %19 = vector.load %arg6[%c0_15, %c0_16] : memref<128x128xbf16, #tpu.memory_space<vmem>>, vector<128x128xbf16>
      tpu.vector_store %arg6[%c0_15, %c0_16], %18 {strides = array<i32>} : memref<128x128xbf16, #tpu.memory_space<vmem>>, vector<128x128xbf16>,
    } else {
    }
    return
  }
  func.func @transform_0(%arg0: i32, %arg1: i32, %arg2: i32) -> (i32, i32) {
    %c0_i32 = arith.constant 0 : i32
    return %arg0, %arg2 : i32, i32
  }
  func.func @transform_1(%arg0: i32, %arg1: i32, %arg2: i32) -> (i32, i32) {
    %c0_i32 = arith.constant 0 : i32
    return %arg2, %arg1 : i32, i32
  }
  func.func @transform_2(%arg0: i32, %arg1: i32, %arg2: i32) -> (i32, i32) {
    %c0_i32 = arith.constant 0 : i32
    %c0_i32_0 = arith.constant 0 : i32
    return %c0_i32, %arg1 : i32, i32
  }
  func.func @transform_3(%arg0: i32, %arg1: i32, %arg2: i32) -> (i32, i32) {
    %c0_i32 = arith.constant 0 : i32
    return %arg0, %arg1 : i32, i32
  }
}

module attributes {stable_mosaic.version = 11 : i64} {
  func.func @_gemm_kernel(%arg0: i32, %arg1: i32, %arg2: i32, %arg3: memref<32x256xbf16, #tpu.memory_space<vmem>>, %arg4: memref<256x128xbf16, #tpu.memory_space<vmem>>, %arg5: memref<1x128xf32, #tpu.memory_space<vmem>>, %arg6: memref<32x128xbf16, #tpu.memory_space<vmem>>, %arg7: memref<32x128xf32, #tpu.memory_space<vmem>>) attributes {dimension_semantics = [#tpu.dimension_semantics<parallel>, #tpu.dimension_semantics<parallel>, #tpu.dimension_semantics<arbitrary>], iteration_bounds = array<i64: 1, 1, 1>, scalar_prefetch = 0 : i64, scratch_operands = 1 : i64, tpu.core_type = #tpu.core_type<tc>, window_params = [{transform_indices = @transform_0, window_bounds = array<i64: 32, 256>}, {transform_indices = @transform_1, window_bounds = array<i64: 256, 128>}, {transform_indices = @transform_2, window_bounds = array<i64: 1, 128>}, {transform_indices = @transform_3, window_bounds = array<i64: 32, 128>}]} {
    %c0_i32 = arith.constant 0 : i32
    %0 = arith.cmpi eq, %arg2, %c0_i32 : i32
    %1 = arith.extui %0 : i1 to i32
    %c0_i32_0 = arith.constant 0 : i32
    %2 = arith.cmpi ne, %1, %c0_i32_0 : i32
    scf.if %2 {
      %cst_10 = arith.constant 0.000000e+00 : f32
      %12 = vector.broadcast %cst_10 : f32 to vector<32x128xf32>
      %c0_11 = arith.constant 0 : index
      %c0_12 = arith.constant 0 : index
      %13 = vector.load %arg7[%c0_11, %c0_12] : memref<32x128xf32, #tpu.memory_space<vmem>>, vector<32x128xf32>
      tpu.vector_store %arg7[%c0_11, %c0_12], %12 {strides = array<i32>} : memref<32x128xf32, #tpu.memory_space<vmem>>, vector<32x128xf32>,
    } else {
    }
    %c0 = arith.constant 0 : index
    %c0_1 = arith.constant 0 : index
    %3 = vector.load %arg7[%c0, %c0_1] : memref<32x128xf32, #tpu.memory_space<vmem>>, vector<32x128xf32>
    %c0_2 = arith.constant 0 : index
    %c0_3 = arith.constant 0 : index
    %4 = vector.load %arg3[%c0_2, %c0_3] : memref<32x256xbf16, #tpu.memory_space<vmem>>, vector<32x256xbf16>
    %c0_4 = arith.constant 0 : index
    %c0_5 = arith.constant 0 : index
    %5 = vector.load %arg4[%c0_4, %c0_5] : memref<256x128xbf16, #tpu.memory_space<vmem>>, vector<256x128xbf16>
    %cst = arith.constant dense<0.000000e+00> : vector<32x128xf32>
    %6 = tpu.matmul %4, %5, %cst {dimension_numbers = #tpu.dot_dimension_numbers<[1], [0], [0], [1], [0, 0, 1, 1], [], []>} : vector<32x256xbf16>, vector<256x128xbf16>, vector<32x128xf32> -> vector<32x128xf32>
    %7 = arith.addf %3, %6 : vector<32x128xf32>
    %c0_6 = arith.constant 0 : index
    %c0_7 = arith.constant 0 : index
    %8 = vector.load %arg7[%c0_6, %c0_7] : memref<32x128xf32, #tpu.memory_space<vmem>>, vector<32x128xf32>
    tpu.vector_store %arg7[%c0_6, %c0_7], %7 {strides = array<i32>} : memref<32x128xf32, #tpu.memory_space<vmem>>, vector<32x128xf32>,
    %c0_i32_8 = arith.constant 0 : i32
    %9 = arith.cmpi eq, %arg2, %c0_i32_8 : i32
    %10 = arith.extui %9 : i1 to i32
    %c0_i32_9 = arith.constant 0 : i32
    %11 = arith.cmpi ne, %10, %c0_i32_9 : i32
    scf.if %11 {
      %c0_10 = arith.constant 0 : index
      %c0_11 = arith.constant 0 : index
      %12 = vector.load %arg7[%c0_10, %c0_11] : memref<32x128xf32, #tpu.memory_space<vmem>>, vector<32x128xf32>
      %c0_12 = arith.constant 0 : index
      %c0_13 = arith.constant 0 : index
      %13 = vector.load %arg5[%c0_12, %c0_13] : memref<1x128xf32, #tpu.memory_space<vmem>>, vector<1x128xf32>
      %14 = vector.broadcast %13 : vector<1x128xf32> to vector<32x128xf32>
      %15 = arith.addf %12, %14 : vector<32x128xf32>
      %cst_14 = arith.constant 0.000000e+00 : f32
      %16 = vector.broadcast %cst_14 : f32 to vector<32x128xf32>
      %17 = arith.maximumf %15, %16 : vector<32x128xf32>
      %18 = arith.truncf %17 : vector<32x128xf32> to vector<32x128xbf16>
      %c0_15 = arith.constant 0 : index
      %c0_16 = arith.constant 0 : index
      %19 = vector.load %arg6[%c0_15, %c0_16] : memref<32x128xbf16, #tpu.memory_space<vmem>>, vector<32x128xbf16>
      tpu.vector_store %arg6[%c0_15, %c0_16], %18 {strides = array<i32>} : memref<32x128xbf16, #tpu.memory_space<vmem>>, vector<32x128xbf16>,
    } else {
    }
    return
  }
  func.func @transform_0(%arg0: i32, %arg1: i32, %arg2: i32) -> (i32, i32) {
    %c0_i32 = arith.constant 0 : i32
    return %arg0, %arg2 : i32, i32
  }
  func.func @transform_1(%arg0: i32, %arg1: i32, %arg2: i32) -> (i32, i32) {
    %c0_i32 = arith.constant 0 : i32
    return %arg2, %arg1 : i32, i32
  }
  func.func @transform_2(%arg0: i32, %arg1: i32, %arg2: i32) -> (i32, i32) {
    %c0_i32 = arith.constant 0 : i32
    %c0_i32_0 = arith.constant 0 : i32
    return %c0_i32, %arg1 : i32, i32
  }
  func.func @transform_3(%arg0: i32, %arg1: i32, %arg2: i32) -> (i32, i32) {
    %c0_i32 = arith.constant 0 : i32
    return %arg0, %arg1 : i32, i32
  }
}

module attributes {stable_mosaic.version = 11 : i64} {
  func.func @_gemm_kernel(%arg0: i32, %arg1: i32, %arg2: i32, %arg3: memref<8x384xbf16, #tpu.memory_space<vmem>>, %arg4: memref<384x128xbf16, #tpu.memory_space<vmem>>, %arg5: memref<1x128xf32, #tpu.memory_space<vmem>>, %arg6: memref<8x128xbf16, #tpu.memory_space<vmem>>, %arg7: memref<8x128xf32, #tpu.memory_space<vmem>>) attributes {dimension_semantics = [#tpu.dimension_semantics<parallel>, #tpu.dimension_semantics<parallel>, #tpu.dimension_semantics<arbitrary>], iteration_bounds = array<i64: 1, 1, 1>, scalar_prefetch = 0 : i64, scratch_operands = 1 : i64, tpu.core_type = #tpu.core_type<tc>, window_params = [{transform_indices = @transform_0, window_bounds = array<i64: 8, 384>}, {transform_indices = @transform_1, window_bounds = array<i64: 384, 128>}, {transform_indices = @transform_2, window_bounds = array<i64: 1, 128>}, {transform_indices = @transform_3, window_bounds = array<i64: 8, 128>}]} {
    %c0_i32 = arith.constant 0 : i32
    %0 = arith.cmpi eq, %arg2, %c0_i32 : i32
    %1 = arith.extui %0 : i1 to i32
    %c0_i32_0 = arith.constant 0 : i32
    %2 = arith.cmpi ne, %1, %c0_i32_0 : i32
    scf.if %2 {
      %cst_10 = arith.constant 0.000000e+00 : f32
      %12 = vector.broadcast %cst_10 : f32 to vector<8x128xf32>
      %c0_11 = arith.constant 0 : index
      %c0_12 = arith.constant 0 : index
      %13 = vector.load %arg7[%c0_11, %c0_12] : memref<8x128xf32, #tpu.memory_space<vmem>>, vector<8x128xf32>
      tpu.vector_store %arg7[%c0_11, %c0_12], %12 {strides = array<i32>} : memref<8x128xf32, #tpu.memory_space<vmem>>, vector<8x128xf32>,
    } else {
    }
    %c0 = arith.constant 0 : index
    %c0_1 = arith.constant 0 : index
    %3 = vector.load %arg7[%c0, %c0_1] : memref<8x128xf32, #tpu.memory_space<vmem>>, vector<8x128xf32>
    %c0_2 = arith.constant 0 : index
    %c0_3 = arith.constant 0 : index
    %4 = vector.load %arg3[%c0_2, %c0_3] : memref<8x384xbf16, #tpu.memory_space<vmem>>, vector<8x384xbf16>
    %c0_4 = arith.constant 0 : index
    %c0_5 = arith.constant 0 : index
    %5 = vector.load %arg4[%c0_4, %c0_5] : memref<384x128xbf16, #tpu.memory_space<vmem>>, vector<384x128xbf16>
    %cst = arith.constant dense<0.000000e+00> : vector<8x128xf32>
    %6 = tpu.matmul %4, %5, %cst {dimension_numbers = #tpu.dot_dimension_numbers<[1], [0], [0], [1], [0, 0, 1, 1], [], []>} : vector<8x384xbf16>, vector<384x128xbf16>, vector<8x128xf32> -> vector<8x128xf32>
    %7 = arith.addf %3, %6 : vector<8x128xf32>
    %c0_6 = arith.constant 0 : index
    %c0_7 = arith.constant 0 : index
    %8 = vector.load %arg7[%c0_6, %c0_7] : memref<8x128xf32, #tpu.memory_space<vmem>>, vector<8x128xf32>
    tpu.vector_store %arg7[%c0_6, %c0_7], %7 {strides = array<i32>} : memref<8x128xf32, #tpu.memory_space<vmem>>, vector<8x128xf32>,
    %c0_i32_8 = arith.constant 0 : i32
    %9 = arith.cmpi eq, %arg2, %c0_i32_8 : i32
    %10 = arith.extui %9 : i1 to i32
    %c0_i32_9 = arith.constant 0 : i32
    %11 = arith.cmpi ne, %10, %c0_i32_9 : i32
    scf.if %11 {
      %c0_10 = arith.constant 0 : index
      %c0_11 = arith.constant 0 : index
      %12 = vector.load %arg7[%c0_10, %c0_11] : memref<8x128xf32, #tpu.memory_space<vmem>>, vector<8x128xf32>
      %c0_12 = arith.constant 0 : index
      %c0_13 = arith.constant 0 : index
      %13 = vector.load %arg5[%c0_12, %c0_13] : memref<1x128xf32, #tpu.memory_space<vmem>>, vector<1x128xf32>
      %14 = vector.broadcast %13 : vector<1x128xf32> to vector<8x128xf32>
      %15 = arith.addf %12, %14 : vector<8x128xf32>
      %cst_14 = arith.constant 0.000000e+00 : f32
      %16 = vector.broadcast %cst_14 : f32 to vector<8x128xf32>
      %17 = arith.maximumf %15, %16 : vector<8x128xf32>
      %18 = arith.truncf %17 : vector<8x128xf32> to vector<8x128xbf16>
      %c0_15 = arith.constant 0 : index
      %c0_16 = arith.constant 0 : index
      %19 = vector.load %arg6[%c0_15, %c0_16] : memref<8x128xbf16, #tpu.memory_space<vmem>>, vector<8x128xbf16>
      tpu.vector_store %arg6[%c0_15, %c0_16], %18 {strides = array<i32>} : memref<8x128xbf16, #tpu.memory_space<vmem>>, vector<8x128xbf16>,
    } else {
    }
    return
  }
  func.func @transform_0(%arg0: i32, %arg1: i32, %arg2: i32) -> (i32, i32) {
    %c0_i32 = arith.constant 0 : i32
    return %arg0, %arg2 : i32, i32
  }
  func.func @transform_1(%arg0: i32, %arg1: i32, %arg2: i32) -> (i32, i32) {
    %c0_i32 = arith.constant 0 : i32
    return %arg2, %arg1 : i32, i32
  }
  func.func @transform_2(%arg0: i32, %arg1: i32, %arg2: i32) -> (i32, i32) {
    %c0_i32 = arith.constant 0 : i32
    %c0_i32_0 = arith.constant 0 : i32
    return %c0_i32, %arg1 : i32, i32
  }
  func.func @transform_3(%arg0: i32, %arg1: i32, %arg2: i32) -> (i32, i32) {
    %c0_i32 = arith.constant 0 : i32
    return %arg0, %arg1 : i32, i32
  }
}

module attributes {stable_mosaic.version = 11 : i64} {
  func.func @_gemm_kernel(%arg0: i32, %arg1: i32, %arg2: i32, %arg3: memref<8x512xbf16, #tpu.memory_space<vmem>>, %arg4: memref<512x128xbf16, #tpu.memory_space<vmem>>, %arg5: memref<1x128xf32, #tpu.memory_space<vmem>>, %arg6: memref<8x128xbf16, #tpu.memory_space<vmem>>, %arg7: memref<8x128xf32, #tpu.memory_space<vmem>>) attributes {dimension_semantics = [#tpu.dimension_semantics<parallel>, #tpu.dimension_semantics<parallel>, #tpu.dimension_semantics<arbitrary>], iteration_bounds = array<i64: 1, 1, 2>, scalar_prefetch = 0 : i64, scratch_operands = 1 : i64, tpu.core_type = #tpu.core_type<tc>, window_params = [{transform_indices = @transform_0, window_bounds = array<i64: 8, 512>}, {transform_indices = @transform_1, window_bounds = array<i64: 512, 128>}, {transform_indices = @transform_2, window_bounds = array<i64: 1, 128>}, {transform_indices = @transform_3, window_bounds = array<i64: 8, 128>}]} {
    %c0_i32 = arith.constant 0 : i32
    %0 = arith.cmpi eq, %arg2, %c0_i32 : i32
    %1 = arith.extui %0 : i1 to i32
    %c0_i32_0 = arith.constant 0 : i32
    %2 = arith.cmpi ne, %1, %c0_i32_0 : i32
    scf.if %2 {
      %cst_9 = arith.constant 0.000000e+00 : f32
      %12 = vector.broadcast %cst_9 : f32 to vector<8x128xf32>
      %c0_10 = arith.constant 0 : index
      %c0_11 = arith.constant 0 : index
      %13 = vector.load %arg7[%c0_10, %c0_11] : memref<8x128xf32, #tpu.memory_space<vmem>>, vector<8x128xf32>
      tpu.vector_store %arg7[%c0_10, %c0_11], %12 {strides = array<i32>} : memref<8x128xf32, #tpu.memory_space<vmem>>, vector<8x128xf32>,
    } else {
    }
    %c0 = arith.constant 0 : index
    %c0_1 = arith.constant 0 : index
    %3 = vector.load %arg7[%c0, %c0_1] : memref<8x128xf32, #tpu.memory_space<vmem>>, vector<8x128xf32>
    %c0_2 = arith.constant 0 : index
    %c0_3 = arith.constant 0 : index
    %4 = vector.load %arg3[%c0_2, %c0_3] : memref<8x512xbf16, #tpu.memory_space<vmem>>, vector<8x512xbf16>
    %c0_4 = arith.constant 0 : index
    %c0_5 = arith.constant 0 : index
    %5 = vector.load %arg4[%c0_4, %c0_5] : memref<512x128xbf16, #tpu.memory_space<vmem>>, vector<512x128xbf16>
    %cst = arith.constant dense<0.000000e+00> : vector<8x128xf32>
    %6 = tpu.matmul %4, %5, %cst {dimension_numbers = #tpu.dot_dimension_numbers<[1], [0], [0], [1], [0, 0, 1, 1], [], []>} : vector<8x512xbf16>, vector<512x128xbf16>, vector<8x128xf32> -> vector<8x128xf32>
    %7 = arith.addf %3, %6 : vector<8x128xf32>
    %c0_6 = arith.constant 0 : index
    %c0_7 = arith.constant 0 : index
    %8 = vector.load %arg7[%c0_6, %c0_7] : memref<8x128xf32, #tpu.memory_space<vmem>>, vector<8x128xf32>
    tpu.vector_store %arg7[%c0_6, %c0_7], %7 {strides = array<i32>} : memref<8x128xf32, #tpu.memory_space<vmem>>, vector<8x128xf32>,
    %c1_i32 = arith.constant 1 : i32
    %9 = arith.cmpi eq, %arg2, %c1_i32 : i32
    %10 = arith.extui %9 : i1 to i32
    %c0_i32_8 = arith.constant 0 : i32
    %11 = arith.cmpi ne, %10, %c0_i32_8 : i32
    scf.if %11 {
      %c0_9 = arith.constant 0 : index
      %c0_10 = arith.constant 0 : index
      %12 = vector.load %arg7[%c0_9, %c0_10] : memref<8x128xf32, #tpu.memory_space<vmem>>, vector<8x128xf32>
      %c0_11 = arith.constant 0 : index
      %c0_12 = arith.constant 0 : index
      %13 = vector.load %arg5[%c0_11, %c0_12] : memref<1x128xf32, #tpu.memory_space<vmem>>, vector<1x128xf32>
      %14 = vector.broadcast %13 : vector<1x128xf32> to vector<8x128xf32>
      %15 = arith.addf %12, %14 : vector<8x128xf32>
      %cst_13 = arith.constant 0.000000e+00 : f32
      %16 = vector.broadcast %cst_13 : f32 to vector<8x128xf32>
      %17 = arith.maximumf %15, %16 : vector<8x128xf32>
      %18 = arith.truncf %17 : vector<8x128xf32> to vector<8x128xbf16>
      %c0_14 = arith.constant 0 : index
      %c0_15 = arith.constant 0 : index
      %19 = vector.load %arg6[%c0_14, %c0_15] : memref<8x128xbf16, #tpu.memory_space<vmem>>, vector<8x128xbf16>
      tpu.vector_store %arg6[%c0_14, %c0_15], %18 {strides = array<i32>} : memref<8x128xbf16, #tpu.memory_space<vmem>>, vector<8x128xbf16>,
    } else {
    }
    return
  }
  func.func @transform_0(%arg0: i32, %arg1: i32, %arg2: i32) -> (i32, i32) {
    %c0_i32 = arith.constant 0 : i32
    return %arg0, %arg2 : i32, i32
  }
  func.func @transform_1(%arg0: i32, %arg1: i32, %arg2: i32) -> (i32, i32) {
    %c0_i32 = arith.constant 0 : i32
    return %arg2, %arg1 : i32, i32
  }
  func.func @transform_2(%arg0: i32, %arg1: i32, %arg2: i32) -> (i32, i32) {
    %c0_i32 = arith.constant 0 : i32
    %c0_i32_0 = arith.constant 0 : i32
    return %c0_i32, %arg1 : i32, i32
  }
  func.func @transform_3(%arg0: i32, %arg1: i32, %arg2: i32) -> (i32, i32) {
    %c0_i32 = arith.constant 0 : i32
    return %arg0, %arg1 : i32, i32
  }
}

module attributes {stable_mosaic.version = 11 : i64} {
  func.func @_gemm_kernel(%arg0: i32, %arg1: i32, %arg2: i32, %arg3: memref<8x128xbf16, #tpu.memory_space<vmem>>, %arg4: memref<128x128xbf16, #tpu.memory_space<vmem>>, %arg5: memref<1x128xf32, #tpu.memory_space<vmem>>, %arg6: memref<8x128xbf16, #tpu.memory_space<vmem>>, %arg7: memref<8x128xf32, #tpu.memory_space<vmem>>) attributes {dimension_semantics = [#tpu.dimension_semantics<parallel>, #tpu.dimension_semantics<parallel>, #tpu.dimension_semantics<arbitrary>], iteration_bounds = array<i64: 1, 1, 1>, scalar_prefetch = 0 : i64, scratch_operands = 1 : i64, tpu.core_type = #tpu.core_type<tc>, window_params = [{transform_indices = @transform_0, window_bounds = array<i64: 8, 128>}, {transform_indices = @transform_1, window_bounds = array<i64: 128, 128>}, {transform_indices = @transform_2, window_bounds = array<i64: 1, 128>}, {transform_indices = @transform_3, window_bounds = array<i64: 8, 128>}]} {
    %c0_i32 = arith.constant 0 : i32
    %0 = arith.cmpi eq, %arg2, %c0_i32 : i32
    %1 = arith.extui %0 : i1 to i32
    %c0_i32_0 = arith.constant 0 : i32
    %2 = arith.cmpi ne, %1, %c0_i32_0 : i32
    scf.if %2 {
      %cst_10 = arith.constant 0.000000e+00 : f32
      %12 = vector.broadcast %cst_10 : f32 to vector<8x128xf32>
      %c0_11 = arith.constant 0 : index
      %c0_12 = arith.constant 0 : index
      %13 = vector.load %arg7[%c0_11, %c0_12] : memref<8x128xf32, #tpu.memory_space<vmem>>, vector<8x128xf32>
      tpu.vector_store %arg7[%c0_11, %c0_12], %12 {strides = array<i32>} : memref<8x128xf32, #tpu.memory_space<vmem>>, vector<8x128xf32>,
    } else {
    }
    %c0 = arith.constant 0 : index
    %c0_1 = arith.constant 0 : index
    %3 = vector.load %arg7[%c0, %c0_1] : memref<8x128xf32, #tpu.memory_space<vmem>>, vector<8x128xf32>
    %c0_2 = arith.constant 0 : index
    %c0_3 = arith.constant 0 : index
    %4 = vector.load %arg3[%c0_2, %c0_3] : memref<8x128xbf16, #tpu.memory_space<vmem>>, vector<8x128xbf16>
    %c0_4 = arith.constant 0 : index
    %c0_5 = arith.constant 0 : index
    %5 = vector.load %arg4[%c0_4, %c0_5] : memref<128x128xbf16, #tpu.memory_space<vmem>>, vector<128x128xbf16>
    %cst = arith.constant dense<0.000000e+00> : vector<8x128xf32>
    %6 = tpu.matmul %4, %5, %cst {dimension_numbers = #tpu.dot_dimension_numbers<[1], [0], [0], [1], [0, 0, 1, 1], [], []>} : vector<8x128xbf16>, vector<128x128xbf16>, vector<8x128xf32> -> vector<8x128xf32>
    %7 = arith.addf %3, %6 : vector<8x128xf32>
    %c0_6 = arith.constant 0 : index
    %c0_7 = arith.constant 0 : index
    %8 = vector.load %arg7[%c0_6, %c0_7] : memref<8x128xf32, #tpu.memory_space<vmem>>, vector<8x128xf32>
    tpu.vector_store %arg7[%c0_6, %c0_7], %7 {strides = array<i32>} : memref<8x128xf32, #tpu.memory_space<vmem>>, vector<8x128xf32>,
    %c0_i32_8 = arith.constant 0 : i32
    %9 = arith.cmpi eq, %arg2, %c0_i32_8 : i32
    %10 = arith.extui %9 : i1 to i32
    %c0_i32_9 = arith.constant 0 : i32
    %11 = arith.cmpi ne, %10, %c0_i32_9 : i32
    scf.if %11 {
      %c0_10 = arith.constant 0 : index
      %c0_11 = arith.constant 0 : index
      %12 = vector.load %arg7[%c0_10, %c0_11] : memref<8x128xf32, #tpu.memory_space<vmem>>, vector<8x128xf32>
      %c0_12 = arith.constant 0 : index
      %c0_13 = arith.constant 0 : index
      %13 = vector.load %arg5[%c0_12, %c0_13] : memref<1x128xf32, #tpu.memory_space<vmem>>, vector<1x128xf32>
      %14 = vector.broadcast %13 : vector<1x128xf32> to vector<8x128xf32>
      %15 = arith.addf %12, %14 : vector<8x128xf32>
      %16 = arith.truncf %15 : vector<8x128xf32> to vector<8x128xbf16>
      %c0_14 = arith.constant 0 : index
      %c0_15 = arith.constant 0 : index
      %17 = vector.load %arg6[%c0_14, %c0_15] : memref<8x128xbf16, #tpu.memory_space<vmem>>, vector<8x128xbf16>
      tpu.vector_store %arg6[%c0_14, %c0_15], %16 {strides = array<i32>} : memref<8x128xbf16, #tpu.memory_space<vmem>>, vector<8x128xbf16>,
    } else {
    }
    return
  }
  func.func @transform_0(%arg0: i32, %arg1: i32, %arg2: i32) -> (i32, i32) {
    %c0_i32 = arith.constant 0 : i32
    return %arg0, %arg2 : i32, i32
  }
  func.func @transform_1(%arg0: i32, %arg1: i32, %arg2: i32) -> (i32, i32) {
    %c0_i32 = arith.constant 0 : i32
    return %arg2, %arg1 : i32, i32
  }
  func.func @transform_2(%arg0: i32, %arg1: i32, %arg2: i32) -> (i32, i32) {
    %c0_i32 = arith.constant 0 : i32
    %c0_i32_0 = arith.constant 0 : i32
    return %c0_i32, %arg1 : i32, i32
  }
  func.func @transform_3(%arg0: i32, %arg1: i32, %arg2: i32) -> (i32, i32) {
    %c0_i32 = arith.constant 0 : i32
    return %arg0, %arg1 : i32, i32
  }
}

module attributes {stable_mosaic.version = 11 : i64} {
  func.func @_mix_kernel(%arg0: i32, %arg1: i32, %arg2: i32, %arg3: memref<8x1xf32, #tpu.memory_space<vmem>>, %arg4: memref<1x1x128xbf16, #tpu.memory_space<vmem>>, %arg5: memref<1x8x128xbf16, #tpu.memory_space<vmem>>) attributes {dimension_semantics = [#tpu.dimension_semantics<parallel>, #tpu.dimension_semantics<parallel>, #tpu.dimension_semantics<parallel>], iteration_bounds = array<i64: 2, 1, 1>, scalar_prefetch = 0 : i64, scratch_operands = 0 : i64, tpu.core_type = #tpu.core_type<tc>, window_params = [{transform_indices = @transform_0, window_bounds = array<i64: 8, 1>}, {transform_indices = @transform_1, window_bounds = array<i64: 1, 1, 128>}, {transform_indices = @transform_2, window_bounds = array<i64: 1, 8, 128>}]} {
    %c0 = arith.constant 0 : index
    %c0_0 = arith.constant 0 : index
    %0 = vector.load %arg3[%c0, %c0_0] : memref<8x1xf32, #tpu.memory_space<vmem>>, vector<8x1xf32>
    %c0_1 = arith.constant 0 : index
    %c0_2 = arith.constant 0 : index
    %c0_3 = arith.constant 0 : index
    %1 = vector.load %arg4[%c0_1, %c0_2, %c0_3] : memref<1x1x128xbf16, #tpu.memory_space<vmem>>, vector<1x1x128xbf16>
    %2 = vector.shape_cast %1 : vector<1x1x128xbf16> to vector<1x128xbf16>
    %3 = arith.extf %2 : vector<1x128xbf16> to vector<1x128xf32>
    %cst = arith.constant dense<0.000000e+00> : vector<8x128xf32>
    %4 = tpu.matmul %0, %3, %cst {dimension_numbers = #tpu.dot_dimension_numbers<[1], [0], [0], [1], [0, 0, 1, 1], [], []>} : vector<8x1xf32>, vector<1x128xf32>, vector<8x128xf32> -> vector<8x128xf32>
    %5 = arith.truncf %4 : vector<8x128xf32> to vector<8x128xbf16>
    %c0_4 = arith.constant 0 : index
    %c0_5 = arith.constant 0 : index
    %c0_6 = arith.constant 0 : index
    %6 = vector.load %arg5[%c0_4, %c0_5, %c0_6] : memref<1x8x128xbf16, #tpu.memory_space<vmem>>, vector<1x8x128xbf16>
    %7 = vector.shape_cast %6 : vector<1x8x128xbf16> to vector<8x128xbf16>
    %8 = vector.shape_cast %5 : vector<8x128xbf16> to vector<1x8x128xbf16>
    tpu.vector_store %arg5[%c0_4, %c0_5, %c0_6], %8 {strides = array<i32>} : memref<1x8x128xbf16, #tpu.memory_space<vmem>>, vector<1x8x128xbf16>,
    return
  }
  func.func @transform_0(%arg0: i32, %arg1: i32, %arg2: i32) -> (i32, i32) {
    %c0_i32 = arith.constant 0 : i32
    %c0_i32_0 = arith.constant 0 : i32
    return %arg1, %c0_i32 : i32, i32
  }
  func.func @transform_1(%arg0: i32, %arg1: i32, %arg2: i32) -> (i32, i32, i32) {
    %c0_i32 = arith.constant 0 : i32
    %c0_i32_0 = arith.constant 0 : i32
    return %arg0, %c0_i32, %arg2 : i32, i32, i32
  }
  func.func @transform_2(%arg0: i32, %arg1: i32, %arg2: i32) -> (i32, i32, i32) {
    %c0_i32 = arith.constant 0 : i32
    return %arg0, %arg1, %arg2 : i32, i32, i32
  }
}

module attributes {stable_mosaic.version = 11 : i64} {
  func.func @_mix_kernel(%arg0: i32, %arg1: i32, %arg2: i32, %arg3: memref<8x1xf32, #tpu.memory_space<vmem>>, %arg4: memref<1x1x128xbf16, #tpu.memory_space<vmem>>, %arg5: memref<1x8x128xbf16, #tpu.memory_space<vmem>>) attributes {dimension_semantics = [#tpu.dimension_semantics<parallel>, #tpu.dimension_semantics<parallel>, #tpu.dimension_semantics<parallel>], iteration_bounds = array<i64: 4, 1, 1>, scalar_prefetch = 0 : i64, scratch_operands = 0 : i64, tpu.core_type = #tpu.core_type<tc>, window_params = [{transform_indices = @transform_0, window_bounds = array<i64: 8, 1>}, {transform_indices = @transform_1, window_bounds = array<i64: 1, 1, 128>}, {transform_indices = @transform_2, window_bounds = array<i64: 1, 8, 128>}]} {
    %c0 = arith.constant 0 : index
    %c0_0 = arith.constant 0 : index
    %0 = vector.load %arg3[%c0, %c0_0] : memref<8x1xf32, #tpu.memory_space<vmem>>, vector<8x1xf32>
    %c0_1 = arith.constant 0 : index
    %c0_2 = arith.constant 0 : index
    %c0_3 = arith.constant 0 : index
    %1 = vector.load %arg4[%c0_1, %c0_2, %c0_3] : memref<1x1x128xbf16, #tpu.memory_space<vmem>>, vector<1x1x128xbf16>
    %2 = vector.shape_cast %1 : vector<1x1x128xbf16> to vector<1x128xbf16>
    %3 = arith.extf %2 : vector<1x128xbf16> to vector<1x128xf32>
    %cst = arith.constant dense<0.000000e+00> : vector<8x128xf32>
    %4 = tpu.matmul %0, %3, %cst {dimension_numbers = #tpu.dot_dimension_numbers<[1], [0], [0], [1], [0, 0, 1, 1], [], []>} : vector<8x1xf32>, vector<1x128xf32>, vector<8x128xf32> -> vector<8x128xf32>
    %5 = arith.truncf %4 : vector<8x128xf32> to vector<8x128xbf16>
    %c0_4 = arith.constant 0 : index
    %c0_5 = arith.constant 0 : index
    %c0_6 = arith.constant 0 : index
    %6 = vector.load %arg5[%c0_4, %c0_5, %c0_6] : memref<1x8x128xbf16, #tpu.memory_space<vmem>>, vector<1x8x128xbf16>
    %7 = vector.shape_cast %6 : vector<1x8x128xbf16> to vector<8x128xbf16>
    %8 = vector.shape_cast %5 : vector<8x128xbf16> to vector<1x8x128xbf16>
    tpu.vector_store %arg5[%c0_4, %c0_5, %c0_6], %8 {strides = array<i32>} : memref<1x8x128xbf16, #tpu.memory_space<vmem>>, vector<1x8x128xbf16>,
    return
  }
  func.func @transform_0(%arg0: i32, %arg1: i32, %arg2: i32) -> (i32, i32) {
    %c0_i32 = arith.constant 0 : i32
    %c0_i32_0 = arith.constant 0 : i32
    return %arg1, %c0_i32 : i32, i32
  }
  func.func @transform_1(%arg0: i32, %arg1: i32, %arg2: i32) -> (i32, i32, i32) {
    %c0_i32 = arith.constant 0 : i32
    %c0_i32_0 = arith.constant 0 : i32
    return %arg0, %c0_i32, %arg2 : i32, i32, i32
  }
  func.func @transform_2(%arg0: i32, %arg1: i32, %arg2: i32) -> (i32, i32, i32) {
    %c0_i32 = arith.constant 0 : i32
    return %arg0, %arg1, %arg2 : i32, i32, i32
  }
}

module attributes {stable_mosaic.version = 11 : i64} {
  func.func @_mix_kernel(%arg0: i32, %arg1: i32, %arg2: i32, %arg3: memref<8x2xf32, #tpu.memory_space<vmem>>, %arg4: memref<1x2x128xbf16, #tpu.memory_space<vmem>>, %arg5: memref<1x8x128xbf16, #tpu.memory_space<vmem>>) attributes {dimension_semantics = [#tpu.dimension_semantics<parallel>, #tpu.dimension_semantics<parallel>, #tpu.dimension_semantics<parallel>], iteration_bounds = array<i64: 2, 1, 1>, scalar_prefetch = 0 : i64, scratch_operands = 0 : i64, tpu.core_type = #tpu.core_type<tc>, window_params = [{transform_indices = @transform_0, window_bounds = array<i64: 8, 2>}, {transform_indices = @transform_1, window_bounds = array<i64: 1, 2, 128>}, {transform_indices = @transform_2, window_bounds = array<i64: 1, 8, 128>}]} {
    %c0 = arith.constant 0 : index
    %c0_0 = arith.constant 0 : index
    %0 = vector.load %arg3[%c0, %c0_0] : memref<8x2xf32, #tpu.memory_space<vmem>>, vector<8x2xf32>
    %c0_1 = arith.constant 0 : index
    %c0_2 = arith.constant 0 : index
    %c0_3 = arith.constant 0 : index
    %1 = vector.load %arg4[%c0_1, %c0_2, %c0_3] : memref<1x2x128xbf16, #tpu.memory_space<vmem>>, vector<1x2x128xbf16>
    %2 = vector.shape_cast %1 : vector<1x2x128xbf16> to vector<2x128xbf16>
    %3 = arith.extf %2 : vector<2x128xbf16> to vector<2x128xf32>
    %cst = arith.constant dense<0.000000e+00> : vector<8x128xf32>
    %4 = tpu.matmul %0, %3, %cst {dimension_numbers = #tpu.dot_dimension_numbers<[1], [0], [0], [1], [0, 0, 1, 1], [], []>} : vector<8x2xf32>, vector<2x128xf32>, vector<8x128xf32> -> vector<8x128xf32>
    %5 = arith.truncf %4 : vector<8x128xf32> to vector<8x128xbf16>
    %c0_4 = arith.constant 0 : index
    %c0_5 = arith.constant 0 : index
    %c0_6 = arith.constant 0 : index
    %6 = vector.load %arg5[%c0_4, %c0_5, %c0_6] : memref<1x8x128xbf16, #tpu.memory_space<vmem>>, vector<1x8x128xbf16>
    %7 = vector.shape_cast %6 : vector<1x8x128xbf16> to vector<8x128xbf16>
    %8 = vector.shape_cast %5 : vector<8x128xbf16> to vector<1x8x128xbf16>
    tpu.vector_store %arg5[%c0_4, %c0_5, %c0_6], %8 {strides = array<i32>} : memref<1x8x128xbf16, #tpu.memory_space<vmem>>, vector<1x8x128xbf16>,
    return
  }
  func.func @transform_0(%arg0: i32, %arg1: i32, %arg2: i32) -> (i32, i32) {
    %c0_i32 = arith.constant 0 : i32
    %c0_i32_0 = arith.constant 0 : i32
    return %arg1, %c0_i32 : i32, i32
  }
  func.func @transform_1(%arg0: i32, %arg1: i32, %arg2: i32) -> (i32, i32, i32) {
    %c0_i32 = arith.constant 0 : i32
    %c0_i32_0 = arith.constant 0 : i32
    return %arg0, %c0_i32, %arg2 : i32, i32, i32
  }
  func.func @transform_2(%arg0: i32, %arg1: i32, %arg2: i32) -> (i32, i32, i32) {
    %c0_i32 = arith.constant 0 : i32
    return %arg0, %arg1, %arg2 : i32, i32, i32
  }
}

module attributes {stable_mosaic.version = 11 : i64} {
  func.func @_gemm_kernel(%arg0: i32, %arg1: i32, %arg2: i32, %arg3: memref<8x128xbf16, #tpu.memory_space<vmem>>, %arg4: memref<128x128xbf16, #tpu.memory_space<vmem>>, %arg5: memref<1x128xf32, #tpu.memory_space<vmem>>, %arg6: memref<8x128xbf16, #tpu.memory_space<vmem>>, %arg7: memref<8x128xbf16, #tpu.memory_space<vmem>>, %arg8: memref<8x128xf32, #tpu.memory_space<vmem>>) attributes {dimension_semantics = [#tpu.dimension_semantics<parallel>, #tpu.dimension_semantics<parallel>, #tpu.dimension_semantics<arbitrary>], iteration_bounds = array<i64: 1, 1, 1>, scalar_prefetch = 0 : i64, scratch_operands = 1 : i64, tpu.core_type = #tpu.core_type<tc>, window_params = [{transform_indices = @transform_0, window_bounds = array<i64: 8, 128>}, {transform_indices = @transform_1, window_bounds = array<i64: 128, 128>}, {transform_indices = @transform_2, window_bounds = array<i64: 1, 128>}, {transform_indices = @transform_3, window_bounds = array<i64: 8, 128>}, {transform_indices = @transform_4, window_bounds = array<i64: 8, 128>}]} {
    %c0_i32 = arith.constant 0 : i32
    %0 = arith.cmpi eq, %arg2, %c0_i32 : i32
    %1 = arith.extui %0 : i1 to i32
    %c0_i32_0 = arith.constant 0 : i32
    %2 = arith.cmpi ne, %1, %c0_i32_0 : i32
    scf.if %2 {
      %cst_10 = arith.constant 0.000000e+00 : f32
      %12 = vector.broadcast %cst_10 : f32 to vector<8x128xf32>
      %c0_11 = arith.constant 0 : index
      %c0_12 = arith.constant 0 : index
      %13 = vector.load %arg8[%c0_11, %c0_12] : memref<8x128xf32, #tpu.memory_space<vmem>>, vector<8x128xf32>
      tpu.vector_store %arg8[%c0_11, %c0_12], %12 {strides = array<i32>} : memref<8x128xf32, #tpu.memory_space<vmem>>, vector<8x128xf32>,
    } else {
    }
    %c0 = arith.constant 0 : index
    %c0_1 = arith.constant 0 : index
    %3 = vector.load %arg8[%c0, %c0_1] : memref<8x128xf32, #tpu.memory_space<vmem>>, vector<8x128xf32>
    %c0_2 = arith.constant 0 : index
    %c0_3 = arith.constant 0 : index
    %4 = vector.load %arg3[%c0_2, %c0_3] : memref<8x128xbf16, #tpu.memory_space<vmem>>, vector<8x128xbf16>
    %c0_4 = arith.constant 0 : index
    %c0_5 = arith.constant 0 : index
    %5 = vector.load %arg4[%c0_4, %c0_5] : memref<128x128xbf16, #tpu.memory_space<vmem>>, vector<128x128xbf16>
    %cst = arith.constant dense<0.000000e+00> : vector<8x128xf32>
    %6 = tpu.matmul %4, %5, %cst {dimension_numbers = #tpu.dot_dimension_numbers<[1], [0], [0], [1], [0, 0, 1, 1], [], []>} : vector<8x128xbf16>, vector<128x128xbf16>, vector<8x128xf32> -> vector<8x128xf32>
    %7 = arith.addf %3, %6 : vector<8x128xf32>
    %c0_6 = arith.constant 0 : index
    %c0_7 = arith.constant 0 : index
    %8 = vector.load %arg8[%c0_6, %c0_7] : memref<8x128xf32, #tpu.memory_space<vmem>>, vector<8x128xf32>
    tpu.vector_store %arg8[%c0_6, %c0_7], %7 {strides = array<i32>} : memref<8x128xf32, #tpu.memory_space<vmem>>, vector<8x128xf32>,
    %c0_i32_8 = arith.constant 0 : i32
    %9 = arith.cmpi eq, %arg2, %c0_i32_8 : i32
    %10 = arith.extui %9 : i1 to i32
    %c0_i32_9 = arith.constant 0 : i32
    %11 = arith.cmpi ne, %10, %c0_i32_9 : i32
    scf.if %11 {
      %c0_10 = arith.constant 0 : index
      %c0_11 = arith.constant 0 : index
      %12 = vector.load %arg8[%c0_10, %c0_11] : memref<8x128xf32, #tpu.memory_space<vmem>>, vector<8x128xf32>
      %c0_12 = arith.constant 0 : index
      %c0_13 = arith.constant 0 : index
      %13 = vector.load %arg5[%c0_12, %c0_13] : memref<1x128xf32, #tpu.memory_space<vmem>>, vector<1x128xf32>
      %14 = vector.broadcast %13 : vector<1x128xf32> to vector<8x128xf32>
      %15 = arith.addf %12, %14 : vector<8x128xf32>
      %c0_14 = arith.constant 0 : index
      %c0_15 = arith.constant 0 : index
      %16 = vector.load %arg6[%c0_14, %c0_15] : memref<8x128xbf16, #tpu.memory_space<vmem>>, vector<8x128xbf16>
      %17 = arith.extf %16 : vector<8x128xbf16> to vector<8x128xf32>
      %18 = arith.addf %15, %17 : vector<8x128xf32>
      %19 = arith.truncf %18 : vector<8x128xf32> to vector<8x128xbf16>
      %c0_16 = arith.constant 0 : index
      %c0_17 = arith.constant 0 : index
      %20 = vector.load %arg7[%c0_16, %c0_17] : memref<8x128xbf16, #tpu.memory_space<vmem>>, vector<8x128xbf16>
      tpu.vector_store %arg7[%c0_16, %c0_17], %19 {strides = array<i32>} : memref<8x128xbf16, #tpu.memory_space<vmem>>, vector<8x128xbf16>,
    } else {
    }
    return
  }
  func.func @transform_0(%arg0: i32, %arg1: i32, %arg2: i32) -> (i32, i32) {
    %c0_i32 = arith.constant 0 : i32
    return %arg0, %arg2 : i32, i32
  }
  func.func @transform_1(%arg0: i32, %arg1: i32, %arg2: i32) -> (i32, i32) {
    %c0_i32 = arith.constant 0 : i32
    return %arg2, %arg1 : i32, i32
  }
  func.func @transform_2(%arg0: i32, %arg1: i32, %arg2: i32) -> (i32, i32) {
    %c0_i32 = arith.constant 0 : i32
    %c0_i32_0 = arith.constant 0 : i32
    return %c0_i32, %arg1 : i32, i32
  }
  func.func @transform_3(%arg0: i32, %arg1: i32, %arg2: i32) -> (i32, i32) {
    %c0_i32 = arith.constant 0 : i32
    return %arg0, %arg1 : i32, i32
  }
  func.func @transform_4(%arg0: i32, %arg1: i32, %arg2: i32) -> (i32, i32) {
    %c0_i32 = arith.constant 0 : i32
    return %arg0, %arg1 : i32, i32
  }
}

module attributes {stable_mosaic.version = 11 : i64} {
  func.func @_mix_kernel(%arg0: i32, %arg1: i32, %arg2: i32, %arg3: memref<8x2xf32, #tpu.memory_space<vmem>>, %arg4: memref<1x2x128xbf16, #tpu.memory_space<vmem>>, %arg5: memref<1x8x128xbf16, #tpu.memory_space<vmem>>) attributes {dimension_semantics = [#tpu.dimension_semantics<parallel>, #tpu.dimension_semantics<parallel>, #tpu.dimension_semantics<parallel>], iteration_bounds = array<i64: 8, 1, 1>, scalar_prefetch = 0 : i64, scratch_operands = 0 : i64, tpu.core_type = #tpu.core_type<tc>, window_params = [{transform_indices = @transform_0, window_bounds = array<i64: 8, 2>}, {transform_indices = @transform_1, window_bounds = array<i64: 1, 2, 128>}, {transform_indices = @transform_2, window_bounds = array<i64: 1, 8, 128>}]} {
    %c0 = arith.constant 0 : index
    %c0_0 = arith.constant 0 : index
    %0 = vector.load %arg3[%c0, %c0_0] : memref<8x2xf32, #tpu.memory_space<vmem>>, vector<8x2xf32>
    %c0_1 = arith.constant 0 : index
    %c0_2 = arith.constant 0 : index
    %c0_3 = arith.constant 0 : index
    %1 = vector.load %arg4[%c0_1, %c0_2, %c0_3] : memref<1x2x128xbf16, #tpu.memory_space<vmem>>, vector<1x2x128xbf16>
    %2 = vector.shape_cast %1 : vector<1x2x128xbf16> to vector<2x128xbf16>
    %3 = arith.extf %2 : vector<2x128xbf16> to vector<2x128xf32>
    %cst = arith.constant dense<0.000000e+00> : vector<8x128xf32>
    %4 = tpu.matmul %0, %3, %cst {dimension_numbers = #tpu.dot_dimension_numbers<[1], [0], [0], [1], [0, 0, 1, 1], [], []>} : vector<8x2xf32>, vector<2x128xf32>, vector<8x128xf32> -> vector<8x128xf32>
    %5 = arith.truncf %4 : vector<8x128xf32> to vector<8x128xbf16>
    %c0_4 = arith.constant 0 : index
    %c0_5 = arith.constant 0 : index
    %c0_6 = arith.constant 0 : index
    %6 = vector.load %arg5[%c0_4, %c0_5, %c0_6] : memref<1x8x128xbf16, #tpu.memory_space<vmem>>, vector<1x8x128xbf16>
    %7 = vector.shape_cast %6 : vector<1x8x128xbf16> to vector<8x128xbf16>
    %8 = vector.shape_cast %5 : vector<8x128xbf16> to vector<1x8x128xbf16>
    tpu.vector_store %arg5[%c0_4, %c0_5, %c0_6], %8 {strides = array<i32>} : memref<1x8x128xbf16, #tpu.memory_space<vmem>>, vector<1x8x128xbf16>,
    return
  }
  func.func @transform_0(%arg0: i32, %arg1: i32, %arg2: i32) -> (i32, i32) {
    %c0_i32 = arith.constant 0 : i32
    %c0_i32_0 = arith.constant 0 : i32
    return %arg1, %c0_i32 : i32, i32
  }
  func.func @transform_1(%arg0: i32, %arg1: i32, %arg2: i32) -> (i32, i32, i32) {
    %c0_i32 = arith.constant 0 : i32
    %c0_i32_0 = arith.constant 0 : i32
    return %arg0, %c0_i32, %arg2 : i32, i32, i32
  }
  func.func @transform_2(%arg0: i32, %arg1: i32, %arg2: i32) -> (i32, i32, i32) {
    %c0_i32 = arith.constant 0 : i32
    return %arg0, %arg1, %arg2 : i32, i32, i32
  }
}

module attributes {stable_mosaic.version = 11 : i64} {
  func.func @_mix_kernel(%arg0: i32, %arg1: i32, %arg2: i32, %arg3: memref<8x4xf32, #tpu.memory_space<vmem>>, %arg4: memref<1x4x128xbf16, #tpu.memory_space<vmem>>, %arg5: memref<1x8x128xbf16, #tpu.memory_space<vmem>>) attributes {dimension_semantics = [#tpu.dimension_semantics<parallel>, #tpu.dimension_semantics<parallel>, #tpu.dimension_semantics<parallel>], iteration_bounds = array<i64: 2, 1, 1>, scalar_prefetch = 0 : i64, scratch_operands = 0 : i64, tpu.core_type = #tpu.core_type<tc>, window_params = [{transform_indices = @transform_0, window_bounds = array<i64: 8, 4>}, {transform_indices = @transform_1, window_bounds = array<i64: 1, 4, 128>}, {transform_indices = @transform_2, window_bounds = array<i64: 1, 8, 128>}]} {
    %c0 = arith.constant 0 : index
    %c0_0 = arith.constant 0 : index
    %0 = vector.load %arg3[%c0, %c0_0] : memref<8x4xf32, #tpu.memory_space<vmem>>, vector<8x4xf32>
    %c0_1 = arith.constant 0 : index
    %c0_2 = arith.constant 0 : index
    %c0_3 = arith.constant 0 : index
    %1 = vector.load %arg4[%c0_1, %c0_2, %c0_3] : memref<1x4x128xbf16, #tpu.memory_space<vmem>>, vector<1x4x128xbf16>
    %2 = vector.shape_cast %1 : vector<1x4x128xbf16> to vector<4x128xbf16>
    %3 = arith.extf %2 : vector<4x128xbf16> to vector<4x128xf32>
    %cst = arith.constant dense<0.000000e+00> : vector<8x128xf32>
    %4 = tpu.matmul %0, %3, %cst {dimension_numbers = #tpu.dot_dimension_numbers<[1], [0], [0], [1], [0, 0, 1, 1], [], []>} : vector<8x4xf32>, vector<4x128xf32>, vector<8x128xf32> -> vector<8x128xf32>
    %5 = arith.truncf %4 : vector<8x128xf32> to vector<8x128xbf16>
    %c0_4 = arith.constant 0 : index
    %c0_5 = arith.constant 0 : index
    %c0_6 = arith.constant 0 : index
    %6 = vector.load %arg5[%c0_4, %c0_5, %c0_6] : memref<1x8x128xbf16, #tpu.memory_space<vmem>>, vector<1x8x128xbf16>
    %7 = vector.shape_cast %6 : vector<1x8x128xbf16> to vector<8x128xbf16>
    %8 = vector.shape_cast %5 : vector<8x128xbf16> to vector<1x8x128xbf16>
    tpu.vector_store %arg5[%c0_4, %c0_5, %c0_6], %8 {strides = array<i32>} : memref<1x8x128xbf16, #tpu.memory_space<vmem>>, vector<1x8x128xbf16>,
    return
  }
  func.func @transform_0(%arg0: i32, %arg1: i32, %arg2: i32) -> (i32, i32) {
    %c0_i32 = arith.constant 0 : i32
    %c0_i32_0 = arith.constant 0 : i32
    return %arg1, %c0_i32 : i32, i32
  }
  func.func @transform_1(%arg0: i32, %arg1: i32, %arg2: i32) -> (i32, i32, i32) {
    %c0_i32 = arith.constant 0 : i32
    %c0_i32_0 = arith.constant 0 : i32
    return %arg0, %c0_i32, %arg2 : i32, i32, i32
  }
  func.func @transform_2(%arg0: i32, %arg1: i32, %arg2: i32) -> (i32, i32, i32) {
    %c0_i32 = arith.constant 0 : i32
    return %arg0, %arg1, %arg2 : i32, i32, i32
  }
}

module attributes {stable_mosaic.version = 11 : i64} {
  func.func @_gemm_kernel(%arg0: i32, %arg1: i32, %arg2: i32, %arg3: memref<32x128xbf16, #tpu.memory_space<vmem>>, %arg4: memref<128x128xbf16, #tpu.memory_space<vmem>>, %arg5: memref<1x128xf32, #tpu.memory_space<vmem>>, %arg6: memref<32x128xbf16, #tpu.memory_space<vmem>>, %arg7: memref<32x128xbf16, #tpu.memory_space<vmem>>, %arg8: memref<32x128xf32, #tpu.memory_space<vmem>>) attributes {dimension_semantics = [#tpu.dimension_semantics<parallel>, #tpu.dimension_semantics<parallel>, #tpu.dimension_semantics<arbitrary>], iteration_bounds = array<i64: 1, 1, 1>, scalar_prefetch = 0 : i64, scratch_operands = 1 : i64, tpu.core_type = #tpu.core_type<tc>, window_params = [{transform_indices = @transform_0, window_bounds = array<i64: 32, 128>}, {transform_indices = @transform_1, window_bounds = array<i64: 128, 128>}, {transform_indices = @transform_2, window_bounds = array<i64: 1, 128>}, {transform_indices = @transform_3, window_bounds = array<i64: 32, 128>}, {transform_indices = @transform_4, window_bounds = array<i64: 32, 128>}]} {
    %c0_i32 = arith.constant 0 : i32
    %0 = arith.cmpi eq, %arg2, %c0_i32 : i32
    %1 = arith.extui %0 : i1 to i32
    %c0_i32_0 = arith.constant 0 : i32
    %2 = arith.cmpi ne, %1, %c0_i32_0 : i32
    scf.if %2 {
      %cst_10 = arith.constant 0.000000e+00 : f32
      %12 = vector.broadcast %cst_10 : f32 to vector<32x128xf32>
      %c0_11 = arith.constant 0 : index
      %c0_12 = arith.constant 0 : index
      %13 = vector.load %arg8[%c0_11, %c0_12] : memref<32x128xf32, #tpu.memory_space<vmem>>, vector<32x128xf32>
      tpu.vector_store %arg8[%c0_11, %c0_12], %12 {strides = array<i32>} : memref<32x128xf32, #tpu.memory_space<vmem>>, vector<32x128xf32>,
    } else {
    }
    %c0 = arith.constant 0 : index
    %c0_1 = arith.constant 0 : index
    %3 = vector.load %arg8[%c0, %c0_1] : memref<32x128xf32, #tpu.memory_space<vmem>>, vector<32x128xf32>
    %c0_2 = arith.constant 0 : index
    %c0_3 = arith.constant 0 : index
    %4 = vector.load %arg3[%c0_2, %c0_3] : memref<32x128xbf16, #tpu.memory_space<vmem>>, vector<32x128xbf16>
    %c0_4 = arith.constant 0 : index
    %c0_5 = arith.constant 0 : index
    %5 = vector.load %arg4[%c0_4, %c0_5] : memref<128x128xbf16, #tpu.memory_space<vmem>>, vector<128x128xbf16>
    %cst = arith.constant dense<0.000000e+00> : vector<32x128xf32>
    %6 = tpu.matmul %4, %5, %cst {dimension_numbers = #tpu.dot_dimension_numbers<[1], [0], [0], [1], [0, 0, 1, 1], [], []>} : vector<32x128xbf16>, vector<128x128xbf16>, vector<32x128xf32> -> vector<32x128xf32>
    %7 = arith.addf %3, %6 : vector<32x128xf32>
    %c0_6 = arith.constant 0 : index
    %c0_7 = arith.constant 0 : index
    %8 = vector.load %arg8[%c0_6, %c0_7] : memref<32x128xf32, #tpu.memory_space<vmem>>, vector<32x128xf32>
    tpu.vector_store %arg8[%c0_6, %c0_7], %7 {strides = array<i32>} : memref<32x128xf32, #tpu.memory_space<vmem>>, vector<32x128xf32>,
    %c0_i32_8 = arith.constant 0 : i32
    %9 = arith.cmpi eq, %arg2, %c0_i32_8 : i32
    %10 = arith.extui %9 : i1 to i32
    %c0_i32_9 = arith.constant 0 : i32
    %11 = arith.cmpi ne, %10, %c0_i32_9 : i32
    scf.if %11 {
      %c0_10 = arith.constant 0 : index
      %c0_11 = arith.constant 0 : index
      %12 = vector.load %arg8[%c0_10, %c0_11] : memref<32x128xf32, #tpu.memory_space<vmem>>, vector<32x128xf32>
      %c0_12 = arith.constant 0 : index
      %c0_13 = arith.constant 0 : index
      %13 = vector.load %arg5[%c0_12, %c0_13] : memref<1x128xf32, #tpu.memory_space<vmem>>, vector<1x128xf32>
      %14 = vector.broadcast %13 : vector<1x128xf32> to vector<32x128xf32>
      %15 = arith.addf %12, %14 : vector<32x128xf32>
      %c0_14 = arith.constant 0 : index
      %c0_15 = arith.constant 0 : index
      %16 = vector.load %arg6[%c0_14, %c0_15] : memref<32x128xbf16, #tpu.memory_space<vmem>>, vector<32x128xbf16>
      %17 = arith.extf %16 : vector<32x128xbf16> to vector<32x128xf32>
      %18 = arith.addf %15, %17 : vector<32x128xf32>
      %19 = arith.truncf %18 : vector<32x128xf32> to vector<32x128xbf16>
      %c0_16 = arith.constant 0 : index
      %c0_17 = arith.constant 0 : index
      %20 = vector.load %arg7[%c0_16, %c0_17] : memref<32x128xbf16, #tpu.memory_space<vmem>>, vector<32x128xbf16>
      tpu.vector_store %arg7[%c0_16, %c0_17], %19 {strides = array<i32>} : memref<32x128xbf16, #tpu.memory_space<vmem>>, vector<32x128xbf16>,
    } else {
    }
    return
  }
  func.func @transform_0(%arg0: i32, %arg1: i32, %arg2: i32) -> (i32, i32) {
    %c0_i32 = arith.constant 0 : i32
    return %arg0, %arg2 : i32, i32
  }
  func.func @transform_1(%arg0: i32, %arg1: i32, %arg2: i32) -> (i32, i32) {
    %c0_i32 = arith.constant 0 : i32
    return %arg2, %arg1 : i32, i32
  }
  func.func @transform_2(%arg0: i32, %arg1: i32, %arg2: i32) -> (i32, i32) {
    %c0_i32 = arith.constant 0 : i32
    %c0_i32_0 = arith.constant 0 : i32
    return %c0_i32, %arg1 : i32, i32
  }
  func.func @transform_3(%arg0: i32, %arg1: i32, %arg2: i32) -> (i32, i32) {
    %c0_i32 = arith.constant 0 : i32
    return %arg0, %arg1 : i32, i32
  }
  func.func @transform_4(%arg0: i32, %arg1: i32, %arg2: i32) -> (i32, i32) {
    %c0_i32 = arith.constant 0 : i32
    return %arg0, %arg1 : i32, i32
  }
}

module attributes {stable_mosaic.version = 11 : i64} {
  func.func @_mix_kernel(%arg0: i32, %arg1: i32, %arg2: i32, %arg3: memref<8x4xf32, #tpu.memory_space<vmem>>, %arg4: memref<1x4x128xbf16, #tpu.memory_space<vmem>>, %arg5: memref<1x8x128xbf16, #tpu.memory_space<vmem>>) attributes {dimension_semantics = [#tpu.dimension_semantics<parallel>, #tpu.dimension_semantics<parallel>, #tpu.dimension_semantics<parallel>], iteration_bounds = array<i64: 16, 1, 1>, scalar_prefetch = 0 : i64, scratch_operands = 0 : i64, tpu.core_type = #tpu.core_type<tc>, window_params = [{transform_indices = @transform_0, window_bounds = array<i64: 8, 4>}, {transform_indices = @transform_1, window_bounds = array<i64: 1, 4, 128>}, {transform_indices = @transform_2, window_bounds = array<i64: 1, 8, 128>}]} {
    %c0 = arith.constant 0 : index
    %c0_0 = arith.constant 0 : index
    %0 = vector.load %arg3[%c0, %c0_0] : memref<8x4xf32, #tpu.memory_space<vmem>>, vector<8x4xf32>
    %c0_1 = arith.constant 0 : index
    %c0_2 = arith.constant 0 : index
    %c0_3 = arith.constant 0 : index
    %1 = vector.load %arg4[%c0_1, %c0_2, %c0_3] : memref<1x4x128xbf16, #tpu.memory_space<vmem>>, vector<1x4x128xbf16>
    %2 = vector.shape_cast %1 : vector<1x4x128xbf16> to vector<4x128xbf16>
    %3 = arith.extf %2 : vector<4x128xbf16> to vector<4x128xf32>
    %cst = arith.constant dense<0.000000e+00> : vector<8x128xf32>
    %4 = tpu.matmul %0, %3, %cst {dimension_numbers = #tpu.dot_dimension_numbers<[1], [0], [0], [1], [0, 0, 1, 1], [], []>} : vector<8x4xf32>, vector<4x128xf32>, vector<8x128xf32> -> vector<8x128xf32>
    %5 = arith.truncf %4 : vector<8x128xf32> to vector<8x128xbf16>
    %c0_4 = arith.constant 0 : index
    %c0_5 = arith.constant 0 : index
    %c0_6 = arith.constant 0 : index
    %6 = vector.load %arg5[%c0_4, %c0_5, %c0_6] : memref<1x8x128xbf16, #tpu.memory_space<vmem>>, vector<1x8x128xbf16>
    %7 = vector.shape_cast %6 : vector<1x8x128xbf16> to vector<8x128xbf16>
    %8 = vector.shape_cast %5 : vector<8x128xbf16> to vector<1x8x128xbf16>
    tpu.vector_store %arg5[%c0_4, %c0_5, %c0_6], %8 {strides = array<i32>} : memref<1x8x128xbf16, #tpu.memory_space<vmem>>, vector<1x8x128xbf16>,
    return
  }
  func.func @transform_0(%arg0: i32, %arg1: i32, %arg2: i32) -> (i32, i32) {
    %c0_i32 = arith.constant 0 : i32
    %c0_i32_0 = arith.constant 0 : i32
    return %arg1, %c0_i32 : i32, i32
  }
  func.func @transform_1(%arg0: i32, %arg1: i32, %arg2: i32) -> (i32, i32, i32) {
    %c0_i32 = arith.constant 0 : i32
    %c0_i32_0 = arith.constant 0 : i32
    return %arg0, %c0_i32, %arg2 : i32, i32, i32
  }
  func.func @transform_2(%arg0: i32, %arg1: i32, %arg2: i32) -> (i32, i32, i32) {
    %c0_i32 = arith.constant 0 : i32
    return %arg0, %arg1, %arg2 : i32, i32, i32
  }
}

module attributes {stable_mosaic.version = 11 : i64} {
  func.func @_gemm_kernel(%arg0: i32, %arg1: i32, %arg2: i32, %arg3: memref<128x128xbf16, #tpu.memory_space<vmem>>, %arg4: memref<128x128xbf16, #tpu.memory_space<vmem>>, %arg5: memref<1x128xf32, #tpu.memory_space<vmem>>, %arg6: memref<128x128xbf16, #tpu.memory_space<vmem>>, %arg7: memref<128x128xbf16, #tpu.memory_space<vmem>>, %arg8: memref<128x128xf32, #tpu.memory_space<vmem>>) attributes {dimension_semantics = [#tpu.dimension_semantics<parallel>, #tpu.dimension_semantics<parallel>, #tpu.dimension_semantics<arbitrary>], iteration_bounds = array<i64: 1, 1, 1>, scalar_prefetch = 0 : i64, scratch_operands = 1 : i64, tpu.core_type = #tpu.core_type<tc>, window_params = [{transform_indices = @transform_0, window_bounds = array<i64: 128, 128>}, {transform_indices = @transform_1, window_bounds = array<i64: 128, 128>}, {transform_indices = @transform_2, window_bounds = array<i64: 1, 128>}, {transform_indices = @transform_3, window_bounds = array<i64: 128, 128>}, {transform_indices = @transform_4, window_bounds = array<i64: 128, 128>}]} {
    %c0_i32 = arith.constant 0 : i32
    %0 = arith.cmpi eq, %arg2, %c0_i32 : i32
    %1 = arith.extui %0 : i1 to i32
    %c0_i32_0 = arith.constant 0 : i32
    %2 = arith.cmpi ne, %1, %c0_i32_0 : i32
    scf.if %2 {
      %cst_10 = arith.constant 0.000000e+00 : f32
      %12 = vector.broadcast %cst_10 : f32 to vector<128x128xf32>
      %c0_11 = arith.constant 0 : index
      %c0_12 = arith.constant 0 : index
      %13 = vector.load %arg8[%c0_11, %c0_12] : memref<128x128xf32, #tpu.memory_space<vmem>>, vector<128x128xf32>
      tpu.vector_store %arg8[%c0_11, %c0_12], %12 {strides = array<i32>} : memref<128x128xf32, #tpu.memory_space<vmem>>, vector<128x128xf32>,
    } else {
    }
    %c0 = arith.constant 0 : index
    %c0_1 = arith.constant 0 : index
    %3 = vector.load %arg8[%c0, %c0_1] : memref<128x128xf32, #tpu.memory_space<vmem>>, vector<128x128xf32>
    %c0_2 = arith.constant 0 : index
    %c0_3 = arith.constant 0 : index
    %4 = vector.load %arg3[%c0_2, %c0_3] : memref<128x128xbf16, #tpu.memory_space<vmem>>, vector<128x128xbf16>
    %c0_4 = arith.constant 0 : index
    %c0_5 = arith.constant 0 : index
    %5 = vector.load %arg4[%c0_4, %c0_5] : memref<128x128xbf16, #tpu.memory_space<vmem>>, vector<128x128xbf16>
    %cst = arith.constant dense<0.000000e+00> : vector<128x128xf32>
    %6 = tpu.matmul %4, %5, %cst {dimension_numbers = #tpu.dot_dimension_numbers<[1], [0], [0], [1], [0, 0, 1, 1], [], []>} : vector<128x128xbf16>, vector<128x128xbf16>, vector<128x128xf32> -> vector<128x128xf32>
    %7 = arith.addf %3, %6 : vector<128x128xf32>
    %c0_6 = arith.constant 0 : index
    %c0_7 = arith.constant 0 : index
    %8 = vector.load %arg8[%c0_6, %c0_7] : memref<128x128xf32, #tpu.memory_space<vmem>>, vector<128x128xf32>
    tpu.vector_store %arg8[%c0_6, %c0_7], %7 {strides = array<i32>} : memref<128x128xf32, #tpu.memory_space<vmem>>, vector<128x128xf32>,
    %c0_i32_8 = arith.constant 0 : i32
    %9 = arith.cmpi eq, %arg2, %c0_i32_8 : i32
    %10 = arith.extui %9 : i1 to i32
    %c0_i32_9 = arith.constant 0 : i32
    %11 = arith.cmpi ne, %10, %c0_i32_9 : i32
    scf.if %11 {
      %c0_10 = arith.constant 0 : index
      %c0_11 = arith.constant 0 : index
      %12 = vector.load %arg8[%c0_10, %c0_11] : memref<128x128xf32, #tpu.memory_space<vmem>>, vector<128x128xf32>
      %c0_12 = arith.constant 0 : index
      %c0_13 = arith.constant 0 : index
      %13 = vector.load %arg5[%c0_12, %c0_13] : memref<1x128xf32, #tpu.memory_space<vmem>>, vector<1x128xf32>
      %14 = vector.broadcast %13 : vector<1x128xf32> to vector<128x128xf32>
      %15 = arith.addf %12, %14 : vector<128x128xf32>
      %c0_14 = arith.constant 0 : index
      %c0_15 = arith.constant 0 : index
      %16 = vector.load %arg6[%c0_14, %c0_15] : memref<128x128xbf16, #tpu.memory_space<vmem>>, vector<128x128xbf16>
      %17 = arith.extf %16 : vector<128x128xbf16> to vector<128x128xf32>
      %18 = arith.addf %15, %17 : vector<128x128xf32>
      %19 = arith.truncf %18 : vector<128x128xf32> to vector<128x128xbf16>
      %c0_16 = arith.constant 0 : index
      %c0_17 = arith.constant 0 : index
      %20 = vector.load %arg7[%c0_16, %c0_17] : memref<128x128xbf16, #tpu.memory_space<vmem>>, vector<128x128xbf16>
      tpu.vector_store %arg7[%c0_16, %c0_17], %19 {strides = array<i32>} : memref<128x128xbf16, #tpu.memory_space<vmem>>, vector<128x128xbf16>,
    } else {
    }
    return
  }
  func.func @transform_0(%arg0: i32, %arg1: i32, %arg2: i32) -> (i32, i32) {
    %c0_i32 = arith.constant 0 : i32
    return %arg0, %arg2 : i32, i32
  }
  func.func @transform_1(%arg0: i32, %arg1: i32, %arg2: i32) -> (i32, i32) {
    %c0_i32 = arith.constant 0 : i32
    return %arg2, %arg1 : i32, i32
  }
  func.func @transform_2(%arg0: i32, %arg1: i32, %arg2: i32) -> (i32, i32) {
    %c0_i32 = arith.constant 0 : i32
    %c0_i32_0 = arith.constant 0 : i32
    return %c0_i32, %arg1 : i32, i32
  }
  func.func @transform_3(%arg0: i32, %arg1: i32, %arg2: i32) -> (i32, i32) {
    %c0_i32 = arith.constant 0 : i32
    return %arg0, %arg1 : i32, i32
  }
  func.func @transform_4(%arg0: i32, %arg1: i32, %arg2: i32) -> (i32, i32) {
    %c0_i32 = arith.constant 0 : i32
    return %arg0, %arg1 : i32, i32
  }
}

module attributes {stable_mosaic.version = 11 : i64} {
  func.func @_mix_kernel(%arg0: i32, %arg1: i32, %arg2: i32, %arg3: memref<8x2xf32, #tpu.memory_space<vmem>>, %arg4: memref<1x2x128xbf16, #tpu.memory_space<vmem>>, %arg5: memref<1x8x128xbf16, #tpu.memory_space<vmem>>) attributes {dimension_semantics = [#tpu.dimension_semantics<parallel>, #tpu.dimension_semantics<parallel>, #tpu.dimension_semantics<parallel>], iteration_bounds = array<i64: 16, 1, 1>, scalar_prefetch = 0 : i64, scratch_operands = 0 : i64, tpu.core_type = #tpu.core_type<tc>, window_params = [{transform_indices = @transform_0, window_bounds = array<i64: 8, 2>}, {transform_indices = @transform_1, window_bounds = array<i64: 1, 2, 128>}, {transform_indices = @transform_2, window_bounds = array<i64: 1, 8, 128>}]} {
    %c0 = arith.constant 0 : index
    %c0_0 = arith.constant 0 : index
    %0 = vector.load %arg3[%c0, %c0_0] : memref<8x2xf32, #tpu.memory_space<vmem>>, vector<8x2xf32>
    %c0_1 = arith.constant 0 : index
    %c0_2 = arith.constant 0 : index
    %c0_3 = arith.constant 0 : index
    %1 = vector.load %arg4[%c0_1, %c0_2, %c0_3] : memref<1x2x128xbf16, #tpu.memory_space<vmem>>, vector<1x2x128xbf16>
    %2 = vector.shape_cast %1 : vector<1x2x128xbf16> to vector<2x128xbf16>
    %3 = arith.extf %2 : vector<2x128xbf16> to vector<2x128xf32>
    %cst = arith.constant dense<0.000000e+00> : vector<8x128xf32>
    %4 = tpu.matmul %0, %3, %cst {dimension_numbers = #tpu.dot_dimension_numbers<[1], [0], [0], [1], [0, 0, 1, 1], [], []>} : vector<8x2xf32>, vector<2x128xf32>, vector<8x128xf32> -> vector<8x128xf32>
    %5 = arith.truncf %4 : vector<8x128xf32> to vector<8x128xbf16>
    %c0_4 = arith.constant 0 : index
    %c0_5 = arith.constant 0 : index
    %c0_6 = arith.constant 0 : index
    %6 = vector.load %arg5[%c0_4, %c0_5, %c0_6] : memref<1x8x128xbf16, #tpu.memory_space<vmem>>, vector<1x8x128xbf16>
    %7 = vector.shape_cast %6 : vector<1x8x128xbf16> to vector<8x128xbf16>
    %8 = vector.shape_cast %5 : vector<8x128xbf16> to vector<1x8x128xbf16>
    tpu.vector_store %arg5[%c0_4, %c0_5, %c0_6], %8 {strides = array<i32>} : memref<1x8x128xbf16, #tpu.memory_space<vmem>>, vector<1x8x128xbf16>,
    return
  }
  func.func @transform_0(%arg0: i32, %arg1: i32, %arg2: i32) -> (i32, i32) {
    %c0_i32 = arith.constant 0 : i32
    %c0_i32_0 = arith.constant 0 : i32
    return %arg1, %c0_i32 : i32, i32
  }
  func.func @transform_1(%arg0: i32, %arg1: i32, %arg2: i32) -> (i32, i32, i32) {
    %c0_i32 = arith.constant 0 : i32
    %c0_i32_0 = arith.constant 0 : i32
    return %arg0, %c0_i32, %arg2 : i32, i32, i32
  }
  func.func @transform_2(%arg0: i32, %arg1: i32, %arg2: i32) -> (i32, i32, i32) {
    %c0_i32 = arith.constant 0 : i32
    return %arg0, %arg1, %arg2 : i32, i32, i32
  }
}

module attributes {stable_mosaic.version = 11 : i64} {
  func.func @_mix_kernel(%arg0: i32, %arg1: i32, %arg2: i32, %arg3: memref<8x1xf32, #tpu.memory_space<vmem>>, %arg4: memref<1x1x128xbf16, #tpu.memory_space<vmem>>, %arg5: memref<1x8x128xbf16, #tpu.memory_space<vmem>>) attributes {dimension_semantics = [#tpu.dimension_semantics<parallel>, #tpu.dimension_semantics<parallel>, #tpu.dimension_semantics<parallel>], iteration_bounds = array<i64: 16, 1, 1>, scalar_prefetch = 0 : i64, scratch_operands = 0 : i64, tpu.core_type = #tpu.core_type<tc>, window_params = [{transform_indices = @transform_0, window_bounds = array<i64: 8, 1>}, {transform_indices = @transform_1, window_bounds = array<i64: 1, 1, 128>}, {transform_indices = @transform_2, window_bounds = array<i64: 1, 8, 128>}]} {
    %c0 = arith.constant 0 : index
    %c0_0 = arith.constant 0 : index
    %0 = vector.load %arg3[%c0, %c0_0] : memref<8x1xf32, #tpu.memory_space<vmem>>, vector<8x1xf32>
    %c0_1 = arith.constant 0 : index
    %c0_2 = arith.constant 0 : index
    %c0_3 = arith.constant 0 : index
    %1 = vector.load %arg4[%c0_1, %c0_2, %c0_3] : memref<1x1x128xbf16, #tpu.memory_space<vmem>>, vector<1x1x128xbf16>
    %2 = vector.shape_cast %1 : vector<1x1x128xbf16> to vector<1x128xbf16>
    %3 = arith.extf %2 : vector<1x128xbf16> to vector<1x128xf32>
    %cst = arith.constant dense<0.000000e+00> : vector<8x128xf32>
    %4 = tpu.matmul %0, %3, %cst {dimension_numbers = #tpu.dot_dimension_numbers<[1], [0], [0], [1], [0, 0, 1, 1], [], []>} : vector<8x1xf32>, vector<1x128xf32>, vector<8x128xf32> -> vector<8x128xf32>
    %5 = arith.truncf %4 : vector<8x128xf32> to vector<8x128xbf16>
    %c0_4 = arith.constant 0 : index
    %c0_5 = arith.constant 0 : index
    %c0_6 = arith.constant 0 : index
    %6 = vector.load %arg5[%c0_4, %c0_5, %c0_6] : memref<1x8x128xbf16, #tpu.memory_space<vmem>>, vector<1x8x128xbf16>
    %7 = vector.shape_cast %6 : vector<1x8x128xbf16> to vector<8x128xbf16>
    %8 = vector.shape_cast %5 : vector<8x128xbf16> to vector<1x8x128xbf16>
    tpu.vector_store %arg5[%c0_4, %c0_5, %c0_6], %8 {strides = array<i32>} : memref<1x8x128xbf16, #tpu.memory_space<vmem>>, vector<1x8x128xbf16>,
    return
  }
  func.func @transform_0(%arg0: i32, %arg1: i32, %arg2: i32) -> (i32, i32) {
    %c0_i32 = arith.constant 0 : i32
    %c0_i32_0 = arith.constant 0 : i32
    return %arg1, %c0_i32 : i32, i32
  }
  func.func @transform_1(%arg0: i32, %arg1: i32, %arg2: i32) -> (i32, i32, i32) {
    %c0_i32 = arith.constant 0 : i32
    %c0_i32_0 = arith.constant 0 : i32
    return %arg0, %c0_i32, %arg2 : i32, i32, i32
  }
  func.func @transform_2(%arg0: i32, %arg1: i32, %arg2: i32) -> (i32, i32, i32) {
    %c0_i32 = arith.constant 0 : i32
    return %arg0, %arg1, %arg2 : i32, i32, i32
  }
}

module attributes {stable_mosaic.version = 11 : i64} {
  func.func @_gemm_kernel(%arg0: i32, %arg1: i32, %arg2: i32, %arg3: memref<128x512xbf16, #tpu.memory_space<vmem>>, %arg4: memref<512x128xbf16, #tpu.memory_space<vmem>>, %arg5: memref<1x128xf32, #tpu.memory_space<vmem>>, %arg6: memref<128x128xbf16, #tpu.memory_space<vmem>>, %arg7: memref<128x128xf32, #tpu.memory_space<vmem>>) attributes {dimension_semantics = [#tpu.dimension_semantics<parallel>, #tpu.dimension_semantics<parallel>, #tpu.dimension_semantics<arbitrary>], iteration_bounds = array<i64: 1, 1, 3>, scalar_prefetch = 0 : i64, scratch_operands = 1 : i64, tpu.core_type = #tpu.core_type<tc>, window_params = [{transform_indices = @transform_0, window_bounds = array<i64: 128, 512>}, {transform_indices = @transform_1, window_bounds = array<i64: 512, 128>}, {transform_indices = @transform_2, window_bounds = array<i64: 1, 128>}, {transform_indices = @transform_3, window_bounds = array<i64: 128, 128>}]} {
    %c0_i32 = arith.constant 0 : i32
    %0 = arith.cmpi eq, %arg2, %c0_i32 : i32
    %1 = arith.extui %0 : i1 to i32
    %c0_i32_0 = arith.constant 0 : i32
    %2 = arith.cmpi ne, %1, %c0_i32_0 : i32
    scf.if %2 {
      %cst_9 = arith.constant 0.000000e+00 : f32
      %12 = vector.broadcast %cst_9 : f32 to vector<128x128xf32>
      %c0_10 = arith.constant 0 : index
      %c0_11 = arith.constant 0 : index
      %13 = vector.load %arg7[%c0_10, %c0_11] : memref<128x128xf32, #tpu.memory_space<vmem>>, vector<128x128xf32>
      tpu.vector_store %arg7[%c0_10, %c0_11], %12 {strides = array<i32>} : memref<128x128xf32, #tpu.memory_space<vmem>>, vector<128x128xf32>,
    } else {
    }
    %c0 = arith.constant 0 : index
    %c0_1 = arith.constant 0 : index
    %3 = vector.load %arg7[%c0, %c0_1] : memref<128x128xf32, #tpu.memory_space<vmem>>, vector<128x128xf32>
    %c0_2 = arith.constant 0 : index
    %c0_3 = arith.constant 0 : index
    %4 = vector.load %arg3[%c0_2, %c0_3] : memref<128x512xbf16, #tpu.memory_space<vmem>>, vector<128x512xbf16>
    %c0_4 = arith.constant 0 : index
    %c0_5 = arith.constant 0 : index
    %5 = vector.load %arg4[%c0_4, %c0_5] : memref<512x128xbf16, #tpu.memory_space<vmem>>, vector<512x128xbf16>
    %cst = arith.constant dense<0.000000e+00> : vector<128x128xf32>
    %6 = tpu.matmul %4, %5, %cst {dimension_numbers = #tpu.dot_dimension_numbers<[1], [0], [0], [1], [0, 0, 1, 1], [], []>} : vector<128x512xbf16>, vector<512x128xbf16>, vector<128x128xf32> -> vector<128x128xf32>
    %7 = arith.addf %3, %6 : vector<128x128xf32>
    %c0_6 = arith.constant 0 : index
    %c0_7 = arith.constant 0 : index
    %8 = vector.load %arg7[%c0_6, %c0_7] : memref<128x128xf32, #tpu.memory_space<vmem>>, vector<128x128xf32>
    tpu.vector_store %arg7[%c0_6, %c0_7], %7 {strides = array<i32>} : memref<128x128xf32, #tpu.memory_space<vmem>>, vector<128x128xf32>,
    %c2_i32 = arith.constant 2 : i32
    %9 = arith.cmpi eq, %arg2, %c2_i32 : i32
    %10 = arith.extui %9 : i1 to i32
    %c0_i32_8 = arith.constant 0 : i32
    %11 = arith.cmpi ne, %10, %c0_i32_8 : i32
    scf.if %11 {
      %c0_9 = arith.constant 0 : index
      %c0_10 = arith.constant 0 : index
      %12 = vector.load %arg7[%c0_9, %c0_10] : memref<128x128xf32, #tpu.memory_space<vmem>>, vector<128x128xf32>
      %c0_11 = arith.constant 0 : index
      %c0_12 = arith.constant 0 : index
      %13 = vector.load %arg5[%c0_11, %c0_12] : memref<1x128xf32, #tpu.memory_space<vmem>>, vector<1x128xf32>
      %14 = vector.broadcast %13 : vector<1x128xf32> to vector<128x128xf32>
      %15 = arith.addf %12, %14 : vector<128x128xf32>
      %cst_13 = arith.constant 0.000000e+00 : f32
      %16 = vector.broadcast %cst_13 : f32 to vector<128x128xf32>
      %17 = arith.maximumf %15, %16 : vector<128x128xf32>
      %18 = arith.truncf %17 : vector<128x128xf32> to vector<128x128xbf16>
      %c0_14 = arith.constant 0 : index
      %c0_15 = arith.constant 0 : index
      %19 = vector.load %arg6[%c0_14, %c0_15] : memref<128x128xbf16, #tpu.memory_space<vmem>>, vector<128x128xbf16>
      tpu.vector_store %arg6[%c0_14, %c0_15], %18 {strides = array<i32>} : memref<128x128xbf16, #tpu.memory_space<vmem>>, vector<128x128xbf16>,
    } else {
    }
    return
  }
  func.func @transform_0(%arg0: i32, %arg1: i32, %arg2: i32) -> (i32, i32) {
    %c0_i32 = arith.constant 0 : i32
    return %arg0, %arg2 : i32, i32
  }
  func.func @transform_1(%arg0: i32, %arg1: i32, %arg2: i32) -> (i32, i32) {
    %c0_i32 = arith.constant 0 : i32
    return %arg2, %arg1 : i32, i32
  }
  func.func @transform_2(%arg0: i32, %arg1: i32, %arg2: i32) -> (i32, i32) {
    %c0_i32 = arith.constant 0 : i32
    %c0_i32_0 = arith.constant 0 : i32
    return %c0_i32, %arg1 : i32, i32
  }
  func.func @transform_3(%arg0: i32, %arg1: i32, %arg2: i32) -> (i32, i32) {
    %c0_i32 = arith.constant 0 : i32
    return %arg0, %arg1 : i32, i32
  }
}

module attributes {stable_mosaic.version = 11 : i64} {
  func.func @_mix_kernel(%arg0: i32, %arg1: i32, %arg2: i32, %arg3: memref<32x8xf32, #tpu.memory_space<vmem>>, %arg4: memref<1x8x128xf32, #tpu.memory_space<vmem>>, %arg5: memref<1x32x128xf32, #tpu.memory_space<vmem>>) attributes {dimension_semantics = [#tpu.dimension_semantics<parallel>, #tpu.dimension_semantics<parallel>, #tpu.dimension_semantics<parallel>], iteration_bounds = array<i64: 2, 1, 1>, scalar_prefetch = 0 : i64, scratch_operands = 0 : i64, tpu.core_type = #tpu.core_type<tc>, window_params = [{transform_indices = @transform_0, window_bounds = array<i64: 32, 8>}, {transform_indices = @transform_1, window_bounds = array<i64: 1, 8, 128>}, {transform_indices = @transform_2, window_bounds = array<i64: 1, 32, 128>}]} {
    %c0 = arith.constant 0 : index
    %c0_0 = arith.constant 0 : index
    %0 = vector.load %arg3[%c0, %c0_0] : memref<32x8xf32, #tpu.memory_space<vmem>>, vector<32x8xf32>
    %c0_1 = arith.constant 0 : index
    %c0_2 = arith.constant 0 : index
    %c0_3 = arith.constant 0 : index
    %1 = vector.load %arg4[%c0_1, %c0_2, %c0_3] : memref<1x8x128xf32, #tpu.memory_space<vmem>>, vector<1x8x128xf32>
    %2 = vector.shape_cast %1 : vector<1x8x128xf32> to vector<8x128xf32>
    %cst = arith.constant dense<0.000000e+00> : vector<32x128xf32>
    %3 = tpu.matmul %0, %2, %cst {dimension_numbers = #tpu.dot_dimension_numbers<[1], [0], [0], [1], [0, 0, 1, 1], [], []>} : vector<32x8xf32>, vector<8x128xf32>, vector<32x128xf32> -> vector<32x128xf32>
    %c0_4 = arith.constant 0 : index
    %c0_5 = arith.constant 0 : index
    %c0_6 = arith.constant 0 : index
    %4 = vector.load %arg5[%c0_4, %c0_5, %c0_6] : memref<1x32x128xf32, #tpu.memory_space<vmem>>, vector<1x32x128xf32>
    %5 = vector.shape_cast %4 : vector<1x32x128xf32> to vector<32x128xf32>
    %6 = vector.shape_cast %3 : vector<32x128xf32> to vector<1x32x128xf32>
    tpu.vector_store %arg5[%c0_4, %c0_5, %c0_6], %6 {strides = array<i32>} : memref<1x32x128xf32, #tpu.memory_space<vmem>>, vector<1x32x128xf32>,
    return
  }
  func.func @transform_0(%arg0: i32, %arg1: i32, %arg2: i32) -> (i32, i32) {
    %c0_i32 = arith.constant 0 : i32
    %c0_i32_0 = arith.constant 0 : i32
    return %arg1, %c0_i32 : i32, i32
  }
  func.func @transform_1(%arg0: i32, %arg1: i32, %arg2: i32) -> (i32, i32, i32) {
    %c0_i32 = arith.constant 0 : i32
    %c0_i32_0 = arith.constant 0 : i32
    return %arg0, %c0_i32, %arg2 : i32, i32, i32
  }
  func.func @transform_2(%arg0: i32, %arg1: i32, %arg2: i32) -> (i32, i32, i32) {
    %c0_i32 = arith.constant 0 : i32
    return %arg0, %arg1, %arg2 : i32, i32, i32
  }
}

module attributes {stable_mosaic.version = 11 : i64} {
  func.func @_gemm_kernel(%arg0: i32, %arg1: i32, %arg2: i32, %arg3: memref<128x128xbf16, #tpu.memory_space<vmem>>, %arg4: memref<128x128xbf16, #tpu.memory_space<vmem>>, %arg5: memref<1x128xf32, #tpu.memory_space<vmem>>, %arg6: memref<128x128xf32, #tpu.memory_space<vmem>>, %arg7: memref<128x128xf32, #tpu.memory_space<vmem>>) attributes {dimension_semantics = [#tpu.dimension_semantics<parallel>, #tpu.dimension_semantics<parallel>, #tpu.dimension_semantics<arbitrary>], iteration_bounds = array<i64: 1, 1, 1>, scalar_prefetch = 0 : i64, scratch_operands = 1 : i64, tpu.core_type = #tpu.core_type<tc>, window_params = [{transform_indices = @transform_0, window_bounds = array<i64: 128, 128>}, {transform_indices = @transform_1, window_bounds = array<i64: 128, 128>}, {transform_indices = @transform_2, window_bounds = array<i64: 1, 128>}, {transform_indices = @transform_3, window_bounds = array<i64: 128, 128>}]} {
    %c0_i32 = arith.constant 0 : i32
    %0 = arith.cmpi eq, %arg2, %c0_i32 : i32
    %1 = arith.extui %0 : i1 to i32
    %c0_i32_0 = arith.constant 0 : i32
    %2 = arith.cmpi ne, %1, %c0_i32_0 : i32
    scf.if %2 {
      %cst_10 = arith.constant 0.000000e+00 : f32
      %12 = vector.broadcast %cst_10 : f32 to vector<128x128xf32>
      %c0_11 = arith.constant 0 : index
      %c0_12 = arith.constant 0 : index
      %13 = vector.load %arg7[%c0_11, %c0_12] : memref<128x128xf32, #tpu.memory_space<vmem>>, vector<128x128xf32>
      tpu.vector_store %arg7[%c0_11, %c0_12], %12 {strides = array<i32>} : memref<128x128xf32, #tpu.memory_space<vmem>>, vector<128x128xf32>,
    } else {
    }
    %c0 = arith.constant 0 : index
    %c0_1 = arith.constant 0 : index
    %3 = vector.load %arg7[%c0, %c0_1] : memref<128x128xf32, #tpu.memory_space<vmem>>, vector<128x128xf32>
    %c0_2 = arith.constant 0 : index
    %c0_3 = arith.constant 0 : index
    %4 = vector.load %arg3[%c0_2, %c0_3] : memref<128x128xbf16, #tpu.memory_space<vmem>>, vector<128x128xbf16>
    %c0_4 = arith.constant 0 : index
    %c0_5 = arith.constant 0 : index
    %5 = vector.load %arg4[%c0_4, %c0_5] : memref<128x128xbf16, #tpu.memory_space<vmem>>, vector<128x128xbf16>
    %cst = arith.constant dense<0.000000e+00> : vector<128x128xf32>
    %6 = tpu.matmul %4, %5, %cst {dimension_numbers = #tpu.dot_dimension_numbers<[1], [0], [0], [1], [0, 0, 1, 1], [], []>} : vector<128x128xbf16>, vector<128x128xbf16>, vector<128x128xf32> -> vector<128x128xf32>
    %7 = arith.addf %3, %6 : vector<128x128xf32>
    %c0_6 = arith.constant 0 : index
    %c0_7 = arith.constant 0 : index
    %8 = vector.load %arg7[%c0_6, %c0_7] : memref<128x128xf32, #tpu.memory_space<vmem>>, vector<128x128xf32>
    tpu.vector_store %arg7[%c0_6, %c0_7], %7 {strides = array<i32>} : memref<128x128xf32, #tpu.memory_space<vmem>>, vector<128x128xf32>,
    %c0_i32_8 = arith.constant 0 : i32
    %9 = arith.cmpi eq, %arg2, %c0_i32_8 : i32
    %10 = arith.extui %9 : i1 to i32
    %c0_i32_9 = arith.constant 0 : i32
    %11 = arith.cmpi ne, %10, %c0_i32_9 : i32
    scf.if %11 {
      %c0_10 = arith.constant 0 : index
      %c0_11 = arith.constant 0 : index
      %12 = vector.load %arg7[%c0_10, %c0_11] : memref<128x128xf32, #tpu.memory_space<vmem>>, vector<128x128xf32>
      %c0_12 = arith.constant 0 : index
      %c0_13 = arith.constant 0 : index
      %13 = vector.load %arg5[%c0_12, %c0_13] : memref<1x128xf32, #tpu.memory_space<vmem>>, vector<1x128xf32>
      %14 = vector.broadcast %13 : vector<1x128xf32> to vector<128x128xf32>
      %15 = arith.addf %12, %14 : vector<128x128xf32>
      %c0_14 = arith.constant 0 : index
      %c0_15 = arith.constant 0 : index
      %16 = vector.load %arg6[%c0_14, %c0_15] : memref<128x128xf32, #tpu.memory_space<vmem>>, vector<128x128xf32>
      tpu.vector_store %arg6[%c0_14, %c0_15], %15 {strides = array<i32>} : memref<128x128xf32, #tpu.memory_space<vmem>>, vector<128x128xf32>,
    } else {
    }
    return
  }
  func.func @transform_0(%arg0: i32, %arg1: i32, %arg2: i32) -> (i32, i32) {
    %c0_i32 = arith.constant 0 : i32
    return %arg0, %arg2 : i32, i32
  }
  func.func @transform_1(%arg0: i32, %arg1: i32, %arg2: i32) -> (i32, i32) {
    %c0_i32 = arith.constant 0 : i32
    return %arg2, %arg1 : i32, i32
  }
  func.func @transform_2(%arg0: i32, %arg1: i32, %arg2: i32) -> (i32, i32) {
    %c0_i32 = arith.constant 0 : i32
    %c0_i32_0 = arith.constant 0 : i32
    return %c0_i32, %arg1 : i32, i32
  }
  func.func @transform_3(%arg0: i32, %arg1: i32, %arg2: i32) -> (i32, i32) {
    %c0_i32 = arith.constant 0 : i32
    return %arg0, %arg1 : i32, i32
  }
}

module attributes {stable_mosaic.version = 11 : i64} {
  func.func @_mix_kernel(%arg0: i32, %arg1: i32, %arg2: i32, %arg3: memref<32x8xf32, #tpu.memory_space<vmem>>, %arg4: memref<1x8x128xf32, #tpu.memory_space<vmem>>, %arg5: memref<1x32x128xf32, #tpu.memory_space<vmem>>) attributes {dimension_semantics = [#tpu.dimension_semantics<parallel>, #tpu.dimension_semantics<parallel>, #tpu.dimension_semantics<parallel>], iteration_bounds = array<i64: 64, 1, 1>, scalar_prefetch = 0 : i64, scratch_operands = 0 : i64, tpu.core_type = #tpu.core_type<tc>, window_params = [{transform_indices = @transform_0, window_bounds = array<i64: 32, 8>}, {transform_indices = @transform_1, window_bounds = array<i64: 1, 8, 128>}, {transform_indices = @transform_2, window_bounds = array<i64: 1, 32, 128>}]} {
    %c0 = arith.constant 0 : index
    %c0_0 = arith.constant 0 : index
    %0 = vector.load %arg3[%c0, %c0_0] : memref<32x8xf32, #tpu.memory_space<vmem>>, vector<32x8xf32>
    %c0_1 = arith.constant 0 : index
    %c0_2 = arith.constant 0 : index
    %c0_3 = arith.constant 0 : index
    %1 = vector.load %arg4[%c0_1, %c0_2, %c0_3] : memref<1x8x128xf32, #tpu.memory_space<vmem>>, vector<1x8x128xf32>
    %2 = vector.shape_cast %1 : vector<1x8x128xf32> to vector<8x128xf32>
    %cst = arith.constant dense<0.000000e+00> : vector<32x128xf32>
    %3 = tpu.matmul %0, %2, %cst {dimension_numbers = #tpu.dot_dimension_numbers<[1], [0], [0], [1], [0, 0, 1, 1], [], []>} : vector<32x8xf32>, vector<8x128xf32>, vector<32x128xf32> -> vector<32x128xf32>
    %c0_4 = arith.constant 0 : index
    %c0_5 = arith.constant 0 : index
    %c0_6 = arith.constant 0 : index
    %4 = vector.load %arg5[%c0_4, %c0_5, %c0_6] : memref<1x32x128xf32, #tpu.memory_space<vmem>>, vector<1x32x128xf32>
    %5 = vector.shape_cast %4 : vector<1x32x128xf32> to vector<32x128xf32>
    %6 = vector.shape_cast %3 : vector<32x128xf32> to vector<1x32x128xf32>
    tpu.vector_store %arg5[%c0_4, %c0_5, %c0_6], %6 {strides = array<i32>} : memref<1x32x128xf32, #tpu.memory_space<vmem>>, vector<1x32x128xf32>,
    return
  }
  func.func @transform_0(%arg0: i32, %arg1: i32, %arg2: i32) -> (i32, i32) {
    %c0_i32 = arith.constant 0 : i32
    %c0_i32_0 = arith.constant 0 : i32
    return %arg1, %c0_i32 : i32, i32
  }
  func.func @transform_1(%arg0: i32, %arg1: i32, %arg2: i32) -> (i32, i32, i32) {
    %c0_i32 = arith.constant 0 : i32
    %c0_i32_0 = arith.constant 0 : i32
    return %arg0, %c0_i32, %arg2 : i32, i32, i32
  }
  func.func @transform_2(%arg0: i32, %arg1: i32, %arg2: i32) -> (i32, i32, i32) {
    %c0_i32 = arith.constant 0 : i32
    return %arg0, %arg1, %arg2 : i32, i32, i32
  }
}

</mosaic_0001>

<llo_original>
// kernel: psenet_forward.24
$region0: #{psenet_forward.24}
  #allocation0 [shape = 'u32[]', space=smem, size = 0x4, offset = 0x4, fixed_abs, tag = 'smem constant byte address 0x4 - core index']
  #allocation1 [shape = 'u32[144,128]{1,0:T(1,128)}', space=vmem, size = 0x12000, scoped, tag = 'internal scratch']
  #allocation2 [shape = 'f32[128,128]{1,0:T(8,128)}', space=vmem, size = 0x10000, scoped, tag = 'scratch operand']
  %s0 = inlined_call_operand.vmem [shape: bf16[128,128], index: 0, kind: input, shape index: {}]
  %s1 = inlined_call_operand.vmem [shape: bf16[128,128], index: 1, kind: input, shape index: {}]
  %s2 = inlined_call_operand.vmem [shape: f32[1,128], index: 2, kind: input, shape index: {}]
  %s3 = inlined_call_operand.vmem [shape: bf16[128,128], index: 3, kind: output, shape index: {}]
  %s4 = sld [smem:[#allocation0]]
  $region30: #{psenet_forward.24} parent=0
    _
  %s6 = ssub.s32 1, %s4
  %s7 = scalar_select 0, %s6, %s4
  // Predicated region
  $region2: #{psenet_forward.24} parent=0 // pred_check
    _
  $region3: #{psenet_forward.24} parent=0 // pred_check_branch
    %9 = sbr.rel (0) target = $region5
  $region4: #{psenet_forward.24} parent=0 // pred_region
    _
  $region5: #{psenet_forward.24} parent=0 // pred_fallthru
    _
  // Predicated region
  $region6: #{psenet_forward.24} parent=0 // pred_check
    _
  $region7: #{psenet_forward.24} parent=0 // pred_check_branch
    %11 = sbr.rel (0) target = $region9
  $region8: #{psenet_forward.24} parent=0 // pred_region
    _
  $region9: #{psenet_forward.24} parent=0 // pred_fallthru
    _
  // Predicated region
  $region10: #{psenet_forward.24} parent=0 // pred_check
    _
  $region11: #{psenet_forward.24} parent=0 // pred_check_branch
    %13 = sbr.rel (0) target = $region13
  $region12: #{psenet_forward.24} parent=0 // pred_region
    _
  $region13: #{psenet_forward.24} parent=0 // pred_fallthru
    _
  %p15 = scmp.eq.s32.totalorder 0, 0
  // Predicated region
  $region14: #{psenet_forward.24} parent=0 // pred_check
    %p16 = pneg %p15
  $region15: #{psenet_forward.24} parent=0 // pred_check_branch
    %18 = sbr.rel (%p16) target = $region17
  $region16: #{psenet_forward.24} parent=0 // pred_region
    %19 = vst [vmem:[#allocation2] sm:$0xff] 0.0
    %20 = vst [vmem:[#allocation2 + $0x8] sm:$0xff] 0.0
    %21 = vst [vmem:[#allocation2 + $0x10] sm:$0xff] 0.0
    %22 = vst [vmem:[#allocation2 + $0x18] sm:$0xff] 0.0
    %23 = vst [vmem:[#allocation2 + $0x20] sm:$0xff] 0.0
    %24 = vst [vmem:[#allocation2 + $0x28] sm:$0xff] 0.0
    %25 = vst [vmem:[#allocation2 + $0x30] sm:$0xff] 0.0
    %26 = vst [vmem:[#allocation2 + $0x38] sm:$0xff] 0.0
    %27 = vst [vmem:[#allocation2 + $0x40] sm:$0xff] 0.0
    %28 = vst [vmem:[#allocation2 + $0x48] sm:$0xff] 0.0
    %29 = vst [vmem:[#allocation2 + $0x50] sm:$0xff] 0.0
    %30 = vst [vmem:[#allocation2 + $0x58] sm:$0xff] 0.0
    %31 = vst [vmem:[#allocation2 + $0x60] sm:$0xff] 0.0
    %32 = vst [vmem:[#allocation2 + $0x68] sm:$0xff] 0.0
    %33 = vst [vmem:[#allocation2 + $0x70] sm:$0xff] 0.0
    %34 = vst [vmem:[#allocation2 + $0x78] sm:$0xff] 0.0
  $region17: #{psenet_forward.24} parent=0 // pred_fallthru
    _
  %v35 = vld [vmem:[#allocation2] sm:$0xff]
  %v36 = vld [vmem:[#allocation2 + $0x8] sm:$0xff]
  %v37 = vld [vmem:[#allocation2 + $0x10] sm:$0xff]
  %v38 = vld [vmem:[#allocation2 + $0x18] sm:$0xff]
  %v39 = vld [vmem:[#allocation2 + $0x20] sm:$0xff]
  %v40 = vld [vmem:[#allocation2 + $0x28] sm:$0xff]
  %v41 = vld [vmem:[#allocation2 + $0x30] sm:$0xff]
  %v42 = vld [vmem:[#allocation2 + $0x38] sm:$0xff]
  %v43 = vld [vmem:[#allocation2 + $0x40] sm:$0xff]
  %v44 = vld [vmem:[#allocation2 + $0x48] sm:$0xff]
  %v45 = vld [vmem:[#allocation2 + $0x50] sm:$0xff]
  %v46 = vld [vmem:[#allocation2 + $0x58] sm:$0xff]
  %v47 = vld [vmem:[#allocation2 + $0x60] sm:$0xff]
  %v48 = vld [vmem:[#allocation2 + $0x68] sm:$0xff]
  %v49 = vld [vmem:[#allocation2 + $0x70] sm:$0xff]
  %v50 = vld [vmem:[#allocation2 + $0x78] sm:$0xff]
  %v51 = vld [vmem:[%s0] sm:$0xf]
  %v52 = vld [vmem:[%s0 + $0x4] sm:$0xf]
  %v53 = vld [vmem:[%s0 + $0x8] sm:$0xf]
  %v54 = vld [vmem:[%s0 + $0xc] sm:$0xf]
  %v55 = vld [vmem:[%s0 + $0x10] sm:$0xf]
  %v56 = vld [vmem:[%s0 + $0x14] sm:$0xf]
  %v57 = vld [vmem:[%s0 + $0x18] sm:$0xf]
  %v58 = vld [vmem:[%s0 + $0x1c] sm:$0xf]
  %v59 = vld [vmem:[%s0 + $0x20] sm:$0xf]
  %v60 = vld [vmem:[%s0 + $0x24] sm:$0xf]
  %v61 = vld [vmem:[%s0 + $0x28] sm:$0xf]
  %v62 = vld [vmem:[%s0 + $0x2c] sm:$0xf]
  %v63 = vld [vmem:[%s0 + $0x30] sm:$0xf]
  %v64 = vld [vmem:[%s0 + $0x34] sm:$0xf]
  %v65 = vld [vmem:[%s0 + $0x38] sm:$0xf]
  %v66 = vld [vmem:[%s0 + $0x3c] sm:$0xf]
  %v67 = vld [vmem:[%s1] sm:$0xf]
  %v68 = vld [vmem:[%s1 + $0x4] sm:$0xf]
  %v69 = vld [vmem:[%s1 + $0x8] sm:$0xf]
  %v70 = vld [vmem:[%s1 + $0xc] sm:$0xf]
  %v71 = vld [vmem:[%s1 + $0x10] sm:$0xf]
  %v72 = vld [vmem:[%s1 + $0x14] sm:$0xf]
  %v73 = vld [vmem:[%s1 + $0x18] sm:$0xf]
  %v74 = vld [vmem:[%s1 + $0x1c] sm:$0xf]
  %v75 = vld [vmem:[%s1 + $0x20] sm:$0xf]
  %v76 = vld [vmem:[%s1 + $0x24] sm:$0xf]
  %v77 = vld [vmem:[%s1 + $0x28] sm:$0xf]
  %v78 = vld [vmem:[%s1 + $0x2c] sm:$0xf]
  %v79 = vld [vmem:[%s1 + $0x30] sm:$0xf]
  %v80 = vld [vmem:[%s1 + $0x34] sm:$0xf]
  %v81 = vld [vmem:[%s1 + $0x38] sm:$0xf]
  %v82 = vld [vmem:[%s1 + $0x3c] sm:$0xf]
  %v99 = vunpack.c.l.b16 %v51
  %v100 = vunpack.c.l.b16 %v52
  %v101 = vunpack.c.l.b16 %v53
  %v102 = vunpack.c.l.b16 %v54
  %v103 = vunpack.c.l.b16 %v55
  %v104 = vunpack.c.l.b16 %v56
  %v105 = vunpack.c.l.b16 %v57
  %v106 = vunpack.c.l.b16 %v58
  %v107 = vunpack.c.l.b16 %v59
  %v108 = vunpack.c.l.b16 %v60
  %v109 = vunpack.c.l.b16 %v61
  %v110 = vunpack.c.l.b16 %v62
  %v111 = vunpack.c.l.b16 %v63
  %v112 = vunpack.c.l.b16 %v64
  %v113 = vunpack.c.l.b16 %v65
  %v114 = vunpack.c.l.b16 %v66
  %v115 = vpack.c.b16 %v100, %v99
  %v116 = vpack.c.b16 %v102, %v101
  %v117 = vpack.c.b16 %v104, %v103
  %v118 = vpack.c.b16 %v106, %v105
  %v119 = vpack.c.b16 %v108, %v107
  %v120 = vpack.c.b16 %v110, %v109
  %v121 = vpack.c.b16 %v112, %v111
  %v122 = vpack.c.b16 %v114, %v113
  %v147 = vunpack.c.l.b16 %v67
  %v148 = vunpack.c.l.b16 %v68
  %v149 = vunpack.c.l.b16 %v69
  %v150 = vunpack.c.l.b16 %v70
  %v151 = vunpack.c.l.b16 %v71
  %v152 = vunpack.c.l.b16 %v72
  %v153 = vunpack.c.l.b16 %v73
  %v154 = vunpack.c.l.b16 %v74
  %v155 = vunpack.c.l.b16 %v75
  %v156 = vunpack.c.l.b16 %v76
  %v157 = vunpack.c.l.b16 %v77
  %v158 = vunpack.c.l.b16 %v78
  %v159 = vunpack.c.l.b16 %v79
  %v160 = vunpack.c.l.b16 %v80
  %v161 = vunpack.c.l.b16 %v81
  %v162 = vunpack.c.l.b16 %v82
  %v163 = vpack.c.b16 %v148, %v147
  %v164 = vpack.c.b16 %v150, %v149
  %v165 = vpack.c.b16 %v152, %v151
  %v166 = vpack.c.b16 %v154, %v153
  %v167 = vpack.c.b16 %v156, %v155
  %v168 = vpack.c.b16 %v158, %v157
  %v169 = vpack.c.b16 %v160, %v159
  %v170 = vpack.c.b16 %v162, %v161
  %179 = vmatprep.subr.bf16.mxu0 0
  %180 = vmatpush1.bf16.msra.mxu0 %v163
  %181 = vmatprep.subr.bf16.mxu0 0
  %182 = vmatpush1.bf16.msra.mxu0 %v164
  %183 = vmatprep.subr.bf16.mxu0 0
  %184 = vmatpush1.bf16.msra.mxu0 %v165
  %185 = vmatprep.subr.bf16.mxu0 0
  %186 = vmatpush1.bf16.msra.mxu0 %v166
  %187 = vmatprep.subr.bf16.mxu0 0
  %188 = vmatpush1.bf16.msra.mxu0 %v167
  %189 = vmatprep.subr.bf16.mxu0 0
  %190 = vmatpush1.bf16.msra.mxu0 %v168
  %191 = vmatprep.subr.bf16.mxu0 0
  %192 = vmatpush1.bf16.msra.mxu0 %v169
  %193 = vmatprep.subr.bf16.mxu0 0
  %194 = vmatpush1.bf16.msra.mxu0 %v170
  %195 = vmatprep.subr.bf16.mxu0 0
  %196 = vmatpush1.bf16.msra.mxu0 0
  %197 = vmatprep.subr.bf16.mxu0 0
  %198 = vmatpush1.bf16.msra.mxu0 0
  %199 = vmatprep.subr.bf16.mxu0 0
  %200 = vmatpush1.bf16.msra.mxu0 0
  %201 = vmatprep.subr.bf16.mxu0 0
  %202 = vmatpush1.bf16.msra.mxu0 0
  %203 = vmatprep.subr.bf16.mxu0 0
  %204 = vmatpush1.bf16.msra.mxu0 0
  %205 = vmatprep.subr.bf16.mxu0 0
  %206 = vmatpush1.bf16.msra.mxu0 0
  %207 = vmatprep.subr.bf16.mxu0 0
  %208 = vmatpush1.bf16.msra.mxu0 0
  %209 = vmatprep.subr.bf16.mxu0 0
  %210 = vmatpush1.bf16.msra.mxu0 0
  %211 = vmatprep.mubr.bf16.mxu0 0
  %212 = vmatmul.mubr.bf16.gmra.mrb[0].mxu0 %v115
  %v213 = vpop.f32.mrb[0].mxu0
  %v214 = vadd.f32 0.0, %v213
  %v215 = vpop.f32.mrb[0].mxu0
  %v216 = vpop.f32.mrb[0].mxu0
  %v217 = vadd.f32 0.0, %v216
  %v218 = vpop.f32.mrb[0].mxu0
  %219 = vmatprep.mubr.bf16.mxu0 0
  %220 = vmatmul.mubr.bf16.gmra.mrb[0].mxu0 %v116
  %v221 = vpop.f32.mrb[0].mxu0
  %v222 = vadd.f32 0.0, %v221
  %v223 = vpop.f32.mrb[0].mxu0
  %v224 = vpop.f32.mrb[0].mxu0
  %v225 = vadd.f32 0.0, %v224
  %v226 = vpop.f32.mrb[0].mxu0
  %227 = vmatprep.mubr.bf16.mxu0 0
  %228 = vmatmul.mubr.bf16.gmra.mrb[0].mxu0 %v117
  %v229 = vpop.f32.mrb[0].mxu0
  %v230 = vadd.f32 0.0, %v229
  %v231 = vpop.f32.mrb[0].mxu0
  %v232 = vpop.f32.mrb[0].mxu0
  %v233 = vadd.f32 0.0, %v232
  %v234 = vpop.f32.mrb[0].mxu0
  %235 = vmatprep.mubr.bf16.mxu0 0
  %236 = vmatmul.mubr.bf16.gmra.mrb[0].mxu0 %v118
  %v237 = vpop.f32.mrb[0].mxu0
  %v238 = vadd.f32 0.0, %v237
  %v239 = vpop.f32.mrb[0].mxu0
  %v240 = vpop.f32.mrb[0].mxu0
  %v241 = vadd.f32 0.0, %v240
  %v242 = vpop.f32.mrb[0].mxu0
  %243 = vmatprep.mubr.bf16.mxu0 0
  %244 = vmatmul.mubr.bf16.gmra.mrb[0].mxu0 %v119
  %v245 = vpop.f32.mrb[0].mxu0
  %v246 = vadd.f32 0.0, %v245
  %v247 = vpop.f32.mrb[0].mxu0
  %v248 = vpop.f32.mrb[0].mxu0
  %v249 = vadd.f32 0.0, %v248
  %v250 = vpop.f32.mrb[0].mxu0
  %251 = vmatprep.mubr.bf16.mxu0 0
  %252 = vmatmul.mubr.bf16.gmra.mrb[0].mxu0 %v120
  %v253 = vpop.f32.mrb[0].mxu0
  %v254 = vadd.f32 0.0, %v253
  %v255 = vpop.f32.mrb[0].mxu0
  %v256 = vpop.f32.mrb[0].mxu0
  %v257 = vadd.f32 0.0, %v256
  %v258 = vpop.f32.mrb[0].mxu0
  %259 = vmatprep.mubr.bf16.mxu0 0
  %260 = vmatmul.mubr.bf16.gmra.mrb[0].mxu0 %v121
  %v261 = vpop.f32.mrb[0].mxu0
  %v262 = vadd.f32 0.0, %v261
  %v263 = vpop.f32.mrb[0].mxu0
  %v264 = vpop.f32.mrb[0].mxu0
  %v265 = vadd.f32 0.0, %v264
  %v266 = vpop.f32.mrb[0].mxu0
  %267 = vmatprep.mubr.bf16.mxu0 0
  %268 = vmatmul.mubr.bf16.gmra.mrb[0].mxu0 %v122
  %v269 = vpop.f32.mrb[0].mxu0
  %v270 = vadd.f32 0.0, %v269
  %v271 = vpop.f32.mrb[0].mxu0
  %v272 = vpop.f32.mrb[0].mxu0
  %v273 = vadd.f32 0.0, %v272
  %v274 = vpop.f32.mrb[0].mxu0
  %275 = vdwg.mxu0
  %v276 = vadd.f32 %v35, %v214
  %v277 = vadd.f32 %v36, %v217
  %v278 = vadd.f32 %v37, %v222
  %v279 = vadd.f32 %v38, %v225
  %v280 = vadd.f32 %v39, %v230
  %v281 = vadd.f32 %v40, %v233
  %v282 = vadd.f32 %v41, %v238
  %v283 = vadd.f32 %v42, %v241
  %v284 = vadd.f32 %v43, %v246
  %v285 = vadd.f32 %v44, %v249
  %v286 = vadd.f32 %v45, %v254
  %v287 = vadd.f32 %v46, %v257
  %v288 = vadd.f32 %v47, %v262
  %v289 = vadd.f32 %v48, %v265
  %v290 = vadd.f32 %v49, %v270
  %v291 = vadd.f32 %v50, %v273
  %292 = vst [vmem:[#allocation2] sm:$0xff] %v276
  %293 = vst [vmem:[#allocation2 + $0x8] sm:$0xff] %v277
  %294 = vst [vmem:[#allocation2 + $0x10] sm:$0xff] %v278
  %295 = vst [vmem:[#allocation2 + $0x18] sm:$0xff] %v279
  %296 = vst [vmem:[#allocation2 + $0x20] sm:$0xff] %v280
  %297 = vst [vmem:[#allocation2 + $0x28] sm:$0xff] %v281
  %298 = vst [vmem:[#allocation2 + $0x30] sm:$0xff] %v282
  %299 = vst [vmem:[#allocation2 + $0x38] sm:$0xff] %v283
  %300 = vst [vmem:[#allocation2 + $0x40] sm:$0xff] %v284
  %301 = vst [vmem:[#allocation2 + $0x48] sm:$0xff] %v285
  %302 = vst [vmem:[#allocation2 + $0x50] sm:$0xff] %v286
  %303 = vst [vmem:[#allocation2 + $0x58] sm:$0xff] %v287
  %304 = vst [vmem:[#allocation2 + $0x60] sm:$0xff] %v288
  %305 = vst [vmem:[#allocation2 + $0x68] sm:$0xff] %v289
  %306 = vst [vmem:[#allocation2 + $0x70] sm:$0xff] %v290
  %307 = vst [vmem:[#allocation2 + $0x78] sm:$0xff] %v291
  // Predicated region
  $region18: #{psenet_forward.24} parent=0 // pred_check
    %p308 = pneg %p15
  $region19: #{psenet_forward.24} parent=0 // pred_check_branch
    %310 = sbr.rel (%p308) target = $region21
  $region20: #{psenet_forward.24} parent=0 // pred_region
    %v311 = vld [vmem:[#allocation2] sm:$0xff]
    %v312 = vld [vmem:[#allocation2 + $0x8] sm:$0xff]
    %v313 = vld [vmem:[#allocation2 + $0x10] sm:$0xff]
    %v314 = vld [vmem:[#allocation2 + $0x18] sm:$0xff]
    %v315 = vld [vmem:[#allocation2 + $0x20] sm:$0xff]
    %v316 = vld [vmem:[#allocation2 + $0x28] sm:$0xff]
    %v317 = vld [vmem:[#allocation2 + $0x30] sm:$0xff]
    %v318 = vld [vmem:[#allocation2 + $0x38] sm:$0xff]
    %v319 = vld [vmem:[#allocation2 + $0x40] sm:$0xff]
    %v320 = vld [vmem:[#allocation2 + $0x48] sm:$0xff]
    %v321 = vld [vmem:[#allocation2 + $0x50] sm:$0xff]
    %v322 = vld [vmem:[#allocation2 + $0x58] sm:$0xff]
    %v323 = vld [vmem:[#allocation2 + $0x60] sm:$0xff]
    %v324 = vld [vmem:[#allocation2 + $0x68] sm:$0xff]
    %v325 = vld [vmem:[#allocation2 + $0x70] sm:$0xff]
    %v326 = vld [vmem:[#allocation2 + $0x78] sm:$0xff]
    %v327 = vld [vmem:[%s2] sm:$0x1]
    %v329 = vlaneseq
    %v330 = vshrl.u32 %v329, 7
    %v331 = vsub.s32 0, %v330
    %v332 = vrot.slane %v327, %v331
    %v334 = vadd.f32 %v311, %v332
    %v335 = vadd.f32 %v312, %v332
    %v336 = vadd.f32 %v313, %v332
    %v337 = vadd.f32 %v314, %v332
    %v338 = vadd.f32 %v315, %v332
    %v339 = vadd.f32 %v316, %v332
    %v340 = vadd.f32 %v317, %v332
    %v341 = vadd.f32 %v318, %v332
    %v342 = vadd.f32 %v319, %v332
    %v343 = vadd.f32 %v320, %v332
    %v344 = vadd.f32 %v321, %v332
    %v345 = vadd.f32 %v322, %v332
    %v346 = vadd.f32 %v323, %v332
    %v347 = vadd.f32 %v324, %v332
    %v348 = vadd.f32 %v325, %v332
    %v349 = vadd.f32 %v326, %v332
    %v350 = vmax.f32 %v334, 0.0
    %v351 = vmax.f32 %v335, 0.0
    %v352 = vmax.f32 %v336, 0.0
    %v353 = vmax.f32 %v337, 0.0
    %v354 = vmax.f32 %v338, 0.0
    %v355 = vmax.f32 %v339, 0.0
    %v356 = vmax.f32 %v340, 0.0
    %v357 = vmax.f32 %v341, 0.0
    %v358 = vmax.f32 %v342, 0.0
    %v359 = vmax.f32 %v343, 0.0
    %v360 = vmax.f32 %v344, 0.0
    %v361 = vmax.f32 %v345, 0.0
    %v362 = vmax.f32 %v346, 0.0
    %v363 = vmax.f32 %v347, 0.0
    %v364 = vmax.f32 %v348, 0.0
    %v365 = vmax.f32 %v349, 0.0
    %v366 = vpack.c.bf16 %v351, %v350
    %v367 = vpack.c.bf16 %v353, %v352
    %v368 = vpack.c.bf16 %v355, %v354
    %v369 = vpack.c.bf16 %v357, %v356
    %v370 = vpack.c.bf16 %v359, %v358
    %v371 = vpack.c.bf16 %v361, %v360
    %v372 = vpack.c.bf16 %v363, %v362
    %v373 = vpack.c.bf16 %v365, %v364
    %v382 = vunpack.c.l.b16 %v366
    %v383 = vunpack.c.h.b16 %v366
    %v384 = vunpack.c.l.b16 %v367
    %v385 = vunpack.c.h.b16 %v367
    %v386 = vunpack.c.l.b16 %v368
    %v387 = vunpack.c.h.b16 %v368
    %v388 = vunpack.c.l.b16 %v369
    %v389 = vunpack.c.h.b16 %v369
    %v390 = vunpack.c.l.b16 %v370
    %v391 = vunpack.c.h.b16 %v370
    %v392 = vunpack.c.l.b16 %v371
    %v393 = vunpack.c.h.b16 %v371
    %v394 = vunpack.c.l.b16 %v372
    %v395 = vunpack.c.h.b16 %v372
    %v396 = vunpack.c.l.b16 %v373
    %v397 = vunpack.c.h.b16 %v373
    %v398 = vpack.c.b16 %v382, %v382
    %v399 = vpack.c.b16 %v383, %v383
    %v400 = vpack.c.b16 %v384, %v384
    %v401 = vpack.c.b16 %v385, %v385
    %v402 = vpack.c.b16 %v386, %v386
    %v403 = vpack.c.b16 %v387, %v387
    %v404 = vpack.c.b16 %v388, %v388
    %v405 = vpack.c.b16 %v389, %v389
    %v406 = vpack.c.b16 %v390, %v390
    %v407 = vpack.c.b16 %v391, %v391
    %v408 = vpack.c.b16 %v392, %v392
    %v409 = vpack.c.b16 %v393, %v393
    %v410 = vpack.c.b16 %v394, %v394
    %v411 = vpack.c.b16 %v395, %v395
    %v412 = vpack.c.b16 %v396, %v396
    %v413 = vpack.c.b16 %v397, %v397
    %430 = vst [vmem:[%s3] sm:$0xf] %v398
    %431 = vst [vmem:[%s3 + $0x4] sm:$0xf] %v399
    %432 = vst [vmem:[%s3 + $0x8] sm:$0xf] %v400
    %433 = vst [vmem:[%s3 + $0xc] sm:$0xf] %v401
    %434 = vst [vmem:[%s3 + $0x10] sm:$0xf] %v402
    %435 = vst [vmem:[%s3 + $0x14] sm:$0xf] %v403
    %436 = vst [vmem:[%s3 + $0x18] sm:$0xf] %v404
    %437 = vst [vmem:[%s3 + $0x1c] sm:$0xf] %v405
    %438 = vst [vmem:[%s3 + $0x20] sm:$0xf] %v406
    %439 = vst [vmem:[%s3 + $0x24] sm:$0xf] %v407
    %440 = vst [vmem:[%s3 + $0x28] sm:$0xf] %v408
    %441 = vst [vmem:[%s3 + $0x2c] sm:$0xf] %v409
    %442 = vst [vmem:[%s3 + $0x30] sm:$0xf] %v410
    %443 = vst [vmem:[%s3 + $0x34] sm:$0xf] %v411
    %444 = vst [vmem:[%s3 + $0x38] sm:$0xf] %v412
    %445 = vst [vmem:[%s3 + $0x3c] sm:$0xf] %v413
  $region21: #{psenet_forward.24} parent=0 // pred_fallthru
    _
  // Predicated region
  $region22: #{psenet_forward.24} parent=0 // pred_check
    _
  $region23: #{psenet_forward.24} parent=0 // pred_check_branch
    %447 = sbr.rel (0) target = $region25
  $region24: #{psenet_forward.24} parent=0 // pred_region
    _
  $region25: #{psenet_forward.24} parent=0 // pred_fallthru
    _
  // Predicated region
  $region26: #{psenet_forward.24} parent=0 // pred_check
    _
  $region27: #{psenet_forward.24} parent=0 // pred_check_branch
    %449 = sbr.rel (0) target = $region29
  $region28: #{psenet_forward.24} parent=0 // pred_region
    _
  $region29: #{psenet_forward.24} parent=0 // pred_fallthru
    _

// kernel: psenet_forward.25
$region0: #{psenet_forward.25}
  #allocation0 [shape = 'u32[]', space=smem, size = 0x4, offset = 0x4, fixed_abs, tag = 'smem constant byte address 0x4 - core index']
  #allocation1 [shape = 'u32[144,128]{1,0:T(1,128)}', space=vmem, size = 0x12000, scoped, tag = 'internal scratch']
  #allocation2 [shape = 'f32[32,128]{1,0:T(8,128)}', space=vmem, size = 0x4000, scoped, tag = 'scratch operand']
  %s0 = inlined_call_operand.vmem [shape: bf16[32,256], index: 0, kind: input, shape index: {}]
  %s1 = inlined_call_operand.vmem [shape: bf16[256,128], index: 1, kind: input, shape index: {}]
  %s2 = inlined_call_operand.vmem [shape: f32[1,128], index: 2, kind: input, shape index: {}]
  %s3 = inlined_call_operand.vmem [shape: bf16[32,128], index: 3, kind: output, shape index: {}]
  %s4 = sld [smem:[#allocation0]]
  $region30: #{psenet_forward.25} parent=0
    _
  %s6 = ssub.s32 1, %s4
  %s7 = scalar_select 0, %s6, %s4
  // Predicated region
  $region2: #{psenet_forward.25} parent=0 // pred_check
    _
  $region3: #{psenet_forward.25} parent=0 // pred_check_branch
    %9 = sbr.rel (0) target = $region5
  $region4: #{psenet_forward.25} parent=0 // pred_region
    _
  $region5: #{psenet_forward.25} parent=0 // pred_fallthru
    _
  // Predicated region
  $region6: #{psenet_forward.25} parent=0 // pred_check
    _
  $region7: #{psenet_forward.25} parent=0 // pred_check_branch
    %11 = sbr.rel (0) target = $region9
  $region8: #{psenet_forward.25} parent=0 // pred_region
    _
  $region9: #{psenet_forward.25} parent=0 // pred_fallthru
    _
  // Predicated region
  $region10: #{psenet_forward.25} parent=0 // pred_check
    _
  $region11: #{psenet_forward.25} parent=0 // pred_check_branch
    %13 = sbr.rel (0) target = $region13
  $region12: #{psenet_forward.25} parent=0 // pred_region
    _
  $region13: #{psenet_forward.25} parent=0 // pred_fallthru
    _
  %p15 = scmp.eq.s32.totalorder 0, 0
  // Predicated region
  $region14: #{psenet_forward.25} parent=0 // pred_check
    %p16 = pneg %p15
  $region15: #{psenet_forward.25} parent=0 // pred_check_branch
    %18 = sbr.rel (%p16) target = $region17
  $region16: #{psenet_forward.25} parent=0 // pred_region
    %19 = vst [vmem:[#allocation2] sm:$0xff] 0.0
    %20 = vst [vmem:[#allocation2 + $0x8] sm:$0xff] 0.0
    %21 = vst [vmem:[#allocation2 + $0x10] sm:$0xff] 0.0
    %22 = vst [vmem:[#allocation2 + $0x18] sm:$0xff] 0.0
  $region17: #{psenet_forward.25} parent=0 // pred_fallthru
    _
  %v23 = vld [vmem:[#allocation2] sm:$0xff]
  %v24 = vld [vmem:[#allocation2 + $0x8] sm:$0xff]
  %v25 = vld [vmem:[#allocation2 + $0x10] sm:$0xff]
  %v26 = vld [vmem:[#allocation2 + $0x18] sm:$0xff]
  %v27 = vld [vmem:[%s0] sm:$0xff]
  %v28 = vld [vmem:[%s0 + $0x8] sm:$0xff]
  %v29 = vld [vmem:[%s0 + $0x10] sm:$0xff]
  %v30 = vld [vmem:[%s0 + $0x18] sm:$0xff]
  %v31 = vld [vmem:[%s1] sm:$0xf]
  %v32 = vld [vmem:[%s1 + $0x4] sm:$0xf]
  %v33 = vld [vmem:[%s1 + $0x8] sm:$0xf]
  %v34 = vld [vmem:[%s1 + $0xc] sm:$0xf]
  %v35 = vld [vmem:[%s1 + $0x10] sm:$0xf]
  %v36 = vld [vmem:[%s1 + $0x14] sm:$0xf]
  %v37 = vld [vmem:[%s1 + $0x18] sm:$0xf]
  %v38 = vld [vmem:[%s1 + $0x1c] sm:$0xf]
  %v39 = vld [vmem:[%s1 + $0x20] sm:$0xf]
  %v40 = vld [vmem:[%s1 + $0x24] sm:$0xf]
  %v41 = vld [vmem:[%s1 + $0x28] sm:$0xf]
  %v42 = vld [vmem:[%s1 + $0x2c] sm:$0xf]
  %v43 = vld [vmem:[%s1 + $0x30] sm:$0xf]
  %v44 = vld [vmem:[%s1 + $0x34] sm:$0xf]
  %v45 = vld [vmem:[%s1 + $0x38] sm:$0xf]
  %v46 = vld [vmem:[%s1 + $0x3c] sm:$0xf]
  %v47 = vld [vmem:[%s1 + $0x40] sm:$0xf]
  %v48 = vld [vmem:[%s1 + $0x44] sm:$0xf]
  %v49 = vld [vmem:[%s1 + $0x48] sm:$0xf]
  %v50 = vld [vmem:[%s1 + $0x4c] sm:$0xf]
  %v51 = vld [vmem:[%s1 + $0x50] sm:$0xf]
  %v52 = vld [vmem:[%s1 + $0x54] sm:$0xf]
  %v53 = vld [vmem:[%s1 + $0x58] sm:$0xf]
  %v54 = vld [vmem:[%s1 + $0x5c] sm:$0xf]
  %v55 = vld [vmem:[%s1 + $0x60] sm:$0xf]
  %v56 = vld [vmem:[%s1 + $0x64] sm:$0xf]
  %v57 = vld [vmem:[%s1 + $0x68] sm:$0xf]
  %v58 = vld [vmem:[%s1 + $0x6c] sm:$0xf]
  %v59 = vld [vmem:[%s1 + $0x70] sm:$0xf]
  %v60 = vld [vmem:[%s1 + $0x74] sm:$0xf]
  %v61 = vld [vmem:[%s1 + $0x78] sm:$0xf]
  %v62 = vld [vmem:[%s1 + $0x7c] sm:$0xf]
  %v67 = vunpack.c.l.b16 %v27
  %v68 = vunpack.c.h.b16 %v27
  %v69 = vunpack.c.l.b16 %v28
  %v70 = vunpack.c.h.b16 %v28
  %v71 = vunpack.c.l.b16 %v29
  %v72 = vunpack.c.h.b16 %v29
  %v73 = vunpack.c.l.b16 %v30
  %v74 = vunpack.c.h.b16 %v30
  %v75 = vpack.c.b16 %v69, %v67
  %v76 = vpack.c.b16 %v70, %v68
  %v77 = vpack.c.b16 %v73, %v71
  %v78 = vpack.c.b16 %v74, %v72
  %v115 = vunpack.c.l.b16 %v31
  %v116 = vunpack.c.l.b16 %v32
  %v117 = vunpack.c.l.b16 %v33
  %v118 = vunpack.c.l.b16 %v34
  %v119 = vunpack.c.l.b16 %v35
  %v120 = vunpack.c.l.b16 %v36
  %v121 = vunpack.c.l.b16 %v37
  %v122 = vunpack.c.l.b16 %v38
  %v123 = vunpack.c.l.b16 %v39
  %v124 = vunpack.c.l.b16 %v40
  %v125 = vunpack.c.l.b16 %v41
  %v126 = vunpack.c.l.b16 %v42
  %v127 = vunpack.c.l.b16 %v43
  %v128 = vunpack.c.l.b16 %v44
  %v129 = vunpack.c.l.b16 %v45
  %v130 = vunpack.c.l.b16 %v46
  %v131 = vunpack.c.l.b16 %v47
  %v132 = vunpack.c.l.b16 %v48
  %v133 = vunpack.c.l.b16 %v49
  %v134 = vunpack.c.l.b16 %v50
  %v135 = vunpack.c.l.b16 %v51
  %v136 = vunpack.c.l.b16 %v52
  %v137 = vunpack.c.l.b16 %v53
  %v138 = vunpack.c.l.b16 %v54
  %v139 = vunpack.c.l.b16 %v55
  %v140 = vunpack.c.l.b16 %v56
  %v141 = vunpack.c.l.b16 %v57
  %v142 = vunpack.c.l.b16 %v58
  %v143 = vunpack.c.l.b16 %v59
  %v144 = vunpack.c.l.b16 %v60
  %v145 = vunpack.c.l.b16 %v61
  %v146 = vunpack.c.l.b16 %v62
  %v147 = vpack.c.b16 %v116, %v115
  %v148 = vpack.c.b16 %v118, %v117
  %v149 = vpack.c.b16 %v120, %v119
  %v150 = vpack.c.b16 %v122, %v121
  %v151 = vpack.c.b16 %v124, %v123
  %v152 = vpack.c.b16 %v126, %v125
  %v153 = vpack.c.b16 %v128, %v127
  %v154 = vpack.c.b16 %v130, %v129
  %v155 = vpack.c.b16 %v132, %v131
  %v156 = vpack.c.b16 %v134, %v133
  %v157 = vpack.c.b16 %v136, %v135
  %v158 = vpack.c.b16 %v138, %v137
  %v159 = vpack.c.b16 %v140, %v139
  %v160 = vpack.c.b16 %v142, %v141
  %v161 = vpack.c.b16 %v144, %v143
  %v162 = vpack.c.b16 %v146, %v145
  %179 = vmatprep.subr.bf16.mxu0 0
  %180 = vmatpush1.bf16.msra.mxu0 %v147
  %181 = vmatprep.subr.bf16.mxu0 0
  %182 = vmatpush1.bf16.msra.mxu0 %v148
  %183 = vmatprep.subr.bf16.mxu0 0
  %184 = vmatpush1.bf16.msra.mxu0 %v149
  %185 = vmatprep.subr.bf16.mxu0 0
  %186 = vmatpush1.bf16.msra.mxu0 %v150
  %187 = vmatprep.subr.bf16.mxu0 0
  %188 = vmatpush1.bf16.msra.mxu0 %v151
  %189 = vmatprep.subr.bf16.mxu0 0
  %190 = vmatpush1.bf16.msra.mxu0 %v152
  %191 = vmatprep.subr.bf16.mxu0 0
  %192 = vmatpush1.bf16.msra.mxu0 %v153
  %193 = vmatprep.subr.bf16.mxu0 0
  %194 = vmatpush1.bf16.msra.mxu0 %v154
  %195 = vmatprep.subr.bf16.mxu0 0
  %196 = vmatpush1.bf16.msra.mxu0 %v155
  %197 = vmatprep.subr.bf16.mxu0 0
  %198 = vmatpush1.bf16.msra.mxu0 %v156
  %199 = vmatprep.subr.bf16.mxu0 0
  %200 = vmatpush1.bf16.msra.mxu0 %v157
  %201 = vmatprep.subr.bf16.mxu0 0
  %202 = vmatpush1.bf16.msra.mxu0 %v158
  %203 = vmatprep.subr.bf16.mxu0 0
  %204 = vmatpush1.bf16.msra.mxu0 %v159
  %205 = vmatprep.subr.bf16.mxu0 0
  %206 = vmatpush1.bf16.msra.mxu0 %v160
  %207 = vmatprep.subr.bf16.mxu0 0
  %208 = vmatpush1.bf16.msra.mxu0 %v161
  %209 = vmatprep.subr.bf16.mxu0 0
  %210 = vmatpush1.bf16.msra.mxu0 %v162
  %211 = vmatprep.mubr.bf16.mxu0 %v76
  %212 = vmatmul.mubr.bf16.gmra.mrb[0].mxu0 %v75
  %v213 = vpop.f32.mrb[0].mxu0
  %v214 = vadd.f32 0.0, %v213
  %v215 = vpop.f32.mrb[0].mxu0
  %v216 = vpop.f32.mrb[0].mxu0
  %v217 = vadd.f32 0.0, %v216
  %v218 = vpop.f32.mrb[0].mxu0
  %219 = vmatprep.mubr.bf16.mxu0 %v78
  %220 = vmatmul.mubr.bf16.gmra.mrb[0].mxu0 %v77
  %v221 = vpop.f32.mrb[0].mxu0
  %v222 = vadd.f32 0.0, %v221
  %v223 = vpop.f32.mrb[0].mxu0
  %v224 = vpop.f32.mrb[0].mxu0
  %v225 = vadd.f32 0.0, %v224
  %v226 = vpop.f32.mrb[0].mxu0
  %227 = vdwg.mxu0
  %v228 = vadd.f32 %v23, %v214
  %v229 = vadd.f32 %v24, %v217
  %v230 = vadd.f32 %v25, %v222
  %v231 = vadd.f32 %v26, %v225
  %232 = vst [vmem:[#allocation2] sm:$0xff] %v228
  %233 = vst [vmem:[#allocation2 + $0x8] sm:$0xff] %v229
  %234 = vst [vmem:[#allocation2 + $0x10] sm:$0xff] %v230
  %235 = vst [vmem:[#allocation2 + $0x18] sm:$0xff] %v231
  // Predicated region
  $region18: #{psenet_forward.25} parent=0 // pred_check
    %p236 = pneg %p15
  $region19: #{psenet_forward.25} parent=0 // pred_check_branch
    %238 = sbr.rel (%p236) target = $region21
  $region20: #{psenet_forward.25} parent=0 // pred_region
    %v239 = vld [vmem:[#allocation2] sm:$0xff]
    %v240 = vld [vmem:[#allocation2 + $0x8] sm:$0xff]
    %v241 = vld [vmem:[#allocation2 + $0x10] sm:$0xff]
    %v242 = vld [vmem:[#allocation2 + $0x18] sm:$0xff]
    %v243 = vld [vmem:[%s2] sm:$0x1]
    %v245 = vlaneseq
    %v246 = vshrl.u32 %v245, 7
    %v247 = vsub.s32 0, %v246
    %v248 = vrot.slane %v243, %v247
    %v250 = vadd.f32 %v239, %v248
    %v251 = vadd.f32 %v240, %v248
    %v252 = vadd.f32 %v241, %v248
    %v253 = vadd.f32 %v242, %v248
    %v254 = vmax.f32 %v250, 0.0
    %v255 = vmax.f32 %v251, 0.0
    %v256 = vmax.f32 %v252, 0.0
    %v257 = vmax.f32 %v253, 0.0
    %v258 = vpack.c.bf16 %v255, %v254
    %v259 = vpack.c.bf16 %v257, %v256
    %v262 = vunpack.c.l.b16 %v258
    %v263 = vunpack.c.h.b16 %v258
    %v264 = vunpack.c.l.b16 %v259
    %v265 = vunpack.c.h.b16 %v259
    %v266 = vpack.c.b16 %v262, %v262
    %v267 = vpack.c.b16 %v263, %v263
    %v268 = vpack.c.b16 %v264, %v264
    %v269 = vpack.c.b16 %v265, %v265
    %274 = vst [vmem:[%s3] sm:$0xf] %v266
    %275 = vst [vmem:[%s3 + $0x4] sm:$0xf] %v267
    %276 = vst [vmem:[%s3 + $0x8] sm:$0xf] %v268
    %277 = vst [vmem:[%s3 + $0xc] sm:$0xf] %v269
  $region21: #{psenet_forward.25} parent=0 // pred_fallthru
    _
  // Predicated region
  $region22: #{psenet_forward.25} parent=0 // pred_check
    _
  $region23: #{psenet_forward.25} parent=0 // pred_check_branch
    %279 = sbr.rel (0) target = $region25
  $region24: #{psenet_forward.25} parent=0 // pred_region
    _
  $region25: #{psenet_forward.25} parent=0 // pred_fallthru
    _
  // Predicated region
  $region26: #{psenet_forward.25} parent=0 // pred_check
    _
  $region27: #{psenet_forward.25} parent=0 // pred_check_branch
    %281 = sbr.rel (0) target = $region29
  $region28: #{psenet_forward.25} parent=0 // pred_region
    _
  $region29: #{psenet_forward.25} parent=0 // pred_fallthru
    _

// kernel: psenet_forward.26
$region0: #{psenet_forward.26}
  #allocation0 [shape = 'u32[]', space=smem, size = 0x4, offset = 0x4, fixed_abs, tag = 'smem constant byte address 0x4 - core index']
  #allocation1 [shape = 'u32[144,128]{1,0:T(1,128)}', space=vmem, size = 0x12000, scoped, tag = 'internal scratch']
  #allocation2 [shape = 'f32[8,128]{1,0:T(8,128)}', space=vmem, size = 0x1000, scoped, tag = 'scratch operand']
  %s0 = inlined_call_operand.vmem [shape: bf16[8,384], index: 0, kind: input, shape index: {}]
  %s1 = inlined_call_operand.vmem [shape: bf16[384,128], index: 1, kind: input, shape index: {}]
  %s2 = inlined_call_operand.vmem [shape: f32[1,128], index: 2, kind: input, shape index: {}]
  %s3 = inlined_call_operand.vmem [shape: bf16[8,128], index: 3, kind: output, shape index: {}]
  %s4 = sld [smem:[#allocation0]]
  $region30: #{psenet_forward.26} parent=0
    _
  %s6 = ssub.s32 1, %s4
  %s7 = scalar_select 0, %s6, %s4
  // Predicated region
  $region2: #{psenet_forward.26} parent=0 // pred_check
    _
  $region3: #{psenet_forward.26} parent=0 // pred_check_branch
    %9 = sbr.rel (0) target = $region5
  $region4: #{psenet_forward.26} parent=0 // pred_region
    _
  $region5: #{psenet_forward.26} parent=0 // pred_fallthru
    _
  // Predicated region
  $region6: #{psenet_forward.26} parent=0 // pred_check
    _
  $region7: #{psenet_forward.26} parent=0 // pred_check_branch
    %11 = sbr.rel (0) target = $region9
  $region8: #{psenet_forward.26} parent=0 // pred_region
    _
  $region9: #{psenet_forward.26} parent=0 // pred_fallthru
    _
  // Predicated region
  $region10: #{psenet_forward.26} parent=0 // pred_check
    _
  $region11: #{psenet_forward.26} parent=0 // pred_check_branch
    %13 = sbr.rel (0) target = $region13
  $region12: #{psenet_forward.26} parent=0 // pred_region
    _
  $region13: #{psenet_forward.26} parent=0 // pred_fallthru
    _
  %p15 = scmp.eq.s32.totalorder 0, 0
  // Predicated region
  $region14: #{psenet_forward.26} parent=0 // pred_check
    %p16 = pneg %p15
  $region15: #{psenet_forward.26} parent=0 // pred_check_branch
    %18 = sbr.rel (%p16) target = $region17
  $region16: #{psenet_forward.26} parent=0 // pred_region
    %19 = vst [vmem:[#allocation2] sm:$0xff] 0.0
  $region17: #{psenet_forward.26} parent=0 // pred_fallthru
    _
  %v20 = vld [vmem:[#allocation2] sm:$0xff]
  %v21 = vld [vmem:[%s0] sm:$0xff]
  %v22 = vld [vmem:[%s0 + $0x8] sm:$0xf]
  %v23 = vld [vmem:[%s1] sm:$0xf]
  %v24 = vld [vmem:[%s1 + $0x4] sm:$0xf]
  %v25 = vld [vmem:[%s1 + $0x8] sm:$0xf]
  %v26 = vld [vmem:[%s1 + $0xc] sm:$0xf]
  %v27 = vld [vmem:[%s1 + $0x10] sm:$0xf]
  %v28 = vld [vmem:[%s1 + $0x14] sm:$0xf]
  %v29 = vld [vmem:[%s1 + $0x18] sm:$0xf]
  %v30 = vld [vmem:[%s1 + $0x1c] sm:$0xf]
  %v31 = vld [vmem:[%s1 + $0x20] sm:$0xf]
  %v32 = vld [vmem:[%s1 + $0x24] sm:$0xf]
  %v33 = vld [vmem:[%s1 + $0x28] sm:$0xf]
  %v34 = vld [vmem:[%s1 + $0x2c] sm:$0xf]
  %v35 = vld [vmem:[%s1 + $0x30] sm:$0xf]
  %v36 = vld [vmem:[%s1 + $0x34] sm:$0xf]
  %v37 = vld [vmem:[%s1 + $0x38] sm:$0xf]
  %v38 = vld [vmem:[%s1 + $0x3c] sm:$0xf]
  %v39 = vld [vmem:[%s1 + $0x40] sm:$0xf]
  %v40 = vld [vmem:[%s1 + $0x44] sm:$0xf]
  %v41 = vld [vmem:[%s1 + $0x48] sm:$0xf]
  %v42 = vld [vmem:[%s1 + $0x4c] sm:$0xf]
  %v43 = vld [vmem:[%s1 + $0x50] sm:$0xf]
  %v44 = vld [vmem:[%s1 + $0x54] sm:$0xf]
  %v45 = vld [vmem:[%s1 + $0x58] sm:$0xf]
  %v46 = vld [vmem:[%s1 + $0x5c] sm:$0xf]
  %v47 = vld [vmem:[%s1 + $0x60] sm:$0xf]
  %v48 = vld [vmem:[%s1 + $0x64] sm:$0xf]
  %v49 = vld [vmem:[%s1 + $0x68] sm:$0xf]
  %v50 = vld [vmem:[%s1 + $0x6c] sm:$0xf]
  %v51 = vld [vmem:[%s1 + $0x70] sm:$0xf]
  %v52 = vld [vmem:[%s1 + $0x74] sm:$0xf]
  %v53 = vld [vmem:[%s1 + $0x78] sm:$0xf]
  %v54 = vld [vmem:[%s1 + $0x7c] sm:$0xf]
  %v55 = vld [vmem:[%s1 + $0x80] sm:$0xf]
  %v56 = vld [vmem:[%s1 + $0x84] sm:$0xf]
  %v57 = vld [vmem:[%s1 + $0x88] sm:$0xf]
  %v58 = vld [vmem:[%s1 + $0x8c] sm:$0xf]
  %v59 = vld [vmem:[%s1 + $0x90] sm:$0xf]
  %v60 = vld [vmem:[%s1 + $0x94] sm:$0xf]
  %v61 = vld [vmem:[%s1 + $0x98] sm:$0xf]
  %v62 = vld [vmem:[%s1 + $0x9c] sm:$0xf]
  %v63 = vld [vmem:[%s1 + $0xa0] sm:$0xf]
  %v64 = vld [vmem:[%s1 + $0xa4] sm:$0xf]
  %v65 = vld [vmem:[%s1 + $0xa8] sm:$0xf]
  %v66 = vld [vmem:[%s1 + $0xac] sm:$0xf]
  %v67 = vld [vmem:[%s1 + $0xb0] sm:$0xf]
  %v68 = vld [vmem:[%s1 + $0xb4] sm:$0xf]
  %v69 = vld [vmem:[%s1 + $0xb8] sm:$0xf]
  %v70 = vld [vmem:[%s1 + $0xbc] sm:$0xf]
  %v73 = vunpack.c.l.b16 %v21
  %v74 = vunpack.c.h.b16 %v21
  %v75 = vunpack.c.l.b16 %v22
  %v76 = vpack.c.b16 %v73, %v73
  %v77 = vpack.c.b16 %v74, %v74
  %v78 = vpack.c.b16 %v75, %v75
  %v130 = vunpack.c.l.b16 %v23
  %v131 = vunpack.c.l.b16 %v24
  %v132 = vunpack.c.l.b16 %v25
  %v133 = vunpack.c.l.b16 %v26
  %v134 = vunpack.c.l.b16 %v27
  %v135 = vunpack.c.l.b16 %v28
  %v136 = vunpack.c.l.b16 %v29
  %v137 = vunpack.c.l.b16 %v30
  %v138 = vunpack.c.l.b16 %v31
  %v139 = vunpack.c.l.b16 %v32
  %v140 = vunpack.c.l.b16 %v33
  %v141 = vunpack.c.l.b16 %v34
  %v142 = vunpack.c.l.b16 %v35
  %v143 = vunpack.c.l.b16 %v36
  %v144 = vunpack.c.l.b16 %v37
  %v145 = vunpack.c.l.b16 %v38
  %v146 = vunpack.c.l.b16 %v39
  %v147 = vunpack.c.l.b16 %v40
  %v148 = vunpack.c.l.b16 %v41
  %v149 = vunpack.c.l.b16 %v42
  %v150 = vunpack.c.l.b16 %v43
  %v151 = vunpack.c.l.b16 %v44
  %v152 = vunpack.c.l.b16 %v45
  %v153 = vunpack.c.l.b16 %v46
  %v154 = vunpack.c.l.b16 %v47
  %v155 = vunpack.c.l.b16 %v48
  %v156 = vunpack.c.l.b16 %v49
  %v157 = vunpack.c.l.b16 %v50
  %v158 = vunpack.c.l.b16 %v51
  %v159 = vunpack.c.l.b16 %v52
  %v160 = vunpack.c.l.b16 %v53
  %v161 = vunpack.c.l.b16 %v54
  %v162 = vunpack.c.l.b16 %v55
  %v163 = vunpack.c.l.b16 %v56
  %v164 = vunpack.c.l.b16 %v57
  %v165 = vunpack.c.l.b16 %v58
  %v166 = vunpack.c.l.b16 %v59
  %v167 = vunpack.c.l.b16 %v60
  %v168 = vunpack.c.l.b16 %v61
  %v169 = vunpack.c.l.b16 %v62
  %v170 = vunpack.c.l.b16 %v63
  %v171 = vunpack.c.l.b16 %v64
  %v172 = vunpack.c.l.b16 %v65
  %v173 = vunpack.c.l.b16 %v66
  %v174 = vunpack.c.l.b16 %v67
  %v175 = vunpack.c.l.b16 %v68
  %v176 = vunpack.c.l.b16 %v69
  %v177 = vunpack.c.l.b16 %v70
  %v178 = vpack.c.b16 %v131, %v130
  %v179 = vpack.c.b16 %v133, %v132
  %v180 = vpack.c.b16 %v135, %v134
  %v181 = vpack.c.b16 %v137, %v136
  %v182 = vpack.c.b16 %v139, %v138
  %v183 = vpack.c.b16 %v141, %v140
  %v184 = vpack.c.b16 %v143, %v142
  %v185 = vpack.c.b16 %v145, %v144
  %v186 = vpack.c.b16 %v147, %v146
  %v187 = vpack.c.b16 %v149, %v148
  %v188 = vpack.c.b16 %v151, %v150
  %v189 = vpack.c.b16 %v153, %v152
  %v190 = vpack.c.b16 %v155, %v154
  %v191 = vpack.c.b16 %v157, %v156
  %v192 = vpack.c.b16 %v159, %v158
  %v193 = vpack.c.b16 %v161, %v160
  %v194 = vpack.c.b16 %v163, %v162
  %v195 = vpack.c.b16 %v165, %v164
  %v196 = vpack.c.b16 %v167, %v166
  %v197 = vpack.c.b16 %v169, %v168
  %v198 = vpack.c.b16 %v171, %v170
  %v199 = vpack.c.b16 %v173, %v172
  %v200 = vpack.c.b16 %v175, %v174
  %v201 = vpack.c.b16 %v177, %v176
  %226 = vmatprep.subr.bf16.mxu0 0
  %227 = vmatpush1.bf16.msra.mxu0 %v178
  %228 = vmatprep.subr.bf16.mxu0 0
  %229 = vmatpush1.bf16.msra.mxu0 %v179
  %230 = vmatprep.subr.bf16.mxu0 0
  %231 = vmatpush1.bf16.msra.mxu0 %v180
  %232 = vmatprep.subr.bf16.mxu0 0
  %233 = vmatpush1.bf16.msra.mxu0 %v181
  %234 = vmatprep.subr.bf16.mxu0 0
  %235 = vmatpush1.bf16.msra.mxu0 %v182
  %236 = vmatprep.subr.bf16.mxu0 0
  %237 = vmatpush1.bf16.msra.mxu0 %v183
  %238 = vmatprep.subr.bf16.mxu0 0
  %239 = vmatpush1.bf16.msra.mxu0 %v184
  %240 = vmatprep.subr.bf16.mxu0 0
  %241 = vmatpush1.bf16.msra.mxu0 %v185
  %242 = vmatprep.subr.bf16.mxu0 0
  %243 = vmatpush1.bf16.msra.mxu0 %v186
  %244 = vmatprep.subr.bf16.mxu0 0
  %245 = vmatpush1.bf16.msra.mxu0 %v187
  %246 = vmatprep.subr.bf16.mxu0 0
  %247 = vmatpush1.bf16.msra.mxu0 %v188
  %248 = vmatprep.subr.bf16.mxu0 0
  %249 = vmatpush1.bf16.msra.mxu0 %v189
  %250 = vmatprep.subr.bf16.mxu0 0
  %251 = vmatpush1.bf16.msra.mxu0 %v190
  %252 = vmatprep.subr.bf16.mxu0 0
  %253 = vmatpush1.bf16.msra.mxu0 %v191
  %254 = vmatprep.subr.bf16.mxu0 0
  %255 = vmatpush1.bf16.msra.mxu0 %v192
  %256 = vmatprep.subr.bf16.mxu0 0
  %257 = vmatpush1.bf16.msra.mxu0 %v193
  %258 = vmatprep.mubr.bf16.mxu0 %v77
  %259 = vmatmul.mubr.bf16.gmra.mrb[0].mxu0 %v76
  %v260 = vpop.f32.mrb[0].mxu0
  %v261 = vadd.f32 0.0, %v260
  %v262 = vpop.f32.mrb[0].mxu0
  %v263 = vpop.f32.mrb[0].mxu0
  %v264 = vpop.f32.mrb[0].mxu0
  %265 = vdwg.mxu0
  %266 = vmatprep.subr.bf16.mxu0 0
  %267 = vmatpush1.bf16.msra.mxu0 %v194
  %268 = vmatprep.subr.bf16.mxu0 0
  %269 = vmatpush1.bf16.msra.mxu0 %v195
  %270 = vmatprep.subr.bf16.mxu0 0
  %271 = vmatpush1.bf16.msra.mxu0 %v196
  %272 = vmatprep.subr.bf16.mxu0 0
  %273 = vmatpush1.bf16.msra.mxu0 %v197
  %274 = vmatprep.subr.bf16.mxu0 0
  %275 = vmatpush1.bf16.msra.mxu0 %v198
  %276 = vmatprep.subr.bf16.mxu0 0
  %277 = vmatpush1.bf16.msra.mxu0 %v199
  %278 = vmatprep.subr.bf16.mxu0 0
  %279 = vmatpush1.bf16.msra.mxu0 %v200
  %280 = vmatprep.subr.bf16.mxu0 0
  %281 = vmatpush1.bf16.msra.mxu0 %v201
  %282 = vmatprep.subr.bf16.mxu0 0
  %283 = vmatpush1.bf16.msra.mxu0 0
  %284 = vmatprep.subr.bf16.mxu0 0
  %285 = vmatpush1.bf16.msra.mxu0 0
  %286 = vmatprep.subr.bf16.mxu0 0
  %287 = vmatpush1.bf16.msra.mxu0 0
  %288 = vmatprep.subr.bf16.mxu0 0
  %289 = vmatpush1.bf16.msra.mxu0 0
  %290 = vmatprep.subr.bf16.mxu0 0
  %291 = vmatpush1.bf16.msra.mxu0 0
  %292 = vmatprep.subr.bf16.mxu0 0
  %293 = vmatpush1.bf16.msra.mxu0 0
  %294 = vmatprep.subr.bf16.mxu0 0
  %295 = vmatpush1.bf16.msra.mxu0 0
  %296 = vmatprep.subr.bf16.mxu0 0
  %297 = vmatpush1.bf16.msra.mxu0 0
  %298 = vmatprep.mubr.bf16.mxu0 0
  %299 = vmatmul.mubr.bf16.gmra.mrb[0].mxu0 %v78
  %v300 = vpop.f32.mrb[0].mxu0
  %v301 = vadd.f32 %v261, %v300
  %v302 = vpop.f32.mrb[0].mxu0
  %v303 = vpop.f32.mrb[0].mxu0
  %v304 = vpop.f32.mrb[0].mxu0
  %305 = vdwg.mxu0
  %v306 = vadd.f32 %v20, %v301
  %307 = vst [vmem:[#allocation2] sm:$0xff] %v306
  // Predicated region
  $region18: #{psenet_forward.26} parent=0 // pred_check
    %p308 = pneg %p15
  $region19: #{psenet_forward.26} parent=0 // pred_check_branch
    %310 = sbr.rel (%p308) target = $region21
  $region20: #{psenet_forward.26} parent=0 // pred_region
    %v311 = vld [vmem:[#allocation2] sm:$0xff]
    %v312 = vld [vmem:[%s2] sm:$0x1]
    %v314 = vlaneseq
    %v315 = vshrl.u32 %v314, 7
    %v316 = vsub.s32 0, %v315
    %v317 = vrot.slane %v312, %v316
    %v319 = vadd.f32 %v311, %v317
    %v320 = vmax.f32 %v319, 0.0
    %v321 = vpack.c.bf16 %v320, %v320
    %322 = vst [vmem:[%s3] sm:$0xf] %v321
  $region21: #{psenet_forward.26} parent=0 // pred_fallthru
    _
  // Predicated region
  $region22: #{psenet_forward.26} parent=0 // pred_check
    _
  $region23: #{psenet_forward.26} parent=0 // pred_check_branch
    %324 = sbr.rel (0) target = $region25
  $region24: #{psenet_forward.26} parent=0 // pred_region
    _
  $region25: #{psenet_forward.26} parent=0 // pred_fallthru
    _
  // Predicated region
  $region26: #{psenet_forward.26} parent=0 // pred_check
    _
  $region27: #{psenet_forward.26} parent=0 // pred_check_branch
    %326 = sbr.rel (0) target = $region29
  $region28: #{psenet_forward.26} parent=0 // pred_region
    _
  $region29: #{psenet_forward.26} parent=0 // pred_fallthru
    _

// kernel: psenet_forward.28
$region0: #{psenet_forward.28}
  #allocation0 [shape = 'u32[]', space=smem, size = 0x4, offset = 0x4, fixed_abs, tag = 'smem constant byte address 0x4 - core index']
  #allocation1 [shape = 'u32[144,128]{1,0:T(1,128)}', space=vmem, size = 0x12000, scoped, tag = 'internal scratch']
  #allocation2 [shape = 'f32[8,128]{1,0:T(8,128)}', space=vmem, size = 0x1000, scoped, tag = 'scratch operand']
  %s0 = inlined_call_operand.vmem [shape: bf16[8,128], index: 0, kind: input, shape index: {}]
  %s1 = inlined_call_operand.vmem [shape: bf16[128,128], index: 1, kind: input, shape index: {}]
  %s2 = inlined_call_operand.vmem [shape: f32[1,128], index: 2, kind: input, shape index: {}]
  %s3 = inlined_call_operand.vmem [shape: bf16[8,128], index: 3, kind: output, shape index: {}]
  %s4 = sld [smem:[#allocation0]]
  $region30: #{psenet_forward.28} parent=0
    _
  %s6 = ssub.s32 1, %s4
  %s7 = scalar_select 0, %s6, %s4
  // Predicated region
  $region2: #{psenet_forward.28} parent=0 // pred_check
    _
  $region3: #{psenet_forward.28} parent=0 // pred_check_branch
    %9 = sbr.rel (0) target = $region5
  $region4: #{psenet_forward.28} parent=0 // pred_region
    _
  $region5: #{psenet_forward.28} parent=0 // pred_fallthru
    _
  // Predicated region
  $region6: #{psenet_forward.28} parent=0 // pred_check
    _
  $region7: #{psenet_forward.28} parent=0 // pred_check_branch
    %11 = sbr.rel (0) target = $region9
  $region8: #{psenet_forward.28} parent=0 // pred_region
    _
  $region9: #{psenet_forward.28} parent=0 // pred_fallthru
    _
  // Predicated region
  $region10: #{psenet_forward.28} parent=0 // pred_check
    _
  $region11: #{psenet_forward.28} parent=0 // pred_check_branch
    %13 = sbr.rel (0) target = $region13
  $region12: #{psenet_forward.28} parent=0 // pred_region
    _
  $region13: #{psenet_forward.28} parent=0 // pred_fallthru
    _
  %p15 = scmp.eq.s32.totalorder 0, 0
  // Predicated region
  $region14: #{psenet_forward.28} parent=0 // pred_check
    %p16 = pneg %p15
  $region15: #{psenet_forward.28} parent=0 // pred_check_branch
    %18 = sbr.rel (%p16) target = $region17
  $region16: #{psenet_forward.28} parent=0 // pred_region
    %19 = vst [vmem:[#allocation2] sm:$0xff] 0.0
  $region17: #{psenet_forward.28} parent=0 // pred_fallthru
    _
  %v20 = vld [vmem:[#allocation2] sm:$0xff]
  %v21 = vld [vmem:[%s0] sm:$0xf]
  %v22 = vld [vmem:[%s1] sm:$0xf]
  %v23 = vld [vmem:[%s1 + $0x4] sm:$0xf]
  %v24 = vld [vmem:[%s1 + $0x8] sm:$0xf]
  %v25 = vld [vmem:[%s1 + $0xc] sm:$0xf]
  %v26 = vld [vmem:[%s1 + $0x10] sm:$0xf]
  %v27 = vld [vmem:[%s1 + $0x14] sm:$0xf]
  %v28 = vld [vmem:[%s1 + $0x18] sm:$0xf]
  %v29 = vld [vmem:[%s1 + $0x1c] sm:$0xf]
  %v30 = vld [vmem:[%s1 + $0x20] sm:$0xf]
  %v31 = vld [vmem:[%s1 + $0x24] sm:$0xf]
  %v32 = vld [vmem:[%s1 + $0x28] sm:$0xf]
  %v33 = vld [vmem:[%s1 + $0x2c] sm:$0xf]
  %v34 = vld [vmem:[%s1 + $0x30] sm:$0xf]
  %v35 = vld [vmem:[%s1 + $0x34] sm:$0xf]
  %v36 = vld [vmem:[%s1 + $0x38] sm:$0xf]
  %v37 = vld [vmem:[%s1 + $0x3c] sm:$0xf]
  %v54 = vunpack.c.l.b16 %v22
  %v55 = vunpack.c.l.b16 %v23
  %v56 = vunpack.c.l.b16 %v24
  %v57 = vunpack.c.l.b16 %v25
  %v58 = vunpack.c.l.b16 %v26
  %v59 = vunpack.c.l.b16 %v27
  %v60 = vunpack.c.l.b16 %v28
  %v61 = vunpack.c.l.b16 %v29
  %v62 = vunpack.c.l.b16 %v30
  %v63 = vunpack.c.l.b16 %v31
  %v64 = vunpack.c.l.b16 %v32
  %v65 = vunpack.c.l.b16 %v33
  %v66 = vunpack.c.l.b16 %v34
  %v67 = vunpack.c.l.b16 %v35
  %v68 = vunpack.c.l.b16 %v36
  %v69 = vunpack.c.l.b16 %v37
  %v70 = vpack.c.b16 %v55, %v54
  %v71 = vpack.c.b16 %v57, %v56
  %v72 = vpack.c.b16 %v59, %v58
  %v73 = vpack.c.b16 %v61, %v60
  %v74 = vpack.c.b16 %v63, %v62
  %v75 = vpack.c.b16 %v65, %v64
  %v76 = vpack.c.b16 %v67, %v66
  %v77 = vpack.c.b16 %v69, %v68
  %86 = vmatprep.subr.bf16.mxu0 0
  %87 = vmatpush1.bf16.msra.mxu0 %v70
  %88 = vmatprep.subr.bf16.mxu0 0
  %89 = vmatpush1.bf16.msra.mxu0 %v71
  %90 = vmatprep.subr.bf16.mxu0 0
  %91 = vmatpush1.bf16.msra.mxu0 %v72
  %92 = vmatprep.subr.bf16.mxu0 0
  %93 = vmatpush1.bf16.msra.mxu0 %v73
  %94 = vmatprep.subr.bf16.mxu0 0
  %95 = vmatpush1.bf16.msra.mxu0 %v74
  %96 = vmatprep.subr.bf16.mxu0 0
  %97 = vmatpush1.bf16.msra.mxu0 %v75
  %98 = vmatprep.subr.bf16.mxu0 0
  %99 = vmatpush1.bf16.msra.mxu0 %v76
  %100 = vmatprep.subr.bf16.mxu0 0
  %101 = vmatpush1.bf16.msra.mxu0 %v77
  %102 = vmatprep.subr.bf16.mxu0 0
  %103 = vmatpush1.bf16.msra.mxu0 0
  %104 = vmatprep.subr.bf16.mxu0 0
  %105 = vmatpush1.bf16.msra.mxu0 0
  %106 = vmatprep.subr.bf16.mxu0 0
  %107 = vmatpush1.bf16.msra.mxu0 0
  %108 = vmatprep.subr.bf16.mxu0 0
  %109 = vmatpush1.bf16.msra.mxu0 0
  %110 = vmatprep.subr.bf16.mxu0 0
  %111 = vmatpush1.bf16.msra.mxu0 0
  %112 = vmatprep.subr.bf16.mxu0 0
  %113 = vmatpush1.bf16.msra.mxu0 0
  %114 = vmatprep.subr.bf16.mxu0 0
  %115 = vmatpush1.bf16.msra.mxu0 0
  %116 = vmatprep.subr.bf16.mxu0 0
  %117 = vmatpush1.bf16.msra.mxu0 0
  %118 = vmatprep.mubr.bf16.mxu0 0
  %119 = vmatmul.mubr.bf16.gmra.mrb[0].mxu0 %v21
  %v120 = vpop.f32.mrb[0].mxu0
  %v121 = vadd.f32 0.0, %v120
  %v122 = vpop.f32.mrb[0].mxu0
  %v123 = vpop.f32.mrb[0].mxu0
  %v124 = vpop.f32.mrb[0].mxu0
  %125 = vdwg.mxu0
  %v126 = vadd.f32 %v20, %v121
  %127 = vst [vmem:[#allocation2] sm:$0xff] %v126
  // Predicated region
  $region18: #{psenet_forward.28} parent=0 // pred_check
    %p128 = pneg %p15
  $region19: #{psenet_forward.28} parent=0 // pred_check_branch
    %130 = sbr.rel (%p128) target = $region21
  $region20: #{psenet_forward.28} parent=0 // pred_region
    %v131 = vld [vmem:[#allocation2] sm:$0xff]
    %v132 = vld [vmem:[%s2] sm:$0x1]
    %v134 = vlaneseq
    %v135 = vshrl.u32 %v134, 7
    %v136 = vsub.s32 0, %v135
    %v137 = vrot.slane %v132, %v136
    %v139 = vadd.f32 %v131, %v137
    %v140 = vpack.c.bf16 %v139, %v139
    %141 = vst [vmem:[%s3] sm:$0xf] %v140
  $region21: #{psenet_forward.28} parent=0 // pred_fallthru
    _
  // Predicated region
  $region22: #{psenet_forward.28} parent=0 // pred_check
    _
  $region23: #{psenet_forward.28} parent=0 // pred_check_branch
    %143 = sbr.rel (0) target = $region25
  $region24: #{psenet_forward.28} parent=0 // pred_region
    _
  $region25: #{psenet_forward.28} parent=0 // pred_fallthru
    _
  // Predicated region
  $region26: #{psenet_forward.28} parent=0 // pred_check
    _
  $region27: #{psenet_forward.28} parent=0 // pred_check_branch
    %145 = sbr.rel (0) target = $region29
  $region28: #{psenet_forward.28} parent=0 // pred_region
    _
  $region29: #{psenet_forward.28} parent=0 // pred_fallthru
    _

// kernel: psenet_forward.27
$region0: #{psenet_forward.27}
  #allocation0 [shape = 'u32[]', space=smem, size = 0x4, offset = 0x4, fixed_abs, tag = 'smem constant byte address 0x4 - core index']
  #allocation1 [shape = 'u32[144,128]{1,0:T(1,128)}', space=vmem, size = 0x12000, scoped, tag = 'internal scratch']
  #allocation2 [shape = 'f32[8,128]{1,0:T(8,128)}', space=vmem, size = 0x1000, scoped, tag = 'scratch operand']
  %s0 = inlined_call_operand.vmem [shape: bf16[8,1024], index: 0, kind: input, shape index: {}]
  %s1 = inlined_call_operand.vmem [shape: bf16[1024,128], index: 1, kind: input, shape index: {}]
  %s2 = inlined_call_operand.vmem [shape: f32[1,128], index: 2, kind: input, shape index: {}]
  %s3 = inlined_call_operand.vmem [shape: bf16[8,128], index: 3, kind: output, shape index: {}]
  %s4 = sld [smem:[#allocation0]]
  $region53: #{psenet_forward.27} parent=0
    _
  %s6 = ssub.s32 1, %s4
  %s7 = scalar_select 0, %s6, %s4
  loop: start=0, step=1, limit=4
  $region2: #{psenet_forward.27} parent=0 // loop_pre_header
    _
  $region3: #{psenet_forward.27} parent=0 // loop_header
    %s9 = sphi 0, %s13
    %p10 = scmp.ge.s32.totalorder %s9, 4
    %s16 = sphi 0, %s35
    %s17 = sphi 0, %s31
    %s18 = sphi 0, %s27
    %s19 = sphi 0, %s16
    %s20 = sphi 0, %s17
    %s21 = sphi 0, %s18
    %s22 = sphi 0, %s19
    %s23 = sphi 0, %s20
    %s24 = sphi 0, %s21
    %s40 = sphi 0, %s42
    %s43 = sphi 0, %s40
    %s44 = sphi 0, %s43
    %s60 = sphi 0, %s44
    %s68 = sphi 0, %s70
    %s71 = sphi 0, %s68
    %s72 = sphi 0, %s71
    %s88 = sphi 0, %s72
    %s94 = sphi 0, %s96
    %s97 = sphi 0, %s94
    %s98 = sphi 0, %s97
    %s114 = sphi 0, %s98
    %s122 = sphi 0, %s124
    %s125 = sphi 0, %s122
    %s126 = sphi 0, %s125
    %s142 = sphi 0, %s126
  $region4: #{psenet_forward.27} parent=0 // loop_header_branch
    %12 = sbr.rel (%p10) target = $region8
  $region5: #{psenet_forward.27} parent=0 // loop_body
    %s14 = ssub.s32 %s9, 1
    %s15 = ssub.s32 %s9, 2
    %s25 = sadd.s32 1, %s18
    %p26 = scmp.ge.s32.totalorder %s25, 2
    %s27 = scalar_select %p26, 0, %s25
    %s28 = sadd.s32 1, %s17
    %s29 = scalar_select %p26, %s28, %s17
    %p30 = scmp.ge.s32.totalorder %s29, 1
    %s31 = scalar_select %p30, 0, %s29
    %s32 = sadd.s32 1, %s16
    %s33 = scalar_select %p30, %s32, %s16
    %p34 = scmp.ge.s32.totalorder %s33, 1
    %s35 = scalar_select %p34, 0, %s33
    %s36 = ssub.s32 %s16, %s35
    %s37 = ssub.s32 %s18, %s27
    %s38 = sor.u32 %s36, %s37
    %p39 = scmp.eq.s32.totalorder %s38, 0
    %s41 = sadd.s32 %s40, 1
    %s42 = scalar_select %p39, %s40, %s41
    %p45 = pneg %p39
    %p46 = scmp.eq.s32.totalorder %s9, 1
    %p47 = por %p45, %p46
    %p48 = scmp.ne.s32.totalorder %s40, %s43
    %p49 = scmp.eq.s32.totalorder %s9, 0
    %p50 = por %p48, %p49
    %p51 = scmp.ne.s32.totalorder %s40, %s43
    %p52 = scmp.eq.s32.totalorder %s14, 1
    %p53 = por %p51, %p52
    %p54 = scmp.ne.s32.totalorder %s43, %s44
    %p55 = scmp.eq.s32.totalorder %s14, 0
    %p56 = por %p54, %p55
    %p57 = scmp.ne.s32.totalorder %s43, %s44
    %p58 = scmp.eq.s32.totalorder %s15, 1
    %p59 = por %p57, %p58
    %p61 = scmp.ne.s32.totalorder %s44, %s60
    %p62 = scmp.eq.s32.totalorder %s15, 0
    %p63 = por %p61, %p62
    %s64 = ssub.s32 %s18, %s27
    %s65 = ssub.s32 %s17, %s31
    %s66 = sor.u32 %s64, %s65
    %p67 = scmp.eq.s32.totalorder %s66, 0
    %s69 = sadd.s32 %s68, 1
    %s70 = scalar_select %p67, %s68, %s69
    %p73 = pneg %p67
    %p74 = scmp.eq.s32.totalorder %s9, 1
    %p75 = por %p73, %p74
    %p76 = scmp.ne.s32.totalorder %s68, %s71
    %p77 = scmp.eq.s32.totalorder %s9, 0
    %p78 = por %p76, %p77
    %p79 = scmp.ne.s32.totalorder %s68, %s71
    %p80 = scmp.eq.s32.totalorder %s14, 1
    %p81 = por %p79, %p80
    %p82 = scmp.ne.s32.totalorder %s71, %s72
    %p83 = scmp.eq.s32.totalorder %s14, 0
    %p84 = por %p82, %p83
    %p85 = scmp.ne.s32.totalorder %s71, %s72
    %p86 = scmp.eq.s32.totalorder %s15, 1
    %p87 = por %p85, %p86
    %p89 = scmp.ne.s32.totalorder %s72, %s88
    %p90 = scmp.eq.s32.totalorder %s15, 0
    %p91 = por %p89, %p90
    %s92 = ssub.s32 %s17, %s31
    %p93 = scmp.eq.s32.totalorder %s92, 0
    %s95 = sadd.s32 %s94, 1
    %s96 = scalar_select %p93, %s94, %s95
    %p99 = pneg %p93
    %p100 = scmp.eq.s32.totalorder %s9, 1
    %p101 = por %p99, %p100
    %p102 = scmp.ne.s32.totalorder %s94, %s97
    %p103 = scmp.eq.s32.totalorder %s9, 0
    %p104 = por %p102, %p103
    %p105 = scmp.ne.s32.totalorder %s94, %s97
    %p106 = scmp.eq.s32.totalorder %s14, 1
    %p107 = por %p105, %p106
    %p108 = scmp.ne.s32.totalorder %s97, %s98
    %p109 = scmp.eq.s32.totalorder %s14, 0
    %p110 = por %p108, %p109
    %p111 = scmp.ne.s32.totalorder %s97, %s98
    %p112 = scmp.eq.s32.totalorder %s15, 1
    %p113 = por %p111, %p112
    %p115 = scmp.ne.s32.totalorder %s98, %s114
    %p116 = scmp.eq.s32.totalorder %s15, 0
    %p117 = por %p115, %p116
    %s118 = ssub.s32 %s16, %s35
    %s119 = ssub.s32 %s17, %s31
    %s120 = sor.u32 %s118, %s119
    %p121 = scmp.eq.s32.totalorder %s120, 0
    %s123 = sadd.s32 %s122, 1
    %s124 = scalar_select %p121, %s122, %s123
    %p127 = pneg %p121
    %p128 = scmp.eq.s32.totalorder %s9, 1
    %p129 = por %p127, %p128
    %p130 = scmp.ne.s32.totalorder %s122, %s125
    %p131 = scmp.eq.s32.totalorder %s9, 0
    %p132 = por %p130, %p131
    %p133 = scmp.ne.s32.totalorder %s122, %s125
    %p134 = scmp.eq.s32.totalorder %s14, 1
    %p135 = por %p133, %p134
    %p136 = scmp.ne.s32.totalorder %s125, %s126
    %p137 = scmp.eq.s32.totalorder %s14, 0
    %p138 = por %p136, %p137
    %p139 = scmp.ne.s32.totalorder %s125, %s126
    %p140 = scmp.eq.s32.totalorder %s15, 1
    %p141 = por %p139, %p140
    %p143 = scmp.ne.s32.totalorder %s126, %s142
    %p144 = scmp.eq.s32.totalorder %s15, 0
    %p145 = por %p143, %p144
    %p146 = scmp.le.s32.totalorder 1, %s9
    %p147 = scmp.lt.s32.totalorder %s9, 3
    %p148 = pnand %p146, %p147
    %p149 = pneg %p148
    // Predicated region
    $region9: #{psenet_forward.27} parent=5 // pred_check
      _
    $region10: #{psenet_forward.27} parent=5 // pred_check_branch
      %151 = sbr.rel (%p148) target = $region12
    $region11: #{psenet_forward.27} parent=5 // pred_region
      %s152 = ssub.s32 %s9, 1
      // Predicated region
      $region13: #{psenet_forward.27} parent=11 // pred_check
        %p153 = pneg %p110
      $region14: #{psenet_forward.27} parent=11 // pred_check_branch
        %155 = sbr.rel (%p153) target = $region16
      $region15: #{psenet_forward.27} parent=11 // pred_region
        %p156 = scmp.lt.s32.totalorder %s20, 0
        %s157 = scalar_select %p156, %s20, 0
        %s158 = scalar_lea.vmem %s2, %s157
      $region16: #{psenet_forward.27} parent=11 // pred_fallthru
        _
    $region12: #{psenet_forward.27} parent=5 // pred_fallthru
      _
    %p159 = scmp.lt.s32.totalorder %s9, 2
    // Predicated region
    $region17: #{psenet_forward.27} parent=5 // pred_check
      %p160 = pneg %p159
    $region18: #{psenet_forward.27} parent=5 // pred_check_branch
      %162 = sbr.rel (%p160) target = $region20
    $region19: #{psenet_forward.27} parent=5 // pred_region
      // Predicated region
      $region21: #{psenet_forward.27} parent=19 // pred_check
        %p163 = pneg %p50
      $region22: #{psenet_forward.27} parent=19 // pred_check_branch
        %165 = sbr.rel (%p163) target = $region24
      $region23: #{psenet_forward.27} parent=19 // pred_region
        %s166 = smul.u32 4, %s18
        %p167 = scmp.lt.s32.totalorder %s16, 0
        %s168 = scalar_select %p167, %s16, 0
        %p169 = scmp.lt.s32.totalorder %s166, 7
        %s170 = scalar_select %p169, %s166, 7
        %s171 = smul.addr %s168, 8
        %s172 = sadd.s32 %s170, %s171
        %s173 = smul.addr %s172, 4
        %s174 = scalar_lea.vmem %s0, %s173
        %s175 = smul.u32 4, %s18
      $region24: #{psenet_forward.27} parent=19 // pred_fallthru
        _
      // Predicated region
      $region25: #{psenet_forward.27} parent=19 // pred_check
        %p176 = pneg %p78
      $region26: #{psenet_forward.27} parent=19 // pred_check_branch
        %178 = sbr.rel (%p176) target = $region28
      $region27: #{psenet_forward.27} parent=19 // pred_region
        %s179 = smul.u32 64, %s18
        %p180 = scmp.lt.s32.totalorder %s179, 127
        %s181 = scalar_select %p180, %s179, 127
        %p182 = scmp.lt.s32.totalorder %s17, 0
        %s183 = scalar_select %p182, %s17, 0
        %s184 = sadd.s32 %s183, %s181
        %s185 = smul.addr %s184, 4
        %s186 = scalar_lea.vmem %s1, %s185
        %s187 = smul.u32 64, %s18
      $region28: #{psenet_forward.27} parent=19 // pred_fallthru
        _
    $region20: #{psenet_forward.27} parent=5 // pred_fallthru
      _
    %p188 = scmp.le.s32.totalorder 1, %s9
    %p189 = scmp.lt.s32.totalorder %s9, 3
    %p190 = pnand %p188, %p189
    %p191 = pneg %p190
    // Predicated region
    $region29: #{psenet_forward.27} parent=5 // pred_check
      _
    $region30: #{psenet_forward.27} parent=5 // pred_check_branch
      %193 = sbr.rel (%p190) target = $region32
    $region31: #{psenet_forward.27} parent=5 // pred_region
      %s194 = ssub.s32 %s9, 1
      %s195 = smul.u32 4, %s21
      %p196 = scmp.lt.s32.totalorder %s19, 0
      %s197 = scalar_select %p196, %s19, 0
      %p198 = scmp.lt.s32.totalorder %s195, 7
      %s199 = scalar_select %p198, %s195, 7
      %s200 = smul.addr %s197, 8
      %s201 = sadd.s32 %s199, %s200
      %s202 = smul.addr %s201, 4
      %s203 = scalar_lea.vmem %s0, %s202
      %p204 = pneg %p56
      %p205 = pneg %p53
      %s206 = smul.u32 64, %s21
      %p207 = scmp.lt.s32.totalorder %s206, 127
      %s208 = scalar_select %p207, %s206, 127
      %p209 = scmp.lt.s32.totalorder %s20, 0
      %s210 = scalar_select %p209, %s20, 0
      %s211 = sadd.s32 %s210, %s208
      %s212 = smul.addr %s211, 4
      %s213 = scalar_lea.vmem %s1, %s212
      %p214 = pneg %p84
      %p215 = pneg %p81
      %p216 = scmp.lt.s32.totalorder %s20, 0
      %s217 = scalar_select %p216, %s20, 0
      %s218 = scalar_lea.vmem %s2, %s217
      %p219 = pneg %p110
      %p220 = pneg %p107
      %p221 = pneg %p138
      %p222 = pneg %p135
      %p223 = scmp.lt.s32.totalorder %s19, 0
      %s224 = scalar_select %p223, %s19, 0
      %p225 = scmp.lt.s32.totalorder %s20, 0
      %s226 = scalar_select %p225, %s20, 0
      %s227 = sadd.s32 %s226, %s224
      %s228 = smul.addr %s227, 4
      %s229 = scalar_lea.vmem %s3, %s228
      %s230 = smul.u32 4, %s21
      %p231 = scmp.lt.s32.totalorder %s19, 0
      %s232 = scalar_select %p231, %s19, 0
      %p233 = scmp.lt.s32.totalorder %s230, 7
      %s234 = scalar_select %p233, %s230, 7
      %s235 = smul.addr %s232, 8
      %s236 = sadd.s32 %s234, %s235
      %s237 = smul.addr %s236, 4
      %s238 = scalar_lea.vmem %s0, %s237
      %s239 = smul.u32 4, %s21
      %s240 = smul.u32 64, %s21
      %p241 = scmp.lt.s32.totalorder %s240, 127
      %s242 = scalar_select %p241, %s240, 127
      %p243 = scmp.lt.s32.totalorder %s20, 0
      %s244 = scalar_select %p243, %s20, 0
      %s245 = sadd.s32 %s244, %s242
      %s246 = smul.addr %s245, 4
      %s247 = scalar_lea.vmem %s1, %s246
      %s248 = smul.u32 64, %s21
      %p249 = scmp.lt.s32.totalorder %s20, 0
      %s250 = scalar_select %p249, %s20, 0
      %s251 = scalar_lea.vmem %s2, %s250
      %p252 = scmp.lt.s32.totalorder %s19, 0
      %s253 = scalar_select %p252, %s19, 0
      %p254 = scmp.lt.s32.totalorder %s20, 0
      %s255 = scalar_select %p254, %s20, 0
      %s256 = sadd.s32 %s255, %s253
      %s257 = smul.addr %s256, 4
      %s258 = scalar_lea.vmem %s3, %s257
      %p260 = scmp.eq.s32.totalorder %s21, 0
      // Predicated region
      $region33: #{psenet_forward.27} parent=31 // pred_check
        %p261 = pneg %p260
      $region34: #{psenet_forward.27} parent=31 // pred_check_branch
        %263 = sbr.rel (%p261) target = $region36
      $region35: #{psenet_forward.27} parent=31 // pred_region
        %264 = vst [vmem:[#allocation2] sm:$0xff] 0.0
      $region36: #{psenet_forward.27} parent=31 // pred_fallthru
        _
      %v265 = vld [vmem:[#allocation2] sm:$0xff]
      %v266 = vld [vmem:[%s238] sm:$0xff]
      %v267 = vld [vmem:[%s238 + $0x8] sm:$0xff]
      %v268 = vld [vmem:[%s247] sm:$0xf]
      %v269 = vld [vmem:[%s247 + $0x4] sm:$0xf]
      %v270 = vld [vmem:[%s247 + $0x8] sm:$0xf]
      %v271 = vld [vmem:[%s247 + $0xc] sm:$0xf]
      %v272 = vld [vmem:[%s247 + $0x10] sm:$0xf]
      %v273 = vld [vmem:[%s247 + $0x14] sm:$0xf]
      %v274 = vld [vmem:[%s247 + $0x18] sm:$0xf]
      %v275 = vld [vmem:[%s247 + $0x1c] sm:$0xf]
      %v276 = vld [vmem:[%s247 + $0x20] sm:$0xf]
      %v277 = vld [vmem:[%s247 + $0x24] sm:$0xf]
      %v278 = vld [vmem:[%s247 + $0x28] sm:$0xf]
      %v279 = vld [vmem:[%s247 + $0x2c] sm:$0xf]
      %v280 = vld [vmem:[%s247 + $0x30] sm:$0xf]
      %v281 = vld [vmem:[%s247 + $0x34] sm:$0xf]
      %v282 = vld [vmem:[%s247 + $0x38] sm:$0xf]
      %v283 = vld [vmem:[%s247 + $0x3c] sm:$0xf]
      %v284 = vld [vmem:[%s247 + $0x40] sm:$0xf]
      %v285 = vld [vmem:[%s247 + $0x44] sm:$0xf]
      %v286 = vld [vmem:[%s247 + $0x48] sm:$0xf]
      %v287 = vld [vmem:[%s247 + $0x4c] sm:$0xf]
      %v288 = vld [vmem:[%s247 + $0x50] sm:$0xf]
      %v289 = vld [vmem:[%s247 + $0x54] sm:$0xf]
      %v290 = vld [vmem:[%s247 + $0x58] sm:$0xf]
      %v291 = vld [vmem:[%s247 + $0x5c] sm:$0xf]
      %v292 = vld [vmem:[%s247 + $0x60] sm:$0xf]
      %v293 = vld [vmem:[%s247 + $0x64] sm:$0xf]
      %v294 = vld [vmem:[%s247 + $0x68] sm:$0xf]
      %v295 = vld [vmem:[%s247 + $0x6c] sm:$0xf]
      %v296 = vld [vmem:[%s247 + $0x70] sm:$0xf]
      %v297 = vld [vmem:[%s247 + $0x74] sm:$0xf]
      %v298 = vld [vmem:[%s247 + $0x78] sm:$0xf]
      %v299 = vld [vmem:[%s247 + $0x7c] sm:$0xf]
      %v300 = vld [vmem:[%s247 + $0x80] sm:$0xf]
      %v301 = vld [vmem:[%s247 + $0x84] sm:$0xf]
      %v302 = vld [vmem:[%s247 + $0x88] sm:$0xf]
      %v303 = vld [vmem:[%s247 + $0x8c] sm:$0xf]
      %v304 = vld [vmem:[%s247 + $0x90] sm:$0xf]
      %v305 = vld [vmem:[%s247 + $0x94] sm:$0xf]
      %v306 = vld [vmem:[%s247 + $0x98] sm:$0xf]
      %v307 = vld [vmem:[%s247 + $0x9c] sm:$0xf]
      %v308 = vld [vmem:[%s247 + $0xa0] sm:$0xf]
      %v309 = vld [vmem:[%s247 + $0xa4] sm:$0xf]
      %v310 = vld [vmem:[%s247 + $0xa8] sm:$0xf]
      %v311 = vld [vmem:[%s247 + $0xac] sm:$0xf]
      %v312 = vld [vmem:[%s247 + $0xb0] sm:$0xf]
      %v313 = vld [vmem:[%s247 + $0xb4] sm:$0xf]
      %v314 = vld [vmem:[%s247 + $0xb8] sm:$0xf]
      %v315 = vld [vmem:[%s247 + $0xbc] sm:$0xf]
      %v316 = vld [vmem:[%s247 + $0xc0] sm:$0xf]
      %v317 = vld [vmem:[%s247 + $0xc4] sm:$0xf]
      %v318 = vld [vmem:[%s247 + $0xc8] sm:$0xf]
      %v319 = vld [vmem:[%s247 + $0xcc] sm:$0xf]
      %v320 = vld [vmem:[%s247 + $0xd0] sm:$0xf]
      %v321 = vld [vmem:[%s247 + $0xd4] sm:$0xf]
      %v322 = vld [vmem:[%s247 + $0xd8] sm:$0xf]
      %v323 = vld [vmem:[%s247 + $0xdc] sm:$0xf]
      %v324 = vld [vmem:[%s247 + $0xe0] sm:$0xf]
      %v325 = vld [vmem:[%s247 + $0xe4] sm:$0xf]
      %v326 = vld [vmem:[%s247 + $0xe8] sm:$0xf]
      %v327 = vld [vmem:[%s247 + $0xec] sm:$0xf]
      %v328 = vld [vmem:[%s247 + $0xf0] sm:$0xf]
      %v329 = vld [vmem:[%s247 + $0xf4] sm:$0xf]
      %v330 = vld [vmem:[%s247 + $0xf8] sm:$0xf]
      %v331 = vld [vmem:[%s247 + $0xfc] sm:$0xf]
      %v334 = vunpack.c.l.b16 %v266
      %v335 = vunpack.c.h.b16 %v266
      %v336 = vunpack.c.l.b16 %v267
      %v337 = vunpack.c.h.b16 %v267
      %v338 = vpack.c.b16 %v334, %v334
      %v339 = vpack.c.b16 %v335, %v335
      %v340 = vpack.c.b16 %v336, %v336
      %v341 = vpack.c.b16 %v337, %v337
      %v410 = vunpack.c.l.b16 %v268
      %v411 = vunpack.c.l.b16 %v269
      %v412 = vunpack.c.l.b16 %v270
      %v413 = vunpack.c.l.b16 %v271
      %v414 = vunpack.c.l.b16 %v272
      %v415 = vunpack.c.l.b16 %v273
      %v416 = vunpack.c.l.b16 %v274
      %v417 = vunpack.c.l.b16 %v275
      %v418 = vunpack.c.l.b16 %v276
      %v419 = vunpack.c.l.b16 %v277
      %v420 = vunpack.c.l.b16 %v278
      %v421 = vunpack.c.l.b16 %v279
      %v422 = vunpack.c.l.b16 %v280
      %v423 = vunpack.c.l.b16 %v281
      %v424 = vunpack.c.l.b16 %v282
      %v425 = vunpack.c.l.b16 %v283
      %v426 = vunpack.c.l.b16 %v284
      %v427 = vunpack.c.l.b16 %v285
      %v428 = vunpack.c.l.b16 %v286
      %v429 = vunpack.c.l.b16 %v287
      %v430 = vunpack.c.l.b16 %v288
      %v431 = vunpack.c.l.b16 %v289
      %v432 = vunpack.c.l.b16 %v290
      %v433 = vunpack.c.l.b16 %v291
      %v434 = vunpack.c.l.b16 %v292
      %v435 = vunpack.c.l.b16 %v293
      %v436 = vunpack.c.l.b16 %v294
      %v437 = vunpack.c.l.b16 %v295
      %v438 = vunpack.c.l.b16 %v296
      %v439 = vunpack.c.l.b16 %v297
      %v440 = vunpack.c.l.b16 %v298
      %v441 = vunpack.c.l.b16 %v299
      %v442 = vunpack.c.l.b16 %v300
      %v443 = vunpack.c.l.b16 %v301
      %v444 = vunpack.c.l.b16 %v302
      %v445 = vunpack.c.l.b16 %v303
      %v446 = vunpack.c.l.b16 %v304
      %v447 = vunpack.c.l.b16 %v305
      %v448 = vunpack.c.l.b16 %v306
      %v449 = vunpack.c.l.b16 %v307
      %v450 = vunpack.c.l.b16 %v308
      %v451 = vunpack.c.l.b16 %v309
      %v452 = vunpack.c.l.b16 %v310
      %v453 = vunpack.c.l.b16 %v311
      %v454 = vunpack.c.l.b16 %v312
      %v455 = vunpack.c.l.b16 %v313
      %v456 = vunpack.c.l.b16 %v314
      %v457 = vunpack.c.l.b16 %v315
      %v458 = vunpack.c.l.b16 %v316
      %v459 = vunpack.c.l.b16 %v317
      %v460 = vunpack.c.l.b16 %v318
      %v461 = vunpack.c.l.b16 %v319
      %v462 = vunpack.c.l.b16 %v320
      %v463 = vunpack.c.l.b16 %v321
      %v464 = vunpack.c.l.b16 %v322
      %v465 = vunpack.c.l.b16 %v323
      %v466 = vunpack.c.l.b16 %v324
      %v467 = vunpack.c.l.b16 %v325
      %v468 = vunpack.c.l.b16 %v326
      %v469 = vunpack.c.l.b16 %v327
      %v470 = vunpack.c.l.b16 %v328
      %v471 = vunpack.c.l.b16 %v329
      %v472 = vunpack.c.l.b16 %v330
      %v473 = vunpack.c.l.b16 %v331
      %v474 = vpack.c.b16 %v411, %v410
      %v475 = vpack.c.b16 %v413, %v412
      %v476 = vpack.c.b16 %v415, %v414
      %v477 = vpack.c.b16 %v417, %v416
      %v478 = vpack.c.b16 %v419, %v418
      %v479 = vpack.c.b16 %v421, %v420
      %v480 = vpack.c.b16 %v423, %v422
      %v481 = vpack.c.b16 %v425, %v424
      %v482 = vpack.c.b16 %v427, %v426
      %v483 = vpack.c.b16 %v429, %v428
      %v484 = vpack.c.b16 %v431, %v430
      %v485 = vpack.c.b16 %v433, %v432
      %v486 = vpack.c.b16 %v435, %v434
      %v487 = vpack.c.b16 %v437, %v436
      %v488 = vpack.c.b16 %v439, %v438
      %v489 = vpack.c.b16 %v441, %v440
      %v490 = vpack.c.b16 %v443, %v442
      %v491 = vpack.c.b16 %v445, %v444
      %v492 = vpack.c.b16 %v447, %v446
      %v493 = vpack.c.b16 %v449, %v448
      %v494 = vpack.c.b16 %v451, %v450
      %v495 = vpack.c.b16 %v453, %v452
      %v496 = vpack.c.b16 %v455, %v454
      %v497 = vpack.c.b16 %v457, %v456
      %v498 = vpack.c.b16 %v459, %v458
      %v499 = vpack.c.b16 %v461, %v460
      %v500 = vpack.c.b16 %v463, %v462
      %v501 = vpack.c.b16 %v465, %v464
      %v502 = vpack.c.b16 %v467, %v466
      %v503 = vpack.c.b16 %v469, %v468
      %v504 = vpack.c.b16 %v471, %v470
      %v505 = vpack.c.b16 %v473, %v472
      %538 = vmatprep.subr.bf16.mxu0 0
      %539 = vmatpush1.bf16.msra.mxu0 %v474
      %540 = vmatprep.subr.bf16.mxu0 0
      %541 = vmatpush1.bf16.msra.mxu0 %v475
      %542 = vmatprep.subr.bf16.mxu0 0
      %543 = vmatpush1.bf16.msra.mxu0 %v476
      %544 = vmatprep.subr.bf16.mxu0 0
      %545 = vmatpush1.bf16.msra.mxu0 %v477
      %546 = vmatprep.subr.bf16.mxu0 0
      %547 = vmatpush1.bf16.msra.mxu0 %v478
      %548 = vmatprep.subr.bf16.mxu0 0
      %549 = vmatpush1.bf16.msra.mxu0 %v479
      %550 = vmatprep.subr.bf16.mxu0 0
      %551 = vmatpush1.bf16.msra.mxu0 %v480
      %552 = vmatprep.subr.bf16.mxu0 0
      %553 = vmatpush1.bf16.msra.mxu0 %v481
      %554 = vmatprep.subr.bf16.mxu0 0
      %555 = vmatpush1.bf16.msra.mxu0 %v482
      %556 = vmatprep.subr.bf16.mxu0 0
      %557 = vmatpush1.bf16.msra.mxu0 %v483
      %558 = vmatprep.subr.bf16.mxu0 0
      %559 = vmatpush1.bf16.msra.mxu0 %v484
      %560 = vmatprep.subr.bf16.mxu0 0
      %561 = vmatpush1.bf16.msra.mxu0 %v485
      %562 = vmatprep.subr.bf16.mxu0 0
      %563 = vmatpush1.bf16.msra.mxu0 %v486
      %564 = vmatprep.subr.bf16.mxu0 0
      %565 = vmatpush1.bf16.msra.mxu0 %v487
      %566 = vmatprep.subr.bf16.mxu0 0
      %567 = vmatpush1.bf16.msra.mxu0 %v488
      %568 = vmatprep.subr.bf16.mxu0 0
      %569 = vmatpush1.bf16.msra.mxu0 %v489
      %570 = vmatprep.mubr.bf16.mxu0 %v339
      %571 = vmatmul.mubr.bf16.gmra.mrb[0].mxu0 %v338
      %v572 = vpop.f32.mrb[0].mxu0
      %v573 = vadd.f32 0.0, %v572
      %v574 = vpop.f32.mrb[0].mxu0
      %v575 = vpop.f32.mrb[0].mxu0
      %v576 = vpop.f32.mrb[0].mxu0
      %577 = vdwg.mxu0
      %578 = vmatprep.subr.bf16.mxu0 0
      %579 = vmatpush1.bf16.msra.mxu0 %v490
      %580 = vmatprep.subr.bf16.mxu0 0
      %581 = vmatpush1.bf16.msra.mxu0 %v491
      %582 = vmatprep.subr.bf16.mxu0 0
      %583 = vmatpush1.bf16.msra.mxu0 %v492
      %584 = vmatprep.subr.bf16.mxu0 0
      %585 = vmatpush1.bf16.msra.mxu0 %v493
      %586 = vmatprep.subr.bf16.mxu0 0
      %587 = vmatpush1.bf16.msra.mxu0 %v494
      %588 = vmatprep.subr.bf16.mxu0 0
      %589 = vmatpush1.bf16.msra.mxu0 %v495
      %590 = vmatprep.subr.bf16.mxu0 0
      %591 = vmatpush1.bf16.msra.mxu0 %v496
      %592 = vmatprep.subr.bf16.mxu0 0
      %593 = vmatpush1.bf16.msra.mxu0 %v497
      %594 = vmatprep.subr.bf16.mxu0 0
      %595 = vmatpush1.bf16.msra.mxu0 %v498
      %596 = vmatprep.subr.bf16.mxu0 0
      %597 = vmatpush1.bf16.msra.mxu0 %v499
      %598 = vmatprep.subr.bf16.mxu0 0
      %599 = vmatpush1.bf16.msra.mxu0 %v500
      %600 = vmatprep.subr.bf16.mxu0 0
      %601 = vmatpush1.bf16.msra.mxu0 %v501
      %602 = vmatprep.subr.bf16.mxu0 0
      %603 = vmatpush1.bf16.msra.mxu0 %v502
      %604 = vmatprep.subr.bf16.mxu0 0
      %605 = vmatpush1.bf16.msra.mxu0 %v503
      %606 = vmatprep.subr.bf16.mxu0 0
      %607 = vmatpush1.bf16.msra.mxu0 %v504
      %608 = vmatprep.subr.bf16.mxu0 0
      %609 = vmatpush1.bf16.msra.mxu0 %v505
      %610 = vmatprep.mubr.bf16.mxu0 %v341
      %611 = vmatmul.mubr.bf16.gmra.mrb[0].mxu0 %v340
      %v612 = vpop.f32.mrb[0].mxu0
      %v613 = vadd.f32 %v573, %v612
      %v614 = vpop.f32.mrb[0].mxu0
      %v615 = vpop.f32.mrb[0].mxu0
      %v616 = vpop.f32.mrb[0].mxu0
      %617 = vdwg.mxu0
      %v618 = vadd.f32 %v265, %v613
      %619 = vst [vmem:[#allocation2] sm:$0xff] %v618
      %p620 = scmp.eq.s32.totalorder %s21, 1
      // Predicated region
      $region37: #{psenet_forward.27} parent=31 // pred_check
        %p621 = pneg %p620
      $region38: #{psenet_forward.27} parent=31 // pred_check_branch
        %623 = sbr.rel (%p621) target = $region40
      $region39: #{psenet_forward.27} parent=31 // pred_region
        %v624 = vld [vmem:[#allocation2] sm:$0xff]
        %v625 = vld [vmem:[%s251] sm:$0x1]
        %v627 = vlaneseq
        %v628 = vshrl.u32 %v627, 7
        %v629 = vsub.s32 0, %v628
        %v630 = vrot.slane %v625, %v629
        %v632 = vadd.f32 %v624, %v630
        %v633 = vmax.f32 %v632, 0.0
        %v634 = vpack.c.bf16 %v633, %v633
        %635 = vst [vmem:[%s258] sm:$0xf] %v634
      $region40: #{psenet_forward.27} parent=31 // pred_fallthru
        _
      %p636 = scmp.lt.s32.totalorder %s19, 0
      %s637 = scalar_select %p636, %s19, 0
      %p638 = scmp.lt.s32.totalorder %s20, 0
      %s639 = scalar_select %p638, %s20, 0
      %s640 = sadd.s32 %s639, %s637
      %s641 = smul.addr %s640, 4
      %s642 = scalar_lea.vmem %s3, %s641
      // Predicated region
      $region41: #{psenet_forward.27} parent=31 // pred_check
        %p643 = pneg %p135
      $region42: #{psenet_forward.27} parent=31 // pred_check_branch
        %645 = sbr.rel (%p643) target = $region44
      $region43: #{psenet_forward.27} parent=31 // pred_region
        _
      $region44: #{psenet_forward.27} parent=31 // pred_fallthru
        _
      // Predicated region
      $region45: #{psenet_forward.27} parent=31 // pred_check
        %p646 = pneg %p135
      $region46: #{psenet_forward.27} parent=31 // pred_check_branch
        %648 = sbr.rel (%p646) target = $region48
      $region47: #{psenet_forward.27} parent=31 // pred_region
        %p649 = scmp.lt.s32.totalorder %s19, 0
        %s650 = scalar_select %p649, %s19, 0
        %p651 = scmp.lt.s32.totalorder %s20, 0
        %s652 = scalar_select %p651, %s20, 0
        %s653 = sadd.s32 %s652, %s650
        %s654 = smul.addr %s653, 4
        %s655 = scalar_lea.vmem %s3, %s654
      $region48: #{psenet_forward.27} parent=31 // pred_fallthru
        _
    $region32: #{psenet_forward.27} parent=5 // pred_fallthru
      _
    %p656 = scmp.le.s32.totalorder 2, %s9
    // Predicated region
    $region49: #{psenet_forward.27} parent=5 // pred_check
      %p657 = pneg %p656
    $region50: #{psenet_forward.27} parent=5 // pred_check_branch
      %659 = sbr.rel (%p657) target = $region52
    $region51: #{psenet_forward.27} parent=5 // pred_region
      %s660 = ssub.s32 %s9, 2
    $region52: #{psenet_forward.27} parent=5 // pred_fallthru
      _
  $region6: #{psenet_forward.27} parent=0 // loop_footer
    %s13 = sadd.s32 1, %s9
  $region7: #{psenet_forward.27} parent=0 // loop_footer_branch
    %8 = sbr.rel target = $region3
  $region8: #{psenet_forward.27} parent=0 // loop_exit
    _

// kernel: psenet_forward.29
$region0: #{psenet_forward.29}
  #allocation0 [shape = 'u32[]', space=smem, size = 0x4, offset = 0x4, fixed_abs, tag = 'smem constant byte address 0x4 - core index']
  #allocation1 [shape = 'u32[144,128]{1,0:T(1,128)}', space=vmem, size = 0x12000, scoped, tag = 'internal scratch']
  %s0 = inlined_call_operand.vmem [shape: f32[8,1], index: 0, kind: input, shape index: {}]
  %s1 = inlined_call_operand.vmem [shape: bf16[2,1,128], index: 1, kind: input, shape index: {}]
  %s2 = inlined_call_operand.vmem [shape: bf16[2,8,128], index: 2, kind: output, shape index: {}]
  %s3 = sld [smem:[#allocation0]]
  $region41: #{psenet_forward.29} parent=0
    _
  %s5 = ssub.s32 1, %s3
  %s6 = scalar_select 0, %s5, %s3
  loop: start=0, step=1, limit=4
  $region2: #{psenet_forward.29} parent=0 // loop_pre_header
    _
  $region3: #{psenet_forward.29} parent=0 // loop_header
    %s8 = sphi 0, %s12
    %p9 = scmp.ge.s32.totalorder %s8, 4
    %s15 = sphi 0, %s34
    %s16 = sphi 0, %s30
    %s17 = sphi 0, %s26
    %s18 = sphi 0, %s15
    %s19 = sphi 0, %s16
    %s20 = sphi 0, %s17
    %s21 = sphi 0, %s18
    %s22 = sphi 0, %s19
    %s23 = sphi 0, %s20
    %s37 = sphi 0, %s39
    %s40 = sphi 0, %s37
    %s41 = sphi 0, %s40
    %s57 = sphi 0, %s41
    %s65 = sphi 0, %s67
    %s68 = sphi 0, %s65
    %s69 = sphi 0, %s68
    %s85 = sphi 0, %s69
    %s95 = sphi 0, %s97
    %s98 = sphi 0, %s95
    %s99 = sphi 0, %s98
    %s115 = sphi 0, %s99
  $region4: #{psenet_forward.29} parent=0 // loop_header_branch
    %11 = sbr.rel (%p9) target = $region8
  $region5: #{psenet_forward.29} parent=0 // loop_body
    %s13 = ssub.s32 %s8, 1
    %s14 = ssub.s32 %s8, 2
    %s24 = sadd.s32 1, %s17
    %p25 = scmp.ge.s32.totalorder %s24, 1
    %s26 = scalar_select %p25, 0, %s24
    %s27 = sadd.s32 1, %s16
    %s28 = scalar_select %p25, %s27, %s16
    %p29 = scmp.ge.s32.totalorder %s28, 1
    %s30 = scalar_select %p29, 0, %s28
    %s31 = sadd.s32 1, %s15
    %s32 = scalar_select %p29, %s31, %s15
    %p33 = scmp.ge.s32.totalorder %s32, 2
    %s34 = scalar_select %p33, 0, %s32
    %s35 = ssub.s32 %s16, %s30
    %p36 = scmp.eq.s32.totalorder %s35, 0
    %s38 = sadd.s32 %s37, 1
    %s39 = scalar_select %p36, %s37, %s38
    %p42 = pneg %p36
    %p43 = scmp.eq.s32.totalorder %s8, 1
    %p44 = por %p42, %p43
    %p45 = scmp.ne.s32.totalorder %s37, %s40
    %p46 = scmp.eq.s32.totalorder %s8, 0
    %p47 = por %p45, %p46
    %p48 = scmp.ne.s32.totalorder %s37, %s40
    %p49 = scmp.eq.s32.totalorder %s13, 1
    %p50 = por %p48, %p49
    %p51 = scmp.ne.s32.totalorder %s40, %s41
    %p52 = scmp.eq.s32.totalorder %s13, 0
    %p53 = por %p51, %p52
    %p54 = scmp.ne.s32.totalorder %s40, %s41
    %p55 = scmp.eq.s32.totalorder %s14, 1
    %p56 = por %p54, %p55
    %p58 = scmp.ne.s32.totalorder %s41, %s57
    %p59 = scmp.eq.s32.totalorder %s14, 0
    %p60 = por %p58, %p59
    %s61 = ssub.s32 %s15, %s34
    %s62 = ssub.s32 %s17, %s26
    %s63 = sor.u32 %s61, %s62
    %p64 = scmp.eq.s32.totalorder %s63, 0
    %s66 = sadd.s32 %s65, 1
    %s67 = scalar_select %p64, %s65, %s66
    %p70 = pneg %p64
    %p71 = scmp.eq.s32.totalorder %s8, 1
    %p72 = por %p70, %p71
    %p73 = scmp.ne.s32.totalorder %s65, %s68
    %p74 = scmp.eq.s32.totalorder %s8, 0
    %p75 = por %p73, %p74
    %p76 = scmp.ne.s32.totalorder %s65, %s68
    %p77 = scmp.eq.s32.totalorder %s13, 1
    %p78 = por %p76, %p77
    %p79 = scmp.ne.s32.totalorder %s68, %s69
    %p80 = scmp.eq.s32.totalorder %s13, 0
    %p81 = por %p79, %p80
    %p82 = scmp.ne.s32.totalorder %s68, %s69
    %p83 = scmp.eq.s32.totalorder %s14, 1
    %p84 = por %p82, %p83
    %p86 = scmp.ne.s32.totalorder %s69, %s85
    %p87 = scmp.eq.s32.totalorder %s14, 0
    %p88 = por %p86, %p87
    %s89 = ssub.s32 %s15, %s34
    %s90 = ssub.s32 %s16, %s30
    %s91 = sor.u32 %s89, %s90
    %s92 = ssub.s32 %s17, %s26
    %s93 = sor.u32 %s91, %s92
    %p94 = scmp.eq.s32.totalorder %s93, 0
    %s96 = sadd.s32 %s95, 1
    %s97 = scalar_select %p94, %s95, %s96
    %p100 = pneg %p94
    %p101 = scmp.eq.s32.totalorder %s8, 1
    %p102 = por %p100, %p101
    %p103 = scmp.ne.s32.totalorder %s95, %s98
    %p104 = scmp.eq.s32.totalorder %s8, 0
    %p105 = por %p103, %p104
    %p106 = scmp.ne.s32.totalorder %s95, %s98
    %p107 = scmp.eq.s32.totalorder %s13, 1
    %p108 = por %p106, %p107
    %p109 = scmp.ne.s32.totalorder %s98, %s99
    %p110 = scmp.eq.s32.totalorder %s13, 0
    %p111 = por %p109, %p110
    %p112 = scmp.ne.s32.totalorder %s98, %s99
    %p113 = scmp.eq.s32.totalorder %s14, 1
    %p114 = por %p112, %p113
    %p116 = scmp.ne.s32.totalorder %s99, %s115
    %p117 = scmp.eq.s32.totalorder %s14, 0
    %p118 = por %p116, %p117
    %p119 = scmp.le.s32.totalorder 1, %s8
    %p120 = scmp.lt.s32.totalorder %s8, 3
    %p121 = pnand %p119, %p120
    %p122 = pneg %p121
    // Predicated region
    $region9: #{psenet_forward.29} parent=5 // pred_check
      _
    $region10: #{psenet_forward.29} parent=5 // pred_check_branch
      %124 = sbr.rel (%p121) target = $region12
    $region11: #{psenet_forward.29} parent=5 // pred_region
      %s125 = ssub.s32 %s8, 1
      // Predicated region
      $region13: #{psenet_forward.29} parent=11 // pred_check
        %p126 = pneg %p53
      $region14: #{psenet_forward.29} parent=11 // pred_check_branch
        %128 = sbr.rel (%p126) target = $region16
      $region15: #{psenet_forward.29} parent=11 // pred_region
        %p129 = scmp.lt.s32.totalorder %s19, 0
        %s130 = scalar_select %p129, %s19, 0
        %s131 = smul.addr %s130, 8
        %s132 = scalar_lea.vmem %s0, %s131
      $region16: #{psenet_forward.29} parent=11 // pred_fallthru
        _
    $region12: #{psenet_forward.29} parent=5 // pred_fallthru
      _
    %p133 = scmp.lt.s32.totalorder %s8, 2
    // Predicated region
    $region17: #{psenet_forward.29} parent=5 // pred_check
      %p134 = pneg %p133
    $region18: #{psenet_forward.29} parent=5 // pred_check_branch
      %136 = sbr.rel (%p134) target = $region20
    $region19: #{psenet_forward.29} parent=5 // pred_region
      // Predicated region
      $region21: #{psenet_forward.29} parent=19 // pred_check
        %p137 = pneg %p75
      $region22: #{psenet_forward.29} parent=19 // pred_check_branch
        %139 = sbr.rel (%p137) target = $region24
      $region23: #{psenet_forward.29} parent=19 // pred_region
        %p140 = scmp.lt.s32.totalorder %s15, 1
        %s141 = scalar_select %p140, %s15, 1
        %p142 = scmp.lt.s32.totalorder %s17, 0
        %s143 = scalar_select %p142, %s17, 0
        %s144 = sadd.s32 %s143, %s141
        %s145 = scalar_lea.vmem %s1, %s144
      $region24: #{psenet_forward.29} parent=19 // pred_fallthru
        _
    $region20: #{psenet_forward.29} parent=5 // pred_fallthru
      _
    %p146 = scmp.le.s32.totalorder 1, %s8
    %p147 = scmp.lt.s32.totalorder %s8, 3
    %p148 = pnand %p146, %p147
    %p149 = pneg %p148
    // Predicated region
    $region25: #{psenet_forward.29} parent=5 // pred_check
      _
    $region26: #{psenet_forward.29} parent=5 // pred_check_branch
      %151 = sbr.rel (%p148) target = $region28
    $region27: #{psenet_forward.29} parent=5 // pred_region
      %s152 = ssub.s32 %s8, 1
      %p153 = scmp.lt.s32.totalorder %s19, 0
      %s154 = scalar_select %p153, %s19, 0
      %s155 = smul.addr %s154, 8
      %s156 = scalar_lea.vmem %s0, %s155
      %p157 = pneg %p53
      %p158 = pneg %p50
      %p159 = scmp.lt.s32.totalorder %s18, 1
      %s160 = scalar_select %p159, %s18, 1
      %p161 = scmp.lt.s32.totalorder %s20, 0
      %s162 = scalar_select %p161, %s20, 0
      %s163 = sadd.s32 %s162, %s160
      %s164 = scalar_lea.vmem %s1, %s163
      %p165 = pneg %p81
      %p166 = pneg %p78
      %p167 = pneg %p111
      %p168 = pneg %p108
      %p169 = scmp.lt.s32.totalorder %s18, 1
      %s170 = scalar_select %p169, %s18, 1
      %p171 = scmp.lt.s32.totalorder %s19, 0
      %s172 = scalar_select %p171, %s19, 0
      %p173 = scmp.lt.s32.totalorder %s20, 0
      %s174 = scalar_select %p173, %s20, 0
      %s175 = sadd.s32 %s174, %s172
      %s176 = sadd.s32 %s175, %s170
      %s177 = smul.addr %s176, 4
      %s178 = scalar_lea.vmem %s2, %s177
      %p179 = scmp.lt.s32.totalorder %s19, 0
      %s180 = scalar_select %p179, %s19, 0
      %s181 = smul.addr %s180, 8
      %s182 = scalar_lea.vmem %s0, %s181
      %p183 = scmp.lt.s32.totalorder %s18, 1
      %s184 = scalar_select %p183, %s18, 1
      %p185 = scmp.lt.s32.totalorder %s20, 0
      %s186 = scalar_select %p185, %s20, 0
      %s187 = sadd.s32 %s186, %s184
      %s188 = scalar_lea.vmem %s1, %s187
      %p189 = scmp.lt.s32.totalorder %s18, 1
      %s190 = scalar_select %p189, %s18, 1
      %p191 = scmp.lt.s32.totalorder %s19, 0
      %s192 = scalar_select %p191, %s19, 0
      %p193 = scmp.lt.s32.totalorder %s20, 0
      %s194 = scalar_select %p193, %s20, 0
      %s195 = sadd.s32 %s194, %s192
      %s196 = sadd.s32 %s195, %s190
      %s197 = smul.addr %s196, 4
      %s198 = scalar_lea.vmem %s2, %s197
      %v199 = vld [vmem:[%s182] sm:$0xff]
      %v200 = vld [vmem:[%s188] sm:$0x1]
      %v201 = vunpack.c.l.bf16 %v200
      %vm202 = vcmask 7168
      %v204 = vsel %vm202, %v199, 0
      %vm206 = vcmask 1040384
      %v208 = vsel %vm206, %v201, 0
      %210 = vmatprep.subr.mxu0 0.0
      %211 = vmatpush1.msra.mxu0 %v208
      %212 = vmatprep.subr.mxu0 0.0
      %213 = vmatpush1.msra.mxu0 0.0
      %214 = vmatprep.subr.mxu0 0.0
      %215 = vmatpush1.msra.mxu0 0.0
      %216 = vmatprep.subr.mxu0 0.0
      %217 = vmatpush1.msra.mxu0 0.0
      %218 = vmatprep.subr.mxu0 0.0
      %219 = vmatpush1.msra.mxu0 0.0
      %220 = vmatprep.subr.mxu0 0.0
      %221 = vmatpush1.msra.mxu0 0.0
      %222 = vmatprep.subr.mxu0 0.0
      %223 = vmatpush1.msra.mxu0 0.0
      %224 = vmatprep.subr.mxu0 0.0
      %225 = vmatpush1.msra.mxu0 0.0
      %226 = vmatprep.subr.mxu0 0.0
      %227 = vmatpush1.msra.mxu0 0.0
      %228 = vmatprep.subr.mxu0 0.0
      %229 = vmatpush1.msra.mxu0 0.0
      %230 = vmatprep.subr.mxu0 0.0
      %231 = vmatpush1.msra.mxu0 0.0
      %232 = vmatprep.subr.mxu0 0.0
      %233 = vmatpush1.msra.mxu0 0.0
      %234 = vmatprep.subr.mxu0 0.0
      %235 = vmatpush1.msra.mxu0 0.0
      %236 = vmatprep.subr.mxu0 0.0
      %237 = vmatpush1.msra.mxu0 0.0
      %238 = vmatprep.subr.mxu0 0.0
      %239 = vmatpush1.msra.mxu0 0.0
      %240 = vmatprep.subr.mxu0 0.0
      %241 = vmatpush1.msra.mxu0 0.0
      %242 = vmatprep.subr.mxu0 0.0
      %243 = vmatpush1.msra.mxu0 0.0
      %244 = vmatprep.subr.mxu0 0.0
      %245 = vmatpush1.msra.mxu0 0.0
      %246 = vmatprep.subr.mxu0 0.0
      %247 = vmatpush1.msra.mxu0 0.0
      %248 = vmatprep.subr.mxu0 0.0
      %249 = vmatpush1.msra.mxu0 0.0
      %250 = vmatprep.subr.mxu0 0.0
      %251 = vmatpush1.msra.mxu0 0.0
      %252 = vmatprep.subr.mxu0 0.0
      %253 = vmatpush1.msra.mxu0 0.0
      %254 = vmatprep.subr.mxu0 0.0
      %255 = vmatpush1.msra.mxu0 0.0
      %256 = vmatprep.subr.mxu0 0.0
      %257 = vmatpush1.msra.mxu0 0.0
      %258 = vmatprep.subr.mxu0 0.0
      %259 = vmatpush1.msra.mxu0 0.0
      %260 = vmatprep.subr.mxu0 0.0
      %261 = vmatpush1.msra.mxu0 0.0
      %262 = vmatprep.subr.mxu0 0.0
      %263 = vmatpush1.msra.mxu0 0.0
      %264 = vmatprep.subr.mxu0 0.0
      %265 = vmatpush1.msra.mxu0 0.0
      %266 = vmatprep.subr.mxu0 0.0
      %267 = vmatpush1.msra.mxu0 0.0
      %268 = vmatprep.subr.mxu0 0.0
      %269 = vmatpush1.msra.mxu0 0.0
      %270 = vmatprep.subr.mxu0 0.0
      %271 = vmatpush1.msra.mxu0 0.0
      %272 = vmatprep.subr.mxu0 0.0
      %273 = vmatpush1.msra.mxu0 0.0
      %274 = vmatprep.mubr.f32.mxu0 0.0
      %275 = vmatmul.mubr.f32.gmra.mrb[0].mxu0 %v204
      %v276 = vpop.f32.mrb[0].mxu0
      %v277 = vadd.f32 0.0, %v276
      %v278 = vpop.f32.mrb[0].mxu0
      %279 = vdwg.mxu0
      %v280 = vpack.c.bf16 %v277, %v277
      %281 = vst [vmem:[%s198] sm:$0xf] %v280
      %p282 = scmp.lt.s32.totalorder %s18, 1
      %s283 = scalar_select %p282, %s18, 1
      %p284 = scmp.lt.s32.totalorder %s19, 0
      %s285 = scalar_select %p284, %s19, 0
      %p286 = scmp.lt.s32.totalorder %s20, 0
      %s287 = scalar_select %p286, %s20, 0
      %s288 = sadd.s32 %s287, %s285
      %s289 = sadd.s32 %s288, %s283
      %s290 = smul.addr %s289, 4
      %s291 = scalar_lea.vmem %s2, %s290
      // Predicated region
      $region29: #{psenet_forward.29} parent=27 // pred_check
        %p292 = pneg %p108
      $region30: #{psenet_forward.29} parent=27 // pred_check_branch
        %294 = sbr.rel (%p292) target = $region32
      $region31: #{psenet_forward.29} parent=27 // pred_region
        _
      $region32: #{psenet_forward.29} parent=27 // pred_fallthru
        _
    $region28: #{psenet_forward.29} parent=5 // pred_fallthru
      _
    %p295 = scmp.le.s32.totalorder 2, %s8
    // Predicated region
    $region33: #{psenet_forward.29} parent=5 // pred_check
      %p296 = pneg %p295
    $region34: #{psenet_forward.29} parent=5 // pred_check_branch
      %298 = sbr.rel (%p296) target = $region36
    $region35: #{psenet_forward.29} parent=5 // pred_region
      %s299 = ssub.s32 %s8, 2
      // Predicated region
      $region37: #{psenet_forward.29} parent=35 // pred_check
        %p300 = pneg %p114
      $region38: #{psenet_forward.29} parent=35 // pred_check_branch
        %302 = sbr.rel (%p300) target = $region40
      $region39: #{psenet_forward.29} parent=35 // pred_region
        %p303 = scmp.lt.s32.totalorder %s21, 1
        %s304 = scalar_select %p303, %s21, 1
        %p305 = scmp.lt.s32.totalorder %s22, 0
        %s306 = scalar_select %p305, %s22, 0
        %p307 = scmp.lt.s32.totalorder %s23, 0
        %s308 = scalar_select %p307, %s23, 0
        %s309 = sadd.s32 %s308, %s306
        %s310 = sadd.s32 %s309, %s304
        %s311 = smul.addr %s310, 4
        %s312 = scalar_lea.vmem %s2, %s311
      $region40: #{psenet_forward.29} parent=35 // pred_fallthru
        _
    $region36: #{psenet_forward.29} parent=5 // pred_fallthru
      _
  $region6: #{psenet_forward.29} parent=0 // loop_footer
    %s12 = sadd.s32 1, %s8
  $region7: #{psenet_forward.29} parent=0 // loop_footer_branch
    %7 = sbr.rel target = $region3
  $region8: #{psenet_forward.29} parent=0 // loop_exit
    _

// kernel: psenet_forward.30
$region0: #{psenet_forward.30}
  #allocation0 [shape = 'u32[]', space=smem, size = 0x4, offset = 0x4, fixed_abs, tag = 'smem constant byte address 0x4 - core index']
  #allocation1 [shape = 'u32[144,128]{1,0:T(1,128)}', space=vmem, size = 0x12000, scoped, tag = 'internal scratch']
  %s0 = inlined_call_operand.vmem [shape: f32[8,1], index: 0, kind: input, shape index: {}]
  %s1 = inlined_call_operand.vmem [shape: bf16[4,1,128], index: 1, kind: input, shape index: {}]
  %s2 = inlined_call_operand.vmem [shape: bf16[4,8,128], index: 2, kind: output, shape index: {}]
  %s3 = sld [smem:[#allocation0]]
  $region41: #{psenet_forward.30} parent=0
    _
  %s5 = ssub.s32 1, %s3
  %s6 = scalar_select 0, %s5, %s3
  loop: start=0, step=1, limit=6
  $region2: #{psenet_forward.30} parent=0 // loop_pre_header
    _
  $region3: #{psenet_forward.30} parent=0 // loop_header
    %s8 = sphi 0, %s12
    %p9 = scmp.ge.s32.totalorder %s8, 6
    %s15 = sphi 0, %s34
    %s16 = sphi 0, %s30
    %s17 = sphi 0, %s26
    %s18 = sphi 0, %s15
    %s19 = sphi 0, %s16
    %s20 = sphi 0, %s17
    %s21 = sphi 0, %s18
    %s22 = sphi 0, %s19
    %s23 = sphi 0, %s20
    %s37 = sphi 0, %s39
    %s40 = sphi 0, %s37
    %s41 = sphi 0, %s40
    %s57 = sphi 0, %s41
    %s65 = sphi 0, %s67
    %s68 = sphi 0, %s65
    %s69 = sphi 0, %s68
    %s85 = sphi 0, %s69
    %s95 = sphi 0, %s97
    %s98 = sphi 0, %s95
    %s99 = sphi 0, %s98
    %s115 = sphi 0, %s99
  $region4: #{psenet_forward.30} parent=0 // loop_header_branch
    %11 = sbr.rel (%p9) target = $region8
  $region5: #{psenet_forward.30} parent=0 // loop_body
    %s13 = ssub.s32 %s8, 1
    %s14 = ssub.s32 %s8, 2
    %s24 = sadd.s32 1, %s17
    %p25 = scmp.ge.s32.totalorder %s24, 1
    %s26 = scalar_select %p25, 0, %s24
    %s27 = sadd.s32 1, %s16
    %s28 = scalar_select %p25, %s27, %s16
    %p29 = scmp.ge.s32.totalorder %s28, 1
    %s30 = scalar_select %p29, 0, %s28
    %s31 = sadd.s32 1, %s15
    %s32 = scalar_select %p29, %s31, %s15
    %p33 = scmp.ge.s32.totalorder %s32, 4
    %s34 = scalar_select %p33, 0, %s32
    %s35 = ssub.s32 %s16, %s30
    %p36 = scmp.eq.s32.totalorder %s35, 0
    %s38 = sadd.s32 %s37, 1
    %s39 = scalar_select %p36, %s37, %s38
    %p42 = pneg %p36
    %p43 = scmp.eq.s32.totalorder %s8, 3
    %p44 = por %p42, %p43
    %p45 = scmp.ne.s32.totalorder %s37, %s40
    %p46 = scmp.eq.s32.totalorder %s8, 0
    %p47 = por %p45, %p46
    %p48 = scmp.ne.s32.totalorder %s37, %s40
    %p49 = scmp.eq.s32.totalorder %s13, 3
    %p50 = por %p48, %p49
    %p51 = scmp.ne.s32.totalorder %s40, %s41
    %p52 = scmp.eq.s32.totalorder %s13, 0
    %p53 = por %p51, %p52
    %p54 = scmp.ne.s32.totalorder %s40, %s41
    %p55 = scmp.eq.s32.totalorder %s14, 3
    %p56 = por %p54, %p55
    %p58 = scmp.ne.s32.totalorder %s41, %s57
    %p59 = scmp.eq.s32.totalorder %s14, 0
    %p60 = por %p58, %p59
    %s61 = ssub.s32 %s15, %s34
    %s62 = ssub.s32 %s17, %s26
    %s63 = sor.u32 %s61, %s62
    %p64 = scmp.eq.s32.totalorder %s63, 0
    %s66 = sadd.s32 %s65, 1
    %s67 = scalar_select %p64, %s65, %s66
    %p70 = pneg %p64
    %p71 = scmp.eq.s32.totalorder %s8, 3
    %p72 = por %p70, %p71
    %p73 = scmp.ne.s32.totalorder %s65, %s68
    %p74 = scmp.eq.s32.totalorder %s8, 0
    %p75 = por %p73, %p74
    %p76 = scmp.ne.s32.totalorder %s65, %s68
    %p77 = scmp.eq.s32.totalorder %s13, 3
    %p78 = por %p76, %p77
    %p79 = scmp.ne.s32.totalorder %s68, %s69
    %p80 = scmp.eq.s32.totalorder %s13, 0
    %p81 = por %p79, %p80
    %p82 = scmp.ne.s32.totalorder %s68, %s69
    %p83 = scmp.eq.s32.totalorder %s14, 3
    %p84 = por %p82, %p83
    %p86 = scmp.ne.s32.totalorder %s69, %s85
    %p87 = scmp.eq.s32.totalorder %s14, 0
    %p88 = por %p86, %p87
    %s89 = ssub.s32 %s15, %s34
    %s90 = ssub.s32 %s16, %s30
    %s91 = sor.u32 %s89, %s90
    %s92 = ssub.s32 %s17, %s26
    %s93 = sor.u32 %s91, %s92
    %p94 = scmp.eq.s32.totalorder %s93, 0
    %s96 = sadd.s32 %s95, 1
    %s97 = scalar_select %p94, %s95, %s96
    %p100 = pneg %p94
    %p101 = scmp.eq.s32.totalorder %s8, 3
    %p102 = por %p100, %p101
    %p103 = scmp.ne.s32.totalorder %s95, %s98
    %p104 = scmp.eq.s32.totalorder %s8, 0
    %p105 = por %p103, %p104
    %p106 = scmp.ne.s32.totalorder %s95, %s98
    %p107 = scmp.eq.s32.totalorder %s13, 3
    %p108 = por %p106, %p107
    %p109 = scmp.ne.s32.totalorder %s98, %s99
    %p110 = scmp.eq.s32.totalorder %s13, 0
    %p111 = por %p109, %p110
    %p112 = scmp.ne.s32.totalorder %s98, %s99
    %p113 = scmp.eq.s32.totalorder %s14, 3
    %p114 = por %p112, %p113
    %p116 = scmp.ne.s32.totalorder %s99, %s115
    %p117 = scmp.eq.s32.totalorder %s14, 0
    %p118 = por %p116, %p117
    %p119 = scmp.le.s32.totalorder 1, %s8
    %p120 = scmp.lt.s32.totalorder %s8, 5
    %p121 = pnand %p119, %p120
    %p122 = pneg %p121
    // Predicated region
    $region9: #{psenet_forward.30} parent=5 // pred_check
      _
    $region10: #{psenet_forward.30} parent=5 // pred_check_branch
      %124 = sbr.rel (%p121) target = $region12
    $region11: #{psenet_forward.30} parent=5 // pred_region
      %s125 = ssub.s32 %s8, 1
      // Predicated region
      $region13: #{psenet_forward.30} parent=11 // pred_check
        %p126 = pneg %p53
      $region14: #{psenet_forward.30} parent=11 // pred_check_branch
        %128 = sbr.rel (%p126) target = $region16
      $region15: #{psenet_forward.30} parent=11 // pred_region
        %p129 = scmp.lt.s32.totalorder %s19, 0
        %s130 = scalar_select %p129, %s19, 0
        %s131 = smul.addr %s130, 8
        %s132 = scalar_lea.vmem %s0, %s131
      $region16: #{psenet_forward.30} parent=11 // pred_fallthru
        _
    $region12: #{psenet_forward.30} parent=5 // pred_fallthru
      _
    %p133 = scmp.lt.s32.totalorder %s8, 4
    // Predicated region
    $region17: #{psenet_forward.30} parent=5 // pred_check
      %p134 = pneg %p133
    $region18: #{psenet_forward.30} parent=5 // pred_check_branch
      %136 = sbr.rel (%p134) target = $region20
    $region19: #{psenet_forward.30} parent=5 // pred_region
      // Predicated region
      $region21: #{psenet_forward.30} parent=19 // pred_check
        %p137 = pneg %p75
      $region22: #{psenet_forward.30} parent=19 // pred_check_branch
        %139 = sbr.rel (%p137) target = $region24
      $region23: #{psenet_forward.30} parent=19 // pred_region
        %p140 = scmp.lt.s32.totalorder %s15, 3
        %s141 = scalar_select %p140, %s15, 3
        %p142 = scmp.lt.s32.totalorder %s17, 0
        %s143 = scalar_select %p142, %s17, 0
        %s144 = sadd.s32 %s143, %s141
        %s145 = scalar_lea.vmem %s1, %s144
      $region24: #{psenet_forward.30} parent=19 // pred_fallthru
        _
    $region20: #{psenet_forward.30} parent=5 // pred_fallthru
      _
    %p146 = scmp.le.s32.totalorder 1, %s8
    %p147 = scmp.lt.s32.totalorder %s8, 5
    %p148 = pnand %p146, %p147
    %p149 = pneg %p148
    // Predicated region
    $region25: #{psenet_forward.30} parent=5 // pred_check
      _
    $region26: #{psenet_forward.30} parent=5 // pred_check_branch
      %151 = sbr.rel (%p148) target = $region28
    $region27: #{psenet_forward.30} parent=5 // pred_region
      %s152 = ssub.s32 %s8, 1
      %p153 = scmp.lt.s32.totalorder %s19, 0
      %s154 = scalar_select %p153, %s19, 0
      %s155 = smul.addr %s154, 8
      %s156 = scalar_lea.vmem %s0, %s155
      %p157 = pneg %p53
      %p158 = pneg %p50
      %p159 = scmp.lt.s32.totalorder %s18, 3
      %s160 = scalar_select %p159, %s18, 3
      %p161 = scmp.lt.s32.totalorder %s20, 0
      %s162 = scalar_select %p161, %s20, 0
      %s163 = sadd.s32 %s162, %s160
      %s164 = scalar_lea.vmem %s1, %s163
      %p165 = pneg %p81
      %p166 = pneg %p78
      %p167 = pneg %p111
      %p168 = pneg %p108
      %p169 = scmp.lt.s32.totalorder %s18, 3
      %s170 = scalar_select %p169, %s18, 3
      %p171 = scmp.lt.s32.totalorder %s19, 0
      %s172 = scalar_select %p171, %s19, 0
      %p173 = scmp.lt.s32.totalorder %s20, 0
      %s174 = scalar_select %p173, %s20, 0
      %s175 = sadd.s32 %s174, %s172
      %s176 = sadd.s32 %s175, %s170
      %s177 = smul.addr %s176, 4
      %s178 = scalar_lea.vmem %s2, %s177
      %p179 = scmp.lt.s32.totalorder %s19, 0
      %s180 = scalar_select %p179, %s19, 0
      %s181 = smul.addr %s180, 8
      %s182 = scalar_lea.vmem %s0, %s181
      %p183 = scmp.lt.s32.totalorder %s18, 3
      %s184 = scalar_select %p183, %s18, 3
      %p185 = scmp.lt.s32.totalorder %s20, 0
      %s186 = scalar_select %p185, %s20, 0
      %s187 = sadd.s32 %s186, %s184
      %s188 = scalar_lea.vmem %s1, %s187
      %p189 = scmp.lt.s32.totalorder %s18, 3
      %s190 = scalar_select %p189, %s18, 3
      %p191 = scmp.lt.s32.totalorder %s19, 0
      %s192 = scalar_select %p191, %s19, 0
      %p193 = scmp.lt.s32.totalorder %s20, 0
      %s194 = scalar_select %p193, %s20, 0
      %s195 = sadd.s32 %s194, %s192
      %s196 = sadd.s32 %s195, %s190
      %s197 = smul.addr %s196, 4
      %s198 = scalar_lea.vmem %s2, %s197
      %v199 = vld [vmem:[%s182] sm:$0xff]
      %v200 = vld [vmem:[%s188] sm:$0x1]
      %v201 = vunpack.c.l.bf16 %v200
      %vm202 = vcmask 7168
      %v204 = vsel %vm202, %v199, 0
      %vm206 = vcmask 1040384
      %v208 = vsel %vm206, %v201, 0
      %210 = vmatprep.subr.mxu0 0.0
      %211 = vmatpush1.msra.mxu0 %v208
      %212 = vmatprep.subr.mxu0 0.0
      %213 = vmatpush1.msra.mxu0 0.0
      %214 = vmatprep.subr.mxu0 0.0
      %215 = vmatpush1.msra.mxu0 0.0
      %216 = vmatprep.subr.mxu0 0.0
      %217 = vmatpush1.msra.mxu0 0.0
      %218 = vmatprep.subr.mxu0 0.0
      %219 = vmatpush1.msra.mxu0 0.0
      %220 = vmatprep.subr.mxu0 0.0
      %221 = vmatpush1.msra.mxu0 0.0
      %222 = vmatprep.subr.mxu0 0.0
      %223 = vmatpush1.msra.mxu0 0.0
      %224 = vmatprep.subr.mxu0 0.0
      %225 = vmatpush1.msra.mxu0 0.0
      %226 = vmatprep.subr.mxu0 0.0
      %227 = vmatpush1.msra.mxu0 0.0
      %228 = vmatprep.subr.mxu0 0.0
      %229 = vmatpush1.msra.mxu0 0.0
      %230 = vmatprep.subr.mxu0 0.0
      %231 = vmatpush1.msra.mxu0 0.0
      %232 = vmatprep.subr.mxu0 0.0
      %233 = vmatpush1.msra.mxu0 0.0
      %234 = vmatprep.subr.mxu0 0.0
      %235 = vmatpush1.msra.mxu0 0.0
      %236 = vmatprep.subr.mxu0 0.0
      %237 = vmatpush1.msra.mxu0 0.0
      %238 = vmatprep.subr.mxu0 0.0
      %239 = vmatpush1.msra.mxu0 0.0
      %240 = vmatprep.subr.mxu0 0.0
      %241 = vmatpush1.msra.mxu0 0.0
      %242 = vmatprep.subr.mxu0 0.0
      %243 = vmatpush1.msra.mxu0 0.0
      %244 = vmatprep.subr.mxu0 0.0
      %245 = vmatpush1.msra.mxu0 0.0
      %246 = vmatprep.subr.mxu0 0.0
      %247 = vmatpush1.msra.mxu0 0.0
      %248 = vmatprep.subr.mxu0 0.0
      %249 = vmatpush1.msra.mxu0 0.0
      %250 = vmatprep.subr.mxu0 0.0
      %251 = vmatpush1.msra.mxu0 0.0
      %252 = vmatprep.subr.mxu0 0.0
      %253 = vmatpush1.msra.mxu0 0.0
      %254 = vmatprep.subr.mxu0 0.0
      %255 = vmatpush1.msra.mxu0 0.0
      %256 = vmatprep.subr.mxu0 0.0
      %257 = vmatpush1.msra.mxu0 0.0
      %258 = vmatprep.subr.mxu0 0.0
      %259 = vmatpush1.msra.mxu0 0.0
      %260 = vmatprep.subr.mxu0 0.0
      %261 = vmatpush1.msra.mxu0 0.0
      %262 = vmatprep.subr.mxu0 0.0
      %263 = vmatpush1.msra.mxu0 0.0
      %264 = vmatprep.subr.mxu0 0.0
      %265 = vmatpush1.msra.mxu0 0.0
      %266 = vmatprep.subr.mxu0 0.0
      %267 = vmatpush1.msra.mxu0 0.0
      %268 = vmatprep.subr.mxu0 0.0
      %269 = vmatpush1.msra.mxu0 0.0
      %270 = vmatprep.subr.mxu0 0.0
      %271 = vmatpush1.msra.mxu0 0.0
      %272 = vmatprep.subr.mxu0 0.0
      %273 = vmatpush1.msra.mxu0 0.0
      %274 = vmatprep.mubr.f32.mxu0 0.0
      %275 = vmatmul.mubr.f32.gmra.mrb[0].mxu0 %v204
      %v276 = vpop.f32.mrb[0].mxu0
      %v277 = vadd.f32 0.0, %v276
      %v278 = vpop.f32.mrb[0].mxu0
      %279 = vdwg.mxu0
      %v280 = vpack.c.bf16 %v277, %v277
      %281 = vst [vmem:[%s198] sm:$0xf] %v280
      %p282 = scmp.lt.s32.totalorder %s18, 3
      %s283 = scalar_select %p282, %s18, 3
      %p284 = scmp.lt.s32.totalorder %s19, 0
      %s285 = scalar_select %p284, %s19, 0
      %p286 = scmp.lt.s32.totalorder %s20, 0
      %s287 = scalar_select %p286, %s20, 0
      %s288 = sadd.s32 %s287, %s285
      %s289 = sadd.s32 %s288, %s283
      %s290 = smul.addr %s289, 4
      %s291 = scalar_lea.vmem %s2, %s290
      // Predicated region
      $region29: #{psenet_forward.30} parent=27 // pred_check
        %p292 = pneg %p108
      $region30: #{psenet_forward.30} parent=27 // pred_check_branch
        %294 = sbr.rel (%p292) target = $region32
      $region31: #{psenet_forward.30} parent=27 // pred_region
        _
      $region32: #{psenet_forward.30} parent=27 // pred_fallthru
        _
    $region28: #{psenet_forward.30} parent=5 // pred_fallthru
      _
    %p295 = scmp.le.s32.totalorder 2, %s8
    // Predicated region
    $region33: #{psenet_forward.30} parent=5 // pred_check
      %p296 = pneg %p295
    $region34: #{psenet_forward.30} parent=5 // pred_check_branch
      %298 = sbr.rel (%p296) target = $region36
    $region35: #{psenet_forward.30} parent=5 // pred_region
      %s299 = ssub.s32 %s8, 2
      // Predicated region
      $region37: #{psenet_forward.30} parent=35 // pred_check
        %p300 = pneg %p114
      $region38: #{psenet_forward.30} parent=35 // pred_check_branch
        %302 = sbr.rel (%p300) target = $region40
      $region39: #{psenet_forward.30} parent=35 // pred_region
        %p303 = scmp.lt.s32.totalorder %s21, 3
        %s304 = scalar_select %p303, %s21, 3
        %p305 = scmp.lt.s32.totalorder %s22, 0
        %s306 = scalar_select %p305, %s22, 0
        %p307 = scmp.lt.s32.totalorder %s23, 0
        %s308 = scalar_select %p307, %s23, 0
        %s309 = sadd.s32 %s308, %s306
        %s310 = sadd.s32 %s309, %s304
        %s311 = smul.addr %s310, 4
        %s312 = scalar_lea.vmem %s2, %s311
      $region40: #{psenet_forward.30} parent=35 // pred_fallthru
        _
    $region36: #{psenet_forward.30} parent=5 // pred_fallthru
      _
  $region6: #{psenet_forward.30} parent=0 // loop_footer
    %s12 = sadd.s32 1, %s8
  $region7: #{psenet_forward.30} parent=0 // loop_footer_branch
    %7 = sbr.rel target = $region3
  $region8: #{psenet_forward.30} parent=0 // loop_exit
    _

// kernel: psenet_forward.31
$region0: #{psenet_forward.31}
  #allocation0 [shape = 'u32[]', space=smem, size = 0x4, offset = 0x4, fixed_abs, tag = 'smem constant byte address 0x4 - core index']
  #allocation1 [shape = 'u32[144,128]{1,0:T(1,128)}', space=vmem, size = 0x12000, scoped, tag = 'internal scratch']
  #allocation2 [shape = 'f32[8,128]{1,0:T(8,128)}', space=vmem, size = 0x1000, scoped, tag = 'scratch operand']
  %s0 = inlined_call_operand.vmem [shape: bf16[8,128], index: 0, kind: input, shape index: {}]
  %s1 = inlined_call_operand.vmem [shape: bf16[128,128], index: 1, kind: input, shape index: {}]
  %s2 = inlined_call_operand.vmem [shape: f32[1,128], index: 2, kind: input, shape index: {}]
  %s3 = inlined_call_operand.vmem [shape: bf16[8,128], index: 3, kind: input, shape index: {}]
  %s4 = inlined_call_operand.vmem [shape: bf16[8,128], index: 4, kind: output, shape index: {}]
  %s5 = sld [smem:[#allocation0]]
  $region34: #{psenet_forward.31} parent=0
    _
  %s7 = ssub.s32 1, %s5
  %s8 = scalar_select 0, %s7, %s5
  // Predicated region
  $region2: #{psenet_forward.31} parent=0 // pred_check
    _
  $region3: #{psenet_forward.31} parent=0 // pred_check_branch
    %10 = sbr.rel (0) target = $region5
  $region4: #{psenet_forward.31} parent=0 // pred_region
    _
  $region5: #{psenet_forward.31} parent=0 // pred_fallthru
    _
  // Predicated region
  $region6: #{psenet_forward.31} parent=0 // pred_check
    _
  $region7: #{psenet_forward.31} parent=0 // pred_check_branch
    %12 = sbr.rel (0) target = $region9
  $region8: #{psenet_forward.31} parent=0 // pred_region
    _
  $region9: #{psenet_forward.31} parent=0 // pred_fallthru
    _
  // Predicated region
  $region10: #{psenet_forward.31} parent=0 // pred_check
    _
  $region11: #{psenet_forward.31} parent=0 // pred_check_branch
    %14 = sbr.rel (0) target = $region13
  $region12: #{psenet_forward.31} parent=0 // pred_region
    _
  $region13: #{psenet_forward.31} parent=0 // pred_fallthru
    _
  // Predicated region
  $region14: #{psenet_forward.31} parent=0 // pred_check
    _
  $region15: #{psenet_forward.31} parent=0 // pred_check_branch
    %16 = sbr.rel (0) target = $region17
  $region16: #{psenet_forward.31} parent=0 // pred_region
    _
  $region17: #{psenet_forward.31} parent=0 // pred_fallthru
    _
  %p18 = scmp.eq.s32.totalorder 0, 0
  // Predicated region
  $region18: #{psenet_forward.31} parent=0 // pred_check
    %p19 = pneg %p18
  $region19: #{psenet_forward.31} parent=0 // pred_check_branch
    %21 = sbr.rel (%p19) target = $region21
  $region20: #{psenet_forward.31} parent=0 // pred_region
    %22 = vst [vmem:[#allocation2] sm:$0xff] 0.0
  $region21: #{psenet_forward.31} parent=0 // pred_fallthru
    _
  %v23 = vld [vmem:[#allocation2] sm:$0xff]
  %v24 = vld [vmem:[%s0] sm:$0xf]
  %v25 = vld [vmem:[%s1] sm:$0xf]
  %v26 = vld [vmem:[%s1 + $0x4] sm:$0xf]
  %v27 = vld [vmem:[%s1 + $0x8] sm:$0xf]
  %v28 = vld [vmem:[%s1 + $0xc] sm:$0xf]
  %v29 = vld [vmem:[%s1 + $0x10] sm:$0xf]
  %v30 = vld [vmem:[%s1 + $0x14] sm:$0xf]
  %v31 = vld [vmem:[%s1 + $0x18] sm:$0xf]
  %v32 = vld [vmem:[%s1 + $0x1c] sm:$0xf]
  %v33 = vld [vmem:[%s1 + $0x20] sm:$0xf]
  %v34 = vld [vmem:[%s1 + $0x24] sm:$0xf]
  %v35 = vld [vmem:[%s1 + $0x28] sm:$0xf]
  %v36 = vld [vmem:[%s1 + $0x2c] sm:$0xf]
  %v37 = vld [vmem:[%s1 + $0x30] sm:$0xf]
  %v38 = vld [vmem:[%s1 + $0x34] sm:$0xf]
  %v39 = vld [vmem:[%s1 + $0x38] sm:$0xf]
  %v40 = vld [vmem:[%s1 + $0x3c] sm:$0xf]
  %v57 = vunpack.c.l.b16 %v25
  %v58 = vunpack.c.l.b16 %v26
  %v59 = vunpack.c.l.b16 %v27
  %v60 = vunpack.c.l.b16 %v28
  %v61 = vunpack.c.l.b16 %v29
  %v62 = vunpack.c.l.b16 %v30
  %v63 = vunpack.c.l.b16 %v31
  %v64 = vunpack.c.l.b16 %v32
  %v65 = vunpack.c.l.b16 %v33
  %v66 = vunpack.c.l.b16 %v34
  %v67 = vunpack.c.l.b16 %v35
  %v68 = vunpack.c.l.b16 %v36
  %v69 = vunpack.c.l.b16 %v37
  %v70 = vunpack.c.l.b16 %v38
  %v71 = vunpack.c.l.b16 %v39
  %v72 = vunpack.c.l.b16 %v40
  %v73 = vpack.c.b16 %v58, %v57
  %v74 = vpack.c.b16 %v60, %v59
  %v75 = vpack.c.b16 %v62, %v61
  %v76 = vpack.c.b16 %v64, %v63
  %v77 = vpack.c.b16 %v66, %v65
  %v78 = vpack.c.b16 %v68, %v67
  %v79 = vpack.c.b16 %v70, %v69
  %v80 = vpack.c.b16 %v72, %v71
  %89 = vmatprep.subr.bf16.mxu0 0
  %90 = vmatpush1.bf16.msra.mxu0 %v73
  %91 = vmatprep.subr.bf16.mxu0 0
  %92 = vmatpush1.bf16.msra.mxu0 %v74
  %93 = vmatprep.subr.bf16.mxu0 0
  %94 = vmatpush1.bf16.msra.mxu0 %v75
  %95 = vmatprep.subr.bf16.mxu0 0
  %96 = vmatpush1.bf16.msra.mxu0 %v76
  %97 = vmatprep.subr.bf16.mxu0 0
  %98 = vmatpush1.bf16.msra.mxu0 %v77
  %99 = vmatprep.subr.bf16.mxu0 0
  %100 = vmatpush1.bf16.msra.mxu0 %v78
  %101 = vmatprep.subr.bf16.mxu0 0
  %102 = vmatpush1.bf16.msra.mxu0 %v79
  %103 = vmatprep.subr.bf16.mxu0 0
  %104 = vmatpush1.bf16.msra.mxu0 %v80
  %105 = vmatprep.subr.bf16.mxu0 0
  %106 = vmatpush1.bf16.msra.mxu0 0
  %107 = vmatprep.subr.bf16.mxu0 0
  %108 = vmatpush1.bf16.msra.mxu0 0
  %109 = vmatprep.subr.bf16.mxu0 0
  %110 = vmatpush1.bf16.msra.mxu0 0
  %111 = vmatprep.subr.bf16.mxu0 0
  %112 = vmatpush1.bf16.msra.mxu0 0
  %113 = vmatprep.subr.bf16.mxu0 0
  %114 = vmatpush1.bf16.msra.mxu0 0
  %115 = vmatprep.subr.bf16.mxu0 0
  %116 = vmatpush1.bf16.msra.mxu0 0
  %117 = vmatprep.subr.bf16.mxu0 0
  %118 = vmatpush1.bf16.msra.mxu0 0
  %119 = vmatprep.subr.bf16.mxu0 0
  %120 = vmatpush1.bf16.msra.mxu0 0
  %121 = vmatprep.mubr.bf16.mxu0 0
  %122 = vmatmul.mubr.bf16.gmra.mrb[0].mxu0 %v24
  %v123 = vpop.f32.mrb[0].mxu0
  %v124 = vadd.f32 0.0, %v123
  %v125 = vpop.f32.mrb[0].mxu0
  %v126 = vpop.f32.mrb[0].mxu0
  %v127 = vpop.f32.mrb[0].mxu0
  %128 = vdwg.mxu0
  %v129 = vadd.f32 %v23, %v124
  %130 = vst [vmem:[#allocation2] sm:$0xff] %v129
  // Predicated region
  $region22: #{psenet_forward.31} parent=0 // pred_check
    %p131 = pneg %p18
  $region23: #{psenet_forward.31} parent=0 // pred_check_branch
    %133 = sbr.rel (%p131) target = $region25
  $region24: #{psenet_forward.31} parent=0 // pred_region
    %v134 = vld [vmem:[#allocation2] sm:$0xff]
    %v135 = vld [vmem:[%s2] sm:$0x1]
    %v137 = vlaneseq
    %v138 = vshrl.u32 %v137, 7
    %v139 = vsub.s32 0, %v138
    %v140 = vrot.slane %v135, %v139
    %v142 = vadd.f32 %v134, %v140
    %v143 = vld [vmem:[%s3] sm:$0xf]
    %v144 = vunpack.c.l.bf16 %v143
    %v145 = vadd.f32 %v142, %v144
    %v146 = vpack.c.bf16 %v145, %v145
    %147 = vst [vmem:[%s4] sm:$0xf] %v146
  $region25: #{psenet_forward.31} parent=0 // pred_fallthru
    _
  // Predicated region
  $region26: #{psenet_forward.31} parent=0 // pred_check
    _
  $region27: #{psenet_forward.31} parent=0 // pred_check_branch
    %149 = sbr.rel (0) target = $region29
  $region28: #{psenet_forward.31} parent=0 // pred_region
    _
  $region29: #{psenet_forward.31} parent=0 // pred_fallthru
    _
  // Predicated region
  $region30: #{psenet_forward.31} parent=0 // pred_check
    _
  $region31: #{psenet_forward.31} parent=0 // pred_check_branch
    %151 = sbr.rel (0) target = $region33
  $region32: #{psenet_forward.31} parent=0 // pred_region
    _
  $region33: #{psenet_forward.31} parent=0 // pred_fallthru
    _

// kernel: psenet_forward.32
$region0: #{psenet_forward.32}
  #allocation0 [shape = 'u32[]', space=smem, size = 0x4, offset = 0x4, fixed_abs, tag = 'smem constant byte address 0x4 - core index']
  #allocation1 [shape = 'u32[144,128]{1,0:T(1,128)}', space=vmem, size = 0x12000, scoped, tag = 'internal scratch']
  %s0 = inlined_call_operand.vmem [shape: f32[8,2], index: 0, kind: input, shape index: {}]
  %s1 = inlined_call_operand.vmem [shape: bf16[2,2,128], index: 1, kind: input, shape index: {}]
  %s2 = inlined_call_operand.vmem [shape: bf16[2,8,128], index: 2, kind: output, shape index: {}]
  %s3 = sld [smem:[#allocation0]]
  $region41: #{psenet_forward.32} parent=0
    _
  %s5 = ssub.s32 1, %s3
  %s6 = scalar_select 0, %s5, %s3
  loop: start=0, step=1, limit=4
  $region2: #{psenet_forward.32} parent=0 // loop_pre_header
    _
  $region3: #{psenet_forward.32} parent=0 // loop_header
    %s8 = sphi 0, %s12
    %p9 = scmp.ge.s32.totalorder %s8, 4
    %s15 = sphi 0, %s34
    %s16 = sphi 0, %s30
    %s17 = sphi 0, %s26
    %s18 = sphi 0, %s15
    %s19 = sphi 0, %s16
    %s20 = sphi 0, %s17
    %s21 = sphi 0, %s18
    %s22 = sphi 0, %s19
    %s23 = sphi 0, %s20
    %s37 = sphi 0, %s39
    %s40 = sphi 0, %s37
    %s41 = sphi 0, %s40
    %s57 = sphi 0, %s41
    %s65 = sphi 0, %s67
    %s68 = sphi 0, %s65
    %s69 = sphi 0, %s68
    %s85 = sphi 0, %s69
    %s95 = sphi 0, %s97
    %s98 = sphi 0, %s95
    %s99 = sphi 0, %s98
    %s115 = sphi 0, %s99
  $region4: #{psenet_forward.32} parent=0 // loop_header_branch
    %11 = sbr.rel (%p9) target = $region8
  $region5: #{psenet_forward.32} parent=0 // loop_body
    %s13 = ssub.s32 %s8, 1
    %s14 = ssub.s32 %s8, 2
    %s24 = sadd.s32 1, %s17
    %p25 = scmp.ge.s32.totalorder %s24, 1
    %s26 = scalar_select %p25, 0, %s24
    %s27 = sadd.s32 1, %s16
    %s28 = scalar_select %p25, %s27, %s16
    %p29 = scmp.ge.s32.totalorder %s28, 1
    %s30 = scalar_select %p29, 0, %s28
    %s31 = sadd.s32 1, %s15
    %s32 = scalar_select %p29, %s31, %s15
    %p33 = scmp.ge.s32.totalorder %s32, 2
    %s34 = scalar_select %p33, 0, %s32
    %s35 = ssub.s32 %s16, %s30
    %p36 = scmp.eq.s32.totalorder %s35, 0
    %s38 = sadd.s32 %s37, 1
    %s39 = scalar_select %p36, %s37, %s38
    %p42 = pneg %p36
    %p43 = scmp.eq.s32.totalorder %s8, 1
    %p44 = por %p42, %p43
    %p45 = scmp.ne.s32.totalorder %s37, %s40
    %p46 = scmp.eq.s32.totalorder %s8, 0
    %p47 = por %p45, %p46
    %p48 = scmp.ne.s32.totalorder %s37, %s40
    %p49 = scmp.eq.s32.totalorder %s13, 1
    %p50 = por %p48, %p49
    %p51 = scmp.ne.s32.totalorder %s40, %s41
    %p52 = scmp.eq.s32.totalorder %s13, 0
    %p53 = por %p51, %p52
    %p54 = scmp.ne.s32.totalorder %s40, %s41
    %p55 = scmp.eq.s32.totalorder %s14, 1
    %p56 = por %p54, %p55
    %p58 = scmp.ne.s32.totalorder %s41, %s57
    %p59 = scmp.eq.s32.totalorder %s14, 0
    %p60 = por %p58, %p59
    %s61 = ssub.s32 %s15, %s34
    %s62 = ssub.s32 %s17, %s26
    %s63 = sor.u32 %s61, %s62
    %p64 = scmp.eq.s32.totalorder %s63, 0
    %s66 = sadd.s32 %s65, 1
    %s67 = scalar_select %p64, %s65, %s66
    %p70 = pneg %p64
    %p71 = scmp.eq.s32.totalorder %s8, 1
    %p72 = por %p70, %p71
    %p73 = scmp.ne.s32.totalorder %s65, %s68
    %p74 = scmp.eq.s32.totalorder %s8, 0
    %p75 = por %p73, %p74
    %p76 = scmp.ne.s32.totalorder %s65, %s68
    %p77 = scmp.eq.s32.totalorder %s13, 1
    %p78 = por %p76, %p77
    %p79 = scmp.ne.s32.totalorder %s68, %s69
    %p80 = scmp.eq.s32.totalorder %s13, 0
    %p81 = por %p79, %p80
    %p82 = scmp.ne.s32.totalorder %s68, %s69
    %p83 = scmp.eq.s32.totalorder %s14, 1
    %p84 = por %p82, %p83
    %p86 = scmp.ne.s32.totalorder %s69, %s85
    %p87 = scmp.eq.s32.totalorder %s14, 0
    %p88 = por %p86, %p87
    %s89 = ssub.s32 %s15, %s34
    %s90 = ssub.s32 %s16, %s30
    %s91 = sor.u32 %s89, %s90
    %s92 = ssub.s32 %s17, %s26
    %s93 = sor.u32 %s91, %s92
    %p94 = scmp.eq.s32.totalorder %s93, 0
    %s96 = sadd.s32 %s95, 1
    %s97 = scalar_select %p94, %s95, %s96
    %p100 = pneg %p94
    %p101 = scmp.eq.s32.totalorder %s8, 1
    %p102 = por %p100, %p101
    %p103 = scmp.ne.s32.totalorder %s95, %s98
    %p104 = scmp.eq.s32.totalorder %s8, 0
    %p105 = por %p103, %p104
    %p106 = scmp.ne.s32.totalorder %s95, %s98
    %p107 = scmp.eq.s32.totalorder %s13, 1
    %p108 = por %p106, %p107
    %p109 = scmp.ne.s32.totalorder %s98, %s99
    %p110 = scmp.eq.s32.totalorder %s13, 0
    %p111 = por %p109, %p110
    %p112 = scmp.ne.s32.totalorder %s98, %s99
    %p113 = scmp.eq.s32.totalorder %s14, 1
    %p114 = por %p112, %p113
    %p116 = scmp.ne.s32.totalorder %s99, %s115
    %p117 = scmp.eq.s32.totalorder %s14, 0
    %p118 = por %p116, %p117
    %p119 = scmp.le.s32.totalorder 1, %s8
    %p120 = scmp.lt.s32.totalorder %s8, 3
    %p121 = pnand %p119, %p120
    %p122 = pneg %p121
    // Predicated region
    $region9: #{psenet_forward.32} parent=5 // pred_check
      _
    $region10: #{psenet_forward.32} parent=5 // pred_check_branch
      %124 = sbr.rel (%p121) target = $region12
    $region11: #{psenet_forward.32} parent=5 // pred_region
      %s125 = ssub.s32 %s8, 1
      // Predicated region
      $region13: #{psenet_forward.32} parent=11 // pred_check
        %p126 = pneg %p53
      $region14: #{psenet_forward.32} parent=11 // pred_check_branch
        %128 = sbr.rel (%p126) target = $region16
      $region15: #{psenet_forward.32} parent=11 // pred_region
        %p129 = scmp.lt.s32.totalorder %s19, 0
        %s130 = scalar_select %p129, %s19, 0
        %s131 = smul.addr %s130, 8
        %s132 = scalar_lea.vmem %s0, %s131
      $region16: #{psenet_forward.32} parent=11 // pred_fallthru
        _
    $region12: #{psenet_forward.32} parent=5 // pred_fallthru
      _
    %p133 = scmp.lt.s32.totalorder %s8, 2
    // Predicated region
    $region17: #{psenet_forward.32} parent=5 // pred_check
      %p134 = pneg %p133
    $region18: #{psenet_forward.32} parent=5 // pred_check_branch
      %136 = sbr.rel (%p134) target = $region20
    $region19: #{psenet_forward.32} parent=5 // pred_region
      // Predicated region
      $region21: #{psenet_forward.32} parent=19 // pred_check
        %p137 = pneg %p75
      $region22: #{psenet_forward.32} parent=19 // pred_check_branch
        %139 = sbr.rel (%p137) target = $region24
      $region23: #{psenet_forward.32} parent=19 // pred_region
        %p140 = scmp.lt.s32.totalorder %s15, 1
        %s141 = scalar_select %p140, %s15, 1
        %p142 = scmp.lt.s32.totalorder %s17, 0
        %s143 = scalar_select %p142, %s17, 0
        %s144 = sadd.s32 %s143, %s141
        %s145 = scalar_lea.vmem %s1, %s144
      $region24: #{psenet_forward.32} parent=19 // pred_fallthru
        _
    $region20: #{psenet_forward.32} parent=5 // pred_fallthru
      _
    %p146 = scmp.le.s32.totalorder 1, %s8
    %p147 = scmp.lt.s32.totalorder %s8, 3
    %p148 = pnand %p146, %p147
    %p149 = pneg %p148
    // Predicated region
    $region25: #{psenet_forward.32} parent=5 // pred_check
      _
    $region26: #{psenet_forward.32} parent=5 // pred_check_branch
      %151 = sbr.rel (%p148) target = $region28
    $region27: #{psenet_forward.32} parent=5 // pred_region
      %s152 = ssub.s32 %s8, 1
      %p153 = scmp.lt.s32.totalorder %s19, 0
      %s154 = scalar_select %p153, %s19, 0
      %s155 = smul.addr %s154, 8
      %s156 = scalar_lea.vmem %s0, %s155
      %p157 = pneg %p53
      %p158 = pneg %p50
      %p159 = scmp.lt.s32.totalorder %s18, 1
      %s160 = scalar_select %p159, %s18, 1
      %p161 = scmp.lt.s32.totalorder %s20, 0
      %s162 = scalar_select %p161, %s20, 0
      %s163 = sadd.s32 %s162, %s160
      %s164 = scalar_lea.vmem %s1, %s163
      %p165 = pneg %p81
      %p166 = pneg %p78
      %p167 = pneg %p111
      %p168 = pneg %p108
      %p169 = scmp.lt.s32.totalorder %s18, 1
      %s170 = scalar_select %p169, %s18, 1
      %p171 = scmp.lt.s32.totalorder %s19, 0
      %s172 = scalar_select %p171, %s19, 0
      %p173 = scmp.lt.s32.totalorder %s20, 0
      %s174 = scalar_select %p173, %s20, 0
      %s175 = sadd.s32 %s174, %s172
      %s176 = sadd.s32 %s175, %s170
      %s177 = smul.addr %s176, 4
      %s178 = scalar_lea.vmem %s2, %s177
      %p179 = scmp.lt.s32.totalorder %s19, 0
      %s180 = scalar_select %p179, %s19, 0
      %s181 = smul.addr %s180, 8
      %s182 = scalar_lea.vmem %s0, %s181
      %p183 = scmp.lt.s32.totalorder %s18, 1
      %s184 = scalar_select %p183, %s18, 1
      %p185 = scmp.lt.s32.totalorder %s20, 0
      %s186 = scalar_select %p185, %s20, 0
      %s187 = sadd.s32 %s186, %s184
      %s188 = scalar_lea.vmem %s1, %s187
      %p189 = scmp.lt.s32.totalorder %s18, 1
      %s190 = scalar_select %p189, %s18, 1
      %p191 = scmp.lt.s32.totalorder %s19, 0
      %s192 = scalar_select %p191, %s19, 0
      %p193 = scmp.lt.s32.totalorder %s20, 0
      %s194 = scalar_select %p193, %s20, 0
      %s195 = sadd.s32 %s194, %s192
      %s196 = sadd.s32 %s195, %s190
      %s197 = smul.addr %s196, 4
      %s198 = scalar_lea.vmem %s2, %s197
      %v199 = vld [vmem:[%s182] sm:$0xff]
      %v200 = vld [vmem:[%s188] sm:$0x1]
      %v201 = vunpack.c.l.bf16 %v200
      %vm202 = vcmask 15360
      %v204 = vsel %vm202, %v199, 0
      %vm206 = vcmask 1041408
      %v208 = vsel %vm206, %v201, 0
      %210 = vmatprep.subr.mxu0 0.0
      %211 = vmatpush1.msra.mxu0 %v208
      %212 = vmatprep.subr.mxu0 0.0
      %213 = vmatpush1.msra.mxu0 0.0
      %214 = vmatprep.subr.mxu0 0.0
      %215 = vmatpush1.msra.mxu0 0.0
      %216 = vmatprep.subr.mxu0 0.0
      %217 = vmatpush1.msra.mxu0 0.0
      %218 = vmatprep.subr.mxu0 0.0
      %219 = vmatpush1.msra.mxu0 0.0
      %220 = vmatprep.subr.mxu0 0.0
      %221 = vmatpush1.msra.mxu0 0.0
      %222 = vmatprep.subr.mxu0 0.0
      %223 = vmatpush1.msra.mxu0 0.0
      %224 = vmatprep.subr.mxu0 0.0
      %225 = vmatpush1.msra.mxu0 0.0
      %226 = vmatprep.subr.mxu0 0.0
      %227 = vmatpush1.msra.mxu0 0.0
      %228 = vmatprep.subr.mxu0 0.0
      %229 = vmatpush1.msra.mxu0 0.0
      %230 = vmatprep.subr.mxu0 0.0
      %231 = vmatpush1.msra.mxu0 0.0
      %232 = vmatprep.subr.mxu0 0.0
      %233 = vmatpush1.msra.mxu0 0.0
      %234 = vmatprep.subr.mxu0 0.0
      %235 = vmatpush1.msra.mxu0 0.0
      %236 = vmatprep.subr.mxu0 0.0
      %237 = vmatpush1.msra.mxu0 0.0
      %238 = vmatprep.subr.mxu0 0.0
      %239 = vmatpush1.msra.mxu0 0.0
      %240 = vmatprep.subr.mxu0 0.0
      %241 = vmatpush1.msra.mxu0 0.0
      %242 = vmatprep.subr.mxu0 0.0
      %243 = vmatpush1.msra.mxu0 0.0
      %244 = vmatprep.subr.mxu0 0.0
      %245 = vmatpush1.msra.mxu0 0.0
      %246 = vmatprep.subr.mxu0 0.0
      %247 = vmatpush1.msra.mxu0 0.0
      %248 = vmatprep.subr.mxu0 0.0
      %249 = vmatpush1.msra.mxu0 0.0
      %250 = vmatprep.subr.mxu0 0.0
      %251 = vmatpush1.msra.mxu0 0.0
      %252 = vmatprep.subr.mxu0 0.0
      %253 = vmatpush1.msra.mxu0 0.0
      %254 = vmatprep.subr.mxu0 0.0
      %255 = vmatpush1.msra.mxu0 0.0
      %256 = vmatprep.subr.mxu0 0.0
      %257 = vmatpush1.msra.mxu0 0.0
      %258 = vmatprep.subr.mxu0 0.0
      %259 = vmatpush1.msra.mxu0 0.0
      %260 = vmatprep.subr.mxu0 0.0
      %261 = vmatpush1.msra.mxu0 0.0
      %262 = vmatprep.subr.mxu0 0.0
      %263 = vmatpush1.msra.mxu0 0.0
      %264 = vmatprep.subr.mxu0 0.0
      %265 = vmatpush1.msra.mxu0 0.0
      %266 = vmatprep.subr.mxu0 0.0
      %267 = vmatpush1.msra.mxu0 0.0
      %268 = vmatprep.subr.mxu0 0.0
      %269 = vmatpush1.msra.mxu0 0.0
      %270 = vmatprep.subr.mxu0 0.0
      %271 = vmatpush1.msra.mxu0 0.0
      %272 = vmatprep.subr.mxu0 0.0
      %273 = vmatpush1.msra.mxu0 0.0
      %274 = vmatprep.mubr.f32.mxu0 0.0
      %275 = vmatmul.mubr.f32.gmra.mrb[0].mxu0 %v204
      %v276 = vpop.f32.mrb[0].mxu0
      %v277 = vadd.f32 0.0, %v276
      %v278 = vpop.f32.mrb[0].mxu0
      %279 = vdwg.mxu0
      %v280 = vpack.c.bf16 %v277, %v277
      %281 = vst [vmem:[%s198] sm:$0xf] %v280
      %p282 = scmp.lt.s32.totalorder %s18, 1
      %s283 = scalar_select %p282, %s18, 1
      %p284 = scmp.lt.s32.totalorder %s19, 0
      %s285 = scalar_select %p284, %s19, 0
      %p286 = scmp.lt.s32.totalorder %s20, 0
      %s287 = scalar_select %p286, %s20, 0
      %s288 = sadd.s32 %s287, %s285
      %s289 = sadd.s32 %s288, %s283
      %s290 = smul.addr %s289, 4
      %s291 = scalar_lea.vmem %s2, %s290
      // Predicated region
      $region29: #{psenet_forward.32} parent=27 // pred_check
        %p292 = pneg %p108
      $region30: #{psenet_forward.32} parent=27 // pred_check_branch
        %294 = sbr.rel (%p292) target = $region32
      $region31: #{psenet_forward.32} parent=27 // pred_region
        _
      $region32: #{psenet_forward.32} parent=27 // pred_fallthru
        _
    $region28: #{psenet_forward.32} parent=5 // pred_fallthru
      _
    %p295 = scmp.le.s32.totalorder 2, %s8
    // Predicated region
    $region33: #{psenet_forward.32} parent=5 // pred_check
      %p296 = pneg %p295
    $region34: #{psenet_forward.32} parent=5 // pred_check_branch
      %298 = sbr.rel (%p296) target = $region36
    $region35: #{psenet_forward.32} parent=5 // pred_region
      %s299 = ssub.s32 %s8, 2
      // Predicated region
      $region37: #{psenet_forward.32} parent=35 // pred_check
        %p300 = pneg %p114
      $region38: #{psenet_forward.32} parent=35 // pred_check_branch
        %302 = sbr.rel (%p300) target = $region40
      $region39: #{psenet_forward.32} parent=35 // pred_region
        %p303 = scmp.lt.s32.totalorder %s21, 1
        %s304 = scalar_select %p303, %s21, 1
        %p305 = scmp.lt.s32.totalorder %s22, 0
        %s306 = scalar_select %p305, %s22, 0
        %p307 = scmp.lt.s32.totalorder %s23, 0
        %s308 = scalar_select %p307, %s23, 0
        %s309 = sadd.s32 %s308, %s306
        %s310 = sadd.s32 %s309, %s304
        %s311 = smul.addr %s310, 4
        %s312 = scalar_lea.vmem %s2, %s311
      $region40: #{psenet_forward.32} parent=35 // pred_fallthru
        _
    $region36: #{psenet_forward.32} parent=5 // pred_fallthru
      _
  $region6: #{psenet_forward.32} parent=0 // loop_footer
    %s12 = sadd.s32 1, %s8
  $region7: #{psenet_forward.32} parent=0 // loop_footer_branch
    %7 = sbr.rel target = $region3
  $region8: #{psenet_forward.32} parent=0 // loop_exit
    _

// kernel: psenet_forward.33
$region0: #{psenet_forward.33}
  #allocation0 [shape = 'u32[]', space=smem, size = 0x4, offset = 0x4, fixed_abs, tag = 'smem constant byte address 0x4 - core index']
  #allocation1 [shape = 'u32[144,128]{1,0:T(1,128)}', space=vmem, size = 0x12000, scoped, tag = 'internal scratch']
  %s0 = inlined_call_operand.vmem [shape: f32[8,2], index: 0, kind: input, shape index: {}]
  %s1 = inlined_call_operand.vmem [shape: bf16[8,2,128], index: 1, kind: input, shape index: {}]
  %s2 = inlined_call_operand.vmem [shape: bf16[8,8,128], index: 2, kind: output, shape index: {}]
  %s3 = sld [smem:[#allocation0]]
  $region41: #{psenet_forward.33} parent=0
    _
  %s5 = ssub.s32 1, %s3
  %s6 = scalar_select 0, %s5, %s3
  loop: start=0, step=1, limit=10
  $region2: #{psenet_forward.33} parent=0 // loop_pre_header
    _
  $region3: #{psenet_forward.33} parent=0 // loop_header
    %s8 = sphi 0, %s12
    %p9 = scmp.ge.s32.totalorder %s8, 10
    %s15 = sphi 0, %s34
    %s16 = sphi 0, %s30
    %s17 = sphi 0, %s26
    %s18 = sphi 0, %s15
    %s19 = sphi 0, %s16
    %s20 = sphi 0, %s17
    %s21 = sphi 0, %s18
    %s22 = sphi 0, %s19
    %s23 = sphi 0, %s20
    %s37 = sphi 0, %s39
    %s40 = sphi 0, %s37
    %s41 = sphi 0, %s40
    %s57 = sphi 0, %s41
    %s65 = sphi 0, %s67
    %s68 = sphi 0, %s65
    %s69 = sphi 0, %s68
    %s85 = sphi 0, %s69
    %s95 = sphi 0, %s97
    %s98 = sphi 0, %s95
    %s99 = sphi 0, %s98
    %s115 = sphi 0, %s99
  $region4: #{psenet_forward.33} parent=0 // loop_header_branch
    %11 = sbr.rel (%p9) target = $region8
  $region5: #{psenet_forward.33} parent=0 // loop_body
    %s13 = ssub.s32 %s8, 1
    %s14 = ssub.s32 %s8, 2
    %s24 = sadd.s32 1, %s17
    %p25 = scmp.ge.s32.totalorder %s24, 1
    %s26 = scalar_select %p25, 0, %s24
    %s27 = sadd.s32 1, %s16
    %s28 = scalar_select %p25, %s27, %s16
    %p29 = scmp.ge.s32.totalorder %s28, 1
    %s30 = scalar_select %p29, 0, %s28
    %s31 = sadd.s32 1, %s15
    %s32 = scalar_select %p29, %s31, %s15
    %p33 = scmp.ge.s32.totalorder %s32, 8
    %s34 = scalar_select %p33, 0, %s32
    %s35 = ssub.s32 %s16, %s30
    %p36 = scmp.eq.s32.totalorder %s35, 0
    %s38 = sadd.s32 %s37, 1
    %s39 = scalar_select %p36, %s37, %s38
    %p42 = pneg %p36
    %p43 = scmp.eq.s32.totalorder %s8, 7
    %p44 = por %p42, %p43
    %p45 = scmp.ne.s32.totalorder %s37, %s40
    %p46 = scmp.eq.s32.totalorder %s8, 0
    %p47 = por %p45, %p46
    %p48 = scmp.ne.s32.totalorder %s37, %s40
    %p49 = scmp.eq.s32.totalorder %s13, 7
    %p50 = por %p48, %p49
    %p51 = scmp.ne.s32.totalorder %s40, %s41
    %p52 = scmp.eq.s32.totalorder %s13, 0
    %p53 = por %p51, %p52
    %p54 = scmp.ne.s32.totalorder %s40, %s41
    %p55 = scmp.eq.s32.totalorder %s14, 7
    %p56 = por %p54, %p55
    %p58 = scmp.ne.s32.totalorder %s41, %s57
    %p59 = scmp.eq.s32.totalorder %s14, 0
    %p60 = por %p58, %p59
    %s61 = ssub.s32 %s15, %s34
    %s62 = ssub.s32 %s17, %s26
    %s63 = sor.u32 %s61, %s62
    %p64 = scmp.eq.s32.totalorder %s63, 0
    %s66 = sadd.s32 %s65, 1
    %s67 = scalar_select %p64, %s65, %s66
    %p70 = pneg %p64
    %p71 = scmp.eq.s32.totalorder %s8, 7
    %p72 = por %p70, %p71
    %p73 = scmp.ne.s32.totalorder %s65, %s68
    %p74 = scmp.eq.s32.totalorder %s8, 0
    %p75 = por %p73, %p74
    %p76 = scmp.ne.s32.totalorder %s65, %s68
    %p77 = scmp.eq.s32.totalorder %s13, 7
    %p78 = por %p76, %p77
    %p79 = scmp.ne.s32.totalorder %s68, %s69
    %p80 = scmp.eq.s32.totalorder %s13, 0
    %p81 = por %p79, %p80
    %p82 = scmp.ne.s32.totalorder %s68, %s69
    %p83 = scmp.eq.s32.totalorder %s14, 7
    %p84 = por %p82, %p83
    %p86 = scmp.ne.s32.totalorder %s69, %s85
    %p87 = scmp.eq.s32.totalorder %s14, 0
    %p88 = por %p86, %p87
    %s89 = ssub.s32 %s15, %s34
    %s90 = ssub.s32 %s16, %s30
    %s91 = sor.u32 %s89, %s90
    %s92 = ssub.s32 %s17, %s26
    %s93 = sor.u32 %s91, %s92
    %p94 = scmp.eq.s32.totalorder %s93, 0
    %s96 = sadd.s32 %s95, 1
    %s97 = scalar_select %p94, %s95, %s96
    %p100 = pneg %p94
    %p101 = scmp.eq.s32.totalorder %s8, 7
    %p102 = por %p100, %p101
    %p103 = scmp.ne.s32.totalorder %s95, %s98
    %p104 = scmp.eq.s32.totalorder %s8, 0
    %p105 = por %p103, %p104
    %p106 = scmp.ne.s32.totalorder %s95, %s98
    %p107 = scmp.eq.s32.totalorder %s13, 7
    %p108 = por %p106, %p107
    %p109 = scmp.ne.s32.totalorder %s98, %s99
    %p110 = scmp.eq.s32.totalorder %s13, 0
    %p111 = por %p109, %p110
    %p112 = scmp.ne.s32.totalorder %s98, %s99
    %p113 = scmp.eq.s32.totalorder %s14, 7
    %p114 = por %p112, %p113
    %p116 = scmp.ne.s32.totalorder %s99, %s115
    %p117 = scmp.eq.s32.totalorder %s14, 0
    %p118 = por %p116, %p117
    %p119 = scmp.le.s32.totalorder 1, %s8
    %p120 = scmp.lt.s32.totalorder %s8, 9
    %p121 = pnand %p119, %p120
    %p122 = pneg %p121
    // Predicated region
    $region9: #{psenet_forward.33} parent=5 // pred_check
      _
    $region10: #{psenet_forward.33} parent=5 // pred_check_branch
      %124 = sbr.rel (%p121) target = $region12
    $region11: #{psenet_forward.33} parent=5 // pred_region
      %s125 = ssub.s32 %s8, 1
      // Predicated region
      $region13: #{psenet_forward.33} parent=11 // pred_check
        %p126 = pneg %p53
      $region14: #{psenet_forward.33} parent=11 // pred_check_branch
        %128 = sbr.rel (%p126) target = $region16
      $region15: #{psenet_forward.33} parent=11 // pred_region
        %p129 = scmp.lt.s32.totalorder %s19, 0
        %s130 = scalar_select %p129, %s19, 0
        %s131 = smul.addr %s130, 8
        %s132 = scalar_lea.vmem %s0, %s131
      $region16: #{psenet_forward.33} parent=11 // pred_fallthru
        _
    $region12: #{psenet_forward.33} parent=5 // pred_fallthru
      _
    %p133 = scmp.lt.s32.totalorder %s8, 8
    // Predicated region
    $region17: #{psenet_forward.33} parent=5 // pred_check
      %p134 = pneg %p133
    $region18: #{psenet_forward.33} parent=5 // pred_check_branch
      %136 = sbr.rel (%p134) target = $region20
    $region19: #{psenet_forward.33} parent=5 // pred_region
      // Predicated region
      $region21: #{psenet_forward.33} parent=19 // pred_check
        %p137 = pneg %p75
      $region22: #{psenet_forward.33} parent=19 // pred_check_branch
        %139 = sbr.rel (%p137) target = $region24
      $region23: #{psenet_forward.33} parent=19 // pred_region
        %p140 = scmp.lt.s32.totalorder %s15, 7
        %s141 = scalar_select %p140, %s15, 7
        %p142 = scmp.lt.s32.totalorder %s17, 0
        %s143 = scalar_select %p142, %s17, 0
        %s144 = sadd.s32 %s143, %s141
        %s145 = scalar_lea.vmem %s1, %s144
      $region24: #{psenet_forward.33} parent=19 // pred_fallthru
        _
    $region20: #{psenet_forward.33} parent=5 // pred_fallthru
      _
    %p146 = scmp.le.s32.totalorder 1, %s8
    %p147 = scmp.lt.s32.totalorder %s8, 9
    %p148 = pnand %p146, %p147
    %p149 = pneg %p148
    // Predicated region
    $region25: #{psenet_forward.33} parent=5 // pred_check
      _
    $region26: #{psenet_forward.33} parent=5 // pred_check_branch
      %151 = sbr.rel (%p148) target = $region28
    $region27: #{psenet_forward.33} parent=5 // pred_region
      %s152 = ssub.s32 %s8, 1
      %p153 = scmp.lt.s32.totalorder %s19, 0
      %s154 = scalar_select %p153, %s19, 0
      %s155 = smul.addr %s154, 8
      %s156 = scalar_lea.vmem %s0, %s155
      %p157 = pneg %p53
      %p158 = pneg %p50
      %p159 = scmp.lt.s32.totalorder %s18, 7
      %s160 = scalar_select %p159, %s18, 7
      %p161 = scmp.lt.s32.totalorder %s20, 0
      %s162 = scalar_select %p161, %s20, 0
      %s163 = sadd.s32 %s162, %s160
      %s164 = scalar_lea.vmem %s1, %s163
      %p165 = pneg %p81
      %p166 = pneg %p78
      %p167 = pneg %p111
      %p168 = pneg %p108
      %p169 = scmp.lt.s32.totalorder %s18, 7
      %s170 = scalar_select %p169, %s18, 7
      %p171 = scmp.lt.s32.totalorder %s19, 0
      %s172 = scalar_select %p171, %s19, 0
      %p173 = scmp.lt.s32.totalorder %s20, 0
      %s174 = scalar_select %p173, %s20, 0
      %s175 = sadd.s32 %s174, %s172
      %s176 = sadd.s32 %s175, %s170
      %s177 = smul.addr %s176, 4
      %s178 = scalar_lea.vmem %s2, %s177
      %p179 = scmp.lt.s32.totalorder %s19, 0
      %s180 = scalar_select %p179, %s19, 0
      %s181 = smul.addr %s180, 8
      %s182 = scalar_lea.vmem %s0, %s181
      %p183 = scmp.lt.s32.totalorder %s18, 7
      %s184 = scalar_select %p183, %s18, 7
      %p185 = scmp.lt.s32.totalorder %s20, 0
      %s186 = scalar_select %p185, %s20, 0
      %s187 = sadd.s32 %s186, %s184
      %s188 = scalar_lea.vmem %s1, %s187
      %p189 = scmp.lt.s32.totalorder %s18, 7
      %s190 = scalar_select %p189, %s18, 7
      %p191 = scmp.lt.s32.totalorder %s19, 0
      %s192 = scalar_select %p191, %s19, 0
      %p193 = scmp.lt.s32.totalorder %s20, 0
      %s194 = scalar_select %p193, %s20, 0
      %s195 = sadd.s32 %s194, %s192
      %s196 = sadd.s32 %s195, %s190
      %s197 = smul.addr %s196, 4
      %s198 = scalar_lea.vmem %s2, %s197
      %v199 = vld [vmem:[%s182] sm:$0xff]
      %v200 = vld [vmem:[%s188] sm:$0x1]
      %v201 = vunpack.c.l.bf16 %v200
      %vm202 = vcmask 15360
      %v204 = vsel %vm202, %v199, 0
      %vm206 = vcmask 1041408
      %v208 = vsel %vm206, %v201, 0
      %210 = vmatprep.subr.mxu0 0.0
      %211 = vmatpush1.msra.mxu0 %v208
      %212 = vmatprep.subr.mxu0 0.0
      %213 = vmatpush1.msra.mxu0 0.0
      %214 = vmatprep.subr.mxu0 0.0
      %215 = vmatpush1.msra.mxu0 0.0
      %216 = vmatprep.subr.mxu0 0.0
      %217 = vmatpush1.msra.mxu0 0.0
      %218 = vmatprep.subr.mxu0 0.0
      %219 = vmatpush1.msra.mxu0 0.0
      %220 = vmatprep.subr.mxu0 0.0
      %221 = vmatpush1.msra.mxu0 0.0
      %222 = vmatprep.subr.mxu0 0.0
      %223 = vmatpush1.msra.mxu0 0.0
      %224 = vmatprep.subr.mxu0 0.0
      %225 = vmatpush1.msra.mxu0 0.0
      %226 = vmatprep.subr.mxu0 0.0
      %227 = vmatpush1.msra.mxu0 0.0
      %228 = vmatprep.subr.mxu0 0.0
      %229 = vmatpush1.msra.mxu0 0.0
      %230 = vmatprep.subr.mxu0 0.0
      %231 = vmatpush1.msra.mxu0 0.0
      %232 = vmatprep.subr.mxu0 0.0
      %233 = vmatpush1.msra.mxu0 0.0
      %234 = vmatprep.subr.mxu0 0.0
      %235 = vmatpush1.msra.mxu0 0.0
      %236 = vmatprep.subr.mxu0 0.0
      %237 = vmatpush1.msra.mxu0 0.0
      %238 = vmatprep.subr.mxu0 0.0
      %239 = vmatpush1.msra.mxu0 0.0
      %240 = vmatprep.subr.mxu0 0.0
      %241 = vmatpush1.msra.mxu0 0.0
      %242 = vmatprep.subr.mxu0 0.0
      %243 = vmatpush1.msra.mxu0 0.0
      %244 = vmatprep.subr.mxu0 0.0
      %245 = vmatpush1.msra.mxu0 0.0
      %246 = vmatprep.subr.mxu0 0.0
      %247 = vmatpush1.msra.mxu0 0.0
      %248 = vmatprep.subr.mxu0 0.0
      %249 = vmatpush1.msra.mxu0 0.0
      %250 = vmatprep.subr.mxu0 0.0
      %251 = vmatpush1.msra.mxu0 0.0
      %252 = vmatprep.subr.mxu0 0.0
      %253 = vmatpush1.msra.mxu0 0.0
      %254 = vmatprep.subr.mxu0 0.0
      %255 = vmatpush1.msra.mxu0 0.0
      %256 = vmatprep.subr.mxu0 0.0
      %257 = vmatpush1.msra.mxu0 0.0
      %258 = vmatprep.subr.mxu0 0.0
      %259 = vmatpush1.msra.mxu0 0.0
      %260 = vmatprep.subr.mxu0 0.0
      %261 = vmatpush1.msra.mxu0 0.0
      %262 = vmatprep.subr.mxu0 0.0
      %263 = vmatpush1.msra.mxu0 0.0
      %264 = vmatprep.subr.mxu0 0.0
      %265 = vmatpush1.msra.mxu0 0.0
      %266 = vmatprep.subr.mxu0 0.0
      %267 = vmatpush1.msra.mxu0 0.0
      %268 = vmatprep.subr.mxu0 0.0
      %269 = vmatpush1.msra.mxu0 0.0
      %270 = vmatprep.subr.mxu0 0.0
      %271 = vmatpush1.msra.mxu0 0.0
      %272 = vmatprep.subr.mxu0 0.0
      %273 = vmatpush1.msra.mxu0 0.0
      %274 = vmatprep.mubr.f32.mxu0 0.0
      %275 = vmatmul.mubr.f32.gmra.mrb[0].mxu0 %v204
      %v276 = vpop.f32.mrb[0].mxu0
      %v277 = vadd.f32 0.0, %v276
      %v278 = vpop.f32.mrb[0].mxu0
      %279 = vdwg.mxu0
      %v280 = vpack.c.bf16 %v277, %v277
      %281 = vst [vmem:[%s198] sm:$0xf] %v280
      %p282 = scmp.lt.s32.totalorder %s18, 7
      %s283 = scalar_select %p282, %s18, 7
      %p284 = scmp.lt.s32.totalorder %s19, 0
      %s285 = scalar_select %p284, %s19, 0
      %p286 = scmp.lt.s32.totalorder %s20, 0
      %s287 = scalar_select %p286, %s20, 0
      %s288 = sadd.s32 %s287, %s285
      %s289 = sadd.s32 %s288, %s283
      %s290 = smul.addr %s289, 4
      %s291 = scalar_lea.vmem %s2, %s290
      // Predicated region
      $region29: #{psenet_forward.33} parent=27 // pred_check
        %p292 = pneg %p108
      $region30: #{psenet_forward.33} parent=27 // pred_check_branch
        %294 = sbr.rel (%p292) target = $region32
      $region31: #{psenet_forward.33} parent=27 // pred_region
        _
      $region32: #{psenet_forward.33} parent=27 // pred_fallthru
        _
    $region28: #{psenet_forward.33} parent=5 // pred_fallthru
      _
    %p295 = scmp.le.s32.totalorder 2, %s8
    // Predicated region
    $region33: #{psenet_forward.33} parent=5 // pred_check
      %p296 = pneg %p295
    $region34: #{psenet_forward.33} parent=5 // pred_check_branch
      %298 = sbr.rel (%p296) target = $region36
    $region35: #{psenet_forward.33} parent=5 // pred_region
      %s299 = ssub.s32 %s8, 2
      // Predicated region
      $region37: #{psenet_forward.33} parent=35 // pred_check
        %p300 = pneg %p114
      $region38: #{psenet_forward.33} parent=35 // pred_check_branch
        %302 = sbr.rel (%p300) target = $region40
      $region39: #{psenet_forward.33} parent=35 // pred_region
        %p303 = scmp.lt.s32.totalorder %s21, 7
        %s304 = scalar_select %p303, %s21, 7
        %p305 = scmp.lt.s32.totalorder %s22, 0
        %s306 = scalar_select %p305, %s22, 0
        %p307 = scmp.lt.s32.totalorder %s23, 0
        %s308 = scalar_select %p307, %s23, 0
        %s309 = sadd.s32 %s308, %s306
        %s310 = sadd.s32 %s309, %s304
        %s311 = smul.addr %s310, 4
        %s312 = scalar_lea.vmem %s2, %s311
      $region40: #{psenet_forward.33} parent=35 // pred_fallthru
        _
    $region36: #{psenet_forward.33} parent=5 // pred_fallthru
      _
  $region6: #{psenet_forward.33} parent=0 // loop_footer
    %s12 = sadd.s32 1, %s8
  $region7: #{psenet_forward.33} parent=0 // loop_footer_branch
    %7 = sbr.rel target = $region3
  $region8: #{psenet_forward.33} parent=0 // loop_exit
    _

// kernel: psenet_forward.35
$region0: #{psenet_forward.35}
  #allocation0 [shape = 'u32[]', space=smem, size = 0x4, offset = 0x4, fixed_abs, tag = 'smem constant byte address 0x4 - core index']
  #allocation1 [shape = 'u32[144,128]{1,0:T(1,128)}', space=vmem, size = 0x12000, scoped, tag = 'internal scratch']
  %s0 = inlined_call_operand.vmem [shape: f32[8,4], index: 0, kind: input, shape index: {}]
  %s1 = inlined_call_operand.vmem [shape: bf16[2,4,128], index: 1, kind: input, shape index: {}]
  %s2 = inlined_call_operand.vmem [shape: bf16[2,8,128], index: 2, kind: output, shape index: {}]
  %s3 = sld [smem:[#allocation0]]
  $region41: #{psenet_forward.35} parent=0
    _
  %s5 = ssub.s32 1, %s3
  %s6 = scalar_select 0, %s5, %s3
  loop: start=0, step=1, limit=4
  $region2: #{psenet_forward.35} parent=0 // loop_pre_header
    _
  $region3: #{psenet_forward.35} parent=0 // loop_header
    %s8 = sphi 0, %s12
    %p9 = scmp.ge.s32.totalorder %s8, 4
    %s15 = sphi 0, %s34
    %s16 = sphi 0, %s30
    %s17 = sphi 0, %s26
    %s18 = sphi 0, %s15
    %s19 = sphi 0, %s16
    %s20 = sphi 0, %s17
    %s21 = sphi 0, %s18
    %s22 = sphi 0, %s19
    %s23 = sphi 0, %s20
    %s37 = sphi 0, %s39
    %s40 = sphi 0, %s37
    %s41 = sphi 0, %s40
    %s57 = sphi 0, %s41
    %s65 = sphi 0, %s67
    %s68 = sphi 0, %s65
    %s69 = sphi 0, %s68
    %s85 = sphi 0, %s69
    %s95 = sphi 0, %s97
    %s98 = sphi 0, %s95
    %s99 = sphi 0, %s98
    %s115 = sphi 0, %s99
  $region4: #{psenet_forward.35} parent=0 // loop_header_branch
    %11 = sbr.rel (%p9) target = $region8
  $region5: #{psenet_forward.35} parent=0 // loop_body
    %s13 = ssub.s32 %s8, 1
    %s14 = ssub.s32 %s8, 2
    %s24 = sadd.s32 1, %s17
    %p25 = scmp.ge.s32.totalorder %s24, 1
    %s26 = scalar_select %p25, 0, %s24
    %s27 = sadd.s32 1, %s16
    %s28 = scalar_select %p25, %s27, %s16
    %p29 = scmp.ge.s32.totalorder %s28, 1
    %s30 = scalar_select %p29, 0, %s28
    %s31 = sadd.s32 1, %s15
    %s32 = scalar_select %p29, %s31, %s15
    %p33 = scmp.ge.s32.totalorder %s32, 2
    %s34 = scalar_select %p33, 0, %s32
    %s35 = ssub.s32 %s16, %s30
    %p36 = scmp.eq.s32.totalorder %s35, 0
    %s38 = sadd.s32 %s37, 1
    %s39 = scalar_select %p36, %s37, %s38
    %p42 = pneg %p36
    %p43 = scmp.eq.s32.totalorder %s8, 1
    %p44 = por %p42, %p43
    %p45 = scmp.ne.s32.totalorder %s37, %s40
    %p46 = scmp.eq.s32.totalorder %s8, 0
    %p47 = por %p45, %p46
    %p48 = scmp.ne.s32.totalorder %s37, %s40
    %p49 = scmp.eq.s32.totalorder %s13, 1
    %p50 = por %p48, %p49
    %p51 = scmp.ne.s32.totalorder %s40, %s41
    %p52 = scmp.eq.s32.totalorder %s13, 0
    %p53 = por %p51, %p52
    %p54 = scmp.ne.s32.totalorder %s40, %s41
    %p55 = scmp.eq.s32.totalorder %s14, 1
    %p56 = por %p54, %p55
    %p58 = scmp.ne.s32.totalorder %s41, %s57
    %p59 = scmp.eq.s32.totalorder %s14, 0
    %p60 = por %p58, %p59
    %s61 = ssub.s32 %s15, %s34
    %s62 = ssub.s32 %s17, %s26
    %s63 = sor.u32 %s61, %s62
    %p64 = scmp.eq.s32.totalorder %s63, 0
    %s66 = sadd.s32 %s65, 1
    %s67 = scalar_select %p64, %s65, %s66
    %p70 = pneg %p64
    %p71 = scmp.eq.s32.totalorder %s8, 1
    %p72 = por %p70, %p71
    %p73 = scmp.ne.s32.totalorder %s65, %s68
    %p74 = scmp.eq.s32.totalorder %s8, 0
    %p75 = por %p73, %p74
    %p76 = scmp.ne.s32.totalorder %s65, %s68
    %p77 = scmp.eq.s32.totalorder %s13, 1
    %p78 = por %p76, %p77
    %p79 = scmp.ne.s32.totalorder %s68, %s69
    %p80 = scmp.eq.s32.totalorder %s13, 0
    %p81 = por %p79, %p80
    %p82 = scmp.ne.s32.totalorder %s68, %s69
    %p83 = scmp.eq.s32.totalorder %s14, 1
    %p84 = por %p82, %p83
    %p86 = scmp.ne.s32.totalorder %s69, %s85
    %p87 = scmp.eq.s32.totalorder %s14, 0
    %p88 = por %p86, %p87
    %s89 = ssub.s32 %s15, %s34
    %s90 = ssub.s32 %s16, %s30
    %s91 = sor.u32 %s89, %s90
    %s92 = ssub.s32 %s17, %s26
    %s93 = sor.u32 %s91, %s92
    %p94 = scmp.eq.s32.totalorder %s93, 0
    %s96 = sadd.s32 %s95, 1
    %s97 = scalar_select %p94, %s95, %s96
    %p100 = pneg %p94
    %p101 = scmp.eq.s32.totalorder %s8, 1
    %p102 = por %p100, %p101
    %p103 = scmp.ne.s32.totalorder %s95, %s98
    %p104 = scmp.eq.s32.totalorder %s8, 0
    %p105 = por %p103, %p104
    %p106 = scmp.ne.s32.totalorder %s95, %s98
    %p107 = scmp.eq.s32.totalorder %s13, 1
    %p108 = por %p106, %p107
    %p109 = scmp.ne.s32.totalorder %s98, %s99
    %p110 = scmp.eq.s32.totalorder %s13, 0
    %p111 = por %p109, %p110
    %p112 = scmp.ne.s32.totalorder %s98, %s99
    %p113 = scmp.eq.s32.totalorder %s14, 1
    %p114 = por %p112, %p113
    %p116 = scmp.ne.s32.totalorder %s99, %s115
    %p117 = scmp.eq.s32.totalorder %s14, 0
    %p118 = por %p116, %p117
    %p119 = scmp.le.s32.totalorder 1, %s8
    %p120 = scmp.lt.s32.totalorder %s8, 3
    %p121 = pnand %p119, %p120
    %p122 = pneg %p121
    // Predicated region
    $region9: #{psenet_forward.35} parent=5 // pred_check
      _
    $region10: #{psenet_forward.35} parent=5 // pred_check_branch
      %124 = sbr.rel (%p121) target = $region12
    $region11: #{psenet_forward.35} parent=5 // pred_region
      %s125 = ssub.s32 %s8, 1
      // Predicated region
      $region13: #{psenet_forward.35} parent=11 // pred_check
        %p126 = pneg %p53
      $region14: #{psenet_forward.35} parent=11 // pred_check_branch
        %128 = sbr.rel (%p126) target = $region16
      $region15: #{psenet_forward.35} parent=11 // pred_region
        %p129 = scmp.lt.s32.totalorder %s19, 0
        %s130 = scalar_select %p129, %s19, 0
        %s131 = smul.addr %s130, 8
        %s132 = scalar_lea.vmem %s0, %s131
      $region16: #{psenet_forward.35} parent=11 // pred_fallthru
        _
    $region12: #{psenet_forward.35} parent=5 // pred_fallthru
      _
    %p133 = scmp.lt.s32.totalorder %s8, 2
    // Predicated region
    $region17: #{psenet_forward.35} parent=5 // pred_check
      %p134 = pneg %p133
    $region18: #{psenet_forward.35} parent=5 // pred_check_branch
      %136 = sbr.rel (%p134) target = $region20
    $region19: #{psenet_forward.35} parent=5 // pred_region
      // Predicated region
      $region21: #{psenet_forward.35} parent=19 // pred_check
        %p137 = pneg %p75
      $region22: #{psenet_forward.35} parent=19 // pred_check_branch
        %139 = sbr.rel (%p137) target = $region24
      $region23: #{psenet_forward.35} parent=19 // pred_region
        %p140 = scmp.lt.s32.totalorder %s15, 1
        %s141 = scalar_select %p140, %s15, 1
        %p142 = scmp.lt.s32.totalorder %s17, 0
        %s143 = scalar_select %p142, %s17, 0
        %s144 = sadd.s32 %s143, %s141
        %s145 = smul.addr %s144, 2
        %s146 = scalar_lea.vmem %s1, %s145
      $region24: #{psenet_forward.35} parent=19 // pred_fallthru
        _
    $region20: #{psenet_forward.35} parent=5 // pred_fallthru
      _
    %p147 = scmp.le.s32.totalorder 1, %s8
    %p148 = scmp.lt.s32.totalorder %s8, 3
    %p149 = pnand %p147, %p148
    %p150 = pneg %p149
    // Predicated region
    $region25: #{psenet_forward.35} parent=5 // pred_check
      _
    $region26: #{psenet_forward.35} parent=5 // pred_check_branch
      %152 = sbr.rel (%p149) target = $region28
    $region27: #{psenet_forward.35} parent=5 // pred_region
      %s153 = ssub.s32 %s8, 1
      %p154 = scmp.lt.s32.totalorder %s19, 0
      %s155 = scalar_select %p154, %s19, 0
      %s156 = smul.addr %s155, 8
      %s157 = scalar_lea.vmem %s0, %s156
      %p158 = pneg %p53
      %p159 = pneg %p50
      %p160 = scmp.lt.s32.totalorder %s18, 1
      %s161 = scalar_select %p160, %s18, 1
      %p162 = scmp.lt.s32.totalorder %s20, 0
      %s163 = scalar_select %p162, %s20, 0
      %s164 = sadd.s32 %s163, %s161
      %s165 = smul.addr %s164, 2
      %s166 = scalar_lea.vmem %s1, %s165
      %p167 = pneg %p81
      %p168 = pneg %p78
      %p169 = pneg %p111
      %p170 = pneg %p108
      %p171 = scmp.lt.s32.totalorder %s18, 1
      %s172 = scalar_select %p171, %s18, 1
      %p173 = scmp.lt.s32.totalorder %s19, 0
      %s174 = scalar_select %p173, %s19, 0
      %p175 = scmp.lt.s32.totalorder %s20, 0
      %s176 = scalar_select %p175, %s20, 0
      %s177 = sadd.s32 %s176, %s174
      %s178 = sadd.s32 %s177, %s172
      %s179 = smul.addr %s178, 4
      %s180 = scalar_lea.vmem %s2, %s179
      %p181 = scmp.lt.s32.totalorder %s19, 0
      %s182 = scalar_select %p181, %s19, 0
      %s183 = smul.addr %s182, 8
      %s184 = scalar_lea.vmem %s0, %s183
      %p185 = scmp.lt.s32.totalorder %s18, 1
      %s186 = scalar_select %p185, %s18, 1
      %p187 = scmp.lt.s32.totalorder %s20, 0
      %s188 = scalar_select %p187, %s20, 0
      %s189 = sadd.s32 %s188, %s186
      %s190 = smul.addr %s189, 2
      %s191 = scalar_lea.vmem %s1, %s190
      %p192 = scmp.lt.s32.totalorder %s18, 1
      %s193 = scalar_select %p192, %s18, 1
      %p194 = scmp.lt.s32.totalorder %s19, 0
      %s195 = scalar_select %p194, %s19, 0
      %p196 = scmp.lt.s32.totalorder %s20, 0
      %s197 = scalar_select %p196, %s20, 0
      %s198 = sadd.s32 %s197, %s195
      %s199 = sadd.s32 %s198, %s193
      %s200 = smul.addr %s199, 4
      %s201 = scalar_lea.vmem %s2, %s200
      %v202 = vld [vmem:[%s184] sm:$0xff]
      %v203 = vld [vmem:[%s191] sm:$0x3]
      %v204 = vunpack.c.l.bf16 %v203
      %vm205 = vcmask 31744
      %v207 = vsel %vm205, %v202, 0
      %vm209 = vcmask 1043456
      %v211 = vsel %vm209, %v204, 0
      %213 = vmatprep.subr.mxu0 0.0
      %214 = vmatpush1.msra.mxu0 %v211
      %215 = vmatprep.subr.mxu0 0.0
      %216 = vmatpush1.msra.mxu0 0.0
      %217 = vmatprep.subr.mxu0 0.0
      %218 = vmatpush1.msra.mxu0 0.0
      %219 = vmatprep.subr.mxu0 0.0
      %220 = vmatpush1.msra.mxu0 0.0
      %221 = vmatprep.subr.mxu0 0.0
      %222 = vmatpush1.msra.mxu0 0.0
      %223 = vmatprep.subr.mxu0 0.0
      %224 = vmatpush1.msra.mxu0 0.0
      %225 = vmatprep.subr.mxu0 0.0
      %226 = vmatpush1.msra.mxu0 0.0
      %227 = vmatprep.subr.mxu0 0.0
      %228 = vmatpush1.msra.mxu0 0.0
      %229 = vmatprep.subr.mxu0 0.0
      %230 = vmatpush1.msra.mxu0 0.0
      %231 = vmatprep.subr.mxu0 0.0
      %232 = vmatpush1.msra.mxu0 0.0
      %233 = vmatprep.subr.mxu0 0.0
      %234 = vmatpush1.msra.mxu0 0.0
      %235 = vmatprep.subr.mxu0 0.0
      %236 = vmatpush1.msra.mxu0 0.0
      %237 = vmatprep.subr.mxu0 0.0
      %238 = vmatpush1.msra.mxu0 0.0
      %239 = vmatprep.subr.mxu0 0.0
      %240 = vmatpush1.msra.mxu0 0.0
      %241 = vmatprep.subr.mxu0 0.0
      %242 = vmatpush1.msra.mxu0 0.0
      %243 = vmatprep.subr.mxu0 0.0
      %244 = vmatpush1.msra.mxu0 0.0
      %245 = vmatprep.subr.mxu0 0.0
      %246 = vmatpush1.msra.mxu0 0.0
      %247 = vmatprep.subr.mxu0 0.0
      %248 = vmatpush1.msra.mxu0 0.0
      %249 = vmatprep.subr.mxu0 0.0
      %250 = vmatpush1.msra.mxu0 0.0
      %251 = vmatprep.subr.mxu0 0.0
      %252 = vmatpush1.msra.mxu0 0.0
      %253 = vmatprep.subr.mxu0 0.0
      %254 = vmatpush1.msra.mxu0 0.0
      %255 = vmatprep.subr.mxu0 0.0
      %256 = vmatpush1.msra.mxu0 0.0
      %257 = vmatprep.subr.mxu0 0.0
      %258 = vmatpush1.msra.mxu0 0.0
      %259 = vmatprep.subr.mxu0 0.0
      %260 = vmatpush1.msra.mxu0 0.0
      %261 = vmatprep.subr.mxu0 0.0
      %262 = vmatpush1.msra.mxu0 0.0
      %263 = vmatprep.subr.mxu0 0.0
      %264 = vmatpush1.msra.mxu0 0.0
      %265 = vmatprep.subr.mxu0 0.0
      %266 = vmatpush1.msra.mxu0 0.0
      %267 = vmatprep.subr.mxu0 0.0
      %268 = vmatpush1.msra.mxu0 0.0
      %269 = vmatprep.subr.mxu0 0.0
      %270 = vmatpush1.msra.mxu0 0.0
      %271 = vmatprep.subr.mxu0 0.0
      %272 = vmatpush1.msra.mxu0 0.0
      %273 = vmatprep.subr.mxu0 0.0
      %274 = vmatpush1.msra.mxu0 0.0
      %275 = vmatprep.subr.mxu0 0.0
      %276 = vmatpush1.msra.mxu0 0.0
      %277 = vmatprep.mubr.f32.mxu0 0.0
      %278 = vmatmul.mubr.f32.gmra.mrb[0].mxu0 %v207
      %v279 = vpop.f32.mrb[0].mxu0
      %v280 = vadd.f32 0.0, %v279
      %v281 = vpop.f32.mrb[0].mxu0
      %282 = vdwg.mxu0
      %v283 = vpack.c.bf16 %v280, %v280
      %284 = vst [vmem:[%s201] sm:$0xf] %v283
      %p285 = scmp.lt.s32.totalorder %s18, 1
      %s286 = scalar_select %p285, %s18, 1
      %p287 = scmp.lt.s32.totalorder %s19, 0
      %s288 = scalar_select %p287, %s19, 0
      %p289 = scmp.lt.s32.totalorder %s20, 0
      %s290 = scalar_select %p289, %s20, 0
      %s291 = sadd.s32 %s290, %s288
      %s292 = sadd.s32 %s291, %s286
      %s293 = smul.addr %s292, 4
      %s294 = scalar_lea.vmem %s2, %s293
      // Predicated region
      $region29: #{psenet_forward.35} parent=27 // pred_check
        %p295 = pneg %p108
      $region30: #{psenet_forward.35} parent=27 // pred_check_branch
        %297 = sbr.rel (%p295) target = $region32
      $region31: #{psenet_forward.35} parent=27 // pred_region
        _
      $region32: #{psenet_forward.35} parent=27 // pred_fallthru
        _
    $region28: #{psenet_forward.35} parent=5 // pred_fallthru
      _
    %p298 = scmp.le.s32.totalorder 2, %s8
    // Predicated region
    $region33: #{psenet_forward.35} parent=5 // pred_check
      %p299 = pneg %p298
    $region34: #{psenet_forward.35} parent=5 // pred_check_branch
      %301 = sbr.rel (%p299) target = $region36
    $region35: #{psenet_forward.35} parent=5 // pred_region
      %s302 = ssub.s32 %s8, 2
      // Predicated region
      $region37: #{psenet_forward.35} parent=35 // pred_check
        %p303 = pneg %p114
      $region38: #{psenet_forward.35} parent=35 // pred_check_branch
        %305 = sbr.rel (%p303) target = $region40
      $region39: #{psenet_forward.35} parent=35 // pred_region
        %p306 = scmp.lt.s32.totalorder %s21, 1
        %s307 = scalar_select %p306, %s21, 1
        %p308 = scmp.lt.s32.totalorder %s22, 0
        %s309 = scalar_select %p308, %s22, 0
        %p310 = scmp.lt.s32.totalorder %s23, 0
        %s311 = scalar_select %p310, %s23, 0
        %s312 = sadd.s32 %s311, %s309
        %s313 = sadd.s32 %s312, %s307
        %s314 = smul.addr %s313, 4
        %s315 = scalar_lea.vmem %s2, %s314
      $region40: #{psenet_forward.35} parent=35 // pred_fallthru
        _
    $region36: #{psenet_forward.35} parent=5 // pred_fallthru
      _
  $region6: #{psenet_forward.35} parent=0 // loop_footer
    %s12 = sadd.s32 1, %s8
  $region7: #{psenet_forward.35} parent=0 // loop_footer_branch
    %7 = sbr.rel target = $region3
  $region8: #{psenet_forward.35} parent=0 // loop_exit
    _

// kernel: psenet_forward.34
$region0: #{psenet_forward.34}
  #allocation0 [shape = 'u32[]', space=smem, size = 0x4, offset = 0x4, fixed_abs, tag = 'smem constant byte address 0x4 - core index']
  #allocation1 [shape = 'u32[144,128]{1,0:T(1,128)}', space=vmem, size = 0x12000, scoped, tag = 'internal scratch']
  #allocation2 [shape = 'f32[32,128]{1,0:T(8,128)}', space=vmem, size = 0x4000, scoped, tag = 'scratch operand']
  %s0 = inlined_call_operand.vmem [shape: bf16[32,128], index: 0, kind: input, shape index: {}]
  %s1 = inlined_call_operand.vmem [shape: bf16[128,128], index: 1, kind: input, shape index: {}]
  %s2 = inlined_call_operand.vmem [shape: f32[1,128], index: 2, kind: input, shape index: {}]
  %s3 = inlined_call_operand.vmem [shape: bf16[32,128], index: 3, kind: input, shape index: {}]
  %s4 = inlined_call_operand.vmem [shape: bf16[32,128], index: 4, kind: output, shape index: {}]
  %s5 = sld [smem:[#allocation0]]
  $region34: #{psenet_forward.34} parent=0
    _
  %s7 = ssub.s32 1, %s5
  %s8 = scalar_select 0, %s7, %s5
  // Predicated region
  $region2: #{psenet_forward.34} parent=0 // pred_check
    _
  $region3: #{psenet_forward.34} parent=0 // pred_check_branch
    %10 = sbr.rel (0) target = $region5
  $region4: #{psenet_forward.34} parent=0 // pred_region
    _
  $region5: #{psenet_forward.34} parent=0 // pred_fallthru
    _
  // Predicated region
  $region6: #{psenet_forward.34} parent=0 // pred_check
    _
  $region7: #{psenet_forward.34} parent=0 // pred_check_branch
    %12 = sbr.rel (0) target = $region9
  $region8: #{psenet_forward.34} parent=0 // pred_region
    _
  $region9: #{psenet_forward.34} parent=0 // pred_fallthru
    _
  // Predicated region
  $region10: #{psenet_forward.34} parent=0 // pred_check
    _
  $region11: #{psenet_forward.34} parent=0 // pred_check_branch
    %14 = sbr.rel (0) target = $region13
  $region12: #{psenet_forward.34} parent=0 // pred_region
    _
  $region13: #{psenet_forward.34} parent=0 // pred_fallthru
    _
  // Predicated region
  $region14: #{psenet_forward.34} parent=0 // pred_check
    _
  $region15: #{psenet_forward.34} parent=0 // pred_check_branch
    %16 = sbr.rel (0) target = $region17
  $region16: #{psenet_forward.34} parent=0 // pred_region
    _
  $region17: #{psenet_forward.34} parent=0 // pred_fallthru
    _
  %p18 = scmp.eq.s32.totalorder 0, 0
  // Predicated region
  $region18: #{psenet_forward.34} parent=0 // pred_check
    %p19 = pneg %p18
  $region19: #{psenet_forward.34} parent=0 // pred_check_branch
    %21 = sbr.rel (%p19) target = $region21
  $region20: #{psenet_forward.34} parent=0 // pred_region
    %22 = vst [vmem:[#allocation2] sm:$0xff] 0.0
    %23 = vst [vmem:[#allocation2 + $0x8] sm:$0xff] 0.0
    %24 = vst [vmem:[#allocation2 + $0x10] sm:$0xff] 0.0
    %25 = vst [vmem:[#allocation2 + $0x18] sm:$0xff] 0.0
  $region21: #{psenet_forward.34} parent=0 // pred_fallthru
    _
  %v26 = vld [vmem:[#allocation2] sm:$0xff]
  %v27 = vld [vmem:[#allocation2 + $0x8] sm:$0xff]
  %v28 = vld [vmem:[#allocation2 + $0x10] sm:$0xff]
  %v29 = vld [vmem:[#allocation2 + $0x18] sm:$0xff]
  %v30 = vld [vmem:[%s0] sm:$0xf]
  %v31 = vld [vmem:[%s0 + $0x4] sm:$0xf]
  %v32 = vld [vmem:[%s0 + $0x8] sm:$0xf]
  %v33 = vld [vmem:[%s0 + $0xc] sm:$0xf]
  %v34 = vld [vmem:[%s1] sm:$0xf]
  %v35 = vld [vmem:[%s1 + $0x4] sm:$0xf]
  %v36 = vld [vmem:[%s1 + $0x8] sm:$0xf]
  %v37 = vld [vmem:[%s1 + $0xc] sm:$0xf]
  %v38 = vld [vmem:[%s1 + $0x10] sm:$0xf]
  %v39 = vld [vmem:[%s1 + $0x14] sm:$0xf]
  %v40 = vld [vmem:[%s1 + $0x18] sm:$0xf]
  %v41 = vld [vmem:[%s1 + $0x1c] sm:$0xf]
  %v42 = vld [vmem:[%s1 + $0x20] sm:$0xf]
  %v43 = vld [vmem:[%s1 + $0x24] sm:$0xf]
  %v44 = vld [vmem:[%s1 + $0x28] sm:$0xf]
  %v45 = vld [vmem:[%s1 + $0x2c] sm:$0xf]
  %v46 = vld [vmem:[%s1 + $0x30] sm:$0xf]
  %v47 = vld [vmem:[%s1 + $0x34] sm:$0xf]
  %v48 = vld [vmem:[%s1 + $0x38] sm:$0xf]
  %v49 = vld [vmem:[%s1 + $0x3c] sm:$0xf]
  %v54 = vunpack.c.l.b16 %v30
  %v55 = vunpack.c.l.b16 %v31
  %v56 = vunpack.c.l.b16 %v32
  %v57 = vunpack.c.l.b16 %v33
  %v58 = vpack.c.b16 %v55, %v54
  %v59 = vpack.c.b16 %v57, %v56
  %v78 = vunpack.c.l.b16 %v34
  %v79 = vunpack.c.l.b16 %v35
  %v80 = vunpack.c.l.b16 %v36
  %v81 = vunpack.c.l.b16 %v37
  %v82 = vunpack.c.l.b16 %v38
  %v83 = vunpack.c.l.b16 %v39
  %v84 = vunpack.c.l.b16 %v40
  %v85 = vunpack.c.l.b16 %v41
  %v86 = vunpack.c.l.b16 %v42
  %v87 = vunpack.c.l.b16 %v43
  %v88 = vunpack.c.l.b16 %v44
  %v89 = vunpack.c.l.b16 %v45
  %v90 = vunpack.c.l.b16 %v46
  %v91 = vunpack.c.l.b16 %v47
  %v92 = vunpack.c.l.b16 %v48
  %v93 = vunpack.c.l.b16 %v49
  %v94 = vpack.c.b16 %v79, %v78
  %v95 = vpack.c.b16 %v81, %v80
  %v96 = vpack.c.b16 %v83, %v82
  %v97 = vpack.c.b16 %v85, %v84
  %v98 = vpack.c.b16 %v87, %v86
  %v99 = vpack.c.b16 %v89, %v88
  %v100 = vpack.c.b16 %v91, %v90
  %v101 = vpack.c.b16 %v93, %v92
  %110 = vmatprep.subr.bf16.mxu0 0
  %111 = vmatpush1.bf16.msra.mxu0 %v94
  %112 = vmatprep.subr.bf16.mxu0 0
  %113 = vmatpush1.bf16.msra.mxu0 %v95
  %114 = vmatprep.subr.bf16.mxu0 0
  %115 = vmatpush1.bf16.msra.mxu0 %v96
  %116 = vmatprep.subr.bf16.mxu0 0
  %117 = vmatpush1.bf16.msra.mxu0 %v97
  %118 = vmatprep.subr.bf16.mxu0 0
  %119 = vmatpush1.bf16.msra.mxu0 %v98
  %120 = vmatprep.subr.bf16.mxu0 0
  %121 = vmatpush1.bf16.msra.mxu0 %v99
  %122 = vmatprep.subr.bf16.mxu0 0
  %123 = vmatpush1.bf16.msra.mxu0 %v100
  %124 = vmatprep.subr.bf16.mxu0 0
  %125 = vmatpush1.bf16.msra.mxu0 %v101
  %126 = vmatprep.subr.bf16.mxu0 0
  %127 = vmatpush1.bf16.msra.mxu0 0
  %128 = vmatprep.subr.bf16.mxu0 0
  %129 = vmatpush1.bf16.msra.mxu0 0
  %130 = vmatprep.subr.bf16.mxu0 0
  %131 = vmatpush1.bf16.msra.mxu0 0
  %132 = vmatprep.subr.bf16.mxu0 0
  %133 = vmatpush1.bf16.msra.mxu0 0
  %134 = vmatprep.subr.bf16.mxu0 0
  %135 = vmatpush1.bf16.msra.mxu0 0
  %136 = vmatprep.subr.bf16.mxu0 0
  %137 = vmatpush1.bf16.msra.mxu0 0
  %138 = vmatprep.subr.bf16.mxu0 0
  %139 = vmatpush1.bf16.msra.mxu0 0
  %140 = vmatprep.subr.bf16.mxu0 0
  %141 = vmatpush1.bf16.msra.mxu0 0
  %142 = vmatprep.mubr.bf16.mxu0 0
  %143 = vmatmul.mubr.bf16.gmra.mrb[0].mxu0 %v58
  %v144 = vpop.f32.mrb[0].mxu0
  %v145 = vadd.f32 0.0, %v144
  %v146 = vpop.f32.mrb[0].mxu0
  %v147 = vpop.f32.mrb[0].mxu0
  %v148 = vadd.f32 0.0, %v147
  %v149 = vpop.f32.mrb[0].mxu0
  %150 = vmatprep.mubr.bf16.mxu0 0
  %151 = vmatmul.mubr.bf16.gmra.mrb[0].mxu0 %v59
  %v152 = vpop.f32.mrb[0].mxu0
  %v153 = vadd.f32 0.0, %v152
  %v154 = vpop.f32.mrb[0].mxu0
  %v155 = vpop.f32.mrb[0].mxu0
  %v156 = vadd.f32 0.0, %v155
  %v157 = vpop.f32.mrb[0].mxu0
  %158 = vdwg.mxu0
  %v159 = vadd.f32 %v26, %v145
  %v160 = vadd.f32 %v27, %v148
  %v161 = vadd.f32 %v28, %v153
  %v162 = vadd.f32 %v29, %v156
  %163 = vst [vmem:[#allocation2] sm:$0xff] %v159
  %164 = vst [vmem:[#allocation2 + $0x8] sm:$0xff] %v160
  %165 = vst [vmem:[#allocation2 + $0x10] sm:$0xff] %v161
  %166 = vst [vmem:[#allocation2 + $0x18] sm:$0xff] %v162
  // Predicated region
  $region22: #{psenet_forward.34} parent=0 // pred_check
    %p167 = pneg %p18
  $region23: #{psenet_forward.34} parent=0 // pred_check_branch
    %169 = sbr.rel (%p167) target = $region25
  $region24: #{psenet_forward.34} parent=0 // pred_region
    %v170 = vld [vmem:[#allocation2] sm:$0xff]
    %v171 = vld [vmem:[#allocation2 + $0x8] sm:$0xff]
    %v172 = vld [vmem:[#allocation2 + $0x10] sm:$0xff]
    %v173 = vld [vmem:[#allocation2 + $0x18] sm:$0xff]
    %v174 = vld [vmem:[%s2] sm:$0x1]
    %v176 = vlaneseq
    %v177 = vshrl.u32 %v176, 7
    %v178 = vsub.s32 0, %v177
    %v179 = vrot.slane %v174, %v178
    %v181 = vadd.f32 %v170, %v179
    %v182 = vadd.f32 %v171, %v179
    %v183 = vadd.f32 %v172, %v179
    %v184 = vadd.f32 %v173, %v179
    %v185 = vld [vmem:[%s3] sm:$0xf]
    %v186 = vld [vmem:[%s3 + $0x4] sm:$0xf]
    %v187 = vld [vmem:[%s3 + $0x8] sm:$0xf]
    %v188 = vld [vmem:[%s3 + $0xc] sm:$0xf]
    %v189 = vunpack.c.l.bf16 %v185
    %v190 = vunpack.c.l.bf16 %v186
    %v191 = vunpack.c.l.bf16 %v187
    %v192 = vunpack.c.l.bf16 %v188
    %v193 = vadd.f32 %v181, %v189
    %v194 = vadd.f32 %v182, %v190
    %v195 = vadd.f32 %v183, %v191
    %v196 = vadd.f32 %v184, %v192
    %v197 = vpack.c.bf16 %v194, %v193
    %v198 = vpack.c.bf16 %v196, %v195
    %v201 = vunpack.c.l.b16 %v197
    %v202 = vunpack.c.h.b16 %v197
    %v203 = vunpack.c.l.b16 %v198
    %v204 = vunpack.c.h.b16 %v198
    %v205 = vpack.c.b16 %v201, %v201
    %v206 = vpack.c.b16 %v202, %v202
    %v207 = vpack.c.b16 %v203, %v203
    %v208 = vpack.c.b16 %v204, %v204
    %213 = vst [vmem:[%s4] sm:$0xf] %v205
    %214 = vst [vmem:[%s4 + $0x4] sm:$0xf] %v206
    %215 = vst [vmem:[%s4 + $0x8] sm:$0xf] %v207
    %216 = vst [vmem:[%s4 + $0xc] sm:$0xf] %v208
  $region25: #{psenet_forward.34} parent=0 // pred_fallthru
    _
  // Predicated region
  $region26: #{psenet_forward.34} parent=0 // pred_check
    _
  $region27: #{psenet_forward.34} parent=0 // pred_check_branch
    %218 = sbr.rel (0) target = $region29
  $region28: #{psenet_forward.34} parent=0 // pred_region
    _
  $region29: #{psenet_forward.34} parent=0 // pred_fallthru
    _
  // Predicated region
  $region30: #{psenet_forward.34} parent=0 // pred_check
    _
  $region31: #{psenet_forward.34} parent=0 // pred_check_branch
    %220 = sbr.rel (0) target = $region33
  $region32: #{psenet_forward.34} parent=0 // pred_region
    _
  $region33: #{psenet_forward.34} parent=0 // pred_fallthru
    _

// kernel: psenet_forward.36
$region0: #{psenet_forward.36}
  #allocation0 [shape = 'u32[]', space=smem, size = 0x4, offset = 0x4, fixed_abs, tag = 'smem constant byte address 0x4 - core index']
  #allocation1 [shape = 'u32[144,128]{1,0:T(1,128)}', space=vmem, size = 0x12000, scoped, tag = 'internal scratch']
  %s0 = inlined_call_operand.vmem [shape: f32[8,4], index: 0, kind: input, shape index: {}]
  %s1 = inlined_call_operand.vmem [shape: bf16[16,4,128], index: 1, kind: input, shape index: {}]
  %s2 = inlined_call_operand.vmem [shape: bf16[16,8,128], index: 2, kind: output, shape index: {}]
  %s3 = sld [smem:[#allocation0]]
  $region41: #{psenet_forward.36} parent=0
    _
  %s5 = ssub.s32 1, %s3
  %s6 = scalar_select 0, %s5, %s3
  loop: start=0, step=1, limit=18
  $region2: #{psenet_forward.36} parent=0 // loop_pre_header
    _
  $region3: #{psenet_forward.36} parent=0 // loop_header
    %s8 = sphi 0, %s12
    %p9 = scmp.ge.s32.totalorder %s8, 18
    %s15 = sphi 0, %s34
    %s16 = sphi 0, %s30
    %s17 = sphi 0, %s26
    %s18 = sphi 0, %s15
    %s19 = sphi 0, %s16
    %s20 = sphi 0, %s17
    %s21 = sphi 0, %s18
    %s22 = sphi 0, %s19
    %s23 = sphi 0, %s20
    %s37 = sphi 0, %s39
    %s40 = sphi 0, %s37
    %s41 = sphi 0, %s40
    %s57 = sphi 0, %s41
    %s65 = sphi 0, %s67
    %s68 = sphi 0, %s65
    %s69 = sphi 0, %s68
    %s85 = sphi 0, %s69
    %s95 = sphi 0, %s97
    %s98 = sphi 0, %s95
    %s99 = sphi 0, %s98
    %s115 = sphi 0, %s99
  $region4: #{psenet_forward.36} parent=0 // loop_header_branch
    %11 = sbr.rel (%p9) target = $region8
  $region5: #{psenet_forward.36} parent=0 // loop_body
    %s13 = ssub.s32 %s8, 1
    %s14 = ssub.s32 %s8, 2
    %s24 = sadd.s32 1, %s17
    %p25 = scmp.ge.s32.totalorder %s24, 1
    %s26 = scalar_select %p25, 0, %s24
    %s27 = sadd.s32 1, %s16
    %s28 = scalar_select %p25, %s27, %s16
    %p29 = scmp.ge.s32.totalorder %s28, 1
    %s30 = scalar_select %p29, 0, %s28
    %s31 = sadd.s32 1, %s15
    %s32 = scalar_select %p29, %s31, %s15
    %p33 = scmp.ge.s32.totalorder %s32, 16
    %s34 = scalar_select %p33, 0, %s32
    %s35 = ssub.s32 %s16, %s30
    %p36 = scmp.eq.s32.totalorder %s35, 0
    %s38 = sadd.s32 %s37, 1
    %s39 = scalar_select %p36, %s37, %s38
    %p42 = pneg %p36
    %p43 = scmp.eq.s32.totalorder %s8, 15
    %p44 = por %p42, %p43
    %p45 = scmp.ne.s32.totalorder %s37, %s40
    %p46 = scmp.eq.s32.totalorder %s8, 0
    %p47 = por %p45, %p46
    %p48 = scmp.ne.s32.totalorder %s37, %s40
    %p49 = scmp.eq.s32.totalorder %s13, 15
    %p50 = por %p48, %p49
    %p51 = scmp.ne.s32.totalorder %s40, %s41
    %p52 = scmp.eq.s32.totalorder %s13, 0
    %p53 = por %p51, %p52
    %p54 = scmp.ne.s32.totalorder %s40, %s41
    %p55 = scmp.eq.s32.totalorder %s14, 15
    %p56 = por %p54, %p55
    %p58 = scmp.ne.s32.totalorder %s41, %s57
    %p59 = scmp.eq.s32.totalorder %s14, 0
    %p60 = por %p58, %p59
    %s61 = ssub.s32 %s15, %s34
    %s62 = ssub.s32 %s17, %s26
    %s63 = sor.u32 %s61, %s62
    %p64 = scmp.eq.s32.totalorder %s63, 0
    %s66 = sadd.s32 %s65, 1
    %s67 = scalar_select %p64, %s65, %s66
    %p70 = pneg %p64
    %p71 = scmp.eq.s32.totalorder %s8, 15
    %p72 = por %p70, %p71
    %p73 = scmp.ne.s32.totalorder %s65, %s68
    %p74 = scmp.eq.s32.totalorder %s8, 0
    %p75 = por %p73, %p74
    %p76 = scmp.ne.s32.totalorder %s65, %s68
    %p77 = scmp.eq.s32.totalorder %s13, 15
    %p78 = por %p76, %p77
    %p79 = scmp.ne.s32.totalorder %s68, %s69
    %p80 = scmp.eq.s32.totalorder %s13, 0
    %p81 = por %p79, %p80
    %p82 = scmp.ne.s32.totalorder %s68, %s69
    %p83 = scmp.eq.s32.totalorder %s14, 15
    %p84 = por %p82, %p83
    %p86 = scmp.ne.s32.totalorder %s69, %s85
    %p87 = scmp.eq.s32.totalorder %s14, 0
    %p88 = por %p86, %p87
    %s89 = ssub.s32 %s15, %s34
    %s90 = ssub.s32 %s16, %s30
    %s91 = sor.u32 %s89, %s90
    %s92 = ssub.s32 %s17, %s26
    %s93 = sor.u32 %s91, %s92
    %p94 = scmp.eq.s32.totalorder %s93, 0
    %s96 = sadd.s32 %s95, 1
    %s97 = scalar_select %p94, %s95, %s96
    %p100 = pneg %p94
    %p101 = scmp.eq.s32.totalorder %s8, 15
    %p102 = por %p100, %p101
    %p103 = scmp.ne.s32.totalorder %s95, %s98
    %p104 = scmp.eq.s32.totalorder %s8, 0
    %p105 = por %p103, %p104
    %p106 = scmp.ne.s32.totalorder %s95, %s98
    %p107 = scmp.eq.s32.totalorder %s13, 15
    %p108 = por %p106, %p107
    %p109 = scmp.ne.s32.totalorder %s98, %s99
    %p110 = scmp.eq.s32.totalorder %s13, 0
    %p111 = por %p109, %p110
    %p112 = scmp.ne.s32.totalorder %s98, %s99
    %p113 = scmp.eq.s32.totalorder %s14, 15
    %p114 = por %p112, %p113
    %p116 = scmp.ne.s32.totalorder %s99, %s115
    %p117 = scmp.eq.s32.totalorder %s14, 0
    %p118 = por %p116, %p117
    %p119 = scmp.le.s32.totalorder 1, %s8
    %p120 = scmp.lt.s32.totalorder %s8, 17
    %p121 = pnand %p119, %p120
    %p122 = pneg %p121
    // Predicated region
    $region9: #{psenet_forward.36} parent=5 // pred_check
      _
    $region10: #{psenet_forward.36} parent=5 // pred_check_branch
      %124 = sbr.rel (%p121) target = $region12
    $region11: #{psenet_forward.36} parent=5 // pred_region
      %s125 = ssub.s32 %s8, 1
      // Predicated region
      $region13: #{psenet_forward.36} parent=11 // pred_check
        %p126 = pneg %p53
      $region14: #{psenet_forward.36} parent=11 // pred_check_branch
        %128 = sbr.rel (%p126) target = $region16
      $region15: #{psenet_forward.36} parent=11 // pred_region
        %p129 = scmp.lt.s32.totalorder %s19, 0
        %s130 = scalar_select %p129, %s19, 0
        %s131 = smul.addr %s130, 8
        %s132 = scalar_lea.vmem %s0, %s131
      $region16: #{psenet_forward.36} parent=11 // pred_fallthru
        _
    $region12: #{psenet_forward.36} parent=5 // pred_fallthru
      _
    %p133 = scmp.lt.s32.totalorder %s8, 16
    // Predicated region
    $region17: #{psenet_forward.36} parent=5 // pred_check
      %p134 = pneg %p133
    $region18: #{psenet_forward.36} parent=5 // pred_check_branch
      %136 = sbr.rel (%p134) target = $region20
    $region19: #{psenet_forward.36} parent=5 // pred_region
      // Predicated region
      $region21: #{psenet_forward.36} parent=19 // pred_check
        %p137 = pneg %p75
      $region22: #{psenet_forward.36} parent=19 // pred_check_branch
        %139 = sbr.rel (%p137) target = $region24
      $region23: #{psenet_forward.36} parent=19 // pred_region
        %p140 = scmp.lt.s32.totalorder %s15, 15
        %s141 = scalar_select %p140, %s15, 15
        %p142 = scmp.lt.s32.totalorder %s17, 0
        %s143 = scalar_select %p142, %s17, 0
        %s144 = sadd.s32 %s143, %s141
        %s145 = smul.addr %s144, 2
        %s146 = scalar_lea.vmem %s1, %s145
      $region24: #{psenet_forward.36} parent=19 // pred_fallthru
        _
    $region20: #{psenet_forward.36} parent=5 // pred_fallthru
      _
    %p147 = scmp.le.s32.totalorder 1, %s8
    %p148 = scmp.lt.s32.totalorder %s8, 17
    %p149 = pnand %p147, %p148
    %p150 = pneg %p149
    // Predicated region
    $region25: #{psenet_forward.36} parent=5 // pred_check
      _
    $region26: #{psenet_forward.36} parent=5 // pred_check_branch
      %152 = sbr.rel (%p149) target = $region28
    $region27: #{psenet_forward.36} parent=5 // pred_region
      %s153 = ssub.s32 %s8, 1
      %p154 = scmp.lt.s32.totalorder %s19, 0
      %s155 = scalar_select %p154, %s19, 0
      %s156 = smul.addr %s155, 8
      %s157 = scalar_lea.vmem %s0, %s156
      %p158 = pneg %p53
      %p159 = pneg %p50
      %p160 = scmp.lt.s32.totalorder %s18, 15
      %s161 = scalar_select %p160, %s18, 15
      %p162 = scmp.lt.s32.totalorder %s20, 0
      %s163 = scalar_select %p162, %s20, 0
      %s164 = sadd.s32 %s163, %s161
      %s165 = smul.addr %s164, 2
      %s166 = scalar_lea.vmem %s1, %s165
      %p167 = pneg %p81
      %p168 = pneg %p78
      %p169 = pneg %p111
      %p170 = pneg %p108
      %p171 = scmp.lt.s32.totalorder %s18, 15
      %s172 = scalar_select %p171, %s18, 15
      %p173 = scmp.lt.s32.totalorder %s19, 0
      %s174 = scalar_select %p173, %s19, 0
      %p175 = scmp.lt.s32.totalorder %s20, 0
      %s176 = scalar_select %p175, %s20, 0
      %s177 = sadd.s32 %s176, %s174
      %s178 = sadd.s32 %s177, %s172
      %s179 = smul.addr %s178, 4
      %s180 = scalar_lea.vmem %s2, %s179
      %p181 = scmp.lt.s32.totalorder %s19, 0
      %s182 = scalar_select %p181, %s19, 0
      %s183 = smul.addr %s182, 8
      %s184 = scalar_lea.vmem %s0, %s183
      %p185 = scmp.lt.s32.totalorder %s18, 15
      %s186 = scalar_select %p185, %s18, 15
      %p187 = scmp.lt.s32.totalorder %s20, 0
      %s188 = scalar_select %p187, %s20, 0
      %s189 = sadd.s32 %s188, %s186
      %s190 = smul.addr %s189, 2
      %s191 = scalar_lea.vmem %s1, %s190
      %p192 = scmp.lt.s32.totalorder %s18, 15
      %s193 = scalar_select %p192, %s18, 15
      %p194 = scmp.lt.s32.totalorder %s19, 0
      %s195 = scalar_select %p194, %s19, 0
      %p196 = scmp.lt.s32.totalorder %s20, 0
      %s197 = scalar_select %p196, %s20, 0
      %s198 = sadd.s32 %s197, %s195
      %s199 = sadd.s32 %s198, %s193
      %s200 = smul.addr %s199, 4
      %s201 = scalar_lea.vmem %s2, %s200
      %v202 = vld [vmem:[%s184] sm:$0xff]
      %v203 = vld [vmem:[%s191] sm:$0x3]
      %v204 = vunpack.c.l.bf16 %v203
      %vm205 = vcmask 31744
      %v207 = vsel %vm205, %v202, 0
      %vm209 = vcmask 1043456
      %v211 = vsel %vm209, %v204, 0
      %213 = vmatprep.subr.mxu0 0.0
      %214 = vmatpush1.msra.mxu0 %v211
      %215 = vmatprep.subr.mxu0 0.0
      %216 = vmatpush1.msra.mxu0 0.0
      %217 = vmatprep.subr.mxu0 0.0
      %218 = vmatpush1.msra.mxu0 0.0
      %219 = vmatprep.subr.mxu0 0.0
      %220 = vmatpush1.msra.mxu0 0.0
      %221 = vmatprep.subr.mxu0 0.0
      %222 = vmatpush1.msra.mxu0 0.0
      %223 = vmatprep.subr.mxu0 0.0
      %224 = vmatpush1.msra.mxu0 0.0
      %225 = vmatprep.subr.mxu0 0.0
      %226 = vmatpush1.msra.mxu0 0.0
      %227 = vmatprep.subr.mxu0 0.0
      %228 = vmatpush1.msra.mxu0 0.0
      %229 = vmatprep.subr.mxu0 0.0
      %230 = vmatpush1.msra.mxu0 0.0
      %231 = vmatprep.subr.mxu0 0.0
      %232 = vmatpush1.msra.mxu0 0.0
      %233 = vmatprep.subr.mxu0 0.0
      %234 = vmatpush1.msra.mxu0 0.0
      %235 = vmatprep.subr.mxu0 0.0
      %236 = vmatpush1.msra.mxu0 0.0
      %237 = vmatprep.subr.mxu0 0.0
      %238 = vmatpush1.msra.mxu0 0.0
      %239 = vmatprep.subr.mxu0 0.0
      %240 = vmatpush1.msra.mxu0 0.0
      %241 = vmatprep.subr.mxu0 0.0
      %242 = vmatpush1.msra.mxu0 0.0
      %243 = vmatprep.subr.mxu0 0.0
      %244 = vmatpush1.msra.mxu0 0.0
      %245 = vmatprep.subr.mxu0 0.0
      %246 = vmatpush1.msra.mxu0 0.0
      %247 = vmatprep.subr.mxu0 0.0
      %248 = vmatpush1.msra.mxu0 0.0
      %249 = vmatprep.subr.mxu0 0.0
      %250 = vmatpush1.msra.mxu0 0.0
      %251 = vmatprep.subr.mxu0 0.0
      %252 = vmatpush1.msra.mxu0 0.0
      %253 = vmatprep.subr.mxu0 0.0
      %254 = vmatpush1.msra.mxu0 0.0
      %255 = vmatprep.subr.mxu0 0.0
      %256 = vmatpush1.msra.mxu0 0.0
      %257 = vmatprep.subr.mxu0 0.0
      %258 = vmatpush1.msra.mxu0 0.0
      %259 = vmatprep.subr.mxu0 0.0
      %260 = vmatpush1.msra.mxu0 0.0
      %261 = vmatprep.subr.mxu0 0.0
      %262 = vmatpush1.msra.mxu0 0.0
      %263 = vmatprep.subr.mxu0 0.0
      %264 = vmatpush1.msra.mxu0 0.0
      %265 = vmatprep.subr.mxu0 0.0
      %266 = vmatpush1.msra.mxu0 0.0
      %267 = vmatprep.subr.mxu0 0.0
      %268 = vmatpush1.msra.mxu0 0.0
      %269 = vmatprep.subr.mxu0 0.0
      %270 = vmatpush1.msra.mxu0 0.0
      %271 = vmatprep.subr.mxu0 0.0
      %272 = vmatpush1.msra.mxu0 0.0
      %273 = vmatprep.subr.mxu0 0.0
      %274 = vmatpush1.msra.mxu0 0.0
      %275 = vmatprep.subr.mxu0 0.0
      %276 = vmatpush1.msra.mxu0 0.0
      %277 = vmatprep.mubr.f32.mxu0 0.0
      %278 = vmatmul.mubr.f32.gmra.mrb[0].mxu0 %v207
      %v279 = vpop.f32.mrb[0].mxu0
      %v280 = vadd.f32 0.0, %v279
      %v281 = vpop.f32.mrb[0].mxu0
      %282 = vdwg.mxu0
      %v283 = vpack.c.bf16 %v280, %v280
      %284 = vst [vmem:[%s201] sm:$0xf] %v283
      %p285 = scmp.lt.s32.totalorder %s18, 15
      %s286 = scalar_select %p285, %s18, 15
      %p287 = scmp.lt.s32.totalorder %s19, 0
      %s288 = scalar_select %p287, %s19, 0
      %p289 = scmp.lt.s32.totalorder %s20, 0
      %s290 = scalar_select %p289, %s20, 0
      %s291 = sadd.s32 %s290, %s288
      %s292 = sadd.s32 %s291, %s286
      %s293 = smul.addr %s292, 4
      %s294 = scalar_lea.vmem %s2, %s293
      // Predicated region
      $region29: #{psenet_forward.36} parent=27 // pred_check
        %p295 = pneg %p108
      $region30: #{psenet_forward.36} parent=27 // pred_check_branch
        %297 = sbr.rel (%p295) target = $region32
      $region31: #{psenet_forward.36} parent=27 // pred_region
        _
      $region32: #{psenet_forward.36} parent=27 // pred_fallthru
        _
    $region28: #{psenet_forward.36} parent=5 // pred_fallthru
      _
    %p298 = scmp.le.s32.totalorder 2, %s8
    // Predicated region
    $region33: #{psenet_forward.36} parent=5 // pred_check
      %p299 = pneg %p298
    $region34: #{psenet_forward.36} parent=5 // pred_check_branch
      %301 = sbr.rel (%p299) target = $region36
    $region35: #{psenet_forward.36} parent=5 // pred_region
      %s302 = ssub.s32 %s8, 2
      // Predicated region
      $region37: #{psenet_forward.36} parent=35 // pred_check
        %p303 = pneg %p114
      $region38: #{psenet_forward.36} parent=35 // pred_check_branch
        %305 = sbr.rel (%p303) target = $region40
      $region39: #{psenet_forward.36} parent=35 // pred_region
        %p306 = scmp.lt.s32.totalorder %s21, 15
        %s307 = scalar_select %p306, %s21, 15
        %p308 = scmp.lt.s32.totalorder %s22, 0
        %s309 = scalar_select %p308, %s22, 0
        %p310 = scmp.lt.s32.totalorder %s23, 0
        %s311 = scalar_select %p310, %s23, 0
        %s312 = sadd.s32 %s311, %s309
        %s313 = sadd.s32 %s312, %s307
        %s314 = smul.addr %s313, 4
        %s315 = scalar_lea.vmem %s2, %s314
      $region40: #{psenet_forward.36} parent=35 // pred_fallthru
        _
    $region36: #{psenet_forward.36} parent=5 // pred_fallthru
      _
  $region6: #{psenet_forward.36} parent=0 // loop_footer
    %s12 = sadd.s32 1, %s8
  $region7: #{psenet_forward.36} parent=0 // loop_footer_branch
    %7 = sbr.rel target = $region3
  $region8: #{psenet_forward.36} parent=0 // loop_exit
    _

// kernel: psenet_forward.37
$region0: #{psenet_forward.37}
  #allocation0 [shape = 'u32[]', space=smem, size = 0x4, offset = 0x4, fixed_abs, tag = 'smem constant byte address 0x4 - core index']
  #allocation1 [shape = 'u32[144,128]{1,0:T(1,128)}', space=vmem, size = 0x12000, scoped, tag = 'internal scratch']
  #allocation2 [shape = 'f32[128,128]{1,0:T(8,128)}', space=vmem, size = 0x10000, scoped, tag = 'scratch operand']
  %s0 = inlined_call_operand.vmem [shape: bf16[128,128], index: 0, kind: input, shape index: {}]
  %s1 = inlined_call_operand.vmem [shape: bf16[128,128], index: 1, kind: input, shape index: {}]
  %s2 = inlined_call_operand.vmem [shape: f32[1,128], index: 2, kind: input, shape index: {}]
  %s3 = inlined_call_operand.vmem [shape: bf16[128,128], index: 3, kind: input, shape index: {}]
  %s4 = inlined_call_operand.vmem [shape: bf16[128,128], index: 4, kind: output, shape index: {}]
  %s5 = sld [smem:[#allocation0]]
  $region34: #{psenet_forward.37} parent=0
    _
  %s7 = ssub.s32 1, %s5
  %s8 = scalar_select 0, %s7, %s5
  // Predicated region
  $region2: #{psenet_forward.37} parent=0 // pred_check
    _
  $region3: #{psenet_forward.37} parent=0 // pred_check_branch
    %10 = sbr.rel (0) target = $region5
  $region4: #{psenet_forward.37} parent=0 // pred_region
    _
  $region5: #{psenet_forward.37} parent=0 // pred_fallthru
    _
  // Predicated region
  $region6: #{psenet_forward.37} parent=0 // pred_check
    _
  $region7: #{psenet_forward.37} parent=0 // pred_check_branch
    %12 = sbr.rel (0) target = $region9
  $region8: #{psenet_forward.37} parent=0 // pred_region
    _
  $region9: #{psenet_forward.37} parent=0 // pred_fallthru
    _
  // Predicated region
  $region10: #{psenet_forward.37} parent=0 // pred_check
    _
  $region11: #{psenet_forward.37} parent=0 // pred_check_branch
    %14 = sbr.rel (0) target = $region13
  $region12: #{psenet_forward.37} parent=0 // pred_region
    _
  $region13: #{psenet_forward.37} parent=0 // pred_fallthru
    _
  // Predicated region
  $region14: #{psenet_forward.37} parent=0 // pred_check
    _
  $region15: #{psenet_forward.37} parent=0 // pred_check_branch
    %16 = sbr.rel (0) target = $region17
  $region16: #{psenet_forward.37} parent=0 // pred_region
    _
  $region17: #{psenet_forward.37} parent=0 // pred_fallthru
    _
  %p18 = scmp.eq.s32.totalorder 0, 0
  // Predicated region
  $region18: #{psenet_forward.37} parent=0 // pred_check
    %p19 = pneg %p18
  $region19: #{psenet_forward.37} parent=0 // pred_check_branch
    %21 = sbr.rel (%p19) target = $region21
  $region20: #{psenet_forward.37} parent=0 // pred_region
    %22 = vst [vmem:[#allocation2] sm:$0xff] 0.0
    %23 = vst [vmem:[#allocation2 + $0x8] sm:$0xff] 0.0
    %24 = vst [vmem:[#allocation2 + $0x10] sm:$0xff] 0.0
    %25 = vst [vmem:[#allocation2 + $0x18] sm:$0xff] 0.0
    %26 = vst [vmem:[#allocation2 + $0x20] sm:$0xff] 0.0
    %27 = vst [vmem:[#allocation2 + $0x28] sm:$0xff] 0.0
    %28 = vst [vmem:[#allocation2 + $0x30] sm:$0xff] 0.0
    %29 = vst [vmem:[#allocation2 + $0x38] sm:$0xff] 0.0
    %30 = vst [vmem:[#allocation2 + $0x40] sm:$0xff] 0.0
    %31 = vst [vmem:[#allocation2 + $0x48] sm:$0xff] 0.0
    %32 = vst [vmem:[#allocation2 + $0x50] sm:$0xff] 0.0
    %33 = vst [vmem:[#allocation2 + $0x58] sm:$0xff] 0.0
    %34 = vst [vmem:[#allocation2 + $0x60] sm:$0xff] 0.0
    %35 = vst [vmem:[#allocation2 + $0x68] sm:$0xff] 0.0
    %36 = vst [vmem:[#allocation2 + $0x70] sm:$0xff] 0.0
    %37 = vst [vmem:[#allocation2 + $0x78] sm:$0xff] 0.0
  $region21: #{psenet_forward.37} parent=0 // pred_fallthru
    _
  %v38 = vld [vmem:[#allocation2] sm:$0xff]
  %v39 = vld [vmem:[#allocation2 + $0x8] sm:$0xff]
  %v40 = vld [vmem:[#allocation2 + $0x10] sm:$0xff]
  %v41 = vld [vmem:[#allocation2 + $0x18] sm:$0xff]
  %v42 = vld [vmem:[#allocation2 + $0x20] sm:$0xff]
  %v43 = vld [vmem:[#allocation2 + $0x28] sm:$0xff]
  %v44 = vld [vmem:[#allocation2 + $0x30] sm:$0xff]
  %v45 = vld [vmem:[#allocation2 + $0x38] sm:$0xff]
  %v46 = vld [vmem:[#allocation2 + $0x40] sm:$0xff]
  %v47 = vld [vmem:[#allocation2 + $0x48] sm:$0xff]
  %v48 = vld [vmem:[#allocation2 + $0x50] sm:$0xff]
  %v49 = vld [vmem:[#allocation2 + $0x58] sm:$0xff]
  %v50 = vld [vmem:[#allocation2 + $0x60] sm:$0xff]
  %v51 = vld [vmem:[#allocation2 + $0x68] sm:$0xff]
  %v52 = vld [vmem:[#allocation2 + $0x70] sm:$0xff]
  %v53 = vld [vmem:[#allocation2 + $0x78] sm:$0xff]
  %v54 = vld [vmem:[%s0] sm:$0xf]
  %v55 = vld [vmem:[%s0 + $0x4] sm:$0xf]
  %v56 = vld [vmem:[%s0 + $0x8] sm:$0xf]
  %v57 = vld [vmem:[%s0 + $0xc] sm:$0xf]
  %v58 = vld [vmem:[%s0 + $0x10] sm:$0xf]
  %v59 = vld [vmem:[%s0 + $0x14] sm:$0xf]
  %v60 = vld [vmem:[%s0 + $0x18] sm:$0xf]
  %v61 = vld [vmem:[%s0 + $0x1c] sm:$0xf]
  %v62 = vld [vmem:[%s0 + $0x20] sm:$0xf]
  %v63 = vld [vmem:[%s0 + $0x24] sm:$0xf]
  %v64 = vld [vmem:[%s0 + $0x28] sm:$0xf]
  %v65 = vld [vmem:[%s0 + $0x2c] sm:$0xf]
  %v66 = vld [vmem:[%s0 + $0x30] sm:$0xf]
  %v67 = vld [vmem:[%s0 + $0x34] sm:$0xf]
  %v68 = vld [vmem:[%s0 + $0x38] sm:$0xf]
  %v69 = vld [vmem:[%s0 + $0x3c] sm:$0xf]
  %v70 = vld [vmem:[%s1] sm:$0xf]
  %v71 = vld [vmem:[%s1 + $0x4] sm:$0xf]
  %v72 = vld [vmem:[%s1 + $0x8] sm:$0xf]
  %v73 = vld [vmem:[%s1 + $0xc] sm:$0xf]
  %v74 = vld [vmem:[%s1 + $0x10] sm:$0xf]
  %v75 = vld [vmem:[%s1 + $0x14] sm:$0xf]
  %v76 = vld [vmem:[%s1 + $0x18] sm:$0xf]
  %v77 = vld [vmem:[%s1 + $0x1c] sm:$0xf]
  %v78 = vld [vmem:[%s1 + $0x20] sm:$0xf]
  %v79 = vld [vmem:[%s1 + $0x24] sm:$0xf]
  %v80 = vld [vmem:[%s1 + $0x28] sm:$0xf]
  %v81 = vld [vmem:[%s1 + $0x2c] sm:$0xf]
  %v82 = vld [vmem:[%s1 + $0x30] sm:$0xf]
  %v83 = vld [vmem:[%s1 + $0x34] sm:$0xf]
  %v84 = vld [vmem:[%s1 + $0x38] sm:$0xf]
  %v85 = vld [vmem:[%s1 + $0x3c] sm:$0xf]
  %v102 = vunpack.c.l.b16 %v54
  %v103 = vunpack.c.l.b16 %v55
  %v104 = vunpack.c.l.b16 %v56
  %v105 = vunpack.c.l.b16 %v57
  %v106 = vunpack.c.l.b16 %v58
  %v107 = vunpack.c.l.b16 %v59
  %v108 = vunpack.c.l.b16 %v60
  %v109 = vunpack.c.l.b16 %v61
  %v110 = vunpack.c.l.b16 %v62
  %v111 = vunpack.c.l.b16 %v63
  %v112 = vunpack.c.l.b16 %v64
  %v113 = vunpack.c.l.b16 %v65
  %v114 = vunpack.c.l.b16 %v66
  %v115 = vunpack.c.l.b16 %v67
  %v116 = vunpack.c.l.b16 %v68
  %v117 = vunpack.c.l.b16 %v69
  %v118 = vpack.c.b16 %v103, %v102
  %v119 = vpack.c.b16 %v105, %v104
  %v120 = vpack.c.b16 %v107, %v106
  %v121 = vpack.c.b16 %v109, %v108
  %v122 = vpack.c.b16 %v111, %v110
  %v123 = vpack.c.b16 %v113, %v112
  %v124 = vpack.c.b16 %v115, %v114
  %v125 = vpack.c.b16 %v117, %v116
  %v150 = vunpack.c.l.b16 %v70
  %v151 = vunpack.c.l.b16 %v71
  %v152 = vunpack.c.l.b16 %v72
  %v153 = vunpack.c.l.b16 %v73
  %v154 = vunpack.c.l.b16 %v74
  %v155 = vunpack.c.l.b16 %v75
  %v156 = vunpack.c.l.b16 %v76
  %v157 = vunpack.c.l.b16 %v77
  %v158 = vunpack.c.l.b16 %v78
  %v159 = vunpack.c.l.b16 %v79
  %v160 = vunpack.c.l.b16 %v80
  %v161 = vunpack.c.l.b16 %v81
  %v162 = vunpack.c.l.b16 %v82
  %v163 = vunpack.c.l.b16 %v83
  %v164 = vunpack.c.l.b16 %v84
  %v165 = vunpack.c.l.b16 %v85
  %v166 = vpack.c.b16 %v151, %v150
  %v167 = vpack.c.b16 %v153, %v152
  %v168 = vpack.c.b16 %v155, %v154
  %v169 = vpack.c.b16 %v157, %v156
  %v170 = vpack.c.b16 %v159, %v158
  %v171 = vpack.c.b16 %v161, %v160
  %v172 = vpack.c.b16 %v163, %v162
  %v173 = vpack.c.b16 %v165, %v164
  %182 = vmatprep.subr.bf16.mxu0 0
  %183 = vmatpush1.bf16.msra.mxu0 %v166
  %184 = vmatprep.subr.bf16.mxu0 0
  %185 = vmatpush1.bf16.msra.mxu0 %v167
  %186 = vmatprep.subr.bf16.mxu0 0
  %187 = vmatpush1.bf16.msra.mxu0 %v168
  %188 = vmatprep.subr.bf16.mxu0 0
  %189 = vmatpush1.bf16.msra.mxu0 %v169
  %190 = vmatprep.subr.bf16.mxu0 0
  %191 = vmatpush1.bf16.msra.mxu0 %v170
  %192 = vmatprep.subr.bf16.mxu0 0
  %193 = vmatpush1.bf16.msra.mxu0 %v171
  %194 = vmatprep.subr.bf16.mxu0 0
  %195 = vmatpush1.bf16.msra.mxu0 %v172
  %196 = vmatprep.subr.bf16.mxu0 0
  %197 = vmatpush1.bf16.msra.mxu0 %v173
  %198 = vmatprep.subr.bf16.mxu0 0
  %199 = vmatpush1.bf16.msra.mxu0 0
  %200 = vmatprep.subr.bf16.mxu0 0
  %201 = vmatpush1.bf16.msra.mxu0 0
  %202 = vmatprep.subr.bf16.mxu0 0
  %203 = vmatpush1.bf16.msra.mxu0 0
  %204 = vmatprep.subr.bf16.mxu0 0
  %205 = vmatpush1.bf16.msra.mxu0 0
  %206 = vmatprep.subr.bf16.mxu0 0
  %207 = vmatpush1.bf16.msra.mxu0 0
  %208 = vmatprep.subr.bf16.mxu0 0
  %209 = vmatpush1.bf16.msra.mxu0 0
  %210 = vmatprep.subr.bf16.mxu0 0
  %211 = vmatpush1.bf16.msra.mxu0 0
  %212 = vmatprep.subr.bf16.mxu0 0
  %213 = vmatpush1.bf16.msra.mxu0 0
  %214 = vmatprep.mubr.bf16.mxu0 0
  %215 = vmatmul.mubr.bf16.gmra.mrb[0].mxu0 %v118
  %v216 = vpop.f32.mrb[0].mxu0
  %v217 = vadd.f32 0.0, %v216
  %v218 = vpop.f32.mrb[0].mxu0
  %v219 = vpop.f32.mrb[0].mxu0
  %v220 = vadd.f32 0.0, %v219
  %v221 = vpop.f32.mrb[0].mxu0
  %222 = vmatprep.mubr.bf16.mxu0 0
  %223 = vmatmul.mubr.bf16.gmra.mrb[0].mxu0 %v119
  %v224 = vpop.f32.mrb[0].mxu0
  %v225 = vadd.f32 0.0, %v224
  %v226 = vpop.f32.mrb[0].mxu0
  %v227 = vpop.f32.mrb[0].mxu0
  %v228 = vadd.f32 0.0, %v227
  %v229 = vpop.f32.mrb[0].mxu0
  %230 = vmatprep.mubr.bf16.mxu0 0
  %231 = vmatmul.mubr.bf16.gmra.mrb[0].mxu0 %v120
  %v232 = vpop.f32.mrb[0].mxu0
  %v233 = vadd.f32 0.0, %v232
  %v234 = vpop.f32.mrb[0].mxu0
  %v235 = vpop.f32.mrb[0].mxu0
  %v236 = vadd.f32 0.0, %v235
  %v237 = vpop.f32.mrb[0].mxu0
  %238 = vmatprep.mubr.bf16.mxu0 0
  %239 = vmatmul.mubr.bf16.gmra.mrb[0].mxu0 %v121
  %v240 = vpop.f32.mrb[0].mxu0
  %v241 = vadd.f32 0.0, %v240
  %v242 = vpop.f32.mrb[0].mxu0
  %v243 = vpop.f32.mrb[0].mxu0
  %v244 = vadd.f32 0.0, %v243
  %v245 = vpop.f32.mrb[0].mxu0
  %246 = vmatprep.mubr.bf16.mxu0 0
  %247 = vmatmul.mubr.bf16.gmra.mrb[0].mxu0 %v122
  %v248 = vpop.f32.mrb[0].mxu0
  %v249 = vadd.f32 0.0, %v248
  %v250 = vpop.f32.mrb[0].mxu0
  %v251 = vpop.f32.mrb[0].mxu0
  %v252 = vadd.f32 0.0, %v251
  %v253 = vpop.f32.mrb[0].mxu0
  %254 = vmatprep.mubr.bf16.mxu0 0
  %255 = vmatmul.mubr.bf16.gmra.mrb[0].mxu0 %v123
  %v256 = vpop.f32.mrb[0].mxu0
  %v257 = vadd.f32 0.0, %v256
  %v258 = vpop.f32.mrb[0].mxu0
  %v259 = vpop.f32.mrb[0].mxu0
  %v260 = vadd.f32 0.0, %v259
  %v261 = vpop.f32.mrb[0].mxu0
  %262 = vmatprep.mubr.bf16.mxu0 0
  %263 = vmatmul.mubr.bf16.gmra.mrb[0].mxu0 %v124
  %v264 = vpop.f32.mrb[0].mxu0
  %v265 = vadd.f32 0.0, %v264
  %v266 = vpop.f32.mrb[0].mxu0
  %v267 = vpop.f32.mrb[0].mxu0
  %v268 = vadd.f32 0.0, %v267
  %v269 = vpop.f32.mrb[0].mxu0
  %270 = vmatprep.mubr.bf16.mxu0 0
  %271 = vmatmul.mubr.bf16.gmra.mrb[0].mxu0 %v125
  %v272 = vpop.f32.mrb[0].mxu0
  %v273 = vadd.f32 0.0, %v272
  %v274 = vpop.f32.mrb[0].mxu0
  %v275 = vpop.f32.mrb[0].mxu0
  %v276 = vadd.f32 0.0, %v275
  %v277 = vpop.f32.mrb[0].mxu0
  %278 = vdwg.mxu0
  %v279 = vadd.f32 %v38, %v217
  %v280 = vadd.f32 %v39, %v220
  %v281 = vadd.f32 %v40, %v225
  %v282 = vadd.f32 %v41, %v228
  %v283 = vadd.f32 %v42, %v233
  %v284 = vadd.f32 %v43, %v236
  %v285 = vadd.f32 %v44, %v241
  %v286 = vadd.f32 %v45, %v244
  %v287 = vadd.f32 %v46, %v249
  %v288 = vadd.f32 %v47, %v252
  %v289 = vadd.f32 %v48, %v257
  %v290 = vadd.f32 %v49, %v260
  %v291 = vadd.f32 %v50, %v265
  %v292 = vadd.f32 %v51, %v268
  %v293 = vadd.f32 %v52, %v273
  %v294 = vadd.f32 %v53, %v276
  %295 = vst [vmem:[#allocation2] sm:$0xff] %v279
  %296 = vst [vmem:[#allocation2 + $0x8] sm:$0xff] %v280
  %297 = vst [vmem:[#allocation2 + $0x10] sm:$0xff] %v281
  %298 = vst [vmem:[#allocation2 + $0x18] sm:$0xff] %v282
  %299 = vst [vmem:[#allocation2 + $0x20] sm:$0xff] %v283
  %300 = vst [vmem:[#allocation2 + $0x28] sm:$0xff] %v284
  %301 = vst [vmem:[#allocation2 + $0x30] sm:$0xff] %v285
  %302 = vst [vmem:[#allocation2 + $0x38] sm:$0xff] %v286
  %303 = vst [vmem:[#allocation2 + $0x40] sm:$0xff] %v287
  %304 = vst [vmem:[#allocation2 + $0x48] sm:$0xff] %v288
  %305 = vst [vmem:[#allocation2 + $0x50] sm:$0xff] %v289
  %306 = vst [vmem:[#allocation2 + $0x58] sm:$0xff] %v290
  %307 = vst [vmem:[#allocation2 + $0x60] sm:$0xff] %v291
  %308 = vst [vmem:[#allocation2 + $0x68] sm:$0xff] %v292
  %309 = vst [vmem:[#allocation2 + $0x70] sm:$0xff] %v293
  %310 = vst [vmem:[#allocation2 + $0x78] sm:$0xff] %v294
  // Predicated region
  $region22: #{psenet_forward.37} parent=0 // pred_check
    %p311 = pneg %p18
  $region23: #{psenet_forward.37} parent=0 // pred_check_branch
    %313 = sbr.rel (%p311) target = $region25
  $region24: #{psenet_forward.37} parent=0 // pred_region
    %v314 = vld [vmem:[#allocation2] sm:$0xff]
    %v315 = vld [vmem:[#allocation2 + $0x8] sm:$0xff]
    %v316 = vld [vmem:[#allocation2 + $0x10] sm:$0xff]
    %v317 = vld [vmem:[#allocation2 + $0x18] sm:$0xff]
    %v318 = vld [vmem:[#allocation2 + $0x20] sm:$0xff]
    %v319 = vld [vmem:[#allocation2 + $0x28] sm:$0xff]
    %v320 = vld [vmem:[#allocation2 + $0x30] sm:$0xff]
    %v321 = vld [vmem:[#allocation2 + $0x38] sm:$0xff]
    %v322 = vld [vmem:[#allocation2 + $0x40] sm:$0xff]
    %v323 = vld [vmem:[#allocation2 + $0x48] sm:$0xff]
    %v324 = vld [vmem:[#allocation2 + $0x50] sm:$0xff]
    %v325 = vld [vmem:[#allocation2 + $0x58] sm:$0xff]
    %v326 = vld [vmem:[#allocation2 + $0x60] sm:$0xff]
    %v327 = vld [vmem:[#allocation2 + $0x68] sm:$0xff]
    %v328 = vld [vmem:[#allocation2 + $0x70] sm:$0xff]
    %v329 = vld [vmem:[#allocation2 + $0x78] sm:$0xff]
    %v330 = vld [vmem:[%s2] sm:$0x1]
    %v332 = vlaneseq
    %v333 = vshrl.u32 %v332, 7
    %v334 = vsub.s32 0, %v333
    %v335 = vrot.slane %v330, %v334
    %v337 = vadd.f32 %v314, %v335
    %v338 = vadd.f32 %v315, %v335
    %v339 = vadd.f32 %v316, %v335
    %v340 = vadd.f32 %v317, %v335
    %v341 = vadd.f32 %v318, %v335
    %v342 = vadd.f32 %v319, %v335
    %v343 = vadd.f32 %v320, %v335
    %v344 = vadd.f32 %v321, %v335
    %v345 = vadd.f32 %v322, %v335
    %v346 = vadd.f32 %v323, %v335
    %v347 = vadd.f32 %v324, %v335
    %v348 = vadd.f32 %v325, %v335
    %v349 = vadd.f32 %v326, %v335
    %v350 = vadd.f32 %v327, %v335
    %v351 = vadd.f32 %v328, %v335
    %v352 = vadd.f32 %v329, %v335
    %v353 = vld [vmem:[%s3] sm:$0xf]
    %v354 = vld [vmem:[%s3 + $0x4] sm:$0xf]
    %v355 = vld [vmem:[%s3 + $0x8] sm:$0xf]
    %v356 = vld [vmem:[%s3 + $0xc] sm:$0xf]
    %v357 = vld [vmem:[%s3 + $0x10] sm:$0xf]
    %v358 = vld [vmem:[%s3 + $0x14] sm:$0xf]
    %v359 = vld [vmem:[%s3 + $0x18] sm:$0xf]
    %v360 = vld [vmem:[%s3 + $0x1c] sm:$0xf]
    %v361 = vld [vmem:[%s3 + $0x20] sm:$0xf]
    %v362 = vld [vmem:[%s3 + $0x24] sm:$0xf]
    %v363 = vld [vmem:[%s3 + $0x28] sm:$0xf]
    %v364 = vld [vmem:[%s3 + $0x2c] sm:$0xf]
    %v365 = vld [vmem:[%s3 + $0x30] sm:$0xf]
    %v366 = vld [vmem:[%s3 + $0x34] sm:$0xf]
    %v367 = vld [vmem:[%s3 + $0x38] sm:$0xf]
    %v368 = vld [vmem:[%s3 + $0x3c] sm:$0xf]
    %v369 = vunpack.c.l.bf16 %v353
    %v370 = vunpack.c.l.bf16 %v354
    %v371 = vunpack.c.l.bf16 %v355
    %v372 = vunpack.c.l.bf16 %v356
    %v373 = vunpack.c.l.bf16 %v357
    %v374 = vunpack.c.l.bf16 %v358
    %v375 = vunpack.c.l.bf16 %v359
    %v376 = vunpack.c.l.bf16 %v360
    %v377 = vunpack.c.l.bf16 %v361
    %v378 = vunpack.c.l.bf16 %v362
    %v379 = vunpack.c.l.bf16 %v363
    %v380 = vunpack.c.l.bf16 %v364
    %v381 = vunpack.c.l.bf16 %v365
    %v382 = vunpack.c.l.bf16 %v366
    %v383 = vunpack.c.l.bf16 %v367
    %v384 = vunpack.c.l.bf16 %v368
    %v385 = vadd.f32 %v337, %v369
    %v386 = vadd.f32 %v338, %v370
    %v387 = vadd.f32 %v339, %v371
    %v388 = vadd.f32 %v340, %v372
    %v389 = vadd.f32 %v341, %v373
    %v390 = vadd.f32 %v342, %v374
    %v391 = vadd.f32 %v343, %v375
    %v392 = vadd.f32 %v344, %v376
    %v393 = vadd.f32 %v345, %v377
    %v394 = vadd.f32 %v346, %v378
    %v395 = vadd.f32 %v347, %v379
    %v396 = vadd.f32 %v348, %v380
    %v397 = vadd.f32 %v349, %v381
    %v398 = vadd.f32 %v350, %v382
    %v399 = vadd.f32 %v351, %v383
    %v400 = vadd.f32 %v352, %v384
    %v401 = vpack.c.bf16 %v386, %v385
    %v402 = vpack.c.bf16 %v388, %v387
    %v403 = vpack.c.bf16 %v390, %v389
    %v404 = vpack.c.bf16 %v392, %v391
    %v405 = vpack.c.bf16 %v394, %v393
    %v406 = vpack.c.bf16 %v396, %v395
    %v407 = vpack.c.bf16 %v398, %v397
    %v408 = vpack.c.bf16 %v400, %v399
    %v417 = vunpack.c.l.b16 %v401
    %v418 = vunpack.c.h.b16 %v401
    %v419 = vunpack.c.l.b16 %v402
    %v420 = vunpack.c.h.b16 %v402
    %v421 = vunpack.c.l.b16 %v403
    %v422 = vunpack.c.h.b16 %v403
    %v423 = vunpack.c.l.b16 %v404
    %v424 = vunpack.c.h.b16 %v404
    %v425 = vunpack.c.l.b16 %v405
    %v426 = vunpack.c.h.b16 %v405
    %v427 = vunpack.c.l.b16 %v406
    %v428 = vunpack.c.h.b16 %v406
    %v429 = vunpack.c.l.b16 %v407
    %v430 = vunpack.c.h.b16 %v407
    %v431 = vunpack.c.l.b16 %v408
    %v432 = vunpack.c.h.b16 %v408
    %v433 = vpack.c.b16 %v417, %v417
    %v434 = vpack.c.b16 %v418, %v418
    %v435 = vpack.c.b16 %v419, %v419
    %v436 = vpack.c.b16 %v420, %v420
    %v437 = vpack.c.b16 %v421, %v421
    %v438 = vpack.c.b16 %v422, %v422
    %v439 = vpack.c.b16 %v423, %v423
    %v440 = vpack.c.b16 %v424, %v424
    %v441 = vpack.c.b16 %v425, %v425
    %v442 = vpack.c.b16 %v426, %v426
    %v443 = vpack.c.b16 %v427, %v427
    %v444 = vpack.c.b16 %v428, %v428
    %v445 = vpack.c.b16 %v429, %v429
    %v446 = vpack.c.b16 %v430, %v430
    %v447 = vpack.c.b16 %v431, %v431
    %v448 = vpack.c.b16 %v432, %v432
    %465 = vst [vmem:[%s4] sm:$0xf] %v433
    %466 = vst [vmem:[%s4 + $0x4] sm:$0xf] %v434
    %467 = vst [vmem:[%s4 + $0x8] sm:$0xf] %v435
    %468 = vst [vmem:[%s4 + $0xc] sm:$0xf] %v436
    %469 = vst [vmem:[%s4 + $0x10] sm:$0xf] %v437
    %470 = vst [vmem:[%s4 + $0x14] sm:$0xf] %v438
    %471 = vst [vmem:[%s4 + $0x18] sm:$0xf] %v439
    %472 = vst [vmem:[%s4 + $0x1c] sm:$0xf] %v440
    %473 = vst [vmem:[%s4 + $0x20] sm:$0xf] %v441
    %474 = vst [vmem:[%s4 + $0x24] sm:$0xf] %v442
    %475 = vst [vmem:[%s4 + $0x28] sm:$0xf] %v443
    %476 = vst [vmem:[%s4 + $0x2c] sm:$0xf] %v444
    %477 = vst [vmem:[%s4 + $0x30] sm:$0xf] %v445
    %478 = vst [vmem:[%s4 + $0x34] sm:$0xf] %v446
    %479 = vst [vmem:[%s4 + $0x38] sm:$0xf] %v447
    %480 = vst [vmem:[%s4 + $0x3c] sm:$0xf] %v448
  $region25: #{psenet_forward.37} parent=0 // pred_fallthru
    _
  // Predicated region
  $region26: #{psenet_forward.37} parent=0 // pred_check
    _
  $region27: #{psenet_forward.37} parent=0 // pred_check_branch
    %482 = sbr.rel (0) target = $region29
  $region28: #{psenet_forward.37} parent=0 // pred_region
    _
  $region29: #{psenet_forward.37} parent=0 // pred_fallthru
    _
  // Predicated region
  $region30: #{psenet_forward.37} parent=0 // pred_check
    _
  $region31: #{psenet_forward.37} parent=0 // pred_check_branch
    %484 = sbr.rel (0) target = $region33
  $region32: #{psenet_forward.37} parent=0 // pred_region
    _
  $region33: #{psenet_forward.37} parent=0 // pred_fallthru
    _

// kernel: psenet_forward.39
$region0: #{psenet_forward.39}
  #allocation0 [shape = 'u32[]', space=smem, size = 0x4, offset = 0x4, fixed_abs, tag = 'smem constant byte address 0x4 - core index']
  #allocation1 [shape = 'u32[144,128]{1,0:T(1,128)}', space=vmem, size = 0x12000, scoped, tag = 'internal scratch']
  %s0 = inlined_call_operand.vmem [shape: f32[8,2], index: 0, kind: input, shape index: {}]
  %s1 = inlined_call_operand.vmem [shape: bf16[16,2,128], index: 1, kind: input, shape index: {}]
  %s2 = inlined_call_operand.vmem [shape: bf16[16,8,128], index: 2, kind: output, shape index: {}]
  %s3 = sld [smem:[#allocation0]]
  $region41: #{psenet_forward.39} parent=0
    _
  %s5 = ssub.s32 1, %s3
  %s6 = scalar_select 0, %s5, %s3
  loop: start=0, step=1, limit=18
  $region2: #{psenet_forward.39} parent=0 // loop_pre_header
    _
  $region3: #{psenet_forward.39} parent=0 // loop_header
    %s8 = sphi 0, %s12
    %p9 = scmp.ge.s32.totalorder %s8, 18
    %s15 = sphi 0, %s34
    %s16 = sphi 0, %s30
    %s17 = sphi 0, %s26
    %s18 = sphi 0, %s15
    %s19 = sphi 0, %s16
    %s20 = sphi 0, %s17
    %s21 = sphi 0, %s18
    %s22 = sphi 0, %s19
    %s23 = sphi 0, %s20
    %s37 = sphi 0, %s39
    %s40 = sphi 0, %s37
    %s41 = sphi 0, %s40
    %s57 = sphi 0, %s41
    %s65 = sphi 0, %s67
    %s68 = sphi 0, %s65
    %s69 = sphi 0, %s68
    %s85 = sphi 0, %s69
    %s95 = sphi 0, %s97
    %s98 = sphi 0, %s95
    %s99 = sphi 0, %s98
    %s115 = sphi 0, %s99
  $region4: #{psenet_forward.39} parent=0 // loop_header_branch
    %11 = sbr.rel (%p9) target = $region8
  $region5: #{psenet_forward.39} parent=0 // loop_body
    %s13 = ssub.s32 %s8, 1
    %s14 = ssub.s32 %s8, 2
    %s24 = sadd.s32 1, %s17
    %p25 = scmp.ge.s32.totalorder %s24, 1
    %s26 = scalar_select %p25, 0, %s24
    %s27 = sadd.s32 1, %s16
    %s28 = scalar_select %p25, %s27, %s16
    %p29 = scmp.ge.s32.totalorder %s28, 1
    %s30 = scalar_select %p29, 0, %s28
    %s31 = sadd.s32 1, %s15
    %s32 = scalar_select %p29, %s31, %s15
    %p33 = scmp.ge.s32.totalorder %s32, 16
    %s34 = scalar_select %p33, 0, %s32
    %s35 = ssub.s32 %s16, %s30
    %p36 = scmp.eq.s32.totalorder %s35, 0
    %s38 = sadd.s32 %s37, 1
    %s39 = scalar_select %p36, %s37, %s38
    %p42 = pneg %p36
    %p43 = scmp.eq.s32.totalorder %s8, 15
    %p44 = por %p42, %p43
    %p45 = scmp.ne.s32.totalorder %s37, %s40
    %p46 = scmp.eq.s32.totalorder %s8, 0
    %p47 = por %p45, %p46
    %p48 = scmp.ne.s32.totalorder %s37, %s40
    %p49 = scmp.eq.s32.totalorder %s13, 15
    %p50 = por %p48, %p49
    %p51 = scmp.ne.s32.totalorder %s40, %s41
    %p52 = scmp.eq.s32.totalorder %s13, 0
    %p53 = por %p51, %p52
    %p54 = scmp.ne.s32.totalorder %s40, %s41
    %p55 = scmp.eq.s32.totalorder %s14, 15
    %p56 = por %p54, %p55
    %p58 = scmp.ne.s32.totalorder %s41, %s57
    %p59 = scmp.eq.s32.totalorder %s14, 0
    %p60 = por %p58, %p59
    %s61 = ssub.s32 %s15, %s34
    %s62 = ssub.s32 %s17, %s26
    %s63 = sor.u32 %s61, %s62
    %p64 = scmp.eq.s32.totalorder %s63, 0
    %s66 = sadd.s32 %s65, 1
    %s67 = scalar_select %p64, %s65, %s66
    %p70 = pneg %p64
    %p71 = scmp.eq.s32.totalorder %s8, 15
    %p72 = por %p70, %p71
    %p73 = scmp.ne.s32.totalorder %s65, %s68
    %p74 = scmp.eq.s32.totalorder %s8, 0
    %p75 = por %p73, %p74
    %p76 = scmp.ne.s32.totalorder %s65, %s68
    %p77 = scmp.eq.s32.totalorder %s13, 15
    %p78 = por %p76, %p77
    %p79 = scmp.ne.s32.totalorder %s68, %s69
    %p80 = scmp.eq.s32.totalorder %s13, 0
    %p81 = por %p79, %p80
    %p82 = scmp.ne.s32.totalorder %s68, %s69
    %p83 = scmp.eq.s32.totalorder %s14, 15
    %p84 = por %p82, %p83
    %p86 = scmp.ne.s32.totalorder %s69, %s85
    %p87 = scmp.eq.s32.totalorder %s14, 0
    %p88 = por %p86, %p87
    %s89 = ssub.s32 %s15, %s34
    %s90 = ssub.s32 %s16, %s30
    %s91 = sor.u32 %s89, %s90
    %s92 = ssub.s32 %s17, %s26
    %s93 = sor.u32 %s91, %s92
    %p94 = scmp.eq.s32.totalorder %s93, 0
    %s96 = sadd.s32 %s95, 1
    %s97 = scalar_select %p94, %s95, %s96
    %p100 = pneg %p94
    %p101 = scmp.eq.s32.totalorder %s8, 15
    %p102 = por %p100, %p101
    %p103 = scmp.ne.s32.totalorder %s95, %s98
    %p104 = scmp.eq.s32.totalorder %s8, 0
    %p105 = por %p103, %p104
    %p106 = scmp.ne.s32.totalorder %s95, %s98
    %p107 = scmp.eq.s32.totalorder %s13, 15
    %p108 = por %p106, %p107
    %p109 = scmp.ne.s32.totalorder %s98, %s99
    %p110 = scmp.eq.s32.totalorder %s13, 0
    %p111 = por %p109, %p110
    %p112 = scmp.ne.s32.totalorder %s98, %s99
    %p113 = scmp.eq.s32.totalorder %s14, 15
    %p114 = por %p112, %p113
    %p116 = scmp.ne.s32.totalorder %s99, %s115
    %p117 = scmp.eq.s32.totalorder %s14, 0
    %p118 = por %p116, %p117
    %p119 = scmp.le.s32.totalorder 1, %s8
    %p120 = scmp.lt.s32.totalorder %s8, 17
    %p121 = pnand %p119, %p120
    %p122 = pneg %p121
    // Predicated region
    $region9: #{psenet_forward.39} parent=5 // pred_check
      _
    $region10: #{psenet_forward.39} parent=5 // pred_check_branch
      %124 = sbr.rel (%p121) target = $region12
    $region11: #{psenet_forward.39} parent=5 // pred_region
      %s125 = ssub.s32 %s8, 1
      // Predicated region
      $region13: #{psenet_forward.39} parent=11 // pred_check
        %p126 = pneg %p53
      $region14: #{psenet_forward.39} parent=11 // pred_check_branch
        %128 = sbr.rel (%p126) target = $region16
      $region15: #{psenet_forward.39} parent=11 // pred_region
        %p129 = scmp.lt.s32.totalorder %s19, 0
        %s130 = scalar_select %p129, %s19, 0
        %s131 = smul.addr %s130, 8
        %s132 = scalar_lea.vmem %s0, %s131
      $region16: #{psenet_forward.39} parent=11 // pred_fallthru
        _
    $region12: #{psenet_forward.39} parent=5 // pred_fallthru
      _
    %p133 = scmp.lt.s32.totalorder %s8, 16
    // Predicated region
    $region17: #{psenet_forward.39} parent=5 // pred_check
      %p134 = pneg %p133
    $region18: #{psenet_forward.39} parent=5 // pred_check_branch
      %136 = sbr.rel (%p134) target = $region20
    $region19: #{psenet_forward.39} parent=5 // pred_region
      // Predicated region
      $region21: #{psenet_forward.39} parent=19 // pred_check
        %p137 = pneg %p75
      $region22: #{psenet_forward.39} parent=19 // pred_check_branch
        %139 = sbr.rel (%p137) target = $region24
      $region23: #{psenet_forward.39} parent=19 // pred_region
        %p140 = scmp.lt.s32.totalorder %s15, 15
        %s141 = scalar_select %p140, %s15, 15
        %p142 = scmp.lt.s32.totalorder %s17, 0
        %s143 = scalar_select %p142, %s17, 0
        %s144 = sadd.s32 %s143, %s141
        %s145 = scalar_lea.vmem %s1, %s144
      $region24: #{psenet_forward.39} parent=19 // pred_fallthru
        _
    $region20: #{psenet_forward.39} parent=5 // pred_fallthru
      _
    %p146 = scmp.le.s32.totalorder 1, %s8
    %p147 = scmp.lt.s32.totalorder %s8, 17
    %p148 = pnand %p146, %p147
    %p149 = pneg %p148
    // Predicated region
    $region25: #{psenet_forward.39} parent=5 // pred_check
      _
    $region26: #{psenet_forward.39} parent=5 // pred_check_branch
      %151 = sbr.rel (%p148) target = $region28
    $region27: #{psenet_forward.39} parent=5 // pred_region
      %s152 = ssub.s32 %s8, 1
      %p153 = scmp.lt.s32.totalorder %s19, 0
      %s154 = scalar_select %p153, %s19, 0
      %s155 = smul.addr %s154, 8
      %s156 = scalar_lea.vmem %s0, %s155
      %p157 = pneg %p53
      %p158 = pneg %p50
      %p159 = scmp.lt.s32.totalorder %s18, 15
      %s160 = scalar_select %p159, %s18, 15
      %p161 = scmp.lt.s32.totalorder %s20, 0
      %s162 = scalar_select %p161, %s20, 0
      %s163 = sadd.s32 %s162, %s160
      %s164 = scalar_lea.vmem %s1, %s163
      %p165 = pneg %p81
      %p166 = pneg %p78
      %p167 = pneg %p111
      %p168 = pneg %p108
      %p169 = scmp.lt.s32.totalorder %s18, 15
      %s170 = scalar_select %p169, %s18, 15
      %p171 = scmp.lt.s32.totalorder %s19, 0
      %s172 = scalar_select %p171, %s19, 0
      %p173 = scmp.lt.s32.totalorder %s20, 0
      %s174 = scalar_select %p173, %s20, 0
      %s175 = sadd.s32 %s174, %s172
      %s176 = sadd.s32 %s175, %s170
      %s177 = smul.addr %s176, 4
      %s178 = scalar_lea.vmem %s2, %s177
      %p179 = scmp.lt.s32.totalorder %s19, 0
      %s180 = scalar_select %p179, %s19, 0
      %s181 = smul.addr %s180, 8
      %s182 = scalar_lea.vmem %s0, %s181
      %p183 = scmp.lt.s32.totalorder %s18, 15
      %s184 = scalar_select %p183, %s18, 15
      %p185 = scmp.lt.s32.totalorder %s20, 0
      %s186 = scalar_select %p185, %s20, 0
      %s187 = sadd.s32 %s186, %s184
      %s188 = scalar_lea.vmem %s1, %s187
      %p189 = scmp.lt.s32.totalorder %s18, 15
      %s190 = scalar_select %p189, %s18, 15
      %p191 = scmp.lt.s32.totalorder %s19, 0
      %s192 = scalar_select %p191, %s19, 0
      %p193 = scmp.lt.s32.totalorder %s20, 0
      %s194 = scalar_select %p193, %s20, 0
      %s195 = sadd.s32 %s194, %s192
      %s196 = sadd.s32 %s195, %s190
      %s197 = smul.addr %s196, 4
      %s198 = scalar_lea.vmem %s2, %s197
      %v199 = vld [vmem:[%s182] sm:$0xff]
      %v200 = vld [vmem:[%s188] sm:$0x1]
      %v201 = vunpack.c.l.bf16 %v200
      %vm202 = vcmask 15360
      %v204 = vsel %vm202, %v199, 0
      %vm206 = vcmask 1041408
      %v208 = vsel %vm206, %v201, 0
      %210 = vmatprep.subr.mxu0 0.0
      %211 = vmatpush1.msra.mxu0 %v208
      %212 = vmatprep.subr.mxu0 0.0
      %213 = vmatpush1.msra.mxu0 0.0
      %214 = vmatprep.subr.mxu0 0.0
      %215 = vmatpush1.msra.mxu0 0.0
      %216 = vmatprep.subr.mxu0 0.0
      %217 = vmatpush1.msra.mxu0 0.0
      %218 = vmatprep.subr.mxu0 0.0
      %219 = vmatpush1.msra.mxu0 0.0
      %220 = vmatprep.subr.mxu0 0.0
      %221 = vmatpush1.msra.mxu0 0.0
      %222 = vmatprep.subr.mxu0 0.0
      %223 = vmatpush1.msra.mxu0 0.0
      %224 = vmatprep.subr.mxu0 0.0
      %225 = vmatpush1.msra.mxu0 0.0
      %226 = vmatprep.subr.mxu0 0.0
      %227 = vmatpush1.msra.mxu0 0.0
      %228 = vmatprep.subr.mxu0 0.0
      %229 = vmatpush1.msra.mxu0 0.0
      %230 = vmatprep.subr.mxu0 0.0
      %231 = vmatpush1.msra.mxu0 0.0
      %232 = vmatprep.subr.mxu0 0.0
      %233 = vmatpush1.msra.mxu0 0.0
      %234 = vmatprep.subr.mxu0 0.0
      %235 = vmatpush1.msra.mxu0 0.0
      %236 = vmatprep.subr.mxu0 0.0
      %237 = vmatpush1.msra.mxu0 0.0
      %238 = vmatprep.subr.mxu0 0.0
      %239 = vmatpush1.msra.mxu0 0.0
      %240 = vmatprep.subr.mxu0 0.0
      %241 = vmatpush1.msra.mxu0 0.0
      %242 = vmatprep.subr.mxu0 0.0
      %243 = vmatpush1.msra.mxu0 0.0
      %244 = vmatprep.subr.mxu0 0.0
      %245 = vmatpush1.msra.mxu0 0.0
      %246 = vmatprep.subr.mxu0 0.0
      %247 = vmatpush1.msra.mxu0 0.0
      %248 = vmatprep.subr.mxu0 0.0
      %249 = vmatpush1.msra.mxu0 0.0
      %250 = vmatprep.subr.mxu0 0.0
      %251 = vmatpush1.msra.mxu0 0.0
      %252 = vmatprep.subr.mxu0 0.0
      %253 = vmatpush1.msra.mxu0 0.0
      %254 = vmatprep.subr.mxu0 0.0
      %255 = vmatpush1.msra.mxu0 0.0
      %256 = vmatprep.subr.mxu0 0.0
      %257 = vmatpush1.msra.mxu0 0.0
      %258 = vmatprep.subr.mxu0 0.0
      %259 = vmatpush1.msra.mxu0 0.0
      %260 = vmatprep.subr.mxu0 0.0
      %261 = vmatpush1.msra.mxu0 0.0
      %262 = vmatprep.subr.mxu0 0.0
      %263 = vmatpush1.msra.mxu0 0.0
      %264 = vmatprep.subr.mxu0 0.0
      %265 = vmatpush1.msra.mxu0 0.0
      %266 = vmatprep.subr.mxu0 0.0
      %267 = vmatpush1.msra.mxu0 0.0
      %268 = vmatprep.subr.mxu0 0.0
      %269 = vmatpush1.msra.mxu0 0.0
      %270 = vmatprep.subr.mxu0 0.0
      %271 = vmatpush1.msra.mxu0 0.0
      %272 = vmatprep.subr.mxu0 0.0
      %273 = vmatpush1.msra.mxu0 0.0
      %274 = vmatprep.mubr.f32.mxu0 0.0
      %275 = vmatmul.mubr.f32.gmra.mrb[0].mxu0 %v204
      %v276 = vpop.f32.mrb[0].mxu0
      %v277 = vadd.f32 0.0, %v276
      %v278 = vpop.f32.mrb[0].mxu0
      %279 = vdwg.mxu0
      %v280 = vpack.c.bf16 %v277, %v277
      %281 = vst [vmem:[%s198] sm:$0xf] %v280
      %p282 = scmp.lt.s32.totalorder %s18, 15
      %s283 = scalar_select %p282, %s18, 15
      %p284 = scmp.lt.s32.totalorder %s19, 0
      %s285 = scalar_select %p284, %s19, 0
      %p286 = scmp.lt.s32.totalorder %s20, 0
      %s287 = scalar_select %p286, %s20, 0
      %s288 = sadd.s32 %s287, %s285
      %s289 = sadd.s32 %s288, %s283
      %s290 = smul.addr %s289, 4
      %s291 = scalar_lea.vmem %s2, %s290
      // Predicated region
      $region29: #{psenet_forward.39} parent=27 // pred_check
        %p292 = pneg %p108
      $region30: #{psenet_forward.39} parent=27 // pred_check_branch
        %294 = sbr.rel (%p292) target = $region32
      $region31: #{psenet_forward.39} parent=27 // pred_region
        _
      $region32: #{psenet_forward.39} parent=27 // pred_fallthru
        _
    $region28: #{psenet_forward.39} parent=5 // pred_fallthru
      _
    %p295 = scmp.le.s32.totalorder 2, %s8
    // Predicated region
    $region33: #{psenet_forward.39} parent=5 // pred_check
      %p296 = pneg %p295
    $region34: #{psenet_forward.39} parent=5 // pred_check_branch
      %298 = sbr.rel (%p296) target = $region36
    $region35: #{psenet_forward.39} parent=5 // pred_region
      %s299 = ssub.s32 %s8, 2
      // Predicated region
      $region37: #{psenet_forward.39} parent=35 // pred_check
        %p300 = pneg %p114
      $region38: #{psenet_forward.39} parent=35 // pred_check_branch
        %302 = sbr.rel (%p300) target = $region40
      $region39: #{psenet_forward.39} parent=35 // pred_region
        %p303 = scmp.lt.s32.totalorder %s21, 15
        %s304 = scalar_select %p303, %s21, 15
        %p305 = scmp.lt.s32.totalorder %s22, 0
        %s306 = scalar_select %p305, %s22, 0
        %p307 = scmp.lt.s32.totalorder %s23, 0
        %s308 = scalar_select %p307, %s23, 0
        %s309 = sadd.s32 %s308, %s306
        %s310 = sadd.s32 %s309, %s304
        %s311 = smul.addr %s310, 4
        %s312 = scalar_lea.vmem %s2, %s311
      $region40: #{psenet_forward.39} parent=35 // pred_fallthru
        _
    $region36: #{psenet_forward.39} parent=5 // pred_fallthru
      _
  $region6: #{psenet_forward.39} parent=0 // loop_footer
    %s12 = sadd.s32 1, %s8
  $region7: #{psenet_forward.39} parent=0 // loop_footer_branch
    %7 = sbr.rel target = $region3
  $region8: #{psenet_forward.39} parent=0 // loop_exit
    _

// kernel: psenet_forward.41
$region0: #{psenet_forward.41}
  #allocation0 [shape = 'u32[]', space=smem, size = 0x4, offset = 0x4, fixed_abs, tag = 'smem constant byte address 0x4 - core index']
  #allocation1 [shape = 'u32[144,128]{1,0:T(1,128)}', space=vmem, size = 0x12000, scoped, tag = 'internal scratch']
  %s0 = inlined_call_operand.vmem [shape: f32[8,1], index: 0, kind: input, shape index: {}]
  %s1 = inlined_call_operand.vmem [shape: bf16[16,1,128], index: 1, kind: input, shape index: {}]
  %s2 = inlined_call_operand.vmem [shape: bf16[16,8,128], index: 2, kind: output, shape index: {}]
  %s3 = sld [smem:[#allocation0]]
  $region41: #{psenet_forward.41} parent=0
    _
  %s5 = ssub.s32 1, %s3
  %s6 = scalar_select 0, %s5, %s3
  loop: start=0, step=1, limit=18
  $region2: #{psenet_forward.41} parent=0 // loop_pre_header
    _
  $region3: #{psenet_forward.41} parent=0 // loop_header
    %s8 = sphi 0, %s12
    %p9 = scmp.ge.s32.totalorder %s8, 18
    %s15 = sphi 0, %s34
    %s16 = sphi 0, %s30
    %s17 = sphi 0, %s26
    %s18 = sphi 0, %s15
    %s19 = sphi 0, %s16
    %s20 = sphi 0, %s17
    %s21 = sphi 0, %s18
    %s22 = sphi 0, %s19
    %s23 = sphi 0, %s20
    %s37 = sphi 0, %s39
    %s40 = sphi 0, %s37
    %s41 = sphi 0, %s40
    %s57 = sphi 0, %s41
    %s65 = sphi 0, %s67
    %s68 = sphi 0, %s65
    %s69 = sphi 0, %s68
    %s85 = sphi 0, %s69
    %s95 = sphi 0, %s97
    %s98 = sphi 0, %s95
    %s99 = sphi 0, %s98
    %s115 = sphi 0, %s99
  $region4: #{psenet_forward.41} parent=0 // loop_header_branch
    %11 = sbr.rel (%p9) target = $region8
  $region5: #{psenet_forward.41} parent=0 // loop_body
    %s13 = ssub.s32 %s8, 1
    %s14 = ssub.s32 %s8, 2
    %s24 = sadd.s32 1, %s17
    %p25 = scmp.ge.s32.totalorder %s24, 1
    %s26 = scalar_select %p25, 0, %s24
    %s27 = sadd.s32 1, %s16
    %s28 = scalar_select %p25, %s27, %s16
    %p29 = scmp.ge.s32.totalorder %s28, 1
    %s30 = scalar_select %p29, 0, %s28
    %s31 = sadd.s32 1, %s15
    %s32 = scalar_select %p29, %s31, %s15
    %p33 = scmp.ge.s32.totalorder %s32, 16
    %s34 = scalar_select %p33, 0, %s32
    %s35 = ssub.s32 %s16, %s30
    %p36 = scmp.eq.s32.totalorder %s35, 0
    %s38 = sadd.s32 %s37, 1
    %s39 = scalar_select %p36, %s37, %s38
    %p42 = pneg %p36
    %p43 = scmp.eq.s32.totalorder %s8, 15
    %p44 = por %p42, %p43
    %p45 = scmp.ne.s32.totalorder %s37, %s40
    %p46 = scmp.eq.s32.totalorder %s8, 0
    %p47 = por %p45, %p46
    %p48 = scmp.ne.s32.totalorder %s37, %s40
    %p49 = scmp.eq.s32.totalorder %s13, 15
    %p50 = por %p48, %p49
    %p51 = scmp.ne.s32.totalorder %s40, %s41
    %p52 = scmp.eq.s32.totalorder %s13, 0
    %p53 = por %p51, %p52
    %p54 = scmp.ne.s32.totalorder %s40, %s41
    %p55 = scmp.eq.s32.totalorder %s14, 15
    %p56 = por %p54, %p55
    %p58 = scmp.ne.s32.totalorder %s41, %s57
    %p59 = scmp.eq.s32.totalorder %s14, 0
    %p60 = por %p58, %p59
    %s61 = ssub.s32 %s15, %s34
    %s62 = ssub.s32 %s17, %s26
    %s63 = sor.u32 %s61, %s62
    %p64 = scmp.eq.s32.totalorder %s63, 0
    %s66 = sadd.s32 %s65, 1
    %s67 = scalar_select %p64, %s65, %s66
    %p70 = pneg %p64
    %p71 = scmp.eq.s32.totalorder %s8, 15
    %p72 = por %p70, %p71
    %p73 = scmp.ne.s32.totalorder %s65, %s68
    %p74 = scmp.eq.s32.totalorder %s8, 0
    %p75 = por %p73, %p74
    %p76 = scmp.ne.s32.totalorder %s65, %s68
    %p77 = scmp.eq.s32.totalorder %s13, 15
    %p78 = por %p76, %p77
    %p79 = scmp.ne.s32.totalorder %s68, %s69
    %p80 = scmp.eq.s32.totalorder %s13, 0
    %p81 = por %p79, %p80
    %p82 = scmp.ne.s32.totalorder %s68, %s69
    %p83 = scmp.eq.s32.totalorder %s14, 15
    %p84 = por %p82, %p83
    %p86 = scmp.ne.s32.totalorder %s69, %s85
    %p87 = scmp.eq.s32.totalorder %s14, 0
    %p88 = por %p86, %p87
    %s89 = ssub.s32 %s15, %s34
    %s90 = ssub.s32 %s16, %s30
    %s91 = sor.u32 %s89, %s90
    %s92 = ssub.s32 %s17, %s26
    %s93 = sor.u32 %s91, %s92
    %p94 = scmp.eq.s32.totalorder %s93, 0
    %s96 = sadd.s32 %s95, 1
    %s97 = scalar_select %p94, %s95, %s96
    %p100 = pneg %p94
    %p101 = scmp.eq.s32.totalorder %s8, 15
    %p102 = por %p100, %p101
    %p103 = scmp.ne.s32.totalorder %s95, %s98
    %p104 = scmp.eq.s32.totalorder %s8, 0
    %p105 = por %p103, %p104
    %p106 = scmp.ne.s32.totalorder %s95, %s98
    %p107 = scmp.eq.s32.totalorder %s13, 15
    %p108 = por %p106, %p107
    %p109 = scmp.ne.s32.totalorder %s98, %s99
    %p110 = scmp.eq.s32.totalorder %s13, 0
    %p111 = por %p109, %p110
    %p112 = scmp.ne.s32.totalorder %s98, %s99
    %p113 = scmp.eq.s32.totalorder %s14, 15
    %p114 = por %p112, %p113
    %p116 = scmp.ne.s32.totalorder %s99, %s115
    %p117 = scmp.eq.s32.totalorder %s14, 0
    %p118 = por %p116, %p117
    %p119 = scmp.le.s32.totalorder 1, %s8
    %p120 = scmp.lt.s32.totalorder %s8, 17
    %p121 = pnand %p119, %p120
    %p122 = pneg %p121
    // Predicated region
    $region9: #{psenet_forward.41} parent=5 // pred_check
      _
    $region10: #{psenet_forward.41} parent=5 // pred_check_branch
      %124 = sbr.rel (%p121) target = $region12
    $region11: #{psenet_forward.41} parent=5 // pred_region
      %s125 = ssub.s32 %s8, 1
      // Predicated region
      $region13: #{psenet_forward.41} parent=11 // pred_check
        %p126 = pneg %p53
      $region14: #{psenet_forward.41} parent=11 // pred_check_branch
        %128 = sbr.rel (%p126) target = $region16
      $region15: #{psenet_forward.41} parent=11 // pred_region
        %p129 = scmp.lt.s32.totalorder %s19, 0
        %s130 = scalar_select %p129, %s19, 0
        %s131 = smul.addr %s130, 8
        %s132 = scalar_lea.vmem %s0, %s131
      $region16: #{psenet_forward.41} parent=11 // pred_fallthru
        _
    $region12: #{psenet_forward.41} parent=5 // pred_fallthru
      _
    %p133 = scmp.lt.s32.totalorder %s8, 16
    // Predicated region
    $region17: #{psenet_forward.41} parent=5 // pred_check
      %p134 = pneg %p133
    $region18: #{psenet_forward.41} parent=5 // pred_check_branch
      %136 = sbr.rel (%p134) target = $region20
    $region19: #{psenet_forward.41} parent=5 // pred_region
      // Predicated region
      $region21: #{psenet_forward.41} parent=19 // pred_check
        %p137 = pneg %p75
      $region22: #{psenet_forward.41} parent=19 // pred_check_branch
        %139 = sbr.rel (%p137) target = $region24
      $region23: #{psenet_forward.41} parent=19 // pred_region
        %p140 = scmp.lt.s32.totalorder %s15, 15
        %s141 = scalar_select %p140, %s15, 15
        %p142 = scmp.lt.s32.totalorder %s17, 0
        %s143 = scalar_select %p142, %s17, 0
        %s144 = sadd.s32 %s143, %s141
        %s145 = scalar_lea.vmem %s1, %s144
      $region24: #{psenet_forward.41} parent=19 // pred_fallthru
        _
    $region20: #{psenet_forward.41} parent=5 // pred_fallthru
      _
    %p146 = scmp.le.s32.totalorder 1, %s8
    %p147 = scmp.lt.s32.totalorder %s8, 17
    %p148 = pnand %p146, %p147
    %p149 = pneg %p148
    // Predicated region
    $region25: #{psenet_forward.41} parent=5 // pred_check
      _
    $region26: #{psenet_forward.41} parent=5 // pred_check_branch
      %151 = sbr.rel (%p148) target = $region28
    $region27: #{psenet_forward.41} parent=5 // pred_region
      %s152 = ssub.s32 %s8, 1
      %p153 = scmp.lt.s32.totalorder %s19, 0
      %s154 = scalar_select %p153, %s19, 0
      %s155 = smul.addr %s154, 8
      %s156 = scalar_lea.vmem %s0, %s155
      %p157 = pneg %p53
      %p158 = pneg %p50
      %p159 = scmp.lt.s32.totalorder %s18, 15
      %s160 = scalar_select %p159, %s18, 15
      %p161 = scmp.lt.s32.totalorder %s20, 0
      %s162 = scalar_select %p161, %s20, 0
      %s163 = sadd.s32 %s162, %s160
      %s164 = scalar_lea.vmem %s1, %s163
      %p165 = pneg %p81
      %p166 = pneg %p78
      %p167 = pneg %p111
      %p168 = pneg %p108
      %p169 = scmp.lt.s32.totalorder %s18, 15
      %s170 = scalar_select %p169, %s18, 15
      %p171 = scmp.lt.s32.totalorder %s19, 0
      %s172 = scalar_select %p171, %s19, 0
      %p173 = scmp.lt.s32.totalorder %s20, 0
      %s174 = scalar_select %p173, %s20, 0
      %s175 = sadd.s32 %s174, %s172
      %s176 = sadd.s32 %s175, %s170
      %s177 = smul.addr %s176, 4
      %s178 = scalar_lea.vmem %s2, %s177
      %p179 = scmp.lt.s32.totalorder %s19, 0
      %s180 = scalar_select %p179, %s19, 0
      %s181 = smul.addr %s180, 8
      %s182 = scalar_lea.vmem %s0, %s181
      %p183 = scmp.lt.s32.totalorder %s18, 15
      %s184 = scalar_select %p183, %s18, 15
      %p185 = scmp.lt.s32.totalorder %s20, 0
      %s186 = scalar_select %p185, %s20, 0
      %s187 = sadd.s32 %s186, %s184
      %s188 = scalar_lea.vmem %s1, %s187
      %p189 = scmp.lt.s32.totalorder %s18, 15
      %s190 = scalar_select %p189, %s18, 15
      %p191 = scmp.lt.s32.totalorder %s19, 0
      %s192 = scalar_select %p191, %s19, 0
      %p193 = scmp.lt.s32.totalorder %s20, 0
      %s194 = scalar_select %p193, %s20, 0
      %s195 = sadd.s32 %s194, %s192
      %s196 = sadd.s32 %s195, %s190
      %s197 = smul.addr %s196, 4
      %s198 = scalar_lea.vmem %s2, %s197
      %v199 = vld [vmem:[%s182] sm:$0xff]
      %v200 = vld [vmem:[%s188] sm:$0x1]
      %v201 = vunpack.c.l.bf16 %v200
      %vm202 = vcmask 7168
      %v204 = vsel %vm202, %v199, 0
      %vm206 = vcmask 1040384
      %v208 = vsel %vm206, %v201, 0
      %210 = vmatprep.subr.mxu0 0.0
      %211 = vmatpush1.msra.mxu0 %v208
      %212 = vmatprep.subr.mxu0 0.0
      %213 = vmatpush1.msra.mxu0 0.0
      %214 = vmatprep.subr.mxu0 0.0
      %215 = vmatpush1.msra.mxu0 0.0
      %216 = vmatprep.subr.mxu0 0.0
      %217 = vmatpush1.msra.mxu0 0.0
      %218 = vmatprep.subr.mxu0 0.0
      %219 = vmatpush1.msra.mxu0 0.0
      %220 = vmatprep.subr.mxu0 0.0
      %221 = vmatpush1.msra.mxu0 0.0
      %222 = vmatprep.subr.mxu0 0.0
      %223 = vmatpush1.msra.mxu0 0.0
      %224 = vmatprep.subr.mxu0 0.0
      %225 = vmatpush1.msra.mxu0 0.0
      %226 = vmatprep.subr.mxu0 0.0
      %227 = vmatpush1.msra.mxu0 0.0
      %228 = vmatprep.subr.mxu0 0.0
      %229 = vmatpush1.msra.mxu0 0.0
      %230 = vmatprep.subr.mxu0 0.0
      %231 = vmatpush1.msra.mxu0 0.0
      %232 = vmatprep.subr.mxu0 0.0
      %233 = vmatpush1.msra.mxu0 0.0
      %234 = vmatprep.subr.mxu0 0.0
      %235 = vmatpush1.msra.mxu0 0.0
      %236 = vmatprep.subr.mxu0 0.0
      %237 = vmatpush1.msra.mxu0 0.0
      %238 = vmatprep.subr.mxu0 0.0
      %239 = vmatpush1.msra.mxu0 0.0
      %240 = vmatprep.subr.mxu0 0.0
      %241 = vmatpush1.msra.mxu0 0.0
      %242 = vmatprep.subr.mxu0 0.0
      %243 = vmatpush1.msra.mxu0 0.0
      %244 = vmatprep.subr.mxu0 0.0
      %245 = vmatpush1.msra.mxu0 0.0
      %246 = vmatprep.subr.mxu0 0.0
      %247 = vmatpush1.msra.mxu0 0.0
      %248 = vmatprep.subr.mxu0 0.0
      %249 = vmatpush1.msra.mxu0 0.0
      %250 = vmatprep.subr.mxu0 0.0
      %251 = vmatpush1.msra.mxu0 0.0
      %252 = vmatprep.subr.mxu0 0.0
      %253 = vmatpush1.msra.mxu0 0.0
      %254 = vmatprep.subr.mxu0 0.0
      %255 = vmatpush1.msra.mxu0 0.0
      %256 = vmatprep.subr.mxu0 0.0
      %257 = vmatpush1.msra.mxu0 0.0
      %258 = vmatprep.subr.mxu0 0.0
      %259 = vmatpush1.msra.mxu0 0.0
      %260 = vmatprep.subr.mxu0 0.0
      %261 = vmatpush1.msra.mxu0 0.0
      %262 = vmatprep.subr.mxu0 0.0
      %263 = vmatpush1.msra.mxu0 0.0
      %264 = vmatprep.subr.mxu0 0.0
      %265 = vmatpush1.msra.mxu0 0.0
      %266 = vmatprep.subr.mxu0 0.0
      %267 = vmatpush1.msra.mxu0 0.0
      %268 = vmatprep.subr.mxu0 0.0
      %269 = vmatpush1.msra.mxu0 0.0
      %270 = vmatprep.subr.mxu0 0.0
      %271 = vmatpush1.msra.mxu0 0.0
      %272 = vmatprep.subr.mxu0 0.0
      %273 = vmatpush1.msra.mxu0 0.0
      %274 = vmatprep.mubr.f32.mxu0 0.0
      %275 = vmatmul.mubr.f32.gmra.mrb[0].mxu0 %v204
      %v276 = vpop.f32.mrb[0].mxu0
      %v277 = vadd.f32 0.0, %v276
      %v278 = vpop.f32.mrb[0].mxu0
      %279 = vdwg.mxu0
      %v280 = vpack.c.bf16 %v277, %v277
      %281 = vst [vmem:[%s198] sm:$0xf] %v280
      %p282 = scmp.lt.s32.totalorder %s18, 15
      %s283 = scalar_select %p282, %s18, 15
      %p284 = scmp.lt.s32.totalorder %s19, 0
      %s285 = scalar_select %p284, %s19, 0
      %p286 = scmp.lt.s32.totalorder %s20, 0
      %s287 = scalar_select %p286, %s20, 0
      %s288 = sadd.s32 %s287, %s285
      %s289 = sadd.s32 %s288, %s283
      %s290 = smul.addr %s289, 4
      %s291 = scalar_lea.vmem %s2, %s290
      // Predicated region
      $region29: #{psenet_forward.41} parent=27 // pred_check
        %p292 = pneg %p108
      $region30: #{psenet_forward.41} parent=27 // pred_check_branch
        %294 = sbr.rel (%p292) target = $region32
      $region31: #{psenet_forward.41} parent=27 // pred_region
        _
      $region32: #{psenet_forward.41} parent=27 // pred_fallthru
        _
    $region28: #{psenet_forward.41} parent=5 // pred_fallthru
      _
    %p295 = scmp.le.s32.totalorder 2, %s8
    // Predicated region
    $region33: #{psenet_forward.41} parent=5 // pred_check
      %p296 = pneg %p295
    $region34: #{psenet_forward.41} parent=5 // pred_check_branch
      %298 = sbr.rel (%p296) target = $region36
    $region35: #{psenet_forward.41} parent=5 // pred_region
      %s299 = ssub.s32 %s8, 2
      // Predicated region
      $region37: #{psenet_forward.41} parent=35 // pred_check
        %p300 = pneg %p114
      $region38: #{psenet_forward.41} parent=35 // pred_check_branch
        %302 = sbr.rel (%p300) target = $region40
      $region39: #{psenet_forward.41} parent=35 // pred_region
        %p303 = scmp.lt.s32.totalorder %s21, 15
        %s304 = scalar_select %p303, %s21, 15
        %p305 = scmp.lt.s32.totalorder %s22, 0
        %s306 = scalar_select %p305, %s22, 0
        %p307 = scmp.lt.s32.totalorder %s23, 0
        %s308 = scalar_select %p307, %s23, 0
        %s309 = sadd.s32 %s308, %s306
        %s310 = sadd.s32 %s309, %s304
        %s311 = smul.addr %s310, 4
        %s312 = scalar_lea.vmem %s2, %s311
      $region40: #{psenet_forward.41} parent=35 // pred_fallthru
        _
    $region36: #{psenet_forward.41} parent=5 // pred_fallthru
      _
  $region6: #{psenet_forward.41} parent=0 // loop_footer
    %s12 = sadd.s32 1, %s8
  $region7: #{psenet_forward.41} parent=0 // loop_footer_branch
    %7 = sbr.rel target = $region3
  $region8: #{psenet_forward.41} parent=0 // loop_exit
    _

// kernel: psenet_forward.44
$region0: #{psenet_forward.44}
  #allocation0 [shape = 'u32[]', space=smem, size = 0x4, offset = 0x4, fixed_abs, tag = 'smem constant byte address 0x4 - core index']
  #allocation1 [shape = 'u32[144,128]{1,0:T(1,128)}', space=vmem, size = 0x12000, scoped, tag = 'internal scratch']
  %s0 = inlined_call_operand.vmem [shape: f32[32,8], index: 0, kind: input, shape index: {}]
  %s1 = inlined_call_operand.vmem [shape: f32[2,8,128], index: 1, kind: input, shape index: {}]
  %s2 = inlined_call_operand.vmem [shape: f32[2,32,128], index: 2, kind: output, shape index: {}]
  %s3 = sld [smem:[#allocation0]]
  $region41: #{psenet_forward.44} parent=0
    _
  %s5 = ssub.s32 1, %s3
  %s6 = scalar_select 0, %s5, %s3
  loop: start=0, step=1, limit=4
  $region2: #{psenet_forward.44} parent=0 // loop_pre_header
    _
  $region3: #{psenet_forward.44} parent=0 // loop_header
    %s8 = sphi 0, %s12
    %p9 = scmp.ge.s32.totalorder %s8, 4
    %s15 = sphi 0, %s34
    %s16 = sphi 0, %s30
    %s17 = sphi 0, %s26
    %s18 = sphi 0, %s15
    %s19 = sphi 0, %s16
    %s20 = sphi 0, %s17
    %s21 = sphi 0, %s18
    %s22 = sphi 0, %s19
    %s23 = sphi 0, %s20
    %s37 = sphi 0, %s39
    %s40 = sphi 0, %s37
    %s41 = sphi 0, %s40
    %s57 = sphi 0, %s41
    %s65 = sphi 0, %s67
    %s68 = sphi 0, %s65
    %s69 = sphi 0, %s68
    %s85 = sphi 0, %s69
    %s95 = sphi 0, %s97
    %s98 = sphi 0, %s95
    %s99 = sphi 0, %s98
    %s115 = sphi 0, %s99
  $region4: #{psenet_forward.44} parent=0 // loop_header_branch
    %11 = sbr.rel (%p9) target = $region8
  $region5: #{psenet_forward.44} parent=0 // loop_body
    %s13 = ssub.s32 %s8, 1
    %s14 = ssub.s32 %s8, 2
    %s24 = sadd.s32 1, %s17
    %p25 = scmp.ge.s32.totalorder %s24, 1
    %s26 = scalar_select %p25, 0, %s24
    %s27 = sadd.s32 1, %s16
    %s28 = scalar_select %p25, %s27, %s16
    %p29 = scmp.ge.s32.totalorder %s28, 1
    %s30 = scalar_select %p29, 0, %s28
    %s31 = sadd.s32 1, %s15
    %s32 = scalar_select %p29, %s31, %s15
    %p33 = scmp.ge.s32.totalorder %s32, 2
    %s34 = scalar_select %p33, 0, %s32
    %s35 = ssub.s32 %s16, %s30
    %p36 = scmp.eq.s32.totalorder %s35, 0
    %s38 = sadd.s32 %s37, 1
    %s39 = scalar_select %p36, %s37, %s38
    %p42 = pneg %p36
    %p43 = scmp.eq.s32.totalorder %s8, 1
    %p44 = por %p42, %p43
    %p45 = scmp.ne.s32.totalorder %s37, %s40
    %p46 = scmp.eq.s32.totalorder %s8, 0
    %p47 = por %p45, %p46
    %p48 = scmp.ne.s32.totalorder %s37, %s40
    %p49 = scmp.eq.s32.totalorder %s13, 1
    %p50 = por %p48, %p49
    %p51 = scmp.ne.s32.totalorder %s40, %s41
    %p52 = scmp.eq.s32.totalorder %s13, 0
    %p53 = por %p51, %p52
    %p54 = scmp.ne.s32.totalorder %s40, %s41
    %p55 = scmp.eq.s32.totalorder %s14, 1
    %p56 = por %p54, %p55
    %p58 = scmp.ne.s32.totalorder %s41, %s57
    %p59 = scmp.eq.s32.totalorder %s14, 0
    %p60 = por %p58, %p59
    %s61 = ssub.s32 %s15, %s34
    %s62 = ssub.s32 %s17, %s26
    %s63 = sor.u32 %s61, %s62
    %p64 = scmp.eq.s32.totalorder %s63, 0
    %s66 = sadd.s32 %s65, 1
    %s67 = scalar_select %p64, %s65, %s66
    %p70 = pneg %p64
    %p71 = scmp.eq.s32.totalorder %s8, 1
    %p72 = por %p70, %p71
    %p73 = scmp.ne.s32.totalorder %s65, %s68
    %p74 = scmp.eq.s32.totalorder %s8, 0
    %p75 = por %p73, %p74
    %p76 = scmp.ne.s32.totalorder %s65, %s68
    %p77 = scmp.eq.s32.totalorder %s13, 1
    %p78 = por %p76, %p77
    %p79 = scmp.ne.s32.totalorder %s68, %s69
    %p80 = scmp.eq.s32.totalorder %s13, 0
    %p81 = por %p79, %p80
    %p82 = scmp.ne.s32.totalorder %s68, %s69
    %p83 = scmp.eq.s32.totalorder %s14, 1
    %p84 = por %p82, %p83
    %p86 = scmp.ne.s32.totalorder %s69, %s85
    %p87 = scmp.eq.s32.totalorder %s14, 0
    %p88 = por %p86, %p87
    %s89 = ssub.s32 %s15, %s34
    %s90 = ssub.s32 %s16, %s30
    %s91 = sor.u32 %s89, %s90
    %s92 = ssub.s32 %s17, %s26
    %s93 = sor.u32 %s91, %s92
    %p94 = scmp.eq.s32.totalorder %s93, 0
    %s96 = sadd.s32 %s95, 1
    %s97 = scalar_select %p94, %s95, %s96
    %p100 = pneg %p94
    %p101 = scmp.eq.s32.totalorder %s8, 1
    %p102 = por %p100, %p101
    %p103 = scmp.ne.s32.totalorder %s95, %s98
    %p104 = scmp.eq.s32.totalorder %s8, 0
    %p105 = por %p103, %p104
    %p106 = scmp.ne.s32.totalorder %s95, %s98
    %p107 = scmp.eq.s32.totalorder %s13, 1
    %p108 = por %p106, %p107
    %p109 = scmp.ne.s32.totalorder %s98, %s99
    %p110 = scmp.eq.s32.totalorder %s13, 0
    %p111 = por %p109, %p110
    %p112 = scmp.ne.s32.totalorder %s98, %s99
    %p113 = scmp.eq.s32.totalorder %s14, 1
    %p114 = por %p112, %p113
    %p116 = scmp.ne.s32.totalorder %s99, %s115
    %p117 = scmp.eq.s32.totalorder %s14, 0
    %p118 = por %p116, %p117
    %p119 = scmp.le.s32.totalorder 1, %s8
    %p120 = scmp.lt.s32.totalorder %s8, 3
    %p121 = pnand %p119, %p120
    %p122 = pneg %p121
    // Predicated region
    $region9: #{psenet_forward.44} parent=5 // pred_check
      _
    $region10: #{psenet_forward.44} parent=5 // pred_check_branch
      %124 = sbr.rel (%p121) target = $region12
    $region11: #{psenet_forward.44} parent=5 // pred_region
      %s125 = ssub.s32 %s8, 1
      // Predicated region
      $region13: #{psenet_forward.44} parent=11 // pred_check
        %p126 = pneg %p53
      $region14: #{psenet_forward.44} parent=11 // pred_check_branch
        %128 = sbr.rel (%p126) target = $region16
      $region15: #{psenet_forward.44} parent=11 // pred_region
        %s129 = smul.u32 4, %s19
        %p130 = scmp.lt.s32.totalorder %s129, 3
        %s131 = scalar_select %p130, %s129, 3
        %s132 = smul.addr %s131, 8
        %s133 = scalar_lea.vmem %s0, %s132
        %s134 = smul.u32 4, %s19
      $region16: #{psenet_forward.44} parent=11 // pred_fallthru
        _
    $region12: #{psenet_forward.44} parent=5 // pred_fallthru
      _
    %p135 = scmp.lt.s32.totalorder %s8, 2
    // Predicated region
    $region17: #{psenet_forward.44} parent=5 // pred_check
      %p136 = pneg %p135
    $region18: #{psenet_forward.44} parent=5 // pred_check_branch
      %138 = sbr.rel (%p136) target = $region20
    $region19: #{psenet_forward.44} parent=5 // pred_region
      // Predicated region
      $region21: #{psenet_forward.44} parent=19 // pred_check
        %p139 = pneg %p75
      $region22: #{psenet_forward.44} parent=19 // pred_check_branch
        %141 = sbr.rel (%p139) target = $region24
      $region23: #{psenet_forward.44} parent=19 // pred_region
        %p142 = scmp.lt.s32.totalorder %s15, 1
        %s143 = scalar_select %p142, %s15, 1
        %p144 = scmp.lt.s32.totalorder %s17, 0
        %s145 = scalar_select %p144, %s17, 0
        %s146 = sadd.s32 %s145, %s143
        %s147 = smul.addr %s146, 8
        %s148 = scalar_lea.vmem %s1, %s147
      $region24: #{psenet_forward.44} parent=19 // pred_fallthru
        _
    $region20: #{psenet_forward.44} parent=5 // pred_fallthru
      _
    %p149 = scmp.le.s32.totalorder 1, %s8
    %p150 = scmp.lt.s32.totalorder %s8, 3
    %p151 = pnand %p149, %p150
    %p152 = pneg %p151
    // Predicated region
    $region25: #{psenet_forward.44} parent=5 // pred_check
      _
    $region26: #{psenet_forward.44} parent=5 // pred_check_branch
      %154 = sbr.rel (%p151) target = $region28
    $region27: #{psenet_forward.44} parent=5 // pred_region
      %s155 = ssub.s32 %s8, 1
      %s156 = smul.u32 4, %s19
      %p157 = scmp.lt.s32.totalorder %s156, 3
      %s158 = scalar_select %p157, %s156, 3
      %s159 = smul.addr %s158, 8
      %s160 = scalar_lea.vmem %s0, %s159
      %p161 = pneg %p53
      %p162 = pneg %p50
      %p163 = scmp.lt.s32.totalorder %s18, 1
      %s164 = scalar_select %p163, %s18, 1
      %p165 = scmp.lt.s32.totalorder %s20, 0
      %s166 = scalar_select %p165, %s20, 0
      %s167 = sadd.s32 %s166, %s164
      %s168 = smul.addr %s167, 8
      %s169 = scalar_lea.vmem %s1, %s168
      %p170 = pneg %p81
      %p171 = pneg %p78
      %p172 = pneg %p111
      %p173 = pneg %p108
      %s174 = smul.u32 4, %s19
      %p175 = scmp.lt.s32.totalorder %s18, 1
      %s176 = scalar_select %p175, %s18, 1
      %p177 = scmp.lt.s32.totalorder %s174, 3
      %s178 = scalar_select %p177, %s174, 3
      %p179 = scmp.lt.s32.totalorder %s20, 0
      %s180 = scalar_select %p179, %s20, 0
      %s181 = sadd.s32 %s180, %s178
      %s182 = smul.addr %s176, 4
      %s183 = sadd.s32 %s181, %s182
      %s184 = smul.addr %s183, 8
      %s185 = scalar_lea.vmem %s2, %s184
      %s186 = smul.u32 4, %s19
      %p187 = scmp.lt.s32.totalorder %s186, 3
      %s188 = scalar_select %p187, %s186, 3
      %s189 = smul.addr %s188, 8
      %s190 = scalar_lea.vmem %s0, %s189
      %s191 = smul.u32 4, %s19
      %p192 = scmp.lt.s32.totalorder %s18, 1
      %s193 = scalar_select %p192, %s18, 1
      %p194 = scmp.lt.s32.totalorder %s20, 0
      %s195 = scalar_select %p194, %s20, 0
      %s196 = sadd.s32 %s195, %s193
      %s197 = smul.addr %s196, 8
      %s198 = scalar_lea.vmem %s1, %s197
      %s199 = smul.u32 4, %s19
      %p200 = scmp.lt.s32.totalorder %s18, 1
      %s201 = scalar_select %p200, %s18, 1
      %p202 = scmp.lt.s32.totalorder %s199, 3
      %s203 = scalar_select %p202, %s199, 3
      %p204 = scmp.lt.s32.totalorder %s20, 0
      %s205 = scalar_select %p204, %s20, 0
      %s206 = sadd.s32 %s205, %s203
      %s207 = smul.addr %s201, 4
      %s208 = sadd.s32 %s206, %s207
      %s209 = smul.addr %s208, 8
      %s210 = scalar_lea.vmem %s2, %s209
      %s211 = smul.u32 4, %s19
      %v212 = vld [vmem:[%s190] sm:$0xff]
      %v213 = vld [vmem:[%s190 + $0x8] sm:$0xff]
      %v214 = vld [vmem:[%s190 + $0x10] sm:$0xff]
      %v215 = vld [vmem:[%s190 + $0x18] sm:$0xff]
      %v216 = vld [vmem:[%s198] sm:$0xff]
      %vm217 = vcmask 64512
      %v219 = vsel %vm217, %v212, 0
      %v222 = vsel %vm217, %v213, 0
      %v225 = vsel %vm217, %v214, 0
      %v228 = vsel %vm217, %v215, 0
      %230 = vmatprep.subr.mxu0 0.0
      %231 = vmatpush1.msra.mxu0 %v216
      %232 = vmatprep.subr.mxu0 0.0
      %233 = vmatpush1.msra.mxu0 0.0
      %234 = vmatprep.subr.mxu0 0.0
      %235 = vmatpush1.msra.mxu0 0.0
      %236 = vmatprep.subr.mxu0 0.0
      %237 = vmatpush1.msra.mxu0 0.0
      %238 = vmatprep.subr.mxu0 0.0
      %239 = vmatpush1.msra.mxu0 0.0
      %240 = vmatprep.subr.mxu0 0.0
      %241 = vmatpush1.msra.mxu0 0.0
      %242 = vmatprep.subr.mxu0 0.0
      %243 = vmatpush1.msra.mxu0 0.0
      %244 = vmatprep.subr.mxu0 0.0
      %245 = vmatpush1.msra.mxu0 0.0
      %246 = vmatprep.subr.mxu0 0.0
      %247 = vmatpush1.msra.mxu0 0.0
      %248 = vmatprep.subr.mxu0 0.0
      %249 = vmatpush1.msra.mxu0 0.0
      %250 = vmatprep.subr.mxu0 0.0
      %251 = vmatpush1.msra.mxu0 0.0
      %252 = vmatprep.subr.mxu0 0.0
      %253 = vmatpush1.msra.mxu0 0.0
      %254 = vmatprep.subr.mxu0 0.0
      %255 = vmatpush1.msra.mxu0 0.0
      %256 = vmatprep.subr.mxu0 0.0
      %257 = vmatpush1.msra.mxu0 0.0
      %258 = vmatprep.subr.mxu0 0.0
      %259 = vmatpush1.msra.mxu0 0.0
      %260 = vmatprep.subr.mxu0 0.0
      %261 = vmatpush1.msra.mxu0 0.0
      %262 = vmatprep.subr.mxu0 0.0
      %263 = vmatpush1.msra.mxu0 0.0
      %264 = vmatprep.subr.mxu0 0.0
      %265 = vmatpush1.msra.mxu0 0.0
      %266 = vmatprep.subr.mxu0 0.0
      %267 = vmatpush1.msra.mxu0 0.0
      %268 = vmatprep.subr.mxu0 0.0
      %269 = vmatpush1.msra.mxu0 0.0
      %270 = vmatprep.subr.mxu0 0.0
      %271 = vmatpush1.msra.mxu0 0.0
      %272 = vmatprep.subr.mxu0 0.0
      %273 = vmatpush1.msra.mxu0 0.0
      %274 = vmatprep.subr.mxu0 0.0
      %275 = vmatpush1.msra.mxu0 0.0
      %276 = vmatprep.subr.mxu0 0.0
      %277 = vmatpush1.msra.mxu0 0.0
      %278 = vmatprep.subr.mxu0 0.0
      %279 = vmatpush1.msra.mxu0 0.0
      %280 = vmatprep.subr.mxu0 0.0
      %281 = vmatpush1.msra.mxu0 0.0
      %282 = vmatprep.subr.mxu0 0.0
      %283 = vmatpush1.msra.mxu0 0.0
      %284 = vmatprep.subr.mxu0 0.0
      %285 = vmatpush1.msra.mxu0 0.0
      %286 = vmatprep.subr.mxu0 0.0
      %287 = vmatpush1.msra.mxu0 0.0
      %288 = vmatprep.subr.mxu0 0.0
      %289 = vmatpush1.msra.mxu0 0.0
      %290 = vmatprep.subr.mxu0 0.0
      %291 = vmatpush1.msra.mxu0 0.0
      %292 = vmatprep.subr.mxu0 0.0
      %293 = vmatpush1.msra.mxu0 0.0
      %294 = vmatprep.mubr.f32.mxu0 0.0
      %295 = vmatmul.mubr.f32.gmra.mrb[0].mxu0 %v219
      %v296 = vpop.f32.mrb[0].mxu0
      %v297 = vadd.f32 0.0, %v296
      %v298 = vpop.f32.mrb[0].mxu0
      %299 = vmatprep.mubr.f32.mxu0 0.0
      %300 = vmatmul.mubr.f32.gmra.mrb[0].mxu0 %v222
      %v301 = vpop.f32.mrb[0].mxu0
      %v302 = vadd.f32 0.0, %v301
      %v303 = vpop.f32.mrb[0].mxu0
      %304 = vmatprep.mubr.f32.mxu0 0.0
      %305 = vmatmul.mubr.f32.gmra.mrb[0].mxu0 %v225
      %v306 = vpop.f32.mrb[0].mxu0
      %v307 = vadd.f32 0.0, %v306
      %v308 = vpop.f32.mrb[0].mxu0
      %309 = vmatprep.mubr.f32.mxu0 0.0
      %310 = vmatmul.mubr.f32.gmra.mrb[0].mxu0 %v228
      %v311 = vpop.f32.mrb[0].mxu0
      %v312 = vadd.f32 0.0, %v311
      %v313 = vpop.f32.mrb[0].mxu0
      %314 = vdwg.mxu0
      %315 = vst [vmem:[%s210] sm:$0xff] %v297
      %316 = vst [vmem:[%s210 + $0x8] sm:$0xff] %v302
      %317 = vst [vmem:[%s210 + $0x10] sm:$0xff] %v307
      %318 = vst [vmem:[%s210 + $0x18] sm:$0xff] %v312
      %s319 = smul.u32 4, %s19
      %p320 = scmp.lt.s32.totalorder %s18, 1
      %s321 = scalar_select %p320, %s18, 1
      %p322 = scmp.lt.s32.totalorder %s319, 3
      %s323 = scalar_select %p322, %s319, 3
      %p324 = scmp.lt.s32.totalorder %s20, 0
      %s325 = scalar_select %p324, %s20, 0
      %s326 = sadd.s32 %s325, %s323
      %s327 = smul.addr %s321, 4
      %s328 = sadd.s32 %s326, %s327
      %s329 = smul.addr %s328, 8
      %s330 = scalar_lea.vmem %s2, %s329
      // Predicated region
      $region29: #{psenet_forward.44} parent=27 // pred_check
        %p331 = pneg %p108
      $region30: #{psenet_forward.44} parent=27 // pred_check_branch
        %333 = sbr.rel (%p331) target = $region32
      $region31: #{psenet_forward.44} parent=27 // pred_region
        %s334 = smul.u32 4, %s19
      $region32: #{psenet_forward.44} parent=27 // pred_fallthru
        _
    $region28: #{psenet_forward.44} parent=5 // pred_fallthru
      _
    %p335 = scmp.le.s32.totalorder 2, %s8
    // Predicated region
    $region33: #{psenet_forward.44} parent=5 // pred_check
      %p336 = pneg %p335
    $region34: #{psenet_forward.44} parent=5 // pred_check_branch
      %338 = sbr.rel (%p336) target = $region36
    $region35: #{psenet_forward.44} parent=5 // pred_region
      %s339 = ssub.s32 %s8, 2
      // Predicated region
      $region37: #{psenet_forward.44} parent=35 // pred_check
        %p340 = pneg %p114
      $region38: #{psenet_forward.44} parent=35 // pred_check_branch
        %342 = sbr.rel (%p340) target = $region40
      $region39: #{psenet_forward.44} parent=35 // pred_region
        %s343 = smul.u32 4, %s22
        %p344 = scmp.lt.s32.totalorder %s21, 1
        %s345 = scalar_select %p344, %s21, 1
        %p346 = scmp.lt.s32.totalorder %s343, 3
        %s347 = scalar_select %p346, %s343, 3
        %p348 = scmp.lt.s32.totalorder %s23, 0
        %s349 = scalar_select %p348, %s23, 0
        %s350 = sadd.s32 %s349, %s347
        %s351 = smul.addr %s345, 4
        %s352 = sadd.s32 %s350, %s351
        %s353 = smul.addr %s352, 8
        %s354 = scalar_lea.vmem %s2, %s353
      $region40: #{psenet_forward.44} parent=35 // pred_fallthru
        _
    $region36: #{psenet_forward.44} parent=5 // pred_fallthru
      _
  $region6: #{psenet_forward.44} parent=0 // loop_footer
    %s12 = sadd.s32 1, %s8
  $region7: #{psenet_forward.44} parent=0 // loop_footer_branch
    %7 = sbr.rel target = $region3
  $region8: #{psenet_forward.44} parent=0 // loop_exit
    _

// kernel: psenet_forward.43
$region0: #{psenet_forward.43}
  #allocation0 [shape = 'u32[]', space=smem, size = 0x4, offset = 0x4, fixed_abs, tag = 'smem constant byte address 0x4 - core index']
  #allocation1 [shape = 'u32[144,128]{1,0:T(1,128)}', space=vmem, size = 0x12000, scoped, tag = 'internal scratch']
  #allocation2 [shape = 'f32[128,128]{1,0:T(8,128)}', space=vmem, size = 0x10000, scoped, tag = 'scratch operand']
  %s0 = inlined_call_operand.vmem [shape: bf16[128,128], index: 0, kind: input, shape index: {}]
  %s1 = inlined_call_operand.vmem [shape: bf16[128,128], index: 1, kind: input, shape index: {}]
  %s2 = inlined_call_operand.vmem [shape: f32[1,128], index: 2, kind: input, shape index: {}]
  %s3 = inlined_call_operand.vmem [shape: f32[128,128], index: 3, kind: output, shape index: {}]
  %s4 = sld [smem:[#allocation0]]
  $region30: #{psenet_forward.43} parent=0
    _
  %s6 = ssub.s32 1, %s4
  %s7 = scalar_select 0, %s6, %s4
  // Predicated region
  $region2: #{psenet_forward.43} parent=0 // pred_check
    _
  $region3: #{psenet_forward.43} parent=0 // pred_check_branch
    %9 = sbr.rel (0) target = $region5
  $region4: #{psenet_forward.43} parent=0 // pred_region
    _
  $region5: #{psenet_forward.43} parent=0 // pred_fallthru
    _
  // Predicated region
  $region6: #{psenet_forward.43} parent=0 // pred_check
    _
  $region7: #{psenet_forward.43} parent=0 // pred_check_branch
    %11 = sbr.rel (0) target = $region9
  $region8: #{psenet_forward.43} parent=0 // pred_region
    _
  $region9: #{psenet_forward.43} parent=0 // pred_fallthru
    _
  // Predicated region
  $region10: #{psenet_forward.43} parent=0 // pred_check
    _
  $region11: #{psenet_forward.43} parent=0 // pred_check_branch
    %13 = sbr.rel (0) target = $region13
  $region12: #{psenet_forward.43} parent=0 // pred_region
    _
  $region13: #{psenet_forward.43} parent=0 // pred_fallthru
    _
  %p15 = scmp.eq.s32.totalorder 0, 0
  // Predicated region
  $region14: #{psenet_forward.43} parent=0 // pred_check
    %p16 = pneg %p15
  $region15: #{psenet_forward.43} parent=0 // pred_check_branch
    %18 = sbr.rel (%p16) target = $region17
  $region16: #{psenet_forward.43} parent=0 // pred_region
    %19 = vst [vmem:[#allocation2] sm:$0xff] 0.0
    %20 = vst [vmem:[#allocation2 + $0x8] sm:$0xff] 0.0
    %21 = vst [vmem:[#allocation2 + $0x10] sm:$0xff] 0.0
    %22 = vst [vmem:[#allocation2 + $0x18] sm:$0xff] 0.0
    %23 = vst [vmem:[#allocation2 + $0x20] sm:$0xff] 0.0
    %24 = vst [vmem:[#allocation2 + $0x28] sm:$0xff] 0.0
    %25 = vst [vmem:[#allocation2 + $0x30] sm:$0xff] 0.0
    %26 = vst [vmem:[#allocation2 + $0x38] sm:$0xff] 0.0
    %27 = vst [vmem:[#allocation2 + $0x40] sm:$0xff] 0.0
    %28 = vst [vmem:[#allocation2 + $0x48] sm:$0xff] 0.0
    %29 = vst [vmem:[#allocation2 + $0x50] sm:$0xff] 0.0
    %30 = vst [vmem:[#allocation2 + $0x58] sm:$0xff] 0.0
    %31 = vst [vmem:[#allocation2 + $0x60] sm:$0xff] 0.0
    %32 = vst [vmem:[#allocation2 + $0x68] sm:$0xff] 0.0
    %33 = vst [vmem:[#allocation2 + $0x70] sm:$0xff] 0.0
    %34 = vst [vmem:[#allocation2 + $0x78] sm:$0xff] 0.0
  $region17: #{psenet_forward.43} parent=0 // pred_fallthru
    _
  %v35 = vld [vmem:[#allocation2] sm:$0xff]
  %v36 = vld [vmem:[#allocation2 + $0x8] sm:$0xff]
  %v37 = vld [vmem:[#allocation2 + $0x10] sm:$0xff]
  %v38 = vld [vmem:[#allocation2 + $0x18] sm:$0xff]
  %v39 = vld [vmem:[#allocation2 + $0x20] sm:$0xff]
  %v40 = vld [vmem:[#allocation2 + $0x28] sm:$0xff]
  %v41 = vld [vmem:[#allocation2 + $0x30] sm:$0xff]
  %v42 = vld [vmem:[#allocation2 + $0x38] sm:$0xff]
  %v43 = vld [vmem:[#allocation2 + $0x40] sm:$0xff]
  %v44 = vld [vmem:[#allocation2 + $0x48] sm:$0xff]
  %v45 = vld [vmem:[#allocation2 + $0x50] sm:$0xff]
  %v46 = vld [vmem:[#allocation2 + $0x58] sm:$0xff]
  %v47 = vld [vmem:[#allocation2 + $0x60] sm:$0xff]
  %v48 = vld [vmem:[#allocation2 + $0x68] sm:$0xff]
  %v49 = vld [vmem:[#allocation2 + $0x70] sm:$0xff]
  %v50 = vld [vmem:[#allocation2 + $0x78] sm:$0xff]
  %v51 = vld [vmem:[%s0] sm:$0xf]
  %v52 = vld [vmem:[%s0 + $0x4] sm:$0xf]
  %v53 = vld [vmem:[%s0 + $0x8] sm:$0xf]
  %v54 = vld [vmem:[%s0 + $0xc] sm:$0xf]
  %v55 = vld [vmem:[%s0 + $0x10] sm:$0xf]
  %v56 = vld [vmem:[%s0 + $0x14] sm:$0xf]
  %v57 = vld [vmem:[%s0 + $0x18] sm:$0xf]
  %v58 = vld [vmem:[%s0 + $0x1c] sm:$0xf]
  %v59 = vld [vmem:[%s0 + $0x20] sm:$0xf]
  %v60 = vld [vmem:[%s0 + $0x24] sm:$0xf]
  %v61 = vld [vmem:[%s0 + $0x28] sm:$0xf]
  %v62 = vld [vmem:[%s0 + $0x2c] sm:$0xf]
  %v63 = vld [vmem:[%s0 + $0x30] sm:$0xf]
  %v64 = vld [vmem:[%s0 + $0x34] sm:$0xf]
  %v65 = vld [vmem:[%s0 + $0x38] sm:$0xf]
  %v66 = vld [vmem:[%s0 + $0x3c] sm:$0xf]
  %v67 = vld [vmem:[%s1] sm:$0xf]
  %v68 = vld [vmem:[%s1 + $0x4] sm:$0xf]
  %v69 = vld [vmem:[%s1 + $0x8] sm:$0xf]
  %v70 = vld [vmem:[%s1 + $0xc] sm:$0xf]
  %v71 = vld [vmem:[%s1 + $0x10] sm:$0xf]
  %v72 = vld [vmem:[%s1 + $0x14] sm:$0xf]
  %v73 = vld [vmem:[%s1 + $0x18] sm:$0xf]
  %v74 = vld [vmem:[%s1 + $0x1c] sm:$0xf]
  %v75 = vld [vmem:[%s1 + $0x20] sm:$0xf]
  %v76 = vld [vmem:[%s1 + $0x24] sm:$0xf]
  %v77 = vld [vmem:[%s1 + $0x28] sm:$0xf]
  %v78 = vld [vmem:[%s1 + $0x2c] sm:$0xf]
  %v79 = vld [vmem:[%s1 + $0x30] sm:$0xf]
  %v80 = vld [vmem:[%s1 + $0x34] sm:$0xf]
  %v81 = vld [vmem:[%s1 + $0x38] sm:$0xf]
  %v82 = vld [vmem:[%s1 + $0x3c] sm:$0xf]
  %v99 = vunpack.c.l.b16 %v51
  %v100 = vunpack.c.l.b16 %v52
  %v101 = vunpack.c.l.b16 %v53
  %v102 = vunpack.c.l.b16 %v54
  %v103 = vunpack.c.l.b16 %v55
  %v104 = vunpack.c.l.b16 %v56
  %v105 = vunpack.c.l.b16 %v57
  %v106 = vunpack.c.l.b16 %v58
  %v107 = vunpack.c.l.b16 %v59
  %v108 = vunpack.c.l.b16 %v60
  %v109 = vunpack.c.l.b16 %v61
  %v110 = vunpack.c.l.b16 %v62
  %v111 = vunpack.c.l.b16 %v63
  %v112 = vunpack.c.l.b16 %v64
  %v113 = vunpack.c.l.b16 %v65
  %v114 = vunpack.c.l.b16 %v66
  %v115 = vpack.c.b16 %v100, %v99
  %v116 = vpack.c.b16 %v102, %v101
  %v117 = vpack.c.b16 %v104, %v103
  %v118 = vpack.c.b16 %v106, %v105
  %v119 = vpack.c.b16 %v108, %v107
  %v120 = vpack.c.b16 %v110, %v109
  %v121 = vpack.c.b16 %v112, %v111
  %v122 = vpack.c.b16 %v114, %v113
  %v147 = vunpack.c.l.b16 %v67
  %v148 = vunpack.c.l.b16 %v68
  %v149 = vunpack.c.l.b16 %v69
  %v150 = vunpack.c.l.b16 %v70
  %v151 = vunpack.c.l.b16 %v71
  %v152 = vunpack.c.l.b16 %v72
  %v153 = vunpack.c.l.b16 %v73
  %v154 = vunpack.c.l.b16 %v74
  %v155 = vunpack.c.l.b16 %v75
  %v156 = vunpack.c.l.b16 %v76
  %v157 = vunpack.c.l.b16 %v77
  %v158 = vunpack.c.l.b16 %v78
  %v159 = vunpack.c.l.b16 %v79
  %v160 = vunpack.c.l.b16 %v80
  %v161 = vunpack.c.l.b16 %v81
  %v162 = vunpack.c.l.b16 %v82
  %v163 = vpack.c.b16 %v148, %v147
  %v164 = vpack.c.b16 %v150, %v149
  %v165 = vpack.c.b16 %v152, %v151
  %v166 = vpack.c.b16 %v154, %v153
  %v167 = vpack.c.b16 %v156, %v155
  %v168 = vpack.c.b16 %v158, %v157
  %v169 = vpack.c.b16 %v160, %v159
  %v170 = vpack.c.b16 %v162, %v161
  %179 = vmatprep.subr.bf16.mxu0 0
  %180 = vmatpush1.bf16.msra.mxu0 %v163
  %181 = vmatprep.subr.bf16.mxu0 0
  %182 = vmatpush1.bf16.msra.mxu0 %v164
  %183 = vmatprep.subr.bf16.mxu0 0
  %184 = vmatpush1.bf16.msra.mxu0 %v165
  %185 = vmatprep.subr.bf16.mxu0 0
  %186 = vmatpush1.bf16.msra.mxu0 %v166
  %187 = vmatprep.subr.bf16.mxu0 0
  %188 = vmatpush1.bf16.msra.mxu0 %v167
  %189 = vmatprep.subr.bf16.mxu0 0
  %190 = vmatpush1.bf16.msra.mxu0 %v168
  %191 = vmatprep.subr.bf16.mxu0 0
  %192 = vmatpush1.bf16.msra.mxu0 %v169
  %193 = vmatprep.subr.bf16.mxu0 0
  %194 = vmatpush1.bf16.msra.mxu0 %v170
  %195 = vmatprep.subr.bf16.mxu0 0
  %196 = vmatpush1.bf16.msra.mxu0 0
  %197 = vmatprep.subr.bf16.mxu0 0
  %198 = vmatpush1.bf16.msra.mxu0 0
  %199 = vmatprep.subr.bf16.mxu0 0
  %200 = vmatpush1.bf16.msra.mxu0 0
  %201 = vmatprep.subr.bf16.mxu0 0
  %202 = vmatpush1.bf16.msra.mxu0 0
  %203 = vmatprep.subr.bf16.mxu0 0
  %204 = vmatpush1.bf16.msra.mxu0 0
  %205 = vmatprep.subr.bf16.mxu0 0
  %206 = vmatpush1.bf16.msra.mxu0 0
  %207 = vmatprep.subr.bf16.mxu0 0
  %208 = vmatpush1.bf16.msra.mxu0 0
  %209 = vmatprep.subr.bf16.mxu0 0
  %210 = vmatpush1.bf16.msra.mxu0 0
  %211 = vmatprep.mubr.bf16.mxu0 0
  %212 = vmatmul.mubr.bf16.gmra.mrb[0].mxu0 %v115
  %v213 = vpop.f32.mrb[0].mxu0
  %v214 = vadd.f32 0.0, %v213
  %v215 = vpop.f32.mrb[0].mxu0
  %v216 = vpop.f32.mrb[0].mxu0
  %v217 = vadd.f32 0.0, %v216
  %v218 = vpop.f32.mrb[0].mxu0
  %219 = vmatprep.mubr.bf16.mxu0 0
  %220 = vmatmul.mubr.bf16.gmra.mrb[0].mxu0 %v116
  %v221 = vpop.f32.mrb[0].mxu0
  %v222 = vadd.f32 0.0, %v221
  %v223 = vpop.f32.mrb[0].mxu0
  %v224 = vpop.f32.mrb[0].mxu0
  %v225 = vadd.f32 0.0, %v224
  %v226 = vpop.f32.mrb[0].mxu0
  %227 = vmatprep.mubr.bf16.mxu0 0
  %228 = vmatmul.mubr.bf16.gmra.mrb[0].mxu0 %v117
  %v229 = vpop.f32.mrb[0].mxu0
  %v230 = vadd.f32 0.0, %v229
  %v231 = vpop.f32.mrb[0].mxu0
  %v232 = vpop.f32.mrb[0].mxu0
  %v233 = vadd.f32 0.0, %v232
  %v234 = vpop.f32.mrb[0].mxu0
  %235 = vmatprep.mubr.bf16.mxu0 0
  %236 = vmatmul.mubr.bf16.gmra.mrb[0].mxu0 %v118
  %v237 = vpop.f32.mrb[0].mxu0
  %v238 = vadd.f32 0.0, %v237
  %v239 = vpop.f32.mrb[0].mxu0
  %v240 = vpop.f32.mrb[0].mxu0
  %v241 = vadd.f32 0.0, %v240
  %v242 = vpop.f32.mrb[0].mxu0
  %243 = vmatprep.mubr.bf16.mxu0 0
  %244 = vmatmul.mubr.bf16.gmra.mrb[0].mxu0 %v119
  %v245 = vpop.f32.mrb[0].mxu0
  %v246 = vadd.f32 0.0, %v245
  %v247 = vpop.f32.mrb[0].mxu0
  %v248 = vpop.f32.mrb[0].mxu0
  %v249 = vadd.f32 0.0, %v248
  %v250 = vpop.f32.mrb[0].mxu0
  %251 = vmatprep.mubr.bf16.mxu0 0
  %252 = vmatmul.mubr.bf16.gmra.mrb[0].mxu0 %v120
  %v253 = vpop.f32.mrb[0].mxu0
  %v254 = vadd.f32 0.0, %v253
  %v255 = vpop.f32.mrb[0].mxu0
  %v256 = vpop.f32.mrb[0].mxu0
  %v257 = vadd.f32 0.0, %v256
  %v258 = vpop.f32.mrb[0].mxu0
  %259 = vmatprep.mubr.bf16.mxu0 0
  %260 = vmatmul.mubr.bf16.gmra.mrb[0].mxu0 %v121
  %v261 = vpop.f32.mrb[0].mxu0
  %v262 = vadd.f32 0.0, %v261
  %v263 = vpop.f32.mrb[0].mxu0
  %v264 = vpop.f32.mrb[0].mxu0
  %v265 = vadd.f32 0.0, %v264
  %v266 = vpop.f32.mrb[0].mxu0
  %267 = vmatprep.mubr.bf16.mxu0 0
  %268 = vmatmul.mubr.bf16.gmra.mrb[0].mxu0 %v122
  %v269 = vpop.f32.mrb[0].mxu0
  %v270 = vadd.f32 0.0, %v269
  %v271 = vpop.f32.mrb[0].mxu0
  %v272 = vpop.f32.mrb[0].mxu0
  %v273 = vadd.f32 0.0, %v272
  %v274 = vpop.f32.mrb[0].mxu0
  %275 = vdwg.mxu0
  %v276 = vadd.f32 %v35, %v214
  %v277 = vadd.f32 %v36, %v217
  %v278 = vadd.f32 %v37, %v222
  %v279 = vadd.f32 %v38, %v225
  %v280 = vadd.f32 %v39, %v230
  %v281 = vadd.f32 %v40, %v233
  %v282 = vadd.f32 %v41, %v238
  %v283 = vadd.f32 %v42, %v241
  %v284 = vadd.f32 %v43, %v246
  %v285 = vadd.f32 %v44, %v249
  %v286 = vadd.f32 %v45, %v254
  %v287 = vadd.f32 %v46, %v257
  %v288 = vadd.f32 %v47, %v262
  %v289 = vadd.f32 %v48, %v265
  %v290 = vadd.f32 %v49, %v270
  %v291 = vadd.f32 %v50, %v273
  %292 = vst [vmem:[#allocation2] sm:$0xff] %v276
  %293 = vst [vmem:[#allocation2 + $0x8] sm:$0xff] %v277
  %294 = vst [vmem:[#allocation2 + $0x10] sm:$0xff] %v278
  %295 = vst [vmem:[#allocation2 + $0x18] sm:$0xff] %v279
  %296 = vst [vmem:[#allocation2 + $0x20] sm:$0xff] %v280
  %297 = vst [vmem:[#allocation2 + $0x28] sm:$0xff] %v281
  %298 = vst [vmem:[#allocation2 + $0x30] sm:$0xff] %v282
  %299 = vst [vmem:[#allocation2 + $0x38] sm:$0xff] %v283
  %300 = vst [vmem:[#allocation2 + $0x40] sm:$0xff] %v284
  %301 = vst [vmem:[#allocation2 + $0x48] sm:$0xff] %v285
  %302 = vst [vmem:[#allocation2 + $0x50] sm:$0xff] %v286
  %303 = vst [vmem:[#allocation2 + $0x58] sm:$0xff] %v287
  %304 = vst [vmem:[#allocation2 + $0x60] sm:$0xff] %v288
  %305 = vst [vmem:[#allocation2 + $0x68] sm:$0xff] %v289
  %306 = vst [vmem:[#allocation2 + $0x70] sm:$0xff] %v290
  %307 = vst [vmem:[#allocation2 + $0x78] sm:$0xff] %v291
  // Predicated region
  $region18: #{psenet_forward.43} parent=0 // pred_check
    %p308 = pneg %p15
  $region19: #{psenet_forward.43} parent=0 // pred_check_branch
    %310 = sbr.rel (%p308) target = $region21
  $region20: #{psenet_forward.43} parent=0 // pred_region
    %v311 = vld [vmem:[#allocation2] sm:$0xff]
    %v312 = vld [vmem:[#allocation2 + $0x8] sm:$0xff]
    %v313 = vld [vmem:[#allocation2 + $0x10] sm:$0xff]
    %v314 = vld [vmem:[#allocation2 + $0x18] sm:$0xff]
    %v315 = vld [vmem:[#allocation2 + $0x20] sm:$0xff]
    %v316 = vld [vmem:[#allocation2 + $0x28] sm:$0xff]
    %v317 = vld [vmem:[#allocation2 + $0x30] sm:$0xff]
    %v318 = vld [vmem:[#allocation2 + $0x38] sm:$0xff]
    %v319 = vld [vmem:[#allocation2 + $0x40] sm:$0xff]
    %v320 = vld [vmem:[#allocation2 + $0x48] sm:$0xff]
    %v321 = vld [vmem:[#allocation2 + $0x50] sm:$0xff]
    %v322 = vld [vmem:[#allocation2 + $0x58] sm:$0xff]
    %v323 = vld [vmem:[#allocation2 + $0x60] sm:$0xff]
    %v324 = vld [vmem:[#allocation2 + $0x68] sm:$0xff]
    %v325 = vld [vmem:[#allocation2 + $0x70] sm:$0xff]
    %v326 = vld [vmem:[#allocation2 + $0x78] sm:$0xff]
    %v327 = vld [vmem:[%s2] sm:$0x1]
    %v329 = vlaneseq
    %v330 = vshrl.u32 %v329, 7
    %v331 = vsub.s32 0, %v330
    %v332 = vrot.slane %v327, %v331
    %v334 = vadd.f32 %v311, %v332
    %v335 = vadd.f32 %v312, %v332
    %v336 = vadd.f32 %v313, %v332
    %v337 = vadd.f32 %v314, %v332
    %v338 = vadd.f32 %v315, %v332
    %v339 = vadd.f32 %v316, %v332
    %v340 = vadd.f32 %v317, %v332
    %v341 = vadd.f32 %v318, %v332
    %v342 = vadd.f32 %v319, %v332
    %v343 = vadd.f32 %v320, %v332
    %v344 = vadd.f32 %v321, %v332
    %v345 = vadd.f32 %v322, %v332
    %v346 = vadd.f32 %v323, %v332
    %v347 = vadd.f32 %v324, %v332
    %v348 = vadd.f32 %v325, %v332
    %v349 = vadd.f32 %v326, %v332
    %350 = vst [vmem:[%s3] sm:$0xff] %v334
    %351 = vst [vmem:[%s3 + $0x8] sm:$0xff] %v335
    %352 = vst [vmem:[%s3 + $0x10] sm:$0xff] %v336
    %353 = vst [vmem:[%s3 + $0x18] sm:$0xff] %v337
    %354 = vst [vmem:[%s3 + $0x20] sm:$0xff] %v338
    %355 = vst [vmem:[%s3 + $0x28] sm:$0xff] %v339
    %356 = vst [vmem:[%s3 + $0x30] sm:$0xff] %v340
    %357 = vst [vmem:[%s3 + $0x38] sm:$0xff] %v341
    %358 = vst [vmem:[%s3 + $0x40] sm:$0xff] %v342
    %359 = vst [vmem:[%s3 + $0x48] sm:$0xff] %v343
    %360 = vst [vmem:[%s3 + $0x50] sm:$0xff] %v344
    %361 = vst [vmem:[%s3 + $0x58] sm:$0xff] %v345
    %362 = vst [vmem:[%s3 + $0x60] sm:$0xff] %v346
    %363 = vst [vmem:[%s3 + $0x68] sm:$0xff] %v347
    %364 = vst [vmem:[%s3 + $0x70] sm:$0xff] %v348
    %365 = vst [vmem:[%s3 + $0x78] sm:$0xff] %v349
  $region21: #{psenet_forward.43} parent=0 // pred_fallthru
    _
  // Predicated region
  $region22: #{psenet_forward.43} parent=0 // pred_check
    _
  $region23: #{psenet_forward.43} parent=0 // pred_check_branch
    %367 = sbr.rel (0) target = $region25
  $region24: #{psenet_forward.43} parent=0 // pred_region
    _
  $region25: #{psenet_forward.43} parent=0 // pred_fallthru
    _
  // Predicated region
  $region26: #{psenet_forward.43} parent=0 // pred_check
    _
  $region27: #{psenet_forward.43} parent=0 // pred_check_branch
    %369 = sbr.rel (0) target = $region29
  $region28: #{psenet_forward.43} parent=0 // pred_region
    _
  $region29: #{psenet_forward.43} parent=0 // pred_fallthru
    _

// kernel: psenet_forward.42
$region0: #{psenet_forward.42}
  #allocation0 [shape = 'u32[]', space=smem, size = 0x4, offset = 0x4, fixed_abs, tag = 'smem constant byte address 0x4 - core index']
  #allocation1 [shape = 'u32[144,128]{1,0:T(1,128)}', space=vmem, size = 0x12000, scoped, tag = 'internal scratch']
  #allocation2 [shape = 'f32[128,128]{1,0:T(8,128)}', space=vmem, size = 0x10000, scoped, tag = 'scratch operand']
  %s0 = inlined_call_operand.vmem [shape: bf16[128,1536], index: 0, kind: input, shape index: {}]
  %s1 = inlined_call_operand.vmem [shape: bf16[1536,128], index: 1, kind: input, shape index: {}]
  %s2 = inlined_call_operand.vmem [shape: f32[1,128], index: 2, kind: input, shape index: {}]
  %s3 = inlined_call_operand.vmem [shape: bf16[128,128], index: 3, kind: output, shape index: {}]
  %s4 = sld [smem:[#allocation0]]
  $region76: #{psenet_forward.42} parent=0
    _
  %s6 = ssub.s32 1, %s4
  %s7 = scalar_select 0, %s6, %s4
  $region1: #{psenet_forward.42} parent=0
    #allocation3 [shape = 'u8[262144]{0}', space=vmem, size = 0x40000, scoped, tag = 'input window, operand 0']
    loop: start=0, step=1, limit=5
    $region2: #{psenet_forward.42} parent=1 // loop_pre_header
      _
    $region3: #{psenet_forward.42} parent=1 // loop_header
      %s9 = sphi 0, %s13
      %p10 = scmp.ge.s32.totalorder %s9, 5
      %s16 = sphi 0, %s35
      %s17 = sphi 0, %s31
      %s18 = sphi 0, %s27
      %s19 = sphi 0, %s16
      %s20 = sphi 0, %s17
      %s21 = sphi 0, %s18
      %s22 = sphi 0, %s19
      %s23 = sphi 0, %s20
      %s24 = sphi 0, %s21
      %s40 = sphi 0, %s42
      %s43 = sphi 0, %s40
      %s44 = sphi 0, %s43
      %s60 = sphi 0, %s44
      %s68 = sphi 0, %s70
      %s71 = sphi 0, %s68
      %s72 = sphi 0, %s71
      %s88 = sphi 0, %s72
      %s94 = sphi 0, %s96
      %s97 = sphi 0, %s94
      %s98 = sphi 0, %s97
      %s114 = sphi 0, %s98
      %s122 = sphi 0, %s124
      %s125 = sphi 0, %s122
      %s126 = sphi 0, %s125
      %s142 = sphi 0, %s126
    $region4: #{psenet_forward.42} parent=1 // loop_header_branch
      %12 = sbr.rel (%p10) target = $region8
    $region5: #{psenet_forward.42} parent=1 // loop_body
      %s14 = ssub.s32 %s9, 1
      %s15 = ssub.s32 %s9, 2
      %s25 = sadd.s32 1, %s18
      %p26 = scmp.ge.s32.totalorder %s25, 3
      %s27 = scalar_select %p26, 0, %s25
      %s28 = sadd.s32 1, %s17
      %s29 = scalar_select %p26, %s28, %s17
      %p30 = scmp.ge.s32.totalorder %s29, 1
      %s31 = scalar_select %p30, 0, %s29
      %s32 = sadd.s32 1, %s16
      %s33 = scalar_select %p30, %s32, %s16
      %p34 = scmp.ge.s32.totalorder %s33, 1
      %s35 = scalar_select %p34, 0, %s33
      %s36 = ssub.s32 %s16, %s35
      %s37 = ssub.s32 %s18, %s27
      %s38 = sor.u32 %s36, %s37
      %p39 = scmp.eq.s32.totalorder %s38, 0
      %s41 = sadd.s32 %s40, 1
      %s42 = scalar_select %p39, %s40, %s41
      %p45 = pneg %p39
      %p46 = scmp.eq.s32.totalorder %s9, 2
      %p47 = por %p45, %p46
      %p48 = scmp.ne.s32.totalorder %s40, %s43
      %p49 = scmp.eq.s32.totalorder %s9, 0
      %p50 = por %p48, %p49
      %p51 = scmp.ne.s32.totalorder %s40, %s43
      %p52 = scmp.eq.s32.totalorder %s14, 2
      %p53 = por %p51, %p52
      %p54 = scmp.ne.s32.totalorder %s43, %s44
      %p55 = scmp.eq.s32.totalorder %s14, 0
      %p56 = por %p54, %p55
      %p57 = scmp.ne.s32.totalorder %s43, %s44
      %p58 = scmp.eq.s32.totalorder %s15, 2
      %p59 = por %p57, %p58
      %p61 = scmp.ne.s32.totalorder %s44, %s60
      %p62 = scmp.eq.s32.totalorder %s15, 0
      %p63 = por %p61, %p62
      %s64 = ssub.s32 %s18, %s27
      %s65 = ssub.s32 %s17, %s31
      %s66 = sor.u32 %s64, %s65
      %p67 = scmp.eq.s32.totalorder %s66, 0
      %s69 = sadd.s32 %s68, 1
      %s70 = scalar_select %p67, %s68, %s69
      %p73 = pneg %p67
      %p74 = scmp.eq.s32.totalorder %s9, 2
      %p75 = por %p73, %p74
      %p76 = scmp.ne.s32.totalorder %s68, %s71
      %p77 = scmp.eq.s32.totalorder %s9, 0
      %p78 = por %p76, %p77
      %p79 = scmp.ne.s32.totalorder %s68, %s71
      %p80 = scmp.eq.s32.totalorder %s14, 2
      %p81 = por %p79, %p80
      %p82 = scmp.ne.s32.totalorder %s71, %s72
      %p83 = scmp.eq.s32.totalorder %s14, 0
      %p84 = por %p82, %p83
      %p85 = scmp.ne.s32.totalorder %s71, %s72
      %p86 = scmp.eq.s32.totalorder %s15, 2
      %p87 = por %p85, %p86
      %p89 = scmp.ne.s32.totalorder %s72, %s88
      %p90 = scmp.eq.s32.totalorder %s15, 0
      %p91 = por %p89, %p90
      %s92 = ssub.s32 %s17, %s31
      %p93 = scmp.eq.s32.totalorder %s92, 0
      %s95 = sadd.s32 %s94, 1
      %s96 = scalar_select %p93, %s94, %s95
      %p99 = pneg %p93
      %p100 = scmp.eq.s32.totalorder %s9, 2
      %p101 = por %p99, %p100
      %p102 = scmp.ne.s32.totalorder %s94, %s97
      %p103 = scmp.eq.s32.totalorder %s9, 0
      %p104 = por %p102, %p103
      %p105 = scmp.ne.s32.totalorder %s94, %s97
      %p106 = scmp.eq.s32.totalorder %s14, 2
      %p107 = por %p105, %p106
      %p108 = scmp.ne.s32.totalorder %s97, %s98
      %p109 = scmp.eq.s32.totalorder %s14, 0
      %p110 = por %p108, %p109
      %p111 = scmp.ne.s32.totalorder %s97, %s98
      %p112 = scmp.eq.s32.totalorder %s15, 2
      %p113 = por %p111, %p112
      %p115 = scmp.ne.s32.totalorder %s98, %s114
      %p116 = scmp.eq.s32.totalorder %s15, 0
      %p117 = por %p115, %p116
      %s118 = ssub.s32 %s16, %s35
      %s119 = ssub.s32 %s17, %s31
      %s120 = sor.u32 %s118, %s119
      %p121 = scmp.eq.s32.totalorder %s120, 0
      %s123 = sadd.s32 %s122, 1
      %s124 = scalar_select %p121, %s122, %s123
      %p127 = pneg %p121
      %p128 = scmp.eq.s32.totalorder %s9, 2
      %p129 = por %p127, %p128
      %p130 = scmp.ne.s32.totalorder %s122, %s125
      %p131 = scmp.eq.s32.totalorder %s9, 0
      %p132 = por %p130, %p131
      %p133 = scmp.ne.s32.totalorder %s122, %s125
      %p134 = scmp.eq.s32.totalorder %s14, 2
      %p135 = por %p133, %p134
      %p136 = scmp.ne.s32.totalorder %s125, %s126
      %p137 = scmp.eq.s32.totalorder %s14, 0
      %p138 = por %p136, %p137
      %p139 = scmp.ne.s32.totalorder %s125, %s126
      %p140 = scmp.eq.s32.totalorder %s15, 2
      %p141 = por %p139, %p140
      %p143 = scmp.ne.s32.totalorder %s126, %s142
      %p144 = scmp.eq.s32.totalorder %s15, 0
      %p145 = por %p143, %p144
      %p146 = scmp.le.s32.totalorder 1, %s9
      %p147 = scmp.lt.s32.totalorder %s9, 4
      %p148 = pnand %p146, %p147
      %p149 = pneg %p148
      // Predicated region
      $region9: #{psenet_forward.42} parent=5 // pred_check
        _
      $region10: #{psenet_forward.42} parent=5 // pred_check_branch
        %151 = sbr.rel (%p148) target = $region12
      $region11: #{psenet_forward.42} parent=5 // pred_region
        %s152 = ssub.s32 %s9, 1
        // Predicated region
        $region13: #{psenet_forward.42} parent=11 // pred_check
          %p153 = pneg %p110
        $region14: #{psenet_forward.42} parent=11 // pred_check_branch
          %155 = sbr.rel (%p153) target = $region16
        $region15: #{psenet_forward.42} parent=11 // pred_region
          %p156 = scmp.lt.s32.totalorder %s20, 0
          %s157 = scalar_select %p156, %s20, 0
          %s158 = scalar_lea.vmem %s2, %s157
        $region16: #{psenet_forward.42} parent=11 // pred_fallthru
          _
      $region12: #{psenet_forward.42} parent=5 // pred_fallthru
        _
      %p159 = scmp.lt.s32.totalorder %s9, 3
      // Predicated region
      $region17: #{psenet_forward.42} parent=5 // pred_check
        %p160 = pneg %p159
      $region18: #{psenet_forward.42} parent=5 // pred_check_branch
        %162 = sbr.rel (%p160) target = $region20
      $region19: #{psenet_forward.42} parent=5 // pred_region
        // Predicated region
        $region21: #{psenet_forward.42} parent=19 // pred_check
          %p163 = pneg %p50
        $region22: #{psenet_forward.42} parent=19 // pred_check_branch
          %165 = sbr.rel (%p163) target = $region24
        $region23: #{psenet_forward.42} parent=19 // pred_region
          %s166 = sand.u32 %s40, 1
          %s167 = sand.u32 %s40, 1
          %s168 = smul.addr %s167, 256
          %s169 = scalar_lea.vmem [#allocation3], %s168
          %s170 = smul.u32 16, %s16
          %s171 = smul.u32 4, %s18
          %s172 = smul.addr %s170, 12
          %s173 = sadd.s32 %s171, %s172
          %s174 = smul.addr %s173, 4
          %s175 = scalar_lea.vmem %s0, %s174
          // Predicated region
          $region25: #{psenet_forward.42} parent=23 // pred_check
            _
          $region26: #{psenet_forward.42} parent=23 // pred_check_branch
            %177 = sbr.rel (0) target = $region28
          $region27: #{psenet_forward.42} parent=23 // pred_region
            // Predicated region
            $region29: #{psenet_forward.42} parent=27 // pred_check
              _
            $region30: #{psenet_forward.42} parent=27 // pred_check_branch
              %179 = sbr.rel (0) target = $region32
            $region31: #{psenet_forward.42} parent=27 // pred_region
              loop: start=0, step=1, limit=1
              $region33: #{psenet_forward.42} parent=31 // loop_pre_header
                _
              $region34: #{psenet_forward.42} parent=31 // loop_header
                %s181 = sphi 0, %s185
                %p182 = scmp.ge.s32.totalorder %s181, 1
                %s186 = sphi %s175, %s175
                %s187 = sphi %s169, %s169
              $region35: #{psenet_forward.42} parent=31 // loop_header_branch
                %184 = sbr.rel (%p182) target = $region39
              $region36: #{psenet_forward.42} parent=31 // loop_body
                %v188 = vld [vmem:[%s186] sm:$0xff]
                %189 = vst [vmem:[%s187] sm:$0xff] %v188
                %v190 = vld [vmem:[%s186 + $0x8] sm:$0xff]
                %191 = vst [vmem:[%s187 + $0x8] sm:$0xff] %v190
                %v192 = vld [vmem:[%s186 + $0x30] sm:$0xff]
                %193 = vst [vmem:[%s187 + $0x10] sm:$0xff] %v192
                %v194 = vld [vmem:[%s186 + $0x38] sm:$0xff]
                %195 = vst [vmem:[%s187 + $0x18] sm:$0xff] %v194
                %v196 = vld [vmem:[%s186 + $0x60] sm:$0xff]
                %197 = vst [vmem:[%s187 + $0x20] sm:$0xff] %v196
                %v198 = vld [vmem:[%s186 + $0x68] sm:$0xff]
                %199 = vst [vmem:[%s187 + $0x28] sm:$0xff] %v198
                %v200 = vld [vmem:[%s186 + $0x90] sm:$0xff]
                %201 = vst [vmem:[%s187 + $0x30] sm:$0xff] %v200
                %v202 = vld [vmem:[%s186 + $0x98] sm:$0xff]
                %203 = vst [vmem:[%s187 + $0x38] sm:$0xff] %v202
                %v204 = vld [vmem:[%s186 + $0xc0] sm:$0xff]
                %205 = vst [vmem:[%s187 + $0x40] sm:$0xff] %v204
                %v206 = vld [vmem:[%s186 + $0xc8] sm:$0xff]
                %207 = vst [vmem:[%s187 + $0x48] sm:$0xff] %v206
                %v208 = vld [vmem:[%s186 + $0xf0] sm:$0xff]
                %209 = vst [vmem:[%s187 + $0x50] sm:$0xff] %v208
                %v210 = vld [vmem:[%s186 + $0xf8] sm:$0xff]
                %211 = vst [vmem:[%s187 + $0x58] sm:$0xff] %v210
                %v212 = vld [vmem:[%s186 + $0x120] sm:$0xff]
                %213 = vst [vmem:[%s187 + $0x60] sm:$0xff] %v212
                %v214 = vld [vmem:[%s186 + $0x128] sm:$0xff]
                %215 = vst [vmem:[%s187 + $0x68] sm:$0xff] %v214
                %v216 = vld [vmem:[%s186 + $0x150] sm:$0xff]
                %217 = vst [vmem:[%s187 + $0x70] sm:$0xff] %v216
                %v218 = vld [vmem:[%s186 + $0x158] sm:$0xff]
                %219 = vst [vmem:[%s187 + $0x78] sm:$0xff] %v218
                %v220 = vld [vmem:[%s186 + $0x180] sm:$0xff]
                %221 = vst [vmem:[%s187 + $0x80] sm:$0xff] %v220
                %v222 = vld [vmem:[%s186 + $0x188] sm:$0xff]
                %223 = vst [vmem:[%s187 + $0x88] sm:$0xff] %v222
                %v224 = vld [vmem:[%s186 + $0x1b0] sm:$0xff]
                %225 = vst [vmem:[%s187 + $0x90] sm:$0xff] %v224
                %v226 = vld [vmem:[%s186 + $0x1b8] sm:$0xff]
                %227 = vst [vmem:[%s187 + $0x98] sm:$0xff] %v226
                %v228 = vld [vmem:[%s186 + $0x1e0] sm:$0xff]
                %229 = vst [vmem:[%s187 + $0xa0] sm:$0xff] %v228
                %v230 = vld [vmem:[%s186 + $0x1e8] sm:$0xff]
                %231 = vst [vmem:[%s187 + $0xa8] sm:$0xff] %v230
                %v232 = vld [vmem:[%s186 + $0x210] sm:$0xff]
                %233 = vst [vmem:[%s187 + $0xb0] sm:$0xff] %v232
                %v234 = vld [vmem:[%s186 + $0x218] sm:$0xff]
                %235 = vst [vmem:[%s187 + $0xb8] sm:$0xff] %v234
                %v236 = vld [vmem:[%s186 + $0x240] sm:$0xff]
                %237 = vst [vmem:[%s187 + $0xc0] sm:$0xff] %v236
                %v238 = vld [vmem:[%s186 + $0x248] sm:$0xff]
                %239 = vst [vmem:[%s187 + $0xc8] sm:$0xff] %v238
                %v240 = vld [vmem:[%s186 + $0x270] sm:$0xff]
                %241 = vst [vmem:[%s187 + $0xd0] sm:$0xff] %v240
                %v242 = vld [vmem:[%s186 + $0x278] sm:$0xff]
                %243 = vst [vmem:[%s187 + $0xd8] sm:$0xff] %v242
                %v244 = vld [vmem:[%s186 + $0x2a0] sm:$0xff]
                %245 = vst [vmem:[%s187 + $0xe0] sm:$0xff] %v244
                %v246 = vld [vmem:[%s186 + $0x2a8] sm:$0xff]
                %247 = vst [vmem:[%s187 + $0xe8] sm:$0xff] %v246
                %v248 = vld [vmem:[%s186 + $0x2d0] sm:$0xff]
                %249 = vst [vmem:[%s187 + $0xf0] sm:$0xff] %v248
                %v250 = vld [vmem:[%s186 + $0x2d8] sm:$0xff]
                %251 = vst [vmem:[%s187 + $0xf8] sm:$0xff] %v250
              $region37: #{psenet_forward.42} parent=31 // loop_footer
                %s185 = sadd.s32 1, %s181
              $region38: #{psenet_forward.42} parent=31 // loop_footer_branch
                %180 = sbr.rel target = $region34
              $region39: #{psenet_forward.42} parent=31 // loop_exit
                _
            $region32: #{psenet_forward.42} parent=27 // pred_fallthru
              _
            // Predicated region
            $region40: #{psenet_forward.42} parent=27 // pred_check
              _
            $region41: #{psenet_forward.42} parent=27 // pred_check_branch
              %253 = sbr.rel target = $region43
            $region42: #{psenet_forward.42} parent=27 // pred_region
              _
            $region43: #{psenet_forward.42} parent=27 // pred_fallthru
              _
          $region28: #{psenet_forward.42} parent=23 // pred_fallthru
            _
          %254 = vnop
        $region24: #{psenet_forward.42} parent=19 // pred_fallthru
          _
        // Predicated region
        $region44: #{psenet_forward.42} parent=19 // pred_check
          %p255 = pneg %p78
        $region45: #{psenet_forward.42} parent=19 // pred_check_branch
          %257 = sbr.rel (%p255) target = $region47
        $region46: #{psenet_forward.42} parent=19 // pred_region
          %s258 = smul.u32 64, %s18
          %p259 = scmp.lt.s32.totalorder %s258, 191
          %s260 = scalar_select %p259, %s258, 191
          %p261 = scmp.lt.s32.totalorder %s17, 0
          %s262 = scalar_select %p261, %s17, 0
          %s263 = sadd.s32 %s262, %s260
          %s264 = smul.addr %s263, 4
          %s265 = scalar_lea.vmem %s1, %s264
          %s266 = smul.u32 64, %s18
        $region47: #{psenet_forward.42} parent=19 // pred_fallthru
          _
      $region20: #{psenet_forward.42} parent=5 // pred_fallthru
        _
      %p267 = scmp.le.s32.totalorder 1, %s9
      %p268 = scmp.lt.s32.totalorder %s9, 4
      %p269 = pnand %p267, %p268
      %p270 = pneg %p269
      // Predicated region
      $region48: #{psenet_forward.42} parent=5 // pred_check
        _
      $region49: #{psenet_forward.42} parent=5 // pred_check_branch
        %272 = sbr.rel (%p269) target = $region51
      $region50: #{psenet_forward.42} parent=5 // pred_region
        %s273 = ssub.s32 %s9, 1
        %s274 = sand.u32 %s43, 1
        %s275 = sand.u32 %s43, 1
        %s276 = smul.addr %s275, 256
        %s277 = scalar_lea.vmem [#allocation3], %s276
        // Predicated region
        $region52: #{psenet_forward.42} parent=50 // pred_check
          %p278 = pneg %p56
        $region53: #{psenet_forward.42} parent=50 // pred_check_branch
          %280 = sbr.rel (%p278) target = $region55
        $region54: #{psenet_forward.42} parent=50 // pred_region
          _
        $region55: #{psenet_forward.42} parent=50 // pred_fallthru
          _
        %s281 = sand.u32 %s43, 1
        %s282 = sand.u32 %s43, 1
        %s283 = smul.addr %s282, 256
        %s284 = scalar_lea.vmem [#allocation3], %s283
        %p285 = pneg %p56
        %p286 = pneg %p53
        %s287 = smul.u32 64, %s21
        %p288 = scmp.lt.s32.totalorder %s287, 191
        %s289 = scalar_select %p288, %s287, 191
        %p290 = scmp.lt.s32.totalorder %s20, 0
        %s291 = scalar_select %p290, %s20, 0
        %s292 = sadd.s32 %s291, %s289
        %s293 = smul.addr %s292, 4
        %s294 = scalar_lea.vmem %s1, %s293
        %p295 = pneg %p84
        %p296 = pneg %p81
        %p297 = scmp.lt.s32.totalorder %s20, 0
        %s298 = scalar_select %p297, %s20, 0
        %s299 = scalar_lea.vmem %s2, %s298
        %p300 = pneg %p110
        %p301 = pneg %p107
        %p302 = pneg %p138
        %p303 = pneg %p135
        %s304 = smul.u32 16, %s19
        %p305 = scmp.lt.s32.totalorder %s304, 15
        %s306 = scalar_select %p305, %s304, 15
        %p307 = scmp.lt.s32.totalorder %s20, 0
        %s308 = scalar_select %p307, %s20, 0
        %s309 = sadd.s32 %s308, %s306
        %s310 = smul.addr %s309, 4
        %s311 = scalar_lea.vmem %s3, %s310
        %s312 = smul.u32 16, %s19
        %s313 = smul.u32 4, %s21
        %s314 = smul.u32 64, %s21
        %p315 = scmp.lt.s32.totalorder %s314, 191
        %s316 = scalar_select %p315, %s314, 191
        %p317 = scmp.lt.s32.totalorder %s20, 0
        %s318 = scalar_select %p317, %s20, 0
        %s319 = sadd.s32 %s318, %s316
        %s320 = smul.addr %s319, 4
        %s321 = scalar_lea.vmem %s1, %s320
        %s322 = smul.u32 64, %s21
        %p323 = scmp.lt.s32.totalorder %s20, 0
        %s324 = scalar_select %p323, %s20, 0
        %s325 = scalar_lea.vmem %s2, %s324
        %s326 = smul.u32 16, %s19
        %p327 = scmp.lt.s32.totalorder %s326, 15
        %s328 = scalar_select %p327, %s326, 15
        %p329 = scmp.lt.s32.totalorder %s20, 0
        %s330 = scalar_select %p329, %s20, 0
        %s331 = sadd.s32 %s330, %s328
        %s332 = smul.addr %s331, 4
        %s333 = scalar_lea.vmem %s3, %s332
        %s334 = smul.u32 16, %s19
        %p336 = scmp.eq.s32.totalorder %s21, 0
        // Predicated region
        $region56: #{psenet_forward.42} parent=50 // pred_check
          %p337 = pneg %p336
        $region57: #{psenet_forward.42} parent=50 // pred_check_branch
          %339 = sbr.rel (%p337) target = $region59
        $region58: #{psenet_forward.42} parent=50 // pred_region
          %340 = vst [vmem:[#allocation2] sm:$0xff] 0.0
          %341 = vst [vmem:[#allocation2 + $0x8] sm:$0xff] 0.0
          %342 = vst [vmem:[#allocation2 + $0x10] sm:$0xff] 0.0
          %343 = vst [vmem:[#allocation2 + $0x18] sm:$0xff] 0.0
          %344 = vst [vmem:[#allocation2 + $0x20] sm:$0xff] 0.0
          %345 = vst [vmem:[#allocation2 + $0x28] sm:$0xff] 0.0
          %346 = vst [vmem:[#allocation2 + $0x30] sm:$0xff] 0.0
          %347 = vst [vmem:[#allocation2 + $0x38] sm:$0xff] 0.0
          %348 = vst [vmem:[#allocation2 + $0x40] sm:$0xff] 0.0
          %349 = vst [vmem:[#allocation2 + $0x48] sm:$0xff] 0.0
          %350 = vst [vmem:[#allocation2 + $0x50] sm:$0xff] 0.0
          %351 = vst [vmem:[#allocation2 + $0x58] sm:$0xff] 0.0
          %352 = vst [vmem:[#allocation2 + $0x60] sm:$0xff] 0.0
          %353 = vst [vmem:[#allocation2 + $0x68] sm:$0xff] 0.0
          %354 = vst [vmem:[#allocation2 + $0x70] sm:$0xff] 0.0
          %355 = vst [vmem:[#allocation2 + $0x78] sm:$0xff] 0.0
        $region59: #{psenet_forward.42} parent=50 // pred_fallthru
          _
        %v356 = vld [vmem:[#allocation2] sm:$0xff]
        %v357 = vld [vmem:[#allocation2 + $0x8] sm:$0xff]
        %v358 = vld [vmem:[#allocation2 + $0x10] sm:$0xff]
        %v359 = vld [vmem:[#allocation2 + $0x18] sm:$0xff]
        %v360 = vld [vmem:[#allocation2 + $0x20] sm:$0xff]
        %v361 = vld [vmem:[#allocation2 + $0x28] sm:$0xff]
        %v362 = vld [vmem:[#allocation2 + $0x30] sm:$0xff]
        %v363 = vld [vmem:[#allocation2 + $0x38] sm:$0xff]
        %v364 = vld [vmem:[#allocation2 + $0x40] sm:$0xff]
        %v365 = vld [vmem:[#allocation2 + $0x48] sm:$0xff]
        %v366 = vld [vmem:[#allocation2 + $0x50] sm:$0xff]
        %v367 = vld [vmem:[#allocation2 + $0x58] sm:$0xff]
        %v368 = vld [vmem:[#allocation2 + $0x60] sm:$0xff]
        %v369 = vld [vmem:[#allocation2 + $0x68] sm:$0xff]
        %v370 = vld [vmem:[#allocation2 + $0x70] sm:$0xff]
        %v371 = vld [vmem:[#allocation2 + $0x78] sm:$0xff]
        %v372 = vld [vmem:[%s277] sm:$0xff]
        %v373 = vld [vmem:[%s277 + $0x8] sm:$0xff]
        %v374 = vld [vmem:[%s277 + $0x10] sm:$0xff]
        %v375 = vld [vmem:[%s277 + $0x18] sm:$0xff]
        %v376 = vld [vmem:[%s277 + $0x20] sm:$0xff]
        %v377 = vld [vmem:[%s277 + $0x28] sm:$0xff]
        %v378 = vld [vmem:[%s277 + $0x30] sm:$0xff]
        %v379 = vld [vmem:[%s277 + $0x38] sm:$0xff]
        %v380 = vld [vmem:[%s277 + $0x40] sm:$0xff]
        %v381 = vld [vmem:[%s277 + $0x48] sm:$0xff]
        %v382 = vld [vmem:[%s277 + $0x50] sm:$0xff]
        %v383 = vld [vmem:[%s277 + $0x58] sm:$0xff]
        %v384 = vld [vmem:[%s277 + $0x60] sm:$0xff]
        %v385 = vld [vmem:[%s277 + $0x68] sm:$0xff]
        %v386 = vld [vmem:[%s277 + $0x70] sm:$0xff]
        %v387 = vld [vmem:[%s277 + $0x78] sm:$0xff]
        %v388 = vld [vmem:[%s277 + $0x80] sm:$0xff]
        %v389 = vld [vmem:[%s277 + $0x88] sm:$0xff]
        %v390 = vld [vmem:[%s277 + $0x90] sm:$0xff]
        %v391 = vld [vmem:[%s277 + $0x98] sm:$0xff]
        %v392 = vld [vmem:[%s277 + $0xa0] sm:$0xff]
        %v393 = vld [vmem:[%s277 + $0xa8] sm:$0xff]
        %v394 = vld [vmem:[%s277 + $0xb0] sm:$0xff]
        %v395 = vld [vmem:[%s277 + $0xb8] sm:$0xff]
        %v396 = vld [vmem:[%s277 + $0xc0] sm:$0xff]
        %v397 = vld [vmem:[%s277 + $0xc8] sm:$0xff]
        %v398 = vld [vmem:[%s277 + $0xd0] sm:$0xff]
        %v399 = vld [vmem:[%s277 + $0xd8] sm:$0xff]
        %v400 = vld [vmem:[%s277 + $0xe0] sm:$0xff]
        %v401 = vld [vmem:[%s277 + $0xe8] sm:$0xff]
        %v402 = vld [vmem:[%s277 + $0xf0] sm:$0xff]
        %v403 = vld [vmem:[%s277 + $0xf8] sm:$0xff]
        %v404 = vld [vmem:[%s321] sm:$0xf]
        %v405 = vld [vmem:[%s321 + $0x4] sm:$0xf]
        %v406 = vld [vmem:[%s321 + $0x8] sm:$0xf]
        %v407 = vld [vmem:[%s321 + $0xc] sm:$0xf]
        %v408 = vld [vmem:[%s321 + $0x10] sm:$0xf]
        %v409 = vld [vmem:[%s321 + $0x14] sm:$0xf]
        %v410 = vld [vmem:[%s321 + $0x18] sm:$0xf]
        %v411 = vld [vmem:[%s321 + $0x1c] sm:$0xf]
        %v412 = vld [vmem:[%s321 + $0x20] sm:$0xf]
        %v413 = vld [vmem:[%s321 + $0x24] sm:$0xf]
        %v414 = vld [vmem:[%s321 + $0x28] sm:$0xf]
        %v415 = vld [vmem:[%s321 + $0x2c] sm:$0xf]
        %v416 = vld [vmem:[%s321 + $0x30] sm:$0xf]
        %v417 = vld [vmem:[%s321 + $0x34] sm:$0xf]
        %v418 = vld [vmem:[%s321 + $0x38] sm:$0xf]
        %v419 = vld [vmem:[%s321 + $0x3c] sm:$0xf]
        %v420 = vld [vmem:[%s321 + $0x40] sm:$0xf]
        %v421 = vld [vmem:[%s321 + $0x44] sm:$0xf]
        %v422 = vld [vmem:[%s321 + $0x48] sm:$0xf]
        %v423 = vld [vmem:[%s321 + $0x4c] sm:$0xf]
        %v424 = vld [vmem:[%s321 + $0x50] sm:$0xf]
        %v425 = vld [vmem:[%s321 + $0x54] sm:$0xf]
        %v426 = vld [vmem:[%s321 + $0x58] sm:$0xf]
        %v427 = vld [vmem:[%s321 + $0x5c] sm:$0xf]
        %v428 = vld [vmem:[%s321 + $0x60] sm:$0xf]
        %v429 = vld [vmem:[%s321 + $0x64] sm:$0xf]
        %v430 = vld [vmem:[%s321 + $0x68] sm:$0xf]
        %v431 = vld [vmem:[%s321 + $0x6c] sm:$0xf]
        %v432 = vld [vmem:[%s321 + $0x70] sm:$0xf]
        %v433 = vld [vmem:[%s321 + $0x74] sm:$0xf]
        %v434 = vld [vmem:[%s321 + $0x78] sm:$0xf]
        %v435 = vld [vmem:[%s321 + $0x7c] sm:$0xf]
        %v436 = vld [vmem:[%s321 + $0x80] sm:$0xf]
        %v437 = vld [vmem:[%s321 + $0x84] sm:$0xf]
        %v438 = vld [vmem:[%s321 + $0x88] sm:$0xf]
        %v439 = vld [vmem:[%s321 + $0x8c] sm:$0xf]
        %v440 = vld [vmem:[%s321 + $0x90] sm:$0xf]
        %v441 = vld [vmem:[%s321 + $0x94] sm:$0xf]
        %v442 = vld [vmem:[%s321 + $0x98] sm:$0xf]
        %v443 = vld [vmem:[%s321 + $0x9c] sm:$0xf]
        %v444 = vld [vmem:[%s321 + $0xa0] sm:$0xf]
        %v445 = vld [vmem:[%s321 + $0xa4] sm:$0xf]
        %v446 = vld [vmem:[%s321 + $0xa8] sm:$0xf]
        %v447 = vld [vmem:[%s321 + $0xac] sm:$0xf]
        %v448 = vld [vmem:[%s321 + $0xb0] sm:$0xf]
        %v449 = vld [vmem:[%s321 + $0xb4] sm:$0xf]
        %v450 = vld [vmem:[%s321 + $0xb8] sm:$0xf]
        %v451 = vld [vmem:[%s321 + $0xbc] sm:$0xf]
        %v452 = vld [vmem:[%s321 + $0xc0] sm:$0xf]
        %v453 = vld [vmem:[%s321 + $0xc4] sm:$0xf]
        %v454 = vld [vmem:[%s321 + $0xc8] sm:$0xf]
        %v455 = vld [vmem:[%s321 + $0xcc] sm:$0xf]
        %v456 = vld [vmem:[%s321 + $0xd0] sm:$0xf]
        %v457 = vld [vmem:[%s321 + $0xd4] sm:$0xf]
        %v458 = vld [vmem:[%s321 + $0xd8] sm:$0xf]
        %v459 = vld [vmem:[%s321 + $0xdc] sm:$0xf]
        %v460 = vld [vmem:[%s321 + $0xe0] sm:$0xf]
        %v461 = vld [vmem:[%s321 + $0xe4] sm:$0xf]
        %v462 = vld [vmem:[%s321 + $0xe8] sm:$0xf]
        %v463 = vld [vmem:[%s321 + $0xec] sm:$0xf]
        %v464 = vld [vmem:[%s321 + $0xf0] sm:$0xf]
        %v465 = vld [vmem:[%s321 + $0xf4] sm:$0xf]
        %v466 = vld [vmem:[%s321 + $0xf8] sm:$0xf]
        %v467 = vld [vmem:[%s321 + $0xfc] sm:$0xf]
        %v500 = vunpack.c.l.b16 %v372
        %v501 = vunpack.c.h.b16 %v372
        %v502 = vunpack.c.l.b16 %v373
        %v503 = vunpack.c.h.b16 %v373
        %v504 = vunpack.c.l.b16 %v374
        %v505 = vunpack.c.h.b16 %v374
        %v506 = vunpack.c.l.b16 %v375
        %v507 = vunpack.c.h.b16 %v375
        %v508 = vunpack.c.l.b16 %v376
        %v509 = vunpack.c.h.b16 %v376
        %v510 = vunpack.c.l.b16 %v377
        %v511 = vunpack.c.h.b16 %v377
        %v512 = vunpack.c.l.b16 %v378
        %v513 = vunpack.c.h.b16 %v378
        %v514 = vunpack.c.l.b16 %v379
        %v515 = vunpack.c.h.b16 %v379
        %v516 = vunpack.c.l.b16 %v380
        %v517 = vunpack.c.h.b16 %v380
        %v518 = vunpack.c.l.b16 %v381
        %v519 = vunpack.c.h.b16 %v381
        %v520 = vunpack.c.l.b16 %v382
        %v521 = vunpack.c.h.b16 %v382
        %v522 = vunpack.c.l.b16 %v383
        %v523 = vunpack.c.h.b16 %v383
        %v524 = vunpack.c.l.b16 %v384
        %v525 = vunpack.c.h.b16 %v384
        %v526 = vunpack.c.l.b16 %v385
        %v527 = vunpack.c.h.b16 %v385
        %v528 = vunpack.c.l.b16 %v386
        %v529 = vunpack.c.h.b16 %v386
        %v530 = vunpack.c.l.b16 %v387
        %v531 = vunpack.c.h.b16 %v387
        %v532 = vunpack.c.l.b16 %v388
        %v533 = vunpack.c.h.b16 %v388
        %v534 = vunpack.c.l.b16 %v389
        %v535 = vunpack.c.h.b16 %v389
        %v536 = vunpack.c.l.b16 %v390
        %v537 = vunpack.c.h.b16 %v390
        %v538 = vunpack.c.l.b16 %v391
        %v539 = vunpack.c.h.b16 %v391
        %v540 = vunpack.c.l.b16 %v392
        %v541 = vunpack.c.h.b16 %v392
        %v542 = vunpack.c.l.b16 %v393
        %v543 = vunpack.c.h.b16 %v393
        %v544 = vunpack.c.l.b16 %v394
        %v545 = vunpack.c.h.b16 %v394
        %v546 = vunpack.c.l.b16 %v395
        %v547 = vunpack.c.h.b16 %v395
        %v548 = vunpack.c.l.b16 %v396
        %v549 = vunpack.c.h.b16 %v396
        %v550 = vunpack.c.l.b16 %v397
        %v551 = vunpack.c.h.b16 %v397
        %v552 = vunpack.c.l.b16 %v398
        %v553 = vunpack.c.h.b16 %v398
        %v554 = vunpack.c.l.b16 %v399
        %v555 = vunpack.c.h.b16 %v399
        %v556 = vunpack.c.l.b16 %v400
        %v557 = vunpack.c.h.b16 %v400
        %v558 = vunpack.c.l.b16 %v401
        %v559 = vunpack.c.h.b16 %v401
        %v560 = vunpack.c.l.b16 %v402
        %v561 = vunpack.c.h.b16 %v402
        %v562 = vunpack.c.l.b16 %v403
        %v563 = vunpack.c.h.b16 %v403
        %v564 = vpack.c.b16 %v504, %v500
        %v565 = vpack.c.b16 %v505, %v501
        %v566 = vpack.c.b16 %v506, %v502
        %v567 = vpack.c.b16 %v507, %v503
        %v568 = vpack.c.b16 %v512, %v508
        %v569 = vpack.c.b16 %v513, %v509
        %v570 = vpack.c.b16 %v514, %v510
        %v571 = vpack.c.b16 %v515, %v511
        %v572 = vpack.c.b16 %v520, %v516
        %v573 = vpack.c.b16 %v521, %v517
        %v574 = vpack.c.b16 %v522, %v518
        %v575 = vpack.c.b16 %v523, %v519
        %v576 = vpack.c.b16 %v528, %v524
        %v577 = vpack.c.b16 %v529, %v525
        %v578 = vpack.c.b16 %v530, %v526
        %v579 = vpack.c.b16 %v531, %v527
        %v580 = vpack.c.b16 %v536, %v532
        %v581 = vpack.c.b16 %v537, %v533
        %v582 = vpack.c.b16 %v538, %v534
        %v583 = vpack.c.b16 %v539, %v535
        %v584 = vpack.c.b16 %v544, %v540
        %v585 = vpack.c.b16 %v545, %v541
        %v586 = vpack.c.b16 %v546, %v542
        %v587 = vpack.c.b16 %v547, %v543
        %v588 = vpack.c.b16 %v552, %v548
        %v589 = vpack.c.b16 %v553, %v549
        %v590 = vpack.c.b16 %v554, %v550
        %v591 = vpack.c.b16 %v555, %v551
        %v592 = vpack.c.b16 %v560, %v556
        %v593 = vpack.c.b16 %v561, %v557
        %v594 = vpack.c.b16 %v562, %v558
        %v595 = vpack.c.b16 %v563, %v559
        %v692 = vunpack.c.l.b16 %v404
        %v693 = vunpack.c.l.b16 %v405
        %v694 = vunpack.c.l.b16 %v406
        %v695 = vunpack.c.l.b16 %v407
        %v696 = vunpack.c.l.b16 %v408
        %v697 = vunpack.c.l.b16 %v409
        %v698 = vunpack.c.l.b16 %v410
        %v699 = vunpack.c.l.b16 %v411
        %v700 = vunpack.c.l.b16 %v412
        %v701 = vunpack.c.l.b16 %v413
        %v702 = vunpack.c.l.b16 %v414
        %v703 = vunpack.c.l.b16 %v415
        %v704 = vunpack.c.l.b16 %v416
        %v705 = vunpack.c.l.b16 %v417
        %v706 = vunpack.c.l.b16 %v418
        %v707 = vunpack.c.l.b16 %v419
        %v708 = vunpack.c.l.b16 %v420
        %v709 = vunpack.c.l.b16 %v421
        %v710 = vunpack.c.l.b16 %v422
        %v711 = vunpack.c.l.b16 %v423
        %v712 = vunpack.c.l.b16 %v424
        %v713 = vunpack.c.l.b16 %v425
        %v714 = vunpack.c.l.b16 %v426
        %v715 = vunpack.c.l.b16 %v427
        %v716 = vunpack.c.l.b16 %v428
        %v717 = vunpack.c.l.b16 %v429
        %v718 = vunpack.c.l.b16 %v430
        %v719 = vunpack.c.l.b16 %v431
        %v720 = vunpack.c.l.b16 %v432
        %v721 = vunpack.c.l.b16 %v433
        %v722 = vunpack.c.l.b16 %v434
        %v723 = vunpack.c.l.b16 %v435
        %v724 = vunpack.c.l.b16 %v436
        %v725 = vunpack.c.l.b16 %v437
        %v726 = vunpack.c.l.b16 %v438
        %v727 = vunpack.c.l.b16 %v439
        %v728 = vunpack.c.l.b16 %v440
        %v729 = vunpack.c.l.b16 %v441
        %v730 = vunpack.c.l.b16 %v442
        %v731 = vunpack.c.l.b16 %v443
        %v732 = vunpack.c.l.b16 %v444
        %v733 = vunpack.c.l.b16 %v445
        %v734 = vunpack.c.l.b16 %v446
        %v735 = vunpack.c.l.b16 %v447
        %v736 = vunpack.c.l.b16 %v448
        %v737 = vunpack.c.l.b16 %v449
        %v738 = vunpack.c.l.b16 %v450
        %v739 = vunpack.c.l.b16 %v451
        %v740 = vunpack.c.l.b16 %v452
        %v741 = vunpack.c.l.b16 %v453
        %v742 = vunpack.c.l.b16 %v454
        %v743 = vunpack.c.l.b16 %v455
        %v744 = vunpack.c.l.b16 %v456
        %v745 = vunpack.c.l.b16 %v457
        %v746 = vunpack.c.l.b16 %v458
        %v747 = vunpack.c.l.b16 %v459
        %v748 = vunpack.c.l.b16 %v460
        %v749 = vunpack.c.l.b16 %v461
        %v750 = vunpack.c.l.b16 %v462
        %v751 = vunpack.c.l.b16 %v463
        %v752 = vunpack.c.l.b16 %v464
        %v753 = vunpack.c.l.b16 %v465
        %v754 = vunpack.c.l.b16 %v466
        %v755 = vunpack.c.l.b16 %v467
        %v756 = vpack.c.b16 %v693, %v692
        %v757 = vpack.c.b16 %v695, %v694
        %v758 = vpack.c.b16 %v697, %v696
        %v759 = vpack.c.b16 %v699, %v698
        %v760 = vpack.c.b16 %v701, %v700
        %v761 = vpack.c.b16 %v703, %v702
        %v762 = vpack.c.b16 %v705, %v704
        %v763 = vpack.c.b16 %v707, %v706
        %v764 = vpack.c.b16 %v709, %v708
        %v765 = vpack.c.b16 %v711, %v710
        %v766 = vpack.c.b16 %v713, %v712
        %v767 = vpack.c.b16 %v715, %v714
        %v768 = vpack.c.b16 %v717, %v716
        %v769 = vpack.c.b16 %v719, %v718
        %v770 = vpack.c.b16 %v721, %v720
        %v771 = vpack.c.b16 %v723, %v722
        %v772 = vpack.c.b16 %v725, %v724
        %v773 = vpack.c.b16 %v727, %v726
        %v774 = vpack.c.b16 %v729, %v728
        %v775 = vpack.c.b16 %v731, %v730
        %v776 = vpack.c.b16 %v733, %v732
        %v777 = vpack.c.b16 %v735, %v734
        %v778 = vpack.c.b16 %v737, %v736
        %v779 = vpack.c.b16 %v739, %v738
        %v780 = vpack.c.b16 %v741, %v740
        %v781 = vpack.c.b16 %v743, %v742
        %v782 = vpack.c.b16 %v745, %v744
        %v783 = vpack.c.b16 %v747, %v746
        %v784 = vpack.c.b16 %v749, %v748
        %v785 = vpack.c.b16 %v751, %v750
        %v786 = vpack.c.b16 %v753, %v752
        %v787 = vpack.c.b16 %v755, %v754
        %820 = vmatprep.subr.bf16.mxu0 0
        %821 = vmatpush1.bf16.msra.mxu0 %v756
        %822 = vmatprep.subr.bf16.mxu0 0
        %823 = vmatpush1.bf16.msra.mxu0 %v757
        %824 = vmatprep.subr.bf16.mxu0 0
        %825 = vmatpush1.bf16.msra.mxu0 %v758
        %826 = vmatprep.subr.bf16.mxu0 0
        %827 = vmatpush1.bf16.msra.mxu0 %v759
        %828 = vmatprep.subr.bf16.mxu0 0
        %829 = vmatpush1.bf16.msra.mxu0 %v760
        %830 = vmatprep.subr.bf16.mxu0 0
        %831 = vmatpush1.bf16.msra.mxu0 %v761
        %832 = vmatprep.subr.bf16.mxu0 0
        %833 = vmatpush1.bf16.msra.mxu0 %v762
        %834 = vmatprep.subr.bf16.mxu0 0
        %835 = vmatpush1.bf16.msra.mxu0 %v763
        %836 = vmatprep.subr.bf16.mxu0 0
        %837 = vmatpush1.bf16.msra.mxu0 %v764
        %838 = vmatprep.subr.bf16.mxu0 0
        %839 = vmatpush1.bf16.msra.mxu0 %v765
        %840 = vmatprep.subr.bf16.mxu0 0
        %841 = vmatpush1.bf16.msra.mxu0 %v766
        %842 = vmatprep.subr.bf16.mxu0 0
        %843 = vmatpush1.bf16.msra.mxu0 %v767
        %844 = vmatprep.subr.bf16.mxu0 0
        %845 = vmatpush1.bf16.msra.mxu0 %v768
        %846 = vmatprep.subr.bf16.mxu0 0
        %847 = vmatpush1.bf16.msra.mxu0 %v769
        %848 = vmatprep.subr.bf16.mxu0 0
        %849 = vmatpush1.bf16.msra.mxu0 %v770
        %850 = vmatprep.subr.bf16.mxu0 0
        %851 = vmatpush1.bf16.msra.mxu0 %v771
        %852 = vmatprep.mubr.bf16.mxu0 %v565
        %853 = vmatmul.mubr.bf16.gmra.mrb[0].mxu0 %v564
        %v854 = vpop.f32.mrb[0].mxu0
        %v855 = vadd.f32 0.0, %v854
        %v856 = vpop.f32.mrb[0].mxu0
        %v857 = vpop.f32.mrb[0].mxu0
        %v858 = vadd.f32 0.0, %v857
        %v859 = vpop.f32.mrb[0].mxu0
        %860 = vmatprep.mubr.bf16.mxu0 %v569
        %861 = vmatmul.mubr.bf16.gmra.mrb[0].mxu0 %v568
        %v862 = vpop.f32.mrb[0].mxu0
        %v863 = vadd.f32 0.0, %v862
        %v864 = vpop.f32.mrb[0].mxu0
        %v865 = vpop.f32.mrb[0].mxu0
        %v866 = vadd.f32 0.0, %v865
        %v867 = vpop.f32.mrb[0].mxu0
        %868 = vmatprep.mubr.bf16.mxu0 %v573
        %869 = vmatmul.mubr.bf16.gmra.mrb[0].mxu0 %v572
        %v870 = vpop.f32.mrb[0].mxu0
        %v871 = vadd.f32 0.0, %v870
        %v872 = vpop.f32.mrb[0].mxu0
        %v873 = vpop.f32.mrb[0].mxu0
        %v874 = vadd.f32 0.0, %v873
        %v875 = vpop.f32.mrb[0].mxu0
        %876 = vmatprep.mubr.bf16.mxu0 %v577
        %877 = vmatmul.mubr.bf16.gmra.mrb[0].mxu0 %v576
        %v878 = vpop.f32.mrb[0].mxu0
        %v879 = vadd.f32 0.0, %v878
        %v880 = vpop.f32.mrb[0].mxu0
        %v881 = vpop.f32.mrb[0].mxu0
        %v882 = vadd.f32 0.0, %v881
        %v883 = vpop.f32.mrb[0].mxu0
        %884 = vmatprep.mubr.bf16.mxu0 %v581
        %885 = vmatmul.mubr.bf16.gmra.mrb[0].mxu0 %v580
        %v886 = vpop.f32.mrb[0].mxu0
        %v887 = vadd.f32 0.0, %v886
        %v888 = vpop.f32.mrb[0].mxu0
        %v889 = vpop.f32.mrb[0].mxu0
        %v890 = vadd.f32 0.0, %v889
        %v891 = vpop.f32.mrb[0].mxu0
        %892 = vmatprep.mubr.bf16.mxu0 %v585
        %893 = vmatmul.mubr.bf16.gmra.mrb[0].mxu0 %v584
        %v894 = vpop.f32.mrb[0].mxu0
        %v895 = vadd.f32 0.0, %v894
        %v896 = vpop.f32.mrb[0].mxu0
        %v897 = vpop.f32.mrb[0].mxu0
        %v898 = vadd.f32 0.0, %v897
        %v899 = vpop.f32.mrb[0].mxu0
        %900 = vmatprep.mubr.bf16.mxu0 %v589
        %901 = vmatmul.mubr.bf16.gmra.mrb[0].mxu0 %v588
        %v902 = vpop.f32.mrb[0].mxu0
        %v903 = vadd.f32 0.0, %v902
        %v904 = vpop.f32.mrb[0].mxu0
        %v905 = vpop.f32.mrb[0].mxu0
        %v906 = vadd.f32 0.0, %v905
        %v907 = vpop.f32.mrb[0].mxu0
        %908 = vmatprep.mubr.bf16.mxu0 %v593
        %909 = vmatmul.mubr.bf16.gmra.mrb[0].mxu0 %v592
        %v910 = vpop.f32.mrb[0].mxu0
        %v911 = vadd.f32 0.0, %v910
        %v912 = vpop.f32.mrb[0].mxu0
        %v913 = vpop.f32.mrb[0].mxu0
        %v914 = vadd.f32 0.0, %v913
        %v915 = vpop.f32.mrb[0].mxu0
        %916 = vdwg.mxu0
        %917 = vmatprep.subr.bf16.mxu0 0
        %918 = vmatpush1.bf16.msra.mxu0 %v772
        %919 = vmatprep.subr.bf16.mxu0 0
        %920 = vmatpush1.bf16.msra.mxu0 %v773
        %921 = vmatprep.subr.bf16.mxu0 0
        %922 = vmatpush1.bf16.msra.mxu0 %v774
        %923 = vmatprep.subr.bf16.mxu0 0
        %924 = vmatpush1.bf16.msra.mxu0 %v775
        %925 = vmatprep.subr.bf16.mxu0 0
        %926 = vmatpush1.bf16.msra.mxu0 %v776
        %927 = vmatprep.subr.bf16.mxu0 0
        %928 = vmatpush1.bf16.msra.mxu0 %v777
        %929 = vmatprep.subr.bf16.mxu0 0
        %930 = vmatpush1.bf16.msra.mxu0 %v778
        %931 = vmatprep.subr.bf16.mxu0 0
        %932 = vmatpush1.bf16.msra.mxu0 %v779
        %933 = vmatprep.subr.bf16.mxu0 0
        %934 = vmatpush1.bf16.msra.mxu0 %v780
        %935 = vmatprep.subr.bf16.mxu0 0
        %936 = vmatpush1.bf16.msra.mxu0 %v781
        %937 = vmatprep.subr.bf16.mxu0 0
        %938 = vmatpush1.bf16.msra.mxu0 %v782
        %939 = vmatprep.subr.bf16.mxu0 0
        %940 = vmatpush1.bf16.msra.mxu0 %v783
        %941 = vmatprep.subr.bf16.mxu0 0
        %942 = vmatpush1.bf16.msra.mxu0 %v784
        %943 = vmatprep.subr.bf16.mxu0 0
        %944 = vmatpush1.bf16.msra.mxu0 %v785
        %945 = vmatprep.subr.bf16.mxu0 0
        %946 = vmatpush1.bf16.msra.mxu0 %v786
        %947 = vmatprep.subr.bf16.mxu0 0
        %948 = vmatpush1.bf16.msra.mxu0 %v787
        %949 = vmatprep.mubr.bf16.mxu0 %v567
        %950 = vmatmul.mubr.bf16.gmra.mrb[0].mxu0 %v566
        %v951 = vpop.f32.mrb[0].mxu0
        %v952 = vadd.f32 %v855, %v951
        %v953 = vpop.f32.mrb[0].mxu0
        %v954 = vpop.f32.mrb[0].mxu0
        %v955 = vadd.f32 %v858, %v954
        %v956 = vpop.f32.mrb[0].mxu0
        %957 = vmatprep.mubr.bf16.mxu0 %v571
        %958 = vmatmul.mubr.bf16.gmra.mrb[0].mxu0 %v570
        %v959 = vpop.f32.mrb[0].mxu0
        %v960 = vadd.f32 %v863, %v959
        %v961 = vpop.f32.mrb[0].mxu0
        %v962 = vpop.f32.mrb[0].mxu0
        %v963 = vadd.f32 %v866, %v962
        %v964 = vpop.f32.mrb[0].mxu0
        %965 = vmatprep.mubr.bf16.mxu0 %v575
        %966 = vmatmul.mubr.bf16.gmra.mrb[0].mxu0 %v574
        %v967 = vpop.f32.mrb[0].mxu0
        %v968 = vadd.f32 %v871, %v967
        %v969 = vpop.f32.mrb[0].mxu0
        %v970 = vpop.f32.mrb[0].mxu0
        %v971 = vadd.f32 %v874, %v970
        %v972 = vpop.f32.mrb[0].mxu0
        %973 = vmatprep.mubr.bf16.mxu0 %v579
        %974 = vmatmul.mubr.bf16.gmra.mrb[0].mxu0 %v578
        %v975 = vpop.f32.mrb[0].mxu0
        %v976 = vadd.f32 %v879, %v975
        %v977 = vpop.f32.mrb[0].mxu0
        %v978 = vpop.f32.mrb[0].mxu0
        %v979 = vadd.f32 %v882, %v978
        %v980 = vpop.f32.mrb[0].mxu0
        %981 = vmatprep.mubr.bf16.mxu0 %v583
        %982 = vmatmul.mubr.bf16.gmra.mrb[0].mxu0 %v582
        %v983 = vpop.f32.mrb[0].mxu0
        %v984 = vadd.f32 %v887, %v983
        %v985 = vpop.f32.mrb[0].mxu0
        %v986 = vpop.f32.mrb[0].mxu0
        %v987 = vadd.f32 %v890, %v986
        %v988 = vpop.f32.mrb[0].mxu0
        %989 = vmatprep.mubr.bf16.mxu0 %v587
        %990 = vmatmul.mubr.bf16.gmra.mrb[0].mxu0 %v586
        %v991 = vpop.f32.mrb[0].mxu0
        %v992 = vadd.f32 %v895, %v991
        %v993 = vpop.f32.mrb[0].mxu0
        %v994 = vpop.f32.mrb[0].mxu0
        %v995 = vadd.f32 %v898, %v994
        %v996 = vpop.f32.mrb[0].mxu0
        %997 = vmatprep.mubr.bf16.mxu0 %v591
        %998 = vmatmul.mubr.bf16.gmra.mrb[0].mxu0 %v590
        %v999 = vpop.f32.mrb[0].mxu0
        %v1000 = vadd.f32 %v903, %v999
        %v1001 = vpop.f32.mrb[0].mxu0
        %v1002 = vpop.f32.mrb[0].mxu0
        %v1003 = vadd.f32 %v906, %v1002
        %v1004 = vpop.f32.mrb[0].mxu0
        %1005 = vmatprep.mubr.bf16.mxu0 %v595
        %1006 = vmatmul.mubr.bf16.gmra.mrb[0].mxu0 %v594
        %v1007 = vpop.f32.mrb[0].mxu0
        %v1008 = vadd.f32 %v911, %v1007
        %v1009 = vpop.f32.mrb[0].mxu0
        %v1010 = vpop.f32.mrb[0].mxu0
        %v1011 = vadd.f32 %v914, %v1010
        %v1012 = vpop.f32.mrb[0].mxu0
        %1013 = vdwg.mxu0
        %v1014 = vadd.f32 %v356, %v952
        %v1015 = vadd.f32 %v357, %v955
        %v1016 = vadd.f32 %v358, %v960
        %v1017 = vadd.f32 %v359, %v963
        %v1018 = vadd.f32 %v360, %v968
        %v1019 = vadd.f32 %v361, %v971
        %v1020 = vadd.f32 %v362, %v976
        %v1021 = vadd.f32 %v363, %v979
        %v1022 = vadd.f32 %v364, %v984
        %v1023 = vadd.f32 %v365, %v987
        %v1024 = vadd.f32 %v366, %v992
        %v1025 = vadd.f32 %v367, %v995
        %v1026 = vadd.f32 %v368, %v1000
        %v1027 = vadd.f32 %v369, %v1003
        %v1028 = vadd.f32 %v370, %v1008
        %v1029 = vadd.f32 %v371, %v1011
        %1030 = vst [vmem:[#allocation2] sm:$0xff] %v1014
        %1031 = vst [vmem:[#allocation2 + $0x8] sm:$0xff] %v1015
        %1032 = vst [vmem:[#allocation2 + $0x10] sm:$0xff] %v1016
        %1033 = vst [vmem:[#allocation2 + $0x18] sm:$0xff] %v1017
        %1034 = vst [vmem:[#allocation2 + $0x20] sm:$0xff] %v1018
        %1035 = vst [vmem:[#allocation2 + $0x28] sm:$0xff] %v1019
        %1036 = vst [vmem:[#allocation2 + $0x30] sm:$0xff] %v1020
        %1037 = vst [vmem:[#allocation2 + $0x38] sm:$0xff] %v1021
        %1038 = vst [vmem:[#allocation2 + $0x40] sm:$0xff] %v1022
        %1039 = vst [vmem:[#allocation2 + $0x48] sm:$0xff] %v1023
        %1040 = vst [vmem:[#allocation2 + $0x50] sm:$0xff] %v1024
        %1041 = vst [vmem:[#allocation2 + $0x58] sm:$0xff] %v1025
        %1042 = vst [vmem:[#allocation2 + $0x60] sm:$0xff] %v1026
        %1043 = vst [vmem:[#allocation2 + $0x68] sm:$0xff] %v1027
        %1044 = vst [vmem:[#allocation2 + $0x70] sm:$0xff] %v1028
        %1045 = vst [vmem:[#allocation2 + $0x78] sm:$0xff] %v1029
        %p1046 = scmp.eq.s32.totalorder %s21, 2
        // Predicated region
        $region60: #{psenet_forward.42} parent=50 // pred_check
          %p1047 = pneg %p1046
        $region61: #{psenet_forward.42} parent=50 // pred_check_branch
          %1049 = sbr.rel (%p1047) target = $region63
        $region62: #{psenet_forward.42} parent=50 // pred_region
          %v1050 = vld [vmem:[#allocation2] sm:$0xff]
          %v1051 = vld [vmem:[#allocation2 + $0x8] sm:$0xff]
          %v1052 = vld [vmem:[#allocation2 + $0x10] sm:$0xff]
          %v1053 = vld [vmem:[#allocation2 + $0x18] sm:$0xff]
          %v1054 = vld [vmem:[#allocation2 + $0x20] sm:$0xff]
          %v1055 = vld [vmem:[#allocation2 + $0x28] sm:$0xff]
          %v1056 = vld [vmem:[#allocation2 + $0x30] sm:$0xff]
          %v1057 = vld [vmem:[#allocation2 + $0x38] sm:$0xff]
          %v1058 = vld [vmem:[#allocation2 + $0x40] sm:$0xff]
          %v1059 = vld [vmem:[#allocation2 + $0x48] sm:$0xff]
          %v1060 = vld [vmem:[#allocation2 + $0x50] sm:$0xff]
          %v1061 = vld [vmem:[#allocation2 + $0x58] sm:$0xff]
          %v1062 = vld [vmem:[#allocation2 + $0x60] sm:$0xff]
          %v1063 = vld [vmem:[#allocation2 + $0x68] sm:$0xff]
          %v1064 = vld [vmem:[#allocation2 + $0x70] sm:$0xff]
          %v1065 = vld [vmem:[#allocation2 + $0x78] sm:$0xff]
          %v1066 = vld [vmem:[%s325] sm:$0x1]
          %v1068 = vlaneseq
          %v1069 = vshrl.u32 %v1068, 7
          %v1070 = vsub.s32 0, %v1069
          %v1071 = vrot.slane %v1066, %v1070
          %v1073 = vadd.f32 %v1050, %v1071
          %v1074 = vadd.f32 %v1051, %v1071
          %v1075 = vadd.f32 %v1052, %v1071
          %v1076 = vadd.f32 %v1053, %v1071
          %v1077 = vadd.f32 %v1054, %v1071
          %v1078 = vadd.f32 %v1055, %v1071
          %v1079 = vadd.f32 %v1056, %v1071
          %v1080 = vadd.f32 %v1057, %v1071
          %v1081 = vadd.f32 %v1058, %v1071
          %v1082 = vadd.f32 %v1059, %v1071
          %v1083 = vadd.f32 %v1060, %v1071
          %v1084 = vadd.f32 %v1061, %v1071
          %v1085 = vadd.f32 %v1062, %v1071
          %v1086 = vadd.f32 %v1063, %v1071
          %v1087 = vadd.f32 %v1064, %v1071
          %v1088 = vadd.f32 %v1065, %v1071
          %v1089 = vmax.f32 %v1073, 0.0
          %v1090 = vmax.f32 %v1074, 0.0
          %v1091 = vmax.f32 %v1075, 0.0
          %v1092 = vmax.f32 %v1076, 0.0
          %v1093 = vmax.f32 %v1077, 0.0
          %v1094 = vmax.f32 %v1078, 0.0
          %v1095 = vmax.f32 %v1079, 0.0
          %v1096 = vmax.f32 %v1080, 0.0
          %v1097 = vmax.f32 %v1081, 0.0
          %v1098 = vmax.f32 %v1082, 0.0
          %v1099 = vmax.f32 %v1083, 0.0
          %v1100 = vmax.f32 %v1084, 0.0
          %v1101 = vmax.f32 %v1085, 0.0
          %v1102 = vmax.f32 %v1086, 0.0
          %v1103 = vmax.f32 %v1087, 0.0
          %v1104 = vmax.f32 %v1088, 0.0
          %v1105 = vpack.c.bf16 %v1090, %v1089
          %v1106 = vpack.c.bf16 %v1092, %v1091
          %v1107 = vpack.c.bf16 %v1094, %v1093
          %v1108 = vpack.c.bf16 %v1096, %v1095
          %v1109 = vpack.c.bf16 %v1098, %v1097
          %v1110 = vpack.c.bf16 %v1100, %v1099
          %v1111 = vpack.c.bf16 %v1102, %v1101
          %v1112 = vpack.c.bf16 %v1104, %v1103
          %v1121 = vunpack.c.l.b16 %v1105
          %v1122 = vunpack.c.h.b16 %v1105
          %v1123 = vunpack.c.l.b16 %v1106
          %v1124 = vunpack.c.h.b16 %v1106
          %v1125 = vunpack.c.l.b16 %v1107
          %v1126 = vunpack.c.h.b16 %v1107
          %v1127 = vunpack.c.l.b16 %v1108
          %v1128 = vunpack.c.h.b16 %v1108
          %v1129 = vunpack.c.l.b16 %v1109
          %v1130 = vunpack.c.h.b16 %v1109
          %v1131 = vunpack.c.l.b16 %v1110
          %v1132 = vunpack.c.h.b16 %v1110
          %v1133 = vunpack.c.l.b16 %v1111
          %v1134 = vunpack.c.h.b16 %v1111
          %v1135 = vunpack.c.l.b16 %v1112
          %v1136 = vunpack.c.h.b16 %v1112
          %v1137 = vpack.c.b16 %v1121, %v1121
          %v1138 = vpack.c.b16 %v1122, %v1122
          %v1139 = vpack.c.b16 %v1123, %v1123
          %v1140 = vpack.c.b16 %v1124, %v1124
          %v1141 = vpack.c.b16 %v1125, %v1125
          %v1142 = vpack.c.b16 %v1126, %v1126
          %v1143 = vpack.c.b16 %v1127, %v1127
          %v1144 = vpack.c.b16 %v1128, %v1128
          %v1145 = vpack.c.b16 %v1129, %v1129
          %v1146 = vpack.c.b16 %v1130, %v1130
          %v1147 = vpack.c.b16 %v1131, %v1131
          %v1148 = vpack.c.b16 %v1132, %v1132
          %v1149 = vpack.c.b16 %v1133, %v1133
          %v1150 = vpack.c.b16 %v1134, %v1134
          %v1151 = vpack.c.b16 %v1135, %v1135
          %v1152 = vpack.c.b16 %v1136, %v1136
          %1169 = vst [vmem:[%s333] sm:$0xf] %v1137
          %1170 = vst [vmem:[%s333 + $0x4] sm:$0xf] %v1138
          %1171 = vst [vmem:[%s333 + $0x8] sm:$0xf] %v1139
          %1172 = vst [vmem:[%s333 + $0xc] sm:$0xf] %v1140
          %1173 = vst [vmem:[%s333 + $0x10] sm:$0xf] %v1141
          %1174 = vst [vmem:[%s333 + $0x14] sm:$0xf] %v1142
          %1175 = vst [vmem:[%s333 + $0x18] sm:$0xf] %v1143
          %1176 = vst [vmem:[%s333 + $0x1c] sm:$0xf] %v1144
          %1177 = vst [vmem:[%s333 + $0x20] sm:$0xf] %v1145
          %1178 = vst [vmem:[%s333 + $0x24] sm:$0xf] %v1146
          %1179 = vst [vmem:[%s333 + $0x28] sm:$0xf] %v1147
          %1180 = vst [vmem:[%s333 + $0x2c] sm:$0xf] %v1148
          %1181 = vst [vmem:[%s333 + $0x30] sm:$0xf] %v1149
          %1182 = vst [vmem:[%s333 + $0x34] sm:$0xf] %v1150
          %1183 = vst [vmem:[%s333 + $0x38] sm:$0xf] %v1151
          %1184 = vst [vmem:[%s333 + $0x3c] sm:$0xf] %v1152
        $region63: #{psenet_forward.42} parent=50 // pred_fallthru
          _
        %s1185 = smul.u32 16, %s19
        %p1186 = scmp.lt.s32.totalorder %s1185, 15
        %s1187 = scalar_select %p1186, %s1185, 15
        %p1188 = scmp.lt.s32.totalorder %s20, 0
        %s1189 = scalar_select %p1188, %s20, 0
        %s1190 = sadd.s32 %s1189, %s1187
        %s1191 = smul.addr %s1190, 4
        %s1192 = scalar_lea.vmem %s3, %s1191
        // Predicated region
        $region64: #{psenet_forward.42} parent=50 // pred_check
          %p1193 = pneg %p135
        $region65: #{psenet_forward.42} parent=50 // pred_check_branch
          %1195 = sbr.rel (%p1193) target = $region67
        $region66: #{psenet_forward.42} parent=50 // pred_region
          %s1196 = smul.u32 16, %s19
        $region67: #{psenet_forward.42} parent=50 // pred_fallthru
          _
        // Predicated region
        $region68: #{psenet_forward.42} parent=50 // pred_check
          %p1197 = pneg %p135
        $region69: #{psenet_forward.42} parent=50 // pred_check_branch
          %1199 = sbr.rel (%p1197) target = $region71
        $region70: #{psenet_forward.42} parent=50 // pred_region
          %s1200 = smul.u32 16, %s19
          %p1201 = scmp.lt.s32.totalorder %s1200, 15
          %s1202 = scalar_select %p1201, %s1200, 15
          %p1203 = scmp.lt.s32.totalorder %s20, 0
          %s1204 = scalar_select %p1203, %s20, 0
          %s1205 = sadd.s32 %s1204, %s1202
          %s1206 = smul.addr %s1205, 4
          %s1207 = scalar_lea.vmem %s3, %s1206
        $region71: #{psenet_forward.42} parent=50 // pred_fallthru
          _
      $region51: #{psenet_forward.42} parent=5 // pred_fallthru
        _
      %p1208 = scmp.le.s32.totalorder 2, %s9
      // Predicated region
      $region72: #{psenet_forward.42} parent=5 // pred_check
        %p1209 = pneg %p1208
      $region73: #{psenet_forward.42} parent=5 // pred_check_branch
        %1211 = sbr.rel (%p1209) target = $region75
      $region74: #{psenet_forward.42} parent=5 // pred_region
        %s1212 = ssub.s32 %s9, 2
      $region75: #{psenet_forward.42} parent=5 // pred_fallthru
        _
    $region6: #{psenet_forward.42} parent=1 // loop_footer
      %s13 = sadd.s32 1, %s9
    $region7: #{psenet_forward.42} parent=1 // loop_footer_branch
      %8 = sbr.rel target = $region3
    $region8: #{psenet_forward.42} parent=1 // loop_exit
      _

// kernel: psenet_forward.45
$region0: #{psenet_forward.45}
  #allocation0 [shape = 'u32[]', space=smem, size = 0x4, offset = 0x4, fixed_abs, tag = 'smem constant byte address 0x4 - core index']
  #allocation1 [shape = 'u32[144,128]{1,0:T(1,128)}', space=vmem, size = 0x12000, scoped, tag = 'internal scratch']
  %s0 = inlined_call_operand.vmem [shape: f32[32,8], index: 0, kind: input, shape index: {}]
  %s1 = inlined_call_operand.vmem [shape: f32[64,8,128], index: 1, kind: input, shape index: {}]
  %s2 = inlined_call_operand.vmem [shape: f32[64,32,128], index: 2, kind: output, shape index: {}]
  %s3 = sld [smem:[#allocation0]]
  $region41: #{psenet_forward.45} parent=0
    _
  %s5 = ssub.s32 1, %s3
  %s6 = scalar_select 0, %s5, %s3
  loop: start=0, step=1, limit=66
  $region2: #{psenet_forward.45} parent=0 // loop_pre_header
    _
  $region3: #{psenet_forward.45} parent=0 // loop_header
    %s8 = sphi 0, %s12
    %p9 = scmp.ge.s32.totalorder %s8, 66
    %s15 = sphi 0, %s34
    %s16 = sphi 0, %s30
    %s17 = sphi 0, %s26
    %s18 = sphi 0, %s15
    %s19 = sphi 0, %s16
    %s20 = sphi 0, %s17
    %s21 = sphi 0, %s18
    %s22 = sphi 0, %s19
    %s23 = sphi 0, %s20
    %s37 = sphi 0, %s39
    %s40 = sphi 0, %s37
    %s41 = sphi 0, %s40
    %s57 = sphi 0, %s41
    %s65 = sphi 0, %s67
    %s68 = sphi 0, %s65
    %s69 = sphi 0, %s68
    %s85 = sphi 0, %s69
    %s95 = sphi 0, %s97
    %s98 = sphi 0, %s95
    %s99 = sphi 0, %s98
    %s115 = sphi 0, %s99
  $region4: #{psenet_forward.45} parent=0 // loop_header_branch
    %11 = sbr.rel (%p9) target = $region8
  $region5: #{psenet_forward.45} parent=0 // loop_body
    %s13 = ssub.s32 %s8, 1
    %s14 = ssub.s32 %s8, 2
    %s24 = sadd.s32 1, %s17
    %p25 = scmp.ge.s32.totalorder %s24, 1
    %s26 = scalar_select %p25, 0, %s24
    %s27 = sadd.s32 1, %s16
    %s28 = scalar_select %p25, %s27, %s16
    %p29 = scmp.ge.s32.totalorder %s28, 1
    %s30 = scalar_select %p29, 0, %s28
    %s31 = sadd.s32 1, %s15
    %s32 = scalar_select %p29, %s31, %s15
    %p33 = scmp.ge.s32.totalorder %s32, 64
    %s34 = scalar_select %p33, 0, %s32
    %s35 = ssub.s32 %s16, %s30
    %p36 = scmp.eq.s32.totalorder %s35, 0
    %s38 = sadd.s32 %s37, 1
    %s39 = scalar_select %p36, %s37, %s38
    %p42 = pneg %p36
    %p43 = scmp.eq.s32.totalorder %s8, 63
    %p44 = por %p42, %p43
    %p45 = scmp.ne.s32.totalorder %s37, %s40
    %p46 = scmp.eq.s32.totalorder %s8, 0
    %p47 = por %p45, %p46
    %p48 = scmp.ne.s32.totalorder %s37, %s40
    %p49 = scmp.eq.s32.totalorder %s13, 63
    %p50 = por %p48, %p49
    %p51 = scmp.ne.s32.totalorder %s40, %s41
    %p52 = scmp.eq.s32.totalorder %s13, 0
    %p53 = por %p51, %p52
    %p54 = scmp.ne.s32.totalorder %s40, %s41
    %p55 = scmp.eq.s32.totalorder %s14, 63
    %p56 = por %p54, %p55
    %p58 = scmp.ne.s32.totalorder %s41, %s57
    %p59 = scmp.eq.s32.totalorder %s14, 0
    %p60 = por %p58, %p59
    %s61 = ssub.s32 %s15, %s34
    %s62 = ssub.s32 %s17, %s26
    %s63 = sor.u32 %s61, %s62
    %p64 = scmp.eq.s32.totalorder %s63, 0
    %s66 = sadd.s32 %s65, 1
    %s67 = scalar_select %p64, %s65, %s66
    %p70 = pneg %p64
    %p71 = scmp.eq.s32.totalorder %s8, 63
    %p72 = por %p70, %p71
    %p73 = scmp.ne.s32.totalorder %s65, %s68
    %p74 = scmp.eq.s32.totalorder %s8, 0
    %p75 = por %p73, %p74
    %p76 = scmp.ne.s32.totalorder %s65, %s68
    %p77 = scmp.eq.s32.totalorder %s13, 63
    %p78 = por %p76, %p77
    %p79 = scmp.ne.s32.totalorder %s68, %s69
    %p80 = scmp.eq.s32.totalorder %s13, 0
    %p81 = por %p79, %p80
    %p82 = scmp.ne.s32.totalorder %s68, %s69
    %p83 = scmp.eq.s32.totalorder %s14, 63
    %p84 = por %p82, %p83
    %p86 = scmp.ne.s32.totalorder %s69, %s85
    %p87 = scmp.eq.s32.totalorder %s14, 0
    %p88 = por %p86, %p87
    %s89 = ssub.s32 %s15, %s34
    %s90 = ssub.s32 %s16, %s30
    %s91 = sor.u32 %s89, %s90
    %s92 = ssub.s32 %s17, %s26
    %s93 = sor.u32 %s91, %s92
    %p94 = scmp.eq.s32.totalorder %s93, 0
    %s96 = sadd.s32 %s95, 1
    %s97 = scalar_select %p94, %s95, %s96
    %p100 = pneg %p94
    %p101 = scmp.eq.s32.totalorder %s8, 63
    %p102 = por %p100, %p101
    %p103 = scmp.ne.s32.totalorder %s95, %s98
    %p104 = scmp.eq.s32.totalorder %s8, 0
    %p105 = por %p103, %p104
    %p106 = scmp.ne.s32.totalorder %s95, %s98
    %p107 = scmp.eq.s32.totalorder %s13, 63
    %p108 = por %p106, %p107
    %p109 = scmp.ne.s32.totalorder %s98, %s99
    %p110 = scmp.eq.s32.totalorder %s13, 0
    %p111 = por %p109, %p110
    %p112 = scmp.ne.s32.totalorder %s98, %s99
    %p113 = scmp.eq.s32.totalorder %s14, 63
    %p114 = por %p112, %p113
    %p116 = scmp.ne.s32.totalorder %s99, %s115
    %p117 = scmp.eq.s32.totalorder %s14, 0
    %p118 = por %p116, %p117
    %p119 = scmp.le.s32.totalorder 1, %s8
    %p120 = scmp.lt.s32.totalorder %s8, 65
    %p121 = pnand %p119, %p120
    %p122 = pneg %p121
    // Predicated region
    $region9: #{psenet_forward.45} parent=5 // pred_check
      _
    $region10: #{psenet_forward.45} parent=5 // pred_check_branch
      %124 = sbr.rel (%p121) target = $region12
    $region11: #{psenet_forward.45} parent=5 // pred_region
      %s125 = ssub.s32 %s8, 1
      // Predicated region
      $region13: #{psenet_forward.45} parent=11 // pred_check
        %p126 = pneg %p53
      $region14: #{psenet_forward.45} parent=11 // pred_check_branch
        %128 = sbr.rel (%p126) target = $region16
      $region15: #{psenet_forward.45} parent=11 // pred_region
        %s129 = smul.u32 4, %s19
        %p130 = scmp.lt.s32.totalorder %s129, 3
        %s131 = scalar_select %p130, %s129, 3
        %s132 = smul.addr %s131, 8
        %s133 = scalar_lea.vmem %s0, %s132
        %s134 = smul.u32 4, %s19
      $region16: #{psenet_forward.45} parent=11 // pred_fallthru
        _
    $region12: #{psenet_forward.45} parent=5 // pred_fallthru
      _
    %p135 = scmp.lt.s32.totalorder %s8, 64
    // Predicated region
    $region17: #{psenet_forward.45} parent=5 // pred_check
      %p136 = pneg %p135
    $region18: #{psenet_forward.45} parent=5 // pred_check_branch
      %138 = sbr.rel (%p136) target = $region20
    $region19: #{psenet_forward.45} parent=5 // pred_region
      // Predicated region
      $region21: #{psenet_forward.45} parent=19 // pred_check
        %p139 = pneg %p75
      $region22: #{psenet_forward.45} parent=19 // pred_check_branch
        %141 = sbr.rel (%p139) target = $region24
      $region23: #{psenet_forward.45} parent=19 // pred_region
        %p142 = scmp.lt.s32.totalorder %s15, 63
        %s143 = scalar_select %p142, %s15, 63
        %p144 = scmp.lt.s32.totalorder %s17, 0
        %s145 = scalar_select %p144, %s17, 0
        %s146 = sadd.s32 %s145, %s143
        %s147 = smul.addr %s146, 8
        %s148 = scalar_lea.vmem %s1, %s147
      $region24: #{psenet_forward.45} parent=19 // pred_fallthru
        _
    $region20: #{psenet_forward.45} parent=5 // pred_fallthru
      _
    %p149 = scmp.le.s32.totalorder 1, %s8
    %p150 = scmp.lt.s32.totalorder %s8, 65
    %p151 = pnand %p149, %p150
    %p152 = pneg %p151
    // Predicated region
    $region25: #{psenet_forward.45} parent=5 // pred_check
      _
    $region26: #{psenet_forward.45} parent=5 // pred_check_branch
      %154 = sbr.rel (%p151) target = $region28
    $region27: #{psenet_forward.45} parent=5 // pred_region
      %s155 = ssub.s32 %s8, 1
      %s156 = smul.u32 4, %s19
      %p157 = scmp.lt.s32.totalorder %s156, 3
      %s158 = scalar_select %p157, %s156, 3
      %s159 = smul.addr %s158, 8
      %s160 = scalar_lea.vmem %s0, %s159
      %p161 = pneg %p53
      %p162 = pneg %p50
      %p163 = scmp.lt.s32.totalorder %s18, 63
      %s164 = scalar_select %p163, %s18, 63
      %p165 = scmp.lt.s32.totalorder %s20, 0
      %s166 = scalar_select %p165, %s20, 0
      %s167 = sadd.s32 %s166, %s164
      %s168 = smul.addr %s167, 8
      %s169 = scalar_lea.vmem %s1, %s168
      %p170 = pneg %p81
      %p171 = pneg %p78
      %p172 = pneg %p111
      %p173 = pneg %p108
      %s174 = smul.u32 4, %s19
      %p175 = scmp.lt.s32.totalorder %s18, 63
      %s176 = scalar_select %p175, %s18, 63
      %p177 = scmp.lt.s32.totalorder %s174, 3
      %s178 = scalar_select %p177, %s174, 3
      %p179 = scmp.lt.s32.totalorder %s20, 0
      %s180 = scalar_select %p179, %s20, 0
      %s181 = sadd.s32 %s180, %s178
      %s182 = smul.addr %s176, 4
      %s183 = sadd.s32 %s181, %s182
      %s184 = smul.addr %s183, 8
      %s185 = scalar_lea.vmem %s2, %s184
      %s186 = smul.u32 4, %s19
      %p187 = scmp.lt.s32.totalorder %s186, 3
      %s188 = scalar_select %p187, %s186, 3
      %s189 = smul.addr %s188, 8
      %s190 = scalar_lea.vmem %s0, %s189
      %s191 = smul.u32 4, %s19
      %p192 = scmp.lt.s32.totalorder %s18, 63
      %s193 = scalar_select %p192, %s18, 63
      %p194 = scmp.lt.s32.totalorder %s20, 0
      %s195 = scalar_select %p194, %s20, 0
      %s196 = sadd.s32 %s195, %s193
      %s197 = smul.addr %s196, 8
      %s198 = scalar_lea.vmem %s1, %s197
      %s199 = smul.u32 4, %s19
      %p200 = scmp.lt.s32.totalorder %s18, 63
      %s201 = scalar_select %p200, %s18, 63
      %p202 = scmp.lt.s32.totalorder %s199, 3
      %s203 = scalar_select %p202, %s199, 3
      %p204 = scmp.lt.s32.totalorder %s20, 0
      %s205 = scalar_select %p204, %s20, 0
      %s206 = sadd.s32 %s205, %s203
      %s207 = smul.addr %s201, 4
      %s208 = sadd.s32 %s206, %s207
      %s209 = smul.addr %s208, 8
      %s210 = scalar_lea.vmem %s2, %s209
      %s211 = smul.u32 4, %s19
      %v212 = vld [vmem:[%s190] sm:$0xff]
      %v213 = vld [vmem:[%s190 + $0x8] sm:$0xff]
      %v214 = vld [vmem:[%s190 + $0x10] sm:$0xff]
      %v215 = vld [vmem:[%s190 + $0x18] sm:$0xff]
      %v216 = vld [vmem:[%s198] sm:$0xff]
      %vm217 = vcmask 64512
      %v219 = vsel %vm217, %v212, 0
      %v222 = vsel %vm217, %v213, 0
      %v225 = vsel %vm217, %v214, 0
      %v228 = vsel %vm217, %v215, 0
      %230 = vmatprep.subr.mxu0 0.0
      %231 = vmatpush1.msra.mxu0 %v216
      %232 = vmatprep.subr.mxu0 0.0
      %233 = vmatpush1.msra.mxu0 0.0
      %234 = vmatprep.subr.mxu0 0.0
      %235 = vmatpush1.msra.mxu0 0.0
      %236 = vmatprep.subr.mxu0 0.0
      %237 = vmatpush1.msra.mxu0 0.0
      %238 = vmatprep.subr.mxu0 0.0
      %239 = vmatpush1.msra.mxu0 0.0
      %240 = vmatprep.subr.mxu0 0.0
      %241 = vmatpush1.msra.mxu0 0.0
      %242 = vmatprep.subr.mxu0 0.0
      %243 = vmatpush1.msra.mxu0 0.0
      %244 = vmatprep.subr.mxu0 0.0
      %245 = vmatpush1.msra.mxu0 0.0
      %246 = vmatprep.subr.mxu0 0.0
      %247 = vmatpush1.msra.mxu0 0.0
      %248 = vmatprep.subr.mxu0 0.0
      %249 = vmatpush1.msra.mxu0 0.0
      %250 = vmatprep.subr.mxu0 0.0
      %251 = vmatpush1.msra.mxu0 0.0
      %252 = vmatprep.subr.mxu0 0.0
      %253 = vmatpush1.msra.mxu0 0.0
      %254 = vmatprep.subr.mxu0 0.0
      %255 = vmatpush1.msra.mxu0 0.0
      %256 = vmatprep.subr.mxu0 0.0
      %257 = vmatpush1.msra.mxu0 0.0
      %258 = vmatprep.subr.mxu0 0.0
      %259 = vmatpush1.msra.mxu0 0.0
      %260 = vmatprep.subr.mxu0 0.0
      %261 = vmatpush1.msra.mxu0 0.0
      %262 = vmatprep.subr.mxu0 0.0
      %263 = vmatpush1.msra.mxu0 0.0
      %264 = vmatprep.subr.mxu0 0.0
      %265 = vmatpush1.msra.mxu0 0.0
      %266 = vmatprep.subr.mxu0 0.0
      %267 = vmatpush1.msra.mxu0 0.0
      %268 = vmatprep.subr.mxu0 0.0
      %269 = vmatpush1.msra.mxu0 0.0
      %270 = vmatprep.subr.mxu0 0.0
      %271 = vmatpush1.msra.mxu0 0.0
      %272 = vmatprep.subr.mxu0 0.0
      %273 = vmatpush1.msra.mxu0 0.0
      %274 = vmatprep.subr.mxu0 0.0
      %275 = vmatpush1.msra.mxu0 0.0
      %276 = vmatprep.subr.mxu0 0.0
      %277 = vmatpush1.msra.mxu0 0.0
      %278 = vmatprep.subr.mxu0 0.0
      %279 = vmatpush1.msra.mxu0 0.0
      %280 = vmatprep.subr.mxu0 0.0
      %281 = vmatpush1.msra.mxu0 0.0
      %282 = vmatprep.subr.mxu0 0.0
      %283 = vmatpush1.msra.mxu0 0.0
      %284 = vmatprep.subr.mxu0 0.0
      %285 = vmatpush1.msra.mxu0 0.0
      %286 = vmatprep.subr.mxu0 0.0
      %287 = vmatpush1.msra.mxu0 0.0
      %288 = vmatprep.subr.mxu0 0.0
      %289 = vmatpush1.msra.mxu0 0.0
      %290 = vmatprep.subr.mxu0 0.0
      %291 = vmatpush1.msra.mxu0 0.0
      %292 = vmatprep.subr.mxu0 0.0
      %293 = vmatpush1.msra.mxu0 0.0
      %294 = vmatprep.mubr.f32.mxu0 0.0
      %295 = vmatmul.mubr.f32.gmra.mrb[0].mxu0 %v219
      %v296 = vpop.f32.mrb[0].mxu0
      %v297 = vadd.f32 0.0, %v296
      %v298 = vpop.f32.mrb[0].mxu0
      %299 = vmatprep.mubr.f32.mxu0 0.0
      %300 = vmatmul.mubr.f32.gmra.mrb[0].mxu0 %v222
      %v301 = vpop.f32.mrb[0].mxu0
      %v302 = vadd.f32 0.0, %v301
      %v303 = vpop.f32.mrb[0].mxu0
      %304 = vmatprep.mubr.f32.mxu0 0.0
      %305 = vmatmul.mubr.f32.gmra.mrb[0].mxu0 %v225
      %v306 = vpop.f32.mrb[0].mxu0
      %v307 = vadd.f32 0.0, %v306
      %v308 = vpop.f32.mrb[0].mxu0
      %309 = vmatprep.mubr.f32.mxu0 0.0
      %310 = vmatmul.mubr.f32.gmra.mrb[0].mxu0 %v228
      %v311 = vpop.f32.mrb[0].mxu0
      %v312 = vadd.f32 0.0, %v311
      %v313 = vpop.f32.mrb[0].mxu0
      %314 = vdwg.mxu0
      %315 = vst [vmem:[%s210] sm:$0xff] %v297
      %316 = vst [vmem:[%s210 + $0x8] sm:$0xff] %v302
      %317 = vst [vmem:[%s210 + $0x10] sm:$0xff] %v307
      %318 = vst [vmem:[%s210 + $0x18] sm:$0xff] %v312
      %s319 = smul.u32 4, %s19
      %p320 = scmp.lt.s32.totalorder %s18, 63
      %s321 = scalar_select %p320, %s18, 63
      %p322 = scmp.lt.s32.totalorder %s319, 3
      %s323 = scalar_select %p322, %s319, 3
      %p324 = scmp.lt.s32.totalorder %s20, 0
      %s325 = scalar_select %p324, %s20, 0
      %s326 = sadd.s32 %s325, %s323
      %s327 = smul.addr %s321, 4
      %s328 = sadd.s32 %s326, %s327
      %s329 = smul.addr %s328, 8
      %s330 = scalar_lea.vmem %s2, %s329
      // Predicated region
      $region29: #{psenet_forward.45} parent=27 // pred_check
        %p331 = pneg %p108
      $region30: #{psenet_forward.45} parent=27 // pred_check_branch
        %333 = sbr.rel (%p331) target = $region32
      $region31: #{psenet_forward.45} parent=27 // pred_region
        %s334 = smul.u32 4, %s19
      $region32: #{psenet_forward.45} parent=27 // pred_fallthru
        _
    $region28: #{psenet_forward.45} parent=5 // pred_fallthru
      _
    %p335 = scmp.le.s32.totalorder 2, %s8
    // Predicated region
    $region33: #{psenet_forward.45} parent=5 // pred_check
      %p336 = pneg %p335
    $region34: #{psenet_forward.45} parent=5 // pred_check_branch
      %338 = sbr.rel (%p336) target = $region36
    $region35: #{psenet_forward.45} parent=5 // pred_region
      %s339 = ssub.s32 %s8, 2
      // Predicated region
      $region37: #{psenet_forward.45} parent=35 // pred_check
        %p340 = pneg %p114
      $region38: #{psenet_forward.45} parent=35 // pred_check_branch
        %342 = sbr.rel (%p340) target = $region40
      $region39: #{psenet_forward.45} parent=35 // pred_region
        %s343 = smul.u32 4, %s22
        %p344 = scmp.lt.s32.totalorder %s21, 63
        %s345 = scalar_select %p344, %s21, 63
        %p346 = scmp.lt.s32.totalorder %s343, 3
        %s347 = scalar_select %p346, %s343, 3
        %p348 = scmp.lt.s32.totalorder %s23, 0
        %s349 = scalar_select %p348, %s23, 0
        %s350 = sadd.s32 %s349, %s347
        %s351 = smul.addr %s345, 4
        %s352 = sadd.s32 %s350, %s351
        %s353 = smul.addr %s352, 8
        %s354 = scalar_lea.vmem %s2, %s353
      $region40: #{psenet_forward.45} parent=35 // pred_fallthru
        _
    $region36: #{psenet_forward.45} parent=5 // pred_fallthru
      _
  $region6: #{psenet_forward.45} parent=0 // loop_footer
    %s12 = sadd.s32 1, %s8
  $region7: #{psenet_forward.45} parent=0 // loop_footer_branch
    %7 = sbr.rel target = $region3
  $region8: #{psenet_forward.45} parent=0 // loop_exit
    _

</llo_original>
